<compile_context>
chip_gen: v7x
topology: tpu7x:2x2x1
jax: 0.10.0
libtpu: 0.0.40
codegen_flags: <defaults>
</compile_context>

<pallas_src>
from functools import partial

import jax
import jax.numpy as jnp
from jax.experimental import pallas as pl
from jax.experimental.pallas import tpu as pltpu


# ----------------------------------------------------------------------------
# Math shared by the Pallas kernel body and the pure-JAX reference.
# `p` holds either Refs (kernel) or per-block arrays (reference); both support
# the same `obj[idx]` / `obj[...]` indexing, so weight slabs are loaded at
# their point of use in the kernel.
# ----------------------------------------------------------------------------
def _gelu(x):
    # tanh-approx GELU -> tanh runs on the EUP slot instead of a long VALU
    # polynomial.  (See TODO at top re: exact-erf numerics.)
    c = 0.7978845608028654  # sqrt(2/pi)
    return 0.5 * x * (1.0 + jnp.tanh(c * (x + 0.044715 * x * x * x)))


def _ln(x, g, b):
    # nn.LayerNorm over last dim, eps=1e-5, biased variance (f32 stats).
    mu = jnp.mean(x, axis=-1, keepdims=True)
    var = jnp.mean(jnp.square(x - mu), axis=-1, keepdims=True)
    return (x - mu) * jax.lax.rsqrt(var + 1e-5) * g + b


def _mha(q_in, kv_in, p, idx, Bt, Nq, Nk, nh, recip):
    """nn.MultiheadAttention semantics on a flattened batch tile.

    q_in: (Bt*Nq, D) f32, kv_in: (Bt*Nk, D) f32.
    Weights pre-transposed (in_features, out_features), bf16:
      wq: (D, D), wkv: (D, 2D) (fused K/V), wo: (D, D); biases f32.
    """
    D = q_in.shape[-1]
    hd = D // nh
    scale = float(hd) ** -0.5

    wq = p['wq'][idx]                                           # load at use
    q = jnp.dot(q_in.astype(wq.dtype), wq,
                preferred_element_type=jnp.float32) + p['bq'][idx]     # (Bt*Nq, D)
    wkv = p['wkv'][idx]                                         # load at use
    kv = jnp.dot(kv_in.astype(wkv.dtype), wkv,
                 preferred_element_type=jnp.float32) + p['bkv'][idx]   # (Bt*Nk, 2D)
    k, v = kv[:, :D], kv[:, D:]

    outs = []
    for b in range(Bt):   # static unroll; attention matmuls are tiny vs projections
        qb = q[b * Nq:(b + 1) * Nq].reshape(Nq, nh, hd)
        kb = k[b * Nk:(b + 1) * Nk].reshape(Nk, nh, hd)
        vb = v[b * Nk:(b + 1) * Nk].reshape(Nk, nh, hd)
        s = jnp.einsum('qhd,khd->hqk', qb, kb,
                       preferred_element_type=jnp.float32) * scale     # (nh, Nq, Nk)
        s = s - jnp.max(s, axis=-1, keepdims=True)
        e = jnp.exp(s)
        pw = e * recip(jnp.sum(e, axis=-1, keepdims=True))             # EUP recip
        o = jnp.einsum('hqk,khd->qhd', pw, vb,
                       preferred_element_type=jnp.float32)
        outs.append(o.reshape(Nq, D))
    o = outs[0] if Bt == 1 else jnp.concatenate(outs, axis=0)          # (Bt*Nq, D)

    wo = p['wo'][idx]                                           # load at use
    return jnp.dot(o.astype(wo.dtype), wo,
                   preferred_element_type=jnp.float32) + p['bo'][idx]


def _ln_ffn(t, g, b, p):
    # LayerNorm + MLP with residual taken from the NORMED tokens — this
    # matches the PyTorch module exactly: ffned = normed + ffn(normed).
    n = _ln(t, g, b)
    w1 = p['w1'][...]                                           # load at use
    h = _gelu(jnp.dot(n.astype(w1.dtype), w1,
                      preferred_element_type=jnp.float32) + p['b1'][...])
    w2 = p['w2'][...]                                           # load at use
    return n + jnp.dot(h.astype(w2.dtype), w2,
                       preferred_element_type=jnp.float32) + p['b2'][...]


def _block_math(x, L, p, *, nh, recip):
    """One LabelGuidedTransformerBlock on a batch tile.

    x: (Bt, N, D) f32, L: (Bt, M, D) f32.
    LN order: 0=norm_patch1, 1=norm_label1, 2=norm_cross_x, 3=norm_cross_L, 4=norm_ffn
    Attn order: 0=msa_patch, 1=msa_label, 2=cross_attn
    """
    Bt, N, D = x.shape
    M = L.shape[1]
    xf = x.reshape(Bt * N, D)
    Lf = L.reshape(Bt * M, D)
    lnw, lnb = p['lnw'], p['lnb']

    # 1) patch self-attention (+ residual)
    xn = _ln(xf, lnw[0], lnb[0])
    xf_new = xf + _mha(xn, xn, p, 0, Bt, N, N, nh, recip)

    # 2) label self-attention (NO residual add — matches the module:
    #    L = L_attn.transpose(0, 1))
    Ln = _ln(Lf, lnw[1], lnb[1])
    L_attn = _mha(Ln, Ln, p, 1, Bt, M, M, nh, recip)

    # 3) cross-attention: queries from L_attn, K/V from the ORIGINAL x;
    #    residual from the ORIGINAL L (matches L_res + cross_out).
    q = _ln(L_attn, lnw[3], lnb[3])
    kv = _ln(xf, lnw[2], lnb[2])
    Lf_new = Lf + _mha(q, kv, p, 2, Bt, M, N, nh, recip)

    # 4) Shared LN + FFN on the concatenated tokens (single MXU pass), split.
    cat = jnp.concatenate([xf_new, Lf_new], axis=0)             # (Bt*(N+M), D)
    ffned = _ln_ffn(cat, lnw[4], lnb[4], p)
    x_out = ffned[:Bt * N].reshape(Bt, N, D)
    L_out = ffned[Bt * N:].reshape(Bt, M, D)
    return x_out, L_out


# ----------------------------------------------------------------------------
# Fused Pallas kernel: all blocks in one pallas_call, grid = (batch_tiles, blocks)
# ----------------------------------------------------------------------------
def _fused_kernel(x_ref, L_ref, lnw_ref, lnb_ref, wq_ref, bq_ref, wkv_ref,
                  bkv_ref, wo_ref, bo_ref, w1_ref, b1_ref, w2_ref, b2_ref,
                  xo_ref, Lo_ref, *, nh):
    blk = pl.program_id(1)

    # Seed the VMEM-resident activation carries at the first block of each
    # batch tile.  The output buffers stay resident across the "arbitrary"
    # block axis (their block index depends only on the batch index), so the
    # only per-block HBM traffic is the (pipelined) weight fetch.
    @pl.when(blk == 0)
    def _():
        xo_ref[...] = x_ref[...]
        Lo_ref[...] = L_ref[...]

    # Pass the REFS — weight slabs are loaded inside _mha/_ln_ffn at their
    # point of use (no giant live weight stacks, no spills).
    p = dict(lnw=lnw_ref, lnb=lnb_ref, wq=wq_ref, bq=bq_ref, wkv=wkv_ref,
             bkv=bkv_ref, wo=wo_ref, bo=bo_ref, w1=w1_ref, b1=b1_ref,
             w2=w2_ref, b2=b2_ref)
    x_out, L_out = _block_math(xo_ref[...], Lo_ref[...], p, nh=nh,
                               recip=lambda s: pl.reciprocal(s, approx=True))
    xo_ref[...] = x_out.astype(xo_ref.dtype)
    Lo_ref[...] = L_out.astype(Lo_ref.dtype)


def _pick_batch_tile(B, N, M, target_rows=256):
    # Pick the largest divisor of B such that Bt*(N+M) is near the MXU row
    # target (256 on v6e/v7x, 128 on v5e) — fills MXU rows and divides
    # per-batch weight HBM traffic by Bt.
    want = max(1, target_rows // (N + M))
    bt = 1
    for c in range(1, min(B, want) + 1):
        if B % c == 0:
            bt = c
    return bt


def fused_forward(x, L, bp, *, nh, batch_tile=None):
    B, N, D = x.shape
    M = L.shape[1]
    nb = bp['lnw'].shape[0]
    Bt = _pick_batch_tile(B, N, M) if batch_tile is None else batch_tile
    assert B % Bt == 0

    def wspec(arr):
        nd = arr.ndim
        return pl.BlockSpec((pl.Squeezed(),) + arr.shape[1:],
                            lambda b, k, _nd=nd: (k,) + (0,) * (_nd - 1))

    kernel = partial(_fused_kernel, nh=nh)
    x_out, L_out = pl.pallas_call(
        kernel,
        grid=(B // Bt, nb),
        in_specs=[
            pl.BlockSpec((Bt, N, D), lambda b, k: (b, 0, 0)),
            pl.BlockSpec((Bt, M, D), lambda b, k: (b, 0, 0)),
            wspec(bp['lnw']), wspec(bp['lnb']),
            wspec(bp['wq']), wspec(bp['bq']),
            wspec(bp['wkv']), wspec(bp['bkv']),
            wspec(bp['wo']), wspec(bp['bo']),
            wspec(bp['w1']), wspec(bp['b1']),
            wspec(bp['w2']), wspec(bp['b2']),
        ],
        out_specs=(
            pl.BlockSpec((Bt, N, D), lambda b, k: (b, 0, 0)),
            pl.BlockSpec((Bt, M, D), lambda b, k: (b, 0, 0)),
        ),
        out_shape=(
            jax.ShapeDtypeStruct((B, N, D), jnp.float32),
            jax.ShapeDtypeStruct((B, M, D), jnp.float32),
        ),
        compiler_params=pltpu.CompilerParams(
            dimension_semantics=("parallel", "arbitrary"),
            vmem_limit_bytes=64 * 1024 * 1024),
    )(x, L, bp['lnw'], bp['lnb'], bp['wq'], bp['bq'], bp['wkv'], bp['bkv'],
      bp['wo'], bp['bo'], bp['w1'], bp['b1'], bp['w2'], bp['b2'])
    return x_out, L_out


# ----------------------------------------------------------------------------
# Glue: patch-embed stand-in for the DINOv2 backbone, param init, full model
# ----------------------------------------------------------------------------
def patchify(img, p):
    # img: (B, C, H, W)  ->  (B, N, C*p*p)
    B, C, H, W = img.shape
    x = img.reshape(B, C, H // p, p, W // p, p)
    x = x.transpose(0, 2, 4, 1, 3, 5)
    return x.reshape(B, (H // p) * (W // p), C * p * p)


def init_params(key, *, dim, num_blocks, num_label_tokens, mlp_ratio, in_ch, patch):
    hidden = int(dim * mlp_ratio)
    pdim = in_ch * patch * patch
    keys = iter(jax.random.split(key, 16))

    def rnd(shape, dtype=jnp.float32, s=0.02):
        return (jax.random.normal(next(keys), shape, jnp.float32) * s).astype(dtype)

    bf16 = jnp.bfloat16
    # Per-block weights stacked on a leading num_blocks axis, pre-transposed
    # (in_features, out_features).  Matmul weights in bf16, everything else f32.
    params = {
        'We': rnd((pdim, dim)),
        'be': rnd((dim,)),
        'label_emb': rnd((1, num_label_tokens, dim)),   # trunc_normal_(std=0.02) stand-in
        'cw': rnd((num_label_tokens, dim)),
        'cb': rnd((1, num_label_tokens)),
        'blk': {
            'lnw': jnp.ones((num_blocks, 5, dim), jnp.float32),
            'lnb': jnp.zeros((num_blocks, 5, dim), jnp.float32),
            'wq': rnd((num_blocks, 3, dim, dim), bf16),
            'bq': rnd((num_blocks, 3, dim)),
            'wkv': rnd((num_blocks, 3, dim, 2 * dim), bf16),
            'bkv': rnd((num_blocks, 3, 2 * dim)),
            'wo': rnd((num_blocks, 3, dim, dim), bf16),
            'bo': rnd((num_blocks, 3, dim)),
            'w1': rnd((num_blocks, dim, hidden), bf16),
            'b1': rnd((num_blocks, 1, hidden)),
            'w2': rnd((num_blocks, hidden, dim), bf16),
            'b2': rnd((num_blocks, 1, dim)),
        },
    }
    return params


def label_guided_transformer(img, params, *, patch, nh):
    """Pallas implementation of LabelGuidedTransformer.forward (backbone stubbed)."""
    patches = patchify(img, patch)
    x = jnp.einsum('bnp,pd->bnd', patches, params['We']) + params['be']   # (B, N, D)
    B = x.shape[0]
    L = jnp.broadcast_to(params['label_emb'],
                         (B,) + params['label_emb'].shape[1:]).astype(jnp.float32)
    _, L_out = fused_forward(x, L, params['blk'], nh=nh)
    # Per-label classifier (D -> 1 per label token): trivial XLA einsum on the
    # kernel output — removed from the kernel epilogue per perf review.
    logits = jnp.einsum('bmd,md->bm', L_out, params['cw']) + params['cb']
    return logits


def label_guided_transformer_ref(img, params, *, patch, nh):
    """Pure-JAX reference using the exact same math (no Pallas)."""
    patches = patchify(img, patch)
    x = jnp.einsum('bnp,pd->bnd', patches, params['We']) + params['be']
    B = x.shape[0]
    L = jnp.broadcast_to(params['label_emb'],
                         (B,) + params['label_emb'].shape[1:]).astype(jnp.float32)
    bp = params['blk']
    nb = bp['lnw'].shape[0]
    for i in range(nb):
        p_i = {k: v[i] for k, v in bp.items()}
        x, L = _block_math(x, L, p_i, nh=nh, recip=lambda s: 1.0 / s)
    logits = jnp.einsum('bmd,md->bm', L, params['cw']) + params['cb']
    return logits


if __name__ == "__main__":
    # Small, module-consistent shapes: dim=64 -> num_heads = dim // 32 = 2.
    B, C, HW = 2, 3, 16
    PATCH = 4            # stand-in patch size -> N = (16/4)^2 = 16 patch tokens
    DIM = 64
    NUM_HEADS = DIM // 32
    NUM_BLOCKS = 2
    NUM_LABEL_TOKENS = 4
    MLP_RATIO = 4.0

    key = jax.random.PRNGKey(0)
    k_img, k_par = jax.random.split(key)
    img = jax.random.normal(k_img, (B, C, HW, HW), jnp.float32)

    params = init_params(k_par, dim=DIM, num_blocks=NUM_BLOCKS,
                         num_label_tokens=NUM_LABEL_TOKENS, mlp_ratio=MLP_RATIO,
                         in_ch=C, patch=PATCH)

    logits = label_guided_transformer(img, params, patch=PATCH, nh=NUM_HEADS)
    logits = jax.block_until_ready(logits)

    ref = label_guided_transformer_ref(img, params, patch=PATCH, nh=NUM_HEADS)
    ref = jax.block_until_ready(ref)

    assert logits.shape == (B, NUM_LABEL_TOKENS), logits.shape
    assert jnp.allclose(logits, ref, atol=1e-2, rtol=1e-2), (
        "Pallas output mismatch vs pure-JAX reference")

    print("KERNEL_OK")
</pallas_src>

<mosaic_0001>
module attributes {stable_mosaic.version = 11 : i64} {
  func.func @_fused_kernel(%arg0: i32, %arg1: i32, %arg2: memref<2x16x64xf32, #tpu.memory_space<vmem>>, %arg3: memref<2x4x64xf32, #tpu.memory_space<vmem>>, %arg4: memref<1x5x64xf32, #tpu.memory_space<vmem>>, %arg5: memref<1x5x64xf32, #tpu.memory_space<vmem>>, %arg6: memref<1x3x64x64xbf16, #tpu.memory_space<vmem>>, %arg7: memref<1x3x64xf32, #tpu.memory_space<vmem>>, %arg8: memref<1x3x64x128xbf16, #tpu.memory_space<vmem>>, %arg9: memref<1x3x128xf32, #tpu.memory_space<vmem>>, %arg10: memref<1x3x64x64xbf16, #tpu.memory_space<vmem>>, %arg11: memref<1x3x64xf32, #tpu.memory_space<vmem>>, %arg12: memref<1x64x256xbf16, #tpu.memory_space<vmem>>, %arg13: memref<1x1x256xf32, #tpu.memory_space<vmem>>, %arg14: memref<1x256x64xbf16, #tpu.memory_space<vmem>>, %arg15: memref<1x1x64xf32, #tpu.memory_space<vmem>>, %arg16: memref<2x16x64xf32, #tpu.memory_space<vmem>>, %arg17: memref<2x4x64xf32, #tpu.memory_space<vmem>>) attributes {dimension_semantics = [#tpu.dimension_semantics<parallel>, #tpu.dimension_semantics<arbitrary>], iteration_bounds = array<i64: 1, 2>, scalar_prefetch = 0 : i64, scratch_operands = 0 : i64, tpu.core_type = #tpu.core_type<tc>, window_params = [{transform_indices = @transform_0, window_bounds = array<i64: 2, 16, 64>}, {transform_indices = @transform_1, window_bounds = array<i64: 2, 4, 64>}, {transform_indices = @transform_2, window_bounds = array<i64: 1, 5, 64>}, {transform_indices = @transform_3, window_bounds = array<i64: 1, 5, 64>}, {transform_indices = @transform_4, window_bounds = array<i64: 1, 3, 64, 64>}, {transform_indices = @transform_5, window_bounds = array<i64: 1, 3, 64>}, {transform_indices = @transform_6, window_bounds = array<i64: 1, 3, 64, 128>}, {transform_indices = @transform_7, window_bounds = array<i64: 1, 3, 128>}, {transform_indices = @transform_8, window_bounds = array<i64: 1, 3, 64, 64>}, {transform_indices = @transform_9, window_bounds = array<i64: 1, 3, 64>}, {transform_indices = @transform_10, window_bounds = array<i64: 1, 64, 256>}, {transform_indices = @transform_11, window_bounds = array<i64: 1, 1, 256>}, {transform_indices = @transform_12, window_bounds = array<i64: 1, 256, 64>}, {transform_indices = @transform_13, window_bounds = array<i64: 1, 1, 64>}, {transform_indices = @transform_14, window_bounds = array<i64: 2, 16, 64>}, {transform_indices = @transform_15, window_bounds = array<i64: 2, 4, 64>}]} {
    %c0_i32 = arith.constant 0 : i32
    %0 = arith.cmpi eq, %arg1, %c0_i32 : i32
    %1 = arith.extui %0 : i1 to i32
    %c0_i32_0 = arith.constant 0 : i32
    %2 = arith.cmpi ne, %1, %c0_i32_0 : i32
    scf.if %2 {
      %c0_182 = arith.constant 0 : index
      %c0_183 = arith.constant 0 : index
      %c0_184 = arith.constant 0 : index
      %408 = vector.load %arg2[%c0_182, %c0_183, %c0_184] : memref<2x16x64xf32, #tpu.memory_space<vmem>>, vector<2x16x64xf32>
      %c0_185 = arith.constant 0 : index
      %c0_186 = arith.constant 0 : index
      %c0_187 = arith.constant 0 : index
      %409 = vector.load %arg16[%c0_185, %c0_186, %c0_187] : memref<2x16x64xf32, #tpu.memory_space<vmem>>, vector<2x16x64xf32>
      tpu.vector_store %arg16[%c0_185, %c0_186, %c0_187], %408 {strides = array<i32>} : memref<2x16x64xf32, #tpu.memory_space<vmem>>, vector<2x16x64xf32>,
      %c0_188 = arith.constant 0 : index
      %c0_189 = arith.constant 0 : index
      %c0_190 = arith.constant 0 : index
      %410 = vector.load %arg3[%c0_188, %c0_189, %c0_190] : memref<2x4x64xf32, #tpu.memory_space<vmem>>, vector<2x4x64xf32>
      %c0_191 = arith.constant 0 : index
      %c0_192 = arith.constant 0 : index
      %c0_193 = arith.constant 0 : index
      %411 = vector.load %arg17[%c0_191, %c0_192, %c0_193] : memref<2x4x64xf32, #tpu.memory_space<vmem>>, vector<2x4x64xf32>
      tpu.vector_store %arg17[%c0_191, %c0_192, %c0_193], %410 {strides = array<i32>} : memref<2x4x64xf32, #tpu.memory_space<vmem>>, vector<2x4x64xf32>,
    } else {
    }
    %c0 = arith.constant 0 : index
    %c0_1 = arith.constant 0 : index
    %c0_2 = arith.constant 0 : index
    %3 = vector.load %arg16[%c0, %c0_1, %c0_2] : memref<2x16x64xf32, #tpu.memory_space<vmem>>, vector<2x16x64xf32>
    %c0_3 = arith.constant 0 : index
    %c0_4 = arith.constant 0 : index
    %c0_5 = arith.constant 0 : index
    %4 = vector.load %arg17[%c0_3, %c0_4, %c0_5] : memref<2x4x64xf32, #tpu.memory_space<vmem>>, vector<2x4x64xf32>
    %5 = vector.shape_cast %3 : vector<2x16x64xf32> to vector<32x64xf32>
    %6 = vector.shape_cast %4 : vector<2x4x64xf32> to vector<8x64xf32>
    %c0_6 = arith.constant 0 : index
    %c0_7 = arith.constant 0 : index
    %c0_8 = arith.constant 0 : index
    %7 = vector.load %arg4[%c0_6, %c0_7, %c0_8] : memref<1x5x64xf32, #tpu.memory_space<vmem>>, vector<1x1x64xf32>
    %8 = vector.shape_cast %7 : vector<1x1x64xf32> to vector<64xf32>
    %c0_9 = arith.constant 0 : index
    %c0_10 = arith.constant 0 : index
    %c0_11 = arith.constant 0 : index
    %9 = vector.load %arg5[%c0_9, %c0_10, %c0_11] : memref<1x5x64xf32, #tpu.memory_space<vmem>>, vector<1x1x64xf32>
    %10 = vector.shape_cast %9 : vector<1x1x64xf32> to vector<64xf32>
    %cst = arith.constant dense<0.000000e+00> : vector<32xf32>
    %11 = vector.multi_reduction <add>, %5, %cst [1] : vector<32x64xf32> to vector<32xf32>
    %12 = vector.shape_cast %11 : vector<32xf32> to vector<32x1xf32>
    %cst_12 = arith.constant 6.400000e+01 : f32
    %13 = vector.broadcast %cst_12 : f32 to vector<32x1xf32>
    %14 = arith.divf %12, %13 : vector<32x1xf32>
    %15 = vector.broadcast %14 : vector<32x1xf32> to vector<32x64xf32>
    %16 = arith.subf %5, %15 : vector<32x64xf32>
    %17 = arith.mulf %16, %16 : vector<32x64xf32>
    %cst_13 = arith.constant dense<0.000000e+00> : vector<32xf32>
    %18 = vector.multi_reduction <add>, %17, %cst_13 [1] : vector<32x64xf32> to vector<32xf32>
    %19 = vector.shape_cast %18 : vector<32xf32> to vector<32x1xf32>
    %cst_14 = arith.constant 6.400000e+01 : f32
    %20 = vector.broadcast %cst_14 : f32 to vector<32x1xf32>
    %21 = arith.divf %19, %20 : vector<32x1xf32>
    %22 = vector.broadcast %14 : vector<32x1xf32> to vector<32x64xf32>
    %23 = arith.subf %5, %22 : vector<32x64xf32>
    %cst_15 = arith.constant 9.99999974E-6 : f32
    %24 = vector.broadcast %cst_15 : f32 to vector<32x1xf32>
    %25 = arith.addf %21, %24 : vector<32x1xf32>
    %26 = math.rsqrt %25 : vector<32x1xf32>
    %27 = vector.broadcast %26 : vector<32x1xf32> to vector<32x64xf32>
    %28 = arith.mulf %23, %27 : vector<32x64xf32>
    %29 = vector.shape_cast %8 : vector<64xf32> to vector<1x64xf32>
    %30 = vector.broadcast %29 : vector<1x64xf32> to vector<32x64xf32>
    %31 = arith.mulf %28, %30 : vector<32x64xf32>
    %32 = vector.shape_cast %10 : vector<64xf32> to vector<1x64xf32>
    %33 = vector.broadcast %32 : vector<1x64xf32> to vector<32x64xf32>
    %34 = arith.addf %31, %33 : vector<32x64xf32>
    %c0_16 = arith.constant 0 : index
    %c0_17 = arith.constant 0 : index
    %c0_18 = arith.constant 0 : index
    %c0_19 = arith.constant 0 : index
    %35 = vector.load %arg6[%c0_16, %c0_17, %c0_18, %c0_19] : memref<1x3x64x64xbf16, #tpu.memory_space<vmem>>, vector<1x1x64x64xbf16>
    %36 = vector.shape_cast %35 : vector<1x1x64x64xbf16> to vector<64x64xbf16>
    %37 = arith.truncf %34 : vector<32x64xf32> to vector<32x64xbf16>
    %cst_20 = arith.constant dense<0.000000e+00> : vector<32x64xf32>
    %38 = tpu.matmul %37, %36, %cst_20 {dimension_numbers = #tpu.dot_dimension_numbers<[1], [0], [0], [1], [0, 0, 1, 1], [], []>} : vector<32x64xbf16>, vector<64x64xbf16>, vector<32x64xf32> -> vector<32x64xf32>
    %c0_21 = arith.constant 0 : index
    %c0_22 = arith.constant 0 : index
    %c0_23 = arith.constant 0 : index
    %39 = vector.load %arg7[%c0_21, %c0_22, %c0_23] : memref<1x3x64xf32, #tpu.memory_space<vmem>>, vector<1x1x64xf32>
    %40 = vector.shape_cast %39 : vector<1x1x64xf32> to vector<64xf32>
    %41 = vector.shape_cast %40 : vector<64xf32> to vector<1x64xf32>
    %42 = vector.broadcast %41 : vector<1x64xf32> to vector<32x64xf32>
    %43 = arith.addf %38, %42 : vector<32x64xf32>
    %c0_24 = arith.constant 0 : index
    %c0_25 = arith.constant 0 : index
    %c0_26 = arith.constant 0 : index
    %c0_27 = arith.constant 0 : index
    %44 = vector.load %arg8[%c0_24, %c0_25, %c0_26, %c0_27] : memref<1x3x64x128xbf16, #tpu.memory_space<vmem>>, vector<1x1x64x128xbf16>
    %45 = vector.shape_cast %44 : vector<1x1x64x128xbf16> to vector<64x128xbf16>
    %46 = arith.truncf %34 : vector<32x64xf32> to vector<32x64xbf16>
    %cst_28 = arith.constant dense<0.000000e+00> : vector<32x128xf32>
    %47 = tpu.matmul %46, %45, %cst_28 {dimension_numbers = #tpu.dot_dimension_numbers<[1], [0], [0], [1], [0, 0, 1, 1], [], []>} : vector<32x64xbf16>, vector<64x128xbf16>, vector<32x128xf32> -> vector<32x128xf32>
    %c0_29 = arith.constant 0 : index
    %c0_30 = arith.constant 0 : index
    %c0_31 = arith.constant 0 : index
    %48 = vector.load %arg9[%c0_29, %c0_30, %c0_31] : memref<1x3x128xf32, #tpu.memory_space<vmem>>, vector<1x1x128xf32>
    %49 = vector.shape_cast %48 : vector<1x1x128xf32> to vector<128xf32>
    %50 = vector.shape_cast %49 : vector<128xf32> to vector<1x128xf32>
    %51 = vector.broadcast %50 : vector<1x128xf32> to vector<32x128xf32>
    %52 = arith.addf %47, %51 : vector<32x128xf32>
    %53 = vector.extract_strided_slice %52 {offsets = [0, 0], sizes = [32, 64], strides = [1, 1]} : vector<32x128xf32> to vector<32x64xf32>
    %54 = vector.extract_strided_slice %52 {offsets = [0, 64], sizes = [32, 64], strides = [1, 1]} : vector<32x128xf32> to vector<32x64xf32>
    %55 = vector.extract_strided_slice %43 {offsets = [0, 0], sizes = [16, 64], strides = [1, 1]} : vector<32x64xf32> to vector<16x64xf32>
    %56 = vector.shape_cast %55 : vector<16x64xf32> to vector<16x2x32xf32>
    %57 = vector.extract_strided_slice %53 {offsets = [0, 0], sizes = [16, 64], strides = [1, 1]} : vector<32x64xf32> to vector<16x64xf32>
    %58 = vector.shape_cast %57 : vector<16x64xf32> to vector<16x2x32xf32>
    %59 = vector.extract_strided_slice %54 {offsets = [0, 0], sizes = [16, 64], strides = [1, 1]} : vector<32x64xf32> to vector<16x64xf32>
    %60 = vector.shape_cast %59 : vector<16x64xf32> to vector<16x2x32xf32>
    "tpu.trace_start"() <{level = 10 : i32, message = "qhd,khd->hqk"}> : () -> ()
    %cst_32 = arith.constant dense<0.000000e+00> : vector<2x16x16xf32>
    %61 = tpu.matmul %56, %58, %cst_32 {dimension_numbers = #tpu.dot_dimension_numbers<[2], [2], [0], [0], [0, 1, 0, 0, 1, 0], [1], [1]>} : vector<16x2x32xf32>, vector<16x2x32xf32>, vector<2x16x16xf32> -> vector<2x16x16xf32>
    "tpu.trace_stop"() : () -> ()
    %cst_33 = arith.constant 0.176776692 : f32
    %62 = vector.broadcast %cst_33 : f32 to vector<2x16x16xf32>
    %63 = arith.mulf %61, %62 : vector<2x16x16xf32>
    %cst_34 = arith.constant dense<0xFF800000> : vector<2x16xf32>
    %64 = vector.multi_reduction <maximumf>, %63, %cst_34 [2] : vector<2x16x16xf32> to vector<2x16xf32>
    %65 = vector.shape_cast %64 : vector<2x16xf32> to vector<2x16x1xf32>
    %66 = vector.broadcast %65 : vector<2x16x1xf32> to vector<2x16x16xf32>
    %67 = arith.subf %63, %66 : vector<2x16x16xf32>
    %68 = math.exp %67 : vector<2x16x16xf32>
    %cst_35 = arith.constant dense<0.000000e+00> : vector<2x16xf32>
    %69 = vector.multi_reduction <add>, %68, %cst_35 [2] : vector<2x16x16xf32> to vector<2x16xf32>
    %70 = vector.shape_cast %69 : vector<2x16xf32> to vector<2x16x1xf32>
    %71 = tpu.reciprocal %70 {approx = true} : vector<2x16x1xf32> -> vector<2x16x1xf32>
    %72 = vector.broadcast %71 : vector<2x16x1xf32> to vector<2x16x16xf32>
    %73 = arith.mulf %68, %72 : vector<2x16x16xf32>
    "tpu.trace_start"() <{level = 10 : i32, message = "hqk,khd->qhd"}> : () -> ()
    %cst_36 = arith.constant dense<0.000000e+00> : vector<2x32x16xf32>
    %74 = tpu.matmul %60, %73, %cst_36 {dimension_numbers = #tpu.dot_dimension_numbers<[0], [2], [2], [1], [0, 1, 0, 2, 1, 1], [1], [0]>} : vector<16x2x32xf32>, vector<2x16x16xf32>, vector<2x32x16xf32> -> vector<2x32x16xf32>
    %75 = tpu.transpose %74, [2, 0, 1] : vector<2x32x16xf32> -> vector<16x2x32xf32>
    "tpu.trace_stop"() : () -> ()
    %76 = vector.shape_cast %75 : vector<16x2x32xf32> to vector<16x64xf32>
    %77 = vector.extract_strided_slice %43 {offsets = [16, 0], sizes = [16, 64], strides = [1, 1]} : vector<32x64xf32> to vector<16x64xf32>
    %78 = vector.shape_cast %77 : vector<16x64xf32> to vector<16x2x32xf32>
    %79 = vector.extract_strided_slice %53 {offsets = [16, 0], sizes = [16, 64], strides = [1, 1]} : vector<32x64xf32> to vector<16x64xf32>
    %80 = vector.shape_cast %79 : vector<16x64xf32> to vector<16x2x32xf32>
    %81 = vector.extract_strided_slice %54 {offsets = [16, 0], sizes = [16, 64], strides = [1, 1]} : vector<32x64xf32> to vector<16x64xf32>
    %82 = vector.shape_cast %81 : vector<16x64xf32> to vector<16x2x32xf32>
    "tpu.trace_start"() <{level = 10 : i32, message = "qhd,khd->hqk"}> : () -> ()
    %cst_37 = arith.constant dense<0.000000e+00> : vector<2x16x16xf32>
    %83 = tpu.matmul %78, %80, %cst_37 {dimension_numbers = #tpu.dot_dimension_numbers<[2], [2], [0], [0], [0, 1, 0, 0, 1, 0], [1], [1]>} : vector<16x2x32xf32>, vector<16x2x32xf32>, vector<2x16x16xf32> -> vector<2x16x16xf32>
    "tpu.trace_stop"() : () -> ()
    %cst_38 = arith.constant 0.176776692 : f32
    %84 = vector.broadcast %cst_38 : f32 to vector<2x16x16xf32>
    %85 = arith.mulf %83, %84 : vector<2x16x16xf32>
    %cst_39 = arith.constant dense<0xFF800000> : vector<2x16xf32>
    %86 = vector.multi_reduction <maximumf>, %85, %cst_39 [2] : vector<2x16x16xf32> to vector<2x16xf32>
    %87 = vector.shape_cast %86 : vector<2x16xf32> to vector<2x16x1xf32>
    %88 = vector.broadcast %87 : vector<2x16x1xf32> to vector<2x16x16xf32>
    %89 = arith.subf %85, %88 : vector<2x16x16xf32>
    %90 = math.exp %89 : vector<2x16x16xf32>
    %cst_40 = arith.constant dense<0.000000e+00> : vector<2x16xf32>
    %91 = vector.multi_reduction <add>, %90, %cst_40 [2] : vector<2x16x16xf32> to vector<2x16xf32>
    %92 = vector.shape_cast %91 : vector<2x16xf32> to vector<2x16x1xf32>
    %93 = tpu.reciprocal %92 {approx = true} : vector<2x16x1xf32> -> vector<2x16x1xf32>
    %94 = vector.broadcast %93 : vector<2x16x1xf32> to vector<2x16x16xf32>
    %95 = arith.mulf %90, %94 : vector<2x16x16xf32>
    "tpu.trace_start"() <{level = 10 : i32, message = "hqk,khd->qhd"}> : () -> ()
    %cst_41 = arith.constant dense<0.000000e+00> : vector<2x32x16xf32>
    %96 = tpu.matmul %82, %95, %cst_41 {dimension_numbers = #tpu.dot_dimension_numbers<[0], [2], [2], [1], [0, 1, 0, 2, 1, 1], [1], [0]>} : vector<16x2x32xf32>, vector<2x16x16xf32>, vector<2x32x16xf32> -> vector<2x32x16xf32>
    %97 = tpu.transpose %96, [2, 0, 1] : vector<2x32x16xf32> -> vector<16x2x32xf32>
    "tpu.trace_stop"() : () -> ()
    %98 = vector.shape_cast %97 : vector<16x2x32xf32> to vector<16x64xf32>
    %99 = tpu.concatenate %76, %98 in 0 : vector<16x64xf32>, vector<16x64xf32> -> vector<32x64xf32>
    %c0_42 = arith.constant 0 : index
    %c0_43 = arith.constant 0 : index
    %c0_44 = arith.constant 0 : index
    %c0_45 = arith.constant 0 : index
    %100 = vector.load %arg10[%c0_42, %c0_43, %c0_44, %c0_45] : memref<1x3x64x64xbf16, #tpu.memory_space<vmem>>, vector<1x1x64x64xbf16>
    %101 = vector.shape_cast %100 : vector<1x1x64x64xbf16> to vector<64x64xbf16>
    %102 = arith.truncf %99 : vector<32x64xf32> to vector<32x64xbf16>
    %cst_46 = arith.constant dense<0.000000e+00> : vector<32x64xf32>
    %103 = tpu.matmul %102, %101, %cst_46 {dimension_numbers = #tpu.dot_dimension_numbers<[1], [0], [0], [1], [0, 0, 1, 1], [], []>} : vector<32x64xbf16>, vector<64x64xbf16>, vector<32x64xf32> -> vector<32x64xf32>
    %c0_47 = arith.constant 0 : index
    %c0_48 = arith.constant 0 : index
    %c0_49 = arith.constant 0 : index
    %104 = vector.load %arg11[%c0_47, %c0_48, %c0_49] : memref<1x3x64xf32, #tpu.memory_space<vmem>>, vector<1x1x64xf32>
    %105 = vector.shape_cast %104 : vector<1x1x64xf32> to vector<64xf32>
    %106 = vector.shape_cast %105 : vector<64xf32> to vector<1x64xf32>
    %107 = vector.broadcast %106 : vector<1x64xf32> to vector<32x64xf32>
    %108 = arith.addf %103, %107 : vector<32x64xf32>
    %109 = arith.addf %5, %108 : vector<32x64xf32>
    %c0_50 = arith.constant 0 : index
    %c1 = arith.constant 1 : index
    %c0_51 = arith.constant 0 : index
    %110 = vector.load %arg4[%c0_50, %c1, %c0_51] : memref<1x5x64xf32, #tpu.memory_space<vmem>>, vector<1x1x64xf32>
    %111 = vector.shape_cast %110 : vector<1x1x64xf32> to vector<64xf32>
    %c0_52 = arith.constant 0 : index
    %c1_53 = arith.constant 1 : index
    %c0_54 = arith.constant 0 : index
    %112 = vector.load %arg5[%c0_52, %c1_53, %c0_54] : memref<1x5x64xf32, #tpu.memory_space<vmem>>, vector<1x1x64xf32>
    %113 = vector.shape_cast %112 : vector<1x1x64xf32> to vector<64xf32>
    %cst_55 = arith.constant dense<0.000000e+00> : vector<8xf32>
    %114 = vector.multi_reduction <add>, %6, %cst_55 [1] : vector<8x64xf32> to vector<8xf32>
    %115 = vector.shape_cast %114 : vector<8xf32> to vector<8x1xf32>
    %cst_56 = arith.constant 6.400000e+01 : f32
    %116 = vector.broadcast %cst_56 : f32 to vector<8x1xf32>
    %117 = arith.divf %115, %116 : vector<8x1xf32>
    %118 = vector.broadcast %117 : vector<8x1xf32> to vector<8x64xf32>
    %119 = arith.subf %6, %118 : vector<8x64xf32>
    %120 = arith.mulf %119, %119 : vector<8x64xf32>
    %cst_57 = arith.constant dense<0.000000e+00> : vector<8xf32>
    %121 = vector.multi_reduction <add>, %120, %cst_57 [1] : vector<8x64xf32> to vector<8xf32>
    %122 = vector.shape_cast %121 : vector<8xf32> to vector<8x1xf32>
    %cst_58 = arith.constant 6.400000e+01 : f32
    %123 = vector.broadcast %cst_58 : f32 to vector<8x1xf32>
    %124 = arith.divf %122, %123 : vector<8x1xf32>
    %125 = vector.broadcast %117 : vector<8x1xf32> to vector<8x64xf32>
    %126 = arith.subf %6, %125 : vector<8x64xf32>
    %cst_59 = arith.constant 9.99999974E-6 : f32
    %127 = vector.broadcast %cst_59 : f32 to vector<8x1xf32>
    %128 = arith.addf %124, %127 : vector<8x1xf32>
    %129 = math.rsqrt %128 : vector<8x1xf32>
    %130 = vector.broadcast %129 : vector<8x1xf32> to vector<8x64xf32>
    %131 = arith.mulf %126, %130 : vector<8x64xf32>
    %132 = vector.shape_cast %111 : vector<64xf32> to vector<1x64xf32>
    %133 = vector.broadcast %132 : vector<1x64xf32> to vector<8x64xf32>
    %134 = arith.mulf %131, %133 : vector<8x64xf32>
    %135 = vector.shape_cast %113 : vector<64xf32> to vector<1x64xf32>
    %136 = vector.broadcast %135 : vector<1x64xf32> to vector<8x64xf32>
    %137 = arith.addf %134, %136 : vector<8x64xf32>
    %c0_60 = arith.constant 0 : index
    %c1_61 = arith.constant 1 : index
    %c0_62 = arith.constant 0 : index
    %c0_63 = arith.constant 0 : index
    %138 = vector.load %arg6[%c0_60, %c1_61, %c0_62, %c0_63] : memref<1x3x64x64xbf16, #tpu.memory_space<vmem>>, vector<1x1x64x64xbf16>
    %139 = vector.shape_cast %138 : vector<1x1x64x64xbf16> to vector<64x64xbf16>
    %140 = arith.truncf %137 : vector<8x64xf32> to vector<8x64xbf16>
    %cst_64 = arith.constant dense<0.000000e+00> : vector<8x64xf32>
    %141 = tpu.matmul %140, %139, %cst_64 {dimension_numbers = #tpu.dot_dimension_numbers<[1], [0], [0], [1], [0, 0, 1, 1], [], []>} : vector<8x64xbf16>, vector<64x64xbf16>, vector<8x64xf32> -> vector<8x64xf32>
    %c0_65 = arith.constant 0 : index
    %c1_66 = arith.constant 1 : index
    %c0_67 = arith.constant 0 : index
    %142 = vector.load %arg7[%c0_65, %c1_66, %c0_67] : memref<1x3x64xf32, #tpu.memory_space<vmem>>, vector<1x1x64xf32>
    %143 = vector.shape_cast %142 : vector<1x1x64xf32> to vector<64xf32>
    %144 = vector.shape_cast %143 : vector<64xf32> to vector<1x64xf32>
    %145 = vector.broadcast %144 : vector<1x64xf32> to vector<8x64xf32>
    %146 = arith.addf %141, %145 : vector<8x64xf32>
    %c0_68 = arith.constant 0 : index
    %c1_69 = arith.constant 1 : index
    %c0_70 = arith.constant 0 : index
    %c0_71 = arith.constant 0 : index
    %147 = vector.load %arg8[%c0_68, %c1_69, %c0_70, %c0_71] : memref<1x3x64x128xbf16, #tpu.memory_space<vmem>>, vector<1x1x64x128xbf16>
    %148 = vector.shape_cast %147 : vector<1x1x64x128xbf16> to vector<64x128xbf16>
    %149 = arith.truncf %137 : vector<8x64xf32> to vector<8x64xbf16>
    %cst_72 = arith.constant dense<0.000000e+00> : vector<8x128xf32>
    %150 = tpu.matmul %149, %148, %cst_72 {dimension_numbers = #tpu.dot_dimension_numbers<[1], [0], [0], [1], [0, 0, 1, 1], [], []>} : vector<8x64xbf16>, vector<64x128xbf16>, vector<8x128xf32> -> vector<8x128xf32>
    %c0_73 = arith.constant 0 : index
    %c1_74 = arith.constant 1 : index
    %c0_75 = arith.constant 0 : index
    %151 = vector.load %arg9[%c0_73, %c1_74, %c0_75] : memref<1x3x128xf32, #tpu.memory_space<vmem>>, vector<1x1x128xf32>
    %152 = vector.shape_cast %151 : vector<1x1x128xf32> to vector<128xf32>
    %153 = vector.shape_cast %152 : vector<128xf32> to vector<1x128xf32>
    %154 = vector.broadcast %153 : vector<1x128xf32> to vector<8x128xf32>
    %155 = arith.addf %150, %154 : vector<8x128xf32>
    %156 = vector.extract_strided_slice %155 {offsets = [0, 0], sizes = [8, 64], strides = [1, 1]} : vector<8x128xf32> to vector<8x64xf32>
    %157 = vector.extract_strided_slice %155 {offsets = [0, 64], sizes = [8, 64], strides = [1, 1]} : vector<8x128xf32> to vector<8x64xf32>
    %158 = vector.extract_strided_slice %146 {offsets = [0, 0], sizes = [4, 64], strides = [1, 1]} : vector<8x64xf32> to vector<4x64xf32>
    %159 = vector.shape_cast %158 : vector<4x64xf32> to vector<4x2x32xf32>
    %160 = vector.extract_strided_slice %156 {offsets = [0, 0], sizes = [4, 64], strides = [1, 1]} : vector<8x64xf32> to vector<4x64xf32>
    %161 = vector.shape_cast %160 : vector<4x64xf32> to vector<4x2x32xf32>
    %162 = vector.extract_strided_slice %157 {offsets = [0, 0], sizes = [4, 64], strides = [1, 1]} : vector<8x64xf32> to vector<4x64xf32>
    %163 = vector.shape_cast %162 : vector<4x64xf32> to vector<4x2x32xf32>
    "tpu.trace_start"() <{level = 10 : i32, message = "qhd,khd->hqk"}> : () -> ()
    %cst_76 = arith.constant dense<0.000000e+00> : vector<2x4x4xf32>
    %164 = tpu.matmul %159, %161, %cst_76 {dimension_numbers = #tpu.dot_dimension_numbers<[2], [2], [0], [0], [0, 1, 0, 0, 1, 0], [1], [1]>} : vector<4x2x32xf32>, vector<4x2x32xf32>, vector<2x4x4xf32> -> vector<2x4x4xf32>
    "tpu.trace_stop"() : () -> ()
    %cst_77 = arith.constant 0.176776692 : f32
    %165 = vector.broadcast %cst_77 : f32 to vector<2x4x4xf32>
    %166 = arith.mulf %164, %165 : vector<2x4x4xf32>
    %cst_78 = arith.constant dense<0xFF800000> : vector<2x4xf32>
    %167 = vector.multi_reduction <maximumf>, %166, %cst_78 [2] : vector<2x4x4xf32> to vector<2x4xf32>
    %168 = vector.shape_cast %167 : vector<2x4xf32> to vector<2x4x1xf32>
    %169 = vector.broadcast %168 : vector<2x4x1xf32> to vector<2x4x4xf32>
    %170 = arith.subf %166, %169 : vector<2x4x4xf32>
    %171 = math.exp %170 : vector<2x4x4xf32>
    %cst_79 = arith.constant dense<0.000000e+00> : vector<2x4xf32>
    %172 = vector.multi_reduction <add>, %171, %cst_79 [2] : vector<2x4x4xf32> to vector<2x4xf32>
    %173 = vector.shape_cast %172 : vector<2x4xf32> to vector<2x4x1xf32>
    %174 = tpu.reciprocal %173 {approx = true} : vector<2x4x1xf32> -> vector<2x4x1xf32>
    %175 = vector.broadcast %174 : vector<2x4x1xf32> to vector<2x4x4xf32>
    %176 = arith.mulf %171, %175 : vector<2x4x4xf32>
    "tpu.trace_start"() <{level = 10 : i32, message = "hqk,khd->qhd"}> : () -> ()
    %cst_80 = arith.constant dense<0.000000e+00> : vector<2x32x4xf32>
    %177 = tpu.matmul %163, %176, %cst_80 {dimension_numbers = #tpu.dot_dimension_numbers<[0], [2], [2], [1], [0, 1, 0, 2, 1, 1], [1], [0]>} : vector<4x2x32xf32>, vector<2x4x4xf32>, vector<2x32x4xf32> -> vector<2x32x4xf32>
    %178 = tpu.transpose %177, [2, 0, 1] : vector<2x32x4xf32> -> vector<4x2x32xf32>
    "tpu.trace_stop"() : () -> ()
    %179 = vector.shape_cast %178 : vector<4x2x32xf32> to vector<4x64xf32>
    %180 = vector.extract_strided_slice %146 {offsets = [4, 0], sizes = [4, 64], strides = [1, 1]} : vector<8x64xf32> to vector<4x64xf32>
    %181 = vector.shape_cast %180 : vector<4x64xf32> to vector<4x2x32xf32>
    %182 = vector.extract_strided_slice %156 {offsets = [4, 0], sizes = [4, 64], strides = [1, 1]} : vector<8x64xf32> to vector<4x64xf32>
    %183 = vector.shape_cast %182 : vector<4x64xf32> to vector<4x2x32xf32>
    %184 = vector.extract_strided_slice %157 {offsets = [4, 0], sizes = [4, 64], strides = [1, 1]} : vector<8x64xf32> to vector<4x64xf32>
    %185 = vector.shape_cast %184 : vector<4x64xf32> to vector<4x2x32xf32>
    "tpu.trace_start"() <{level = 10 : i32, message = "qhd,khd->hqk"}> : () -> ()
    %cst_81 = arith.constant dense<0.000000e+00> : vector<2x4x4xf32>
    %186 = tpu.matmul %181, %183, %cst_81 {dimension_numbers = #tpu.dot_dimension_numbers<[2], [2], [0], [0], [0, 1, 0, 0, 1, 0], [1], [1]>} : vector<4x2x32xf32>, vector<4x2x32xf32>, vector<2x4x4xf32> -> vector<2x4x4xf32>
    "tpu.trace_stop"() : () -> ()
    %cst_82 = arith.constant 0.176776692 : f32
    %187 = vector.broadcast %cst_82 : f32 to vector<2x4x4xf32>
    %188 = arith.mulf %186, %187 : vector<2x4x4xf32>
    %cst_83 = arith.constant dense<0xFF800000> : vector<2x4xf32>
    %189 = vector.multi_reduction <maximumf>, %188, %cst_83 [2] : vector<2x4x4xf32> to vector<2x4xf32>
    %190 = vector.shape_cast %189 : vector<2x4xf32> to vector<2x4x1xf32>
    %191 = vector.broadcast %190 : vector<2x4x1xf32> to vector<2x4x4xf32>
    %192 = arith.subf %188, %191 : vector<2x4x4xf32>
    %193 = math.exp %192 : vector<2x4x4xf32>
    %cst_84 = arith.constant dense<0.000000e+00> : vector<2x4xf32>
    %194 = vector.multi_reduction <add>, %193, %cst_84 [2] : vector<2x4x4xf32> to vector<2x4xf32>
    %195 = vector.shape_cast %194 : vector<2x4xf32> to vector<2x4x1xf32>
    %196 = tpu.reciprocal %195 {approx = true} : vector<2x4x1xf32> -> vector<2x4x1xf32>
    %197 = vector.broadcast %196 : vector<2x4x1xf32> to vector<2x4x4xf32>
    %198 = arith.mulf %193, %197 : vector<2x4x4xf32>
    "tpu.trace_start"() <{level = 10 : i32, message = "hqk,khd->qhd"}> : () -> ()
    %cst_85 = arith.constant dense<0.000000e+00> : vector<2x32x4xf32>
    %199 = tpu.matmul %185, %198, %cst_85 {dimension_numbers = #tpu.dot_dimension_numbers<[0], [2], [2], [1], [0, 1, 0, 2, 1, 1], [1], [0]>} : vector<4x2x32xf32>, vector<2x4x4xf32>, vector<2x32x4xf32> -> vector<2x32x4xf32>
    %200 = tpu.transpose %199, [2, 0, 1] : vector<2x32x4xf32> -> vector<4x2x32xf32>
    "tpu.trace_stop"() : () -> ()
    %201 = vector.shape_cast %200 : vector<4x2x32xf32> to vector<4x64xf32>
    %202 = tpu.concatenate %179, %201 in 0 : vector<4x64xf32>, vector<4x64xf32> -> vector<8x64xf32>
    %c0_86 = arith.constant 0 : index
    %c1_87 = arith.constant 1 : index
    %c0_88 = arith.constant 0 : index
    %c0_89 = arith.constant 0 : index
    %203 = vector.load %arg10[%c0_86, %c1_87, %c0_88, %c0_89] : memref<1x3x64x64xbf16, #tpu.memory_space<vmem>>, vector<1x1x64x64xbf16>
    %204 = vector.shape_cast %203 : vector<1x1x64x64xbf16> to vector<64x64xbf16>
    %205 = arith.truncf %202 : vector<8x64xf32> to vector<8x64xbf16>
    %cst_90 = arith.constant dense<0.000000e+00> : vector<8x64xf32>
    %206 = tpu.matmul %205, %204, %cst_90 {dimension_numbers = #tpu.dot_dimension_numbers<[1], [0], [0], [1], [0, 0, 1, 1], [], []>} : vector<8x64xbf16>, vector<64x64xbf16>, vector<8x64xf32> -> vector<8x64xf32>
    %c0_91 = arith.constant 0 : index
    %c1_92 = arith.constant 1 : index
    %c0_93 = arith.constant 0 : index
    %207 = vector.load %arg11[%c0_91, %c1_92, %c0_93] : memref<1x3x64xf32, #tpu.memory_space<vmem>>, vector<1x1x64xf32>
    %208 = vector.shape_cast %207 : vector<1x1x64xf32> to vector<64xf32>
    %209 = vector.shape_cast %208 : vector<64xf32> to vector<1x64xf32>
    %210 = vector.broadcast %209 : vector<1x64xf32> to vector<8x64xf32>
    %211 = arith.addf %206, %210 : vector<8x64xf32>
    %c0_94 = arith.constant 0 : index
    %c3 = arith.constant 3 : index
    %c0_95 = arith.constant 0 : index
    %212 = vector.load %arg4[%c0_94, %c3, %c0_95] : memref<1x5x64xf32, #tpu.memory_space<vmem>>, vector<1x1x64xf32>
    %213 = vector.shape_cast %212 : vector<1x1x64xf32> to vector<64xf32>
    %c0_96 = arith.constant 0 : index
    %c3_97 = arith.constant 3 : index
    %c0_98 = arith.constant 0 : index
    %214 = vector.load %arg5[%c0_96, %c3_97, %c0_98] : memref<1x5x64xf32, #tpu.memory_space<vmem>>, vector<1x1x64xf32>
    %215 = vector.shape_cast %214 : vector<1x1x64xf32> to vector<64xf32>
    %cst_99 = arith.constant dense<0.000000e+00> : vector<8xf32>
    %216 = vector.multi_reduction <add>, %211, %cst_99 [1] : vector<8x64xf32> to vector<8xf32>
    %217 = vector.shape_cast %216 : vector<8xf32> to vector<8x1xf32>
    %cst_100 = arith.constant 6.400000e+01 : f32
    %218 = vector.broadcast %cst_100 : f32 to vector<8x1xf32>
    %219 = arith.divf %217, %218 : vector<8x1xf32>
    %220 = vector.broadcast %219 : vector<8x1xf32> to vector<8x64xf32>
    %221 = arith.subf %211, %220 : vector<8x64xf32>
    %222 = arith.mulf %221, %221 : vector<8x64xf32>
    %cst_101 = arith.constant dense<0.000000e+00> : vector<8xf32>
    %223 = vector.multi_reduction <add>, %222, %cst_101 [1] : vector<8x64xf32> to vector<8xf32>
    %224 = vector.shape_cast %223 : vector<8xf32> to vector<8x1xf32>
    %cst_102 = arith.constant 6.400000e+01 : f32
    %225 = vector.broadcast %cst_102 : f32 to vector<8x1xf32>
    %226 = arith.divf %224, %225 : vector<8x1xf32>
    %227 = vector.broadcast %219 : vector<8x1xf32> to vector<8x64xf32>
    %228 = arith.subf %211, %227 : vector<8x64xf32>
    %cst_103 = arith.constant 9.99999974E-6 : f32
    %229 = vector.broadcast %cst_103 : f32 to vector<8x1xf32>
    %230 = arith.addf %226, %229 : vector<8x1xf32>
    %231 = math.rsqrt %230 : vector<8x1xf32>
    %232 = vector.broadcast %231 : vector<8x1xf32> to vector<8x64xf32>
    %233 = arith.mulf %228, %232 : vector<8x64xf32>
    %234 = vector.shape_cast %213 : vector<64xf32> to vector<1x64xf32>
    %235 = vector.broadcast %234 : vector<1x64xf32> to vector<8x64xf32>
    %236 = arith.mulf %233, %235 : vector<8x64xf32>
    %237 = vector.shape_cast %215 : vector<64xf32> to vector<1x64xf32>
    %238 = vector.broadcast %237 : vector<1x64xf32> to vector<8x64xf32>
    %239 = arith.addf %236, %238 : vector<8x64xf32>
    %c0_104 = arith.constant 0 : index
    %c2 = arith.constant 2 : index
    %c0_105 = arith.constant 0 : index
    %240 = vector.load %arg4[%c0_104, %c2, %c0_105] : memref<1x5x64xf32, #tpu.memory_space<vmem>>, vector<1x1x64xf32>
    %241 = vector.shape_cast %240 : vector<1x1x64xf32> to vector<64xf32>
    %c0_106 = arith.constant 0 : index
    %c2_107 = arith.constant 2 : index
    %c0_108 = arith.constant 0 : index
    %242 = vector.load %arg5[%c0_106, %c2_107, %c0_108] : memref<1x5x64xf32, #tpu.memory_space<vmem>>, vector<1x1x64xf32>
    %243 = vector.shape_cast %242 : vector<1x1x64xf32> to vector<64xf32>
    %cst_109 = arith.constant dense<0.000000e+00> : vector<32xf32>
    %244 = vector.multi_reduction <add>, %5, %cst_109 [1] : vector<32x64xf32> to vector<32xf32>
    %245 = vector.shape_cast %244 : vector<32xf32> to vector<32x1xf32>
    %cst_110 = arith.constant 6.400000e+01 : f32
    %246 = vector.broadcast %cst_110 : f32 to vector<32x1xf32>
    %247 = arith.divf %245, %246 : vector<32x1xf32>
    %248 = vector.broadcast %247 : vector<32x1xf32> to vector<32x64xf32>
    %249 = arith.subf %5, %248 : vector<32x64xf32>
    %250 = arith.mulf %249, %249 : vector<32x64xf32>
    %cst_111 = arith.constant dense<0.000000e+00> : vector<32xf32>
    %251 = vector.multi_reduction <add>, %250, %cst_111 [1] : vector<32x64xf32> to vector<32xf32>
    %252 = vector.shape_cast %251 : vector<32xf32> to vector<32x1xf32>
    %cst_112 = arith.constant 6.400000e+01 : f32
    %253 = vector.broadcast %cst_112 : f32 to vector<32x1xf32>
    %254 = arith.divf %252, %253 : vector<32x1xf32>
    %255 = vector.broadcast %247 : vector<32x1xf32> to vector<32x64xf32>
    %256 = arith.subf %5, %255 : vector<32x64xf32>
    %cst_113 = arith.constant 9.99999974E-6 : f32
    %257 = vector.broadcast %cst_113 : f32 to vector<32x1xf32>
    %258 = arith.addf %254, %257 : vector<32x1xf32>
    %259 = math.rsqrt %258 : vector<32x1xf32>
    %260 = vector.broadcast %259 : vector<32x1xf32> to vector<32x64xf32>
    %261 = arith.mulf %256, %260 : vector<32x64xf32>
    %262 = vector.shape_cast %241 : vector<64xf32> to vector<1x64xf32>
    %263 = vector.broadcast %262 : vector<1x64xf32> to vector<32x64xf32>
    %264 = arith.mulf %261, %263 : vector<32x64xf32>
    %265 = vector.shape_cast %243 : vector<64xf32> to vector<1x64xf32>
    %266 = vector.broadcast %265 : vector<1x64xf32> to vector<32x64xf32>
    %267 = arith.addf %264, %266 : vector<32x64xf32>
    %c0_114 = arith.constant 0 : index
    %c2_115 = arith.constant 2 : index
    %c0_116 = arith.constant 0 : index
    %c0_117 = arith.constant 0 : index
    %268 = vector.load %arg6[%c0_114, %c2_115, %c0_116, %c0_117] : memref<1x3x64x64xbf16, #tpu.memory_space<vmem>>, vector<1x1x64x64xbf16>
    %269 = vector.shape_cast %268 : vector<1x1x64x64xbf16> to vector<64x64xbf16>
    %270 = arith.truncf %239 : vector<8x64xf32> to vector<8x64xbf16>
    %cst_118 = arith.constant dense<0.000000e+00> : vector<8x64xf32>
    %271 = tpu.matmul %270, %269, %cst_118 {dimension_numbers = #tpu.dot_dimension_numbers<[1], [0], [0], [1], [0, 0, 1, 1], [], []>} : vector<8x64xbf16>, vector<64x64xbf16>, vector<8x64xf32> -> vector<8x64xf32>
    %c0_119 = arith.constant 0 : index
    %c2_120 = arith.constant 2 : index
    %c0_121 = arith.constant 0 : index
    %272 = vector.load %arg7[%c0_119, %c2_120, %c0_121] : memref<1x3x64xf32, #tpu.memory_space<vmem>>, vector<1x1x64xf32>
    %273 = vector.shape_cast %272 : vector<1x1x64xf32> to vector<64xf32>
    %274 = vector.shape_cast %273 : vector<64xf32> to vector<1x64xf32>
    %275 = vector.broadcast %274 : vector<1x64xf32> to vector<8x64xf32>
    %276 = arith.addf %271, %275 : vector<8x64xf32>
    %c0_122 = arith.constant 0 : index
    %c2_123 = arith.constant 2 : index
    %c0_124 = arith.constant 0 : index
    %c0_125 = arith.constant 0 : index
    %277 = vector.load %arg8[%c0_122, %c2_123, %c0_124, %c0_125] : memref<1x3x64x128xbf16, #tpu.memory_space<vmem>>, vector<1x1x64x128xbf16>
    %278 = vector.shape_cast %277 : vector<1x1x64x128xbf16> to vector<64x128xbf16>
    %279 = arith.truncf %267 : vector<32x64xf32> to vector<32x64xbf16>
    %cst_126 = arith.constant dense<0.000000e+00> : vector<32x128xf32>
    %280 = tpu.matmul %279, %278, %cst_126 {dimension_numbers = #tpu.dot_dimension_numbers<[1], [0], [0], [1], [0, 0, 1, 1], [], []>} : vector<32x64xbf16>, vector<64x128xbf16>, vector<32x128xf32> -> vector<32x128xf32>
    %c0_127 = arith.constant 0 : index
    %c2_128 = arith.constant 2 : index
    %c0_129 = arith.constant 0 : index
    %281 = vector.load %arg9[%c0_127, %c2_128, %c0_129] : memref<1x3x128xf32, #tpu.memory_space<vmem>>, vector<1x1x128xf32>
    %282 = vector.shape_cast %281 : vector<1x1x128xf32> to vector<128xf32>
    %283 = vector.shape_cast %282 : vector<128xf32> to vector<1x128xf32>
    %284 = vector.broadcast %283 : vector<1x128xf32> to vector<32x128xf32>
    %285 = arith.addf %280, %284 : vector<32x128xf32>
    %286 = vector.extract_strided_slice %285 {offsets = [0, 0], sizes = [32, 64], strides = [1, 1]} : vector<32x128xf32> to vector<32x64xf32>
    %287 = vector.extract_strided_slice %285 {offsets = [0, 64], sizes = [32, 64], strides = [1, 1]} : vector<32x128xf32> to vector<32x64xf32>
    %288 = vector.extract_strided_slice %276 {offsets = [0, 0], sizes = [4, 64], strides = [1, 1]} : vector<8x64xf32> to vector<4x64xf32>
    %289 = vector.shape_cast %288 : vector<4x64xf32> to vector<4x2x32xf32>
    %290 = vector.extract_strided_slice %286 {offsets = [0, 0], sizes = [16, 64], strides = [1, 1]} : vector<32x64xf32> to vector<16x64xf32>
    %291 = vector.shape_cast %290 : vector<16x64xf32> to vector<16x2x32xf32>
    %292 = vector.extract_strided_slice %287 {offsets = [0, 0], sizes = [16, 64], strides = [1, 1]} : vector<32x64xf32> to vector<16x64xf32>
    %293 = vector.shape_cast %292 : vector<16x64xf32> to vector<16x2x32xf32>
    "tpu.trace_start"() <{level = 10 : i32, message = "qhd,khd->hqk"}> : () -> ()
    %cst_130 = arith.constant dense<0.000000e+00> : vector<2x4x16xf32>
    %294 = tpu.matmul %289, %291, %cst_130 {dimension_numbers = #tpu.dot_dimension_numbers<[2], [2], [0], [0], [0, 1, 0, 0, 1, 0], [1], [1]>} : vector<4x2x32xf32>, vector<16x2x32xf32>, vector<2x4x16xf32> -> vector<2x4x16xf32>
    "tpu.trace_stop"() : () -> ()
    %cst_131 = arith.constant 0.176776692 : f32
    %295 = vector.broadcast %cst_131 : f32 to vector<2x4x16xf32>
    %296 = arith.mulf %294, %295 : vector<2x4x16xf32>
    %cst_132 = arith.constant dense<0xFF800000> : vector<2x4xf32>
    %297 = vector.multi_reduction <maximumf>, %296, %cst_132 [2] : vector<2x4x16xf32> to vector<2x4xf32>
    %298 = vector.shape_cast %297 : vector<2x4xf32> to vector<2x4x1xf32>
    %299 = vector.broadcast %298 : vector<2x4x1xf32> to vector<2x4x16xf32>
    %300 = arith.subf %296, %299 : vector<2x4x16xf32>
    %301 = math.exp %300 : vector<2x4x16xf32>
    %cst_133 = arith.constant dense<0.000000e+00> : vector<2x4xf32>
    %302 = vector.multi_reduction <add>, %301, %cst_133 [2] : vector<2x4x16xf32> to vector<2x4xf32>
    %303 = vector.shape_cast %302 : vector<2x4xf32> to vector<2x4x1xf32>
    %304 = tpu.reciprocal %303 {approx = true} : vector<2x4x1xf32> -> vector<2x4x1xf32>
    %305 = vector.broadcast %304 : vector<2x4x1xf32> to vector<2x4x16xf32>
    %306 = arith.mulf %301, %305 : vector<2x4x16xf32>
    "tpu.trace_start"() <{level = 10 : i32, message = "hqk,khd->qhd"}> : () -> ()
    %cst_134 = arith.constant dense<0.000000e+00> : vector<2x32x4xf32>
    %307 = tpu.matmul %293, %306, %cst_134 {dimension_numbers = #tpu.dot_dimension_numbers<[0], [2], [2], [1], [0, 1, 0, 2, 1, 1], [1], [0]>} : vector<16x2x32xf32>, vector<2x4x16xf32>, vector<2x32x4xf32> -> vector<2x32x4xf32>
    %308 = tpu.transpose %307, [2, 0, 1] : vector<2x32x4xf32> -> vector<4x2x32xf32>
    "tpu.trace_stop"() : () -> ()
    %309 = vector.shape_cast %308 : vector<4x2x32xf32> to vector<4x64xf32>
    %310 = vector.extract_strided_slice %276 {offsets = [4, 0], sizes = [4, 64], strides = [1, 1]} : vector<8x64xf32> to vector<4x64xf32>
    %311 = vector.shape_cast %310 : vector<4x64xf32> to vector<4x2x32xf32>
    %312 = vector.extract_strided_slice %286 {offsets = [16, 0], sizes = [16, 64], strides = [1, 1]} : vector<32x64xf32> to vector<16x64xf32>
    %313 = vector.shape_cast %312 : vector<16x64xf32> to vector<16x2x32xf32>
    %314 = vector.extract_strided_slice %287 {offsets = [16, 0], sizes = [16, 64], strides = [1, 1]} : vector<32x64xf32> to vector<16x64xf32>
    %315 = vector.shape_cast %314 : vector<16x64xf32> to vector<16x2x32xf32>
    "tpu.trace_start"() <{level = 10 : i32, message = "qhd,khd->hqk"}> : () -> ()
    %cst_135 = arith.constant dense<0.000000e+00> : vector<2x4x16xf32>
    %316 = tpu.matmul %311, %313, %cst_135 {dimension_numbers = #tpu.dot_dimension_numbers<[2], [2], [0], [0], [0, 1, 0, 0, 1, 0], [1], [1]>} : vector<4x2x32xf32>, vector<16x2x32xf32>, vector<2x4x16xf32> -> vector<2x4x16xf32>
    "tpu.trace_stop"() : () -> ()
    %cst_136 = arith.constant 0.176776692 : f32
    %317 = vector.broadcast %cst_136 : f32 to vector<2x4x16xf32>
    %318 = arith.mulf %316, %317 : vector<2x4x16xf32>
    %cst_137 = arith.constant dense<0xFF800000> : vector<2x4xf32>
    %319 = vector.multi_reduction <maximumf>, %318, %cst_137 [2] : vector<2x4x16xf32> to vector<2x4xf32>
    %320 = vector.shape_cast %319 : vector<2x4xf32> to vector<2x4x1xf32>
    %321 = vector.broadcast %320 : vector<2x4x1xf32> to vector<2x4x16xf32>
    %322 = arith.subf %318, %321 : vector<2x4x16xf32>
    %323 = math.exp %322 : vector<2x4x16xf32>
    %cst_138 = arith.constant dense<0.000000e+00> : vector<2x4xf32>
    %324 = vector.multi_reduction <add>, %323, %cst_138 [2] : vector<2x4x16xf32> to vector<2x4xf32>
    %325 = vector.shape_cast %324 : vector<2x4xf32> to vector<2x4x1xf32>
    %326 = tpu.reciprocal %325 {approx = true} : vector<2x4x1xf32> -> vector<2x4x1xf32>
    %327 = vector.broadcast %326 : vector<2x4x1xf32> to vector<2x4x16xf32>
    %328 = arith.mulf %323, %327 : vector<2x4x16xf32>
    "tpu.trace_start"() <{level = 10 : i32, message = "hqk,khd->qhd"}> : () -> ()
    %cst_139 = arith.constant dense<0.000000e+00> : vector<2x32x4xf32>
    %329 = tpu.matmul %315, %328, %cst_139 {dimension_numbers = #tpu.dot_dimension_numbers<[0], [2], [2], [1], [0, 1, 0, 2, 1, 1], [1], [0]>} : vector<16x2x32xf32>, vector<2x4x16xf32>, vector<2x32x4xf32> -> vector<2x32x4xf32>
    %330 = tpu.transpose %329, [2, 0, 1] : vector<2x32x4xf32> -> vector<4x2x32xf32>
    "tpu.trace_stop"() : () -> ()
    %331 = vector.shape_cast %330 : vector<4x2x32xf32> to vector<4x64xf32>
    %332 = tpu.concatenate %309, %331 in 0 : vector<4x64xf32>, vector<4x64xf32> -> vector<8x64xf32>
    %c0_140 = arith.constant 0 : index
    %c2_141 = arith.constant 2 : index
    %c0_142 = arith.constant 0 : index
    %c0_143 = arith.constant 0 : index
    %333 = vector.load %arg10[%c0_140, %c2_141, %c0_142, %c0_143] : memref<1x3x64x64xbf16, #tpu.memory_space<vmem>>, vector<1x1x64x64xbf16>
    %334 = vector.shape_cast %333 : vector<1x1x64x64xbf16> to vector<64x64xbf16>
    %335 = arith.truncf %332 : vector<8x64xf32> to vector<8x64xbf16>
    %cst_144 = arith.constant dense<0.000000e+00> : vector<8x64xf32>
    %336 = tpu.matmul %335, %334, %cst_144 {dimension_numbers = #tpu.dot_dimension_numbers<[1], [0], [0], [1], [0, 0, 1, 1], [], []>} : vector<8x64xbf16>, vector<64x64xbf16>, vector<8x64xf32> -> vector<8x64xf32>
    %c0_145 = arith.constant 0 : index
    %c2_146 = arith.constant 2 : index
    %c0_147 = arith.constant 0 : index
    %337 = vector.load %arg11[%c0_145, %c2_146, %c0_147] : memref<1x3x64xf32, #tpu.memory_space<vmem>>, vector<1x1x64xf32>
    %338 = vector.shape_cast %337 : vector<1x1x64xf32> to vector<64xf32>
    %339 = vector.shape_cast %338 : vector<64xf32> to vector<1x64xf32>
    %340 = vector.broadcast %339 : vector<1x64xf32> to vector<8x64xf32>
    %341 = arith.addf %336, %340 : vector<8x64xf32>
    %342 = arith.addf %6, %341 : vector<8x64xf32>
    %343 = tpu.concatenate %109, %342 in 0 : vector<32x64xf32>, vector<8x64xf32> -> vector<40x64xf32>
    %c0_148 = arith.constant 0 : index
    %c4 = arith.constant 4 : index
    %c0_149 = arith.constant 0 : index
    %344 = vector.load %arg4[%c0_148, %c4, %c0_149] : memref<1x5x64xf32, #tpu.memory_space<vmem>>, vector<1x1x64xf32>
    %345 = vector.shape_cast %344 : vector<1x1x64xf32> to vector<64xf32>
    %c0_150 = arith.constant 0 : index
    %c4_151 = arith.constant 4 : index
    %c0_152 = arith.constant 0 : index
    %346 = vector.load %arg5[%c0_150, %c4_151, %c0_152] : memref<1x5x64xf32, #tpu.memory_space<vmem>>, vector<1x1x64xf32>
    %347 = vector.shape_cast %346 : vector<1x1x64xf32> to vector<64xf32>
    %cst_153 = arith.constant dense<0.000000e+00> : vector<40xf32>
    %348 = vector.multi_reduction <add>, %343, %cst_153 [1] : vector<40x64xf32> to vector<40xf32>
    %349 = vector.shape_cast %348 : vector<40xf32> to vector<40x1xf32>
    %cst_154 = arith.constant 6.400000e+01 : f32
    %350 = vector.broadcast %cst_154 : f32 to vector<40x1xf32>
    %351 = arith.divf %349, %350 : vector<40x1xf32>
    %352 = vector.broadcast %351 : vector<40x1xf32> to vector<40x64xf32>
    %353 = arith.subf %343, %352 : vector<40x64xf32>
    %354 = arith.mulf %353, %353 : vector<40x64xf32>
    %cst_155 = arith.constant dense<0.000000e+00> : vector<40xf32>
    %355 = vector.multi_reduction <add>, %354, %cst_155 [1] : vector<40x64xf32> to vector<40xf32>
    %356 = vector.shape_cast %355 : vector<40xf32> to vector<40x1xf32>
    %cst_156 = arith.constant 6.400000e+01 : f32
    %357 = vector.broadcast %cst_156 : f32 to vector<40x1xf32>
    %358 = arith.divf %356, %357 : vector<40x1xf32>
    %359 = vector.broadcast %351 : vector<40x1xf32> to vector<40x64xf32>
    %360 = arith.subf %343, %359 : vector<40x64xf32>
    %cst_157 = arith.constant 9.99999974E-6 : f32
    %361 = vector.broadcast %cst_157 : f32 to vector<40x1xf32>
    %362 = arith.addf %358, %361 : vector<40x1xf32>
    %363 = math.rsqrt %362 : vector<40x1xf32>
    %364 = vector.broadcast %363 : vector<40x1xf32> to vector<40x64xf32>
    %365 = arith.mulf %360, %364 : vector<40x64xf32>
    %366 = vector.shape_cast %345 : vector<64xf32> to vector<1x64xf32>
    %367 = vector.broadcast %366 : vector<1x64xf32> to vector<40x64xf32>
    %368 = arith.mulf %365, %367 : vector<40x64xf32>
    %369 = vector.shape_cast %347 : vector<64xf32> to vector<1x64xf32>
    %370 = vector.broadcast %369 : vector<1x64xf32> to vector<40x64xf32>
    %371 = arith.addf %368, %370 : vector<40x64xf32>
    %c0_158 = arith.constant 0 : index
    %c0_159 = arith.constant 0 : index
    %c0_160 = arith.constant 0 : index
    %372 = vector.load %arg12[%c0_158, %c0_159, %c0_160] : memref<1x64x256xbf16, #tpu.memory_space<vmem>>, vector<1x64x256xbf16>
    %373 = vector.shape_cast %372 : vector<1x64x256xbf16> to vector<64x256xbf16>
    %374 = arith.truncf %371 : vector<40x64xf32> to vector<40x64xbf16>
    %cst_161 = arith.constant dense<0.000000e+00> : vector<40x256xf32>
    %375 = tpu.matmul %374, %373, %cst_161 {dimension_numbers = #tpu.dot_dimension_numbers<[1], [0], [0], [1], [0, 0, 1, 1], [], []>} : vector<40x64xbf16>, vector<64x256xbf16>, vector<40x256xf32> -> vector<40x256xf32>
    %c0_162 = arith.constant 0 : index
    %c0_163 = arith.constant 0 : index
    %c0_164 = arith.constant 0 : index
    %376 = vector.load %arg13[%c0_162, %c0_163, %c0_164] : memref<1x1x256xf32, #tpu.memory_space<vmem>>, vector<1x1x256xf32>
    %377 = vector.shape_cast %376 : vector<1x1x256xf32> to vector<1x256xf32>
    %378 = vector.broadcast %377 : vector<1x256xf32> to vector<40x256xf32>
    %379 = arith.addf %375, %378 : vector<40x256xf32>
    %cst_165 = arith.constant 5.000000e-01 : f32
    %380 = vector.broadcast %cst_165 : f32 to vector<40x256xf32>
    %381 = arith.mulf %380, %379 : vector<40x256xf32>
    %cst_166 = arith.constant 4.471500e-02 : f32
    %382 = vector.broadcast %cst_166 : f32 to vector<40x256xf32>
    %383 = arith.mulf %382, %379 : vector<40x256xf32>
    %384 = arith.mulf %383, %379 : vector<40x256xf32>
    %385 = arith.mulf %384, %379 : vector<40x256xf32>
    %386 = arith.addf %379, %385 : vector<40x256xf32>
    %cst_167 = arith.constant 0.797884583 : f32
    %387 = vector.broadcast %cst_167 : f32 to vector<40x256xf32>
    %388 = arith.mulf %387, %386 : vector<40x256xf32>
    %389 = math.tanh %388 : vector<40x256xf32>
    %cst_168 = arith.constant 1.000000e+00 : f32
    %390 = vector.broadcast %cst_168 : f32 to vector<40x256xf32>
    %391 = arith.addf %390, %389 : vector<40x256xf32>
    %392 = arith.mulf %381, %391 : vector<40x256xf32>
    %c0_169 = arith.constant 0 : index
    %c0_170 = arith.constant 0 : index
    %c0_171 = arith.constant 0 : index
    %393 = vector.load %arg14[%c0_169, %c0_170, %c0_171] : memref<1x256x64xbf16, #tpu.memory_space<vmem>>, vector<1x256x64xbf16>
    %394 = vector.shape_cast %393 : vector<1x256x64xbf16> to vector<256x64xbf16>
    %395 = arith.truncf %392 : vector<40x256xf32> to vector<40x256xbf16>
    %cst_172 = arith.constant dense<0.000000e+00> : vector<40x64xf32>
    %396 = tpu.matmul %395, %394, %cst_172 {dimension_numbers = #tpu.dot_dimension_numbers<[1], [0], [0], [1], [0, 0, 1, 1], [], []>} : vector<40x256xbf16>, vector<256x64xbf16>, vector<40x64xf32> -> vector<40x64xf32>
    %397 = arith.addf %371, %396 : vector<40x64xf32>
    %c0_173 = arith.constant 0 : index
    %c0_174 = arith.constant 0 : index
    %c0_175 = arith.constant 0 : index
    %398 = vector.load %arg15[%c0_173, %c0_174, %c0_175] : memref<1x1x64xf32, #tpu.memory_space<vmem>>, vector<1x1x64xf32>
    %399 = vector.shape_cast %398 : vector<1x1x64xf32> to vector<1x64xf32>
    %400 = vector.broadcast %399 : vector<1x64xf32> to vector<40x64xf32>
    %401 = arith.addf %397, %400 : vector<40x64xf32>
    %402 = vector.extract_strided_slice %401 {offsets = [0, 0], sizes = [32, 64], strides = [1, 1]} : vector<40x64xf32> to vector<32x64xf32>
    %403 = vector.shape_cast %402 : vector<32x64xf32> to vector<2x16x64xf32>
    %404 = vector.extract_strided_slice %401 {offsets = [32, 0], sizes = [8, 64], strides = [1, 1]} : vector<40x64xf32> to vector<8x64xf32>
    %405 = vector.shape_cast %404 : vector<8x64xf32> to vector<2x4x64xf32>
    %c0_176 = arith.constant 0 : index
    %c0_177 = arith.constant 0 : index
    %c0_178 = arith.constant 0 : index
    %406 = vector.load %arg16[%c0_176, %c0_177, %c0_178] : memref<2x16x64xf32, #tpu.memory_space<vmem>>, vector<2x16x64xf32>
    tpu.vector_store %arg16[%c0_176, %c0_177, %c0_178], %403 {strides = array<i32>} : memref<2x16x64xf32, #tpu.memory_space<vmem>>, vector<2x16x64xf32>,
    %c0_179 = arith.constant 0 : index
    %c0_180 = arith.constant 0 : index
    %c0_181 = arith.constant 0 : index
    %407 = vector.load %arg17[%c0_179, %c0_180, %c0_181] : memref<2x4x64xf32, #tpu.memory_space<vmem>>, vector<2x4x64xf32>
    tpu.vector_store %arg17[%c0_179, %c0_180, %c0_181], %405 {strides = array<i32>} : memref<2x4x64xf32, #tpu.memory_space<vmem>>, vector<2x4x64xf32>,
    return
  }
  func.func @transform_0(%arg0: i32, %arg1: i32) -> (i32, i32, i32) {
    %c0_i32 = arith.constant 0 : i32
    %c0_i32_0 = arith.constant 0 : i32
    %c0_i32_1 = arith.constant 0 : i32
    return %arg0, %c0_i32, %c0_i32_0 : i32, i32, i32
  }
  func.func @transform_1(%arg0: i32, %arg1: i32) -> (i32, i32, i32) {
    %c0_i32 = arith.constant 0 : i32
    %c0_i32_0 = arith.constant 0 : i32
    %c0_i32_1 = arith.constant 0 : i32
    return %arg0, %c0_i32, %c0_i32_0 : i32, i32, i32
  }
  func.func @transform_2(%arg0: i32, %arg1: i32) -> (i32, i32, i32) {
    %c0_i32 = arith.constant 0 : i32
    %c0_i32_0 = arith.constant 0 : i32
    %c0_i32_1 = arith.constant 0 : i32
    return %arg1, %c0_i32, %c0_i32_0 : i32, i32, i32
  }
  func.func @transform_3(%arg0: i32, %arg1: i32) -> (i32, i32, i32) {
    %c0_i32 = arith.constant 0 : i32
    %c0_i32_0 = arith.constant 0 : i32
    %c0_i32_1 = arith.constant 0 : i32
    return %arg1, %c0_i32, %c0_i32_0 : i32, i32, i32
  }
  func.func @transform_4(%arg0: i32, %arg1: i32) -> (i32, i32, i32, i32) {
    %c0_i32 = arith.constant 0 : i32
    %c0_i32_0 = arith.constant 0 : i32
    %c0_i32_1 = arith.constant 0 : i32
    %c0_i32_2 = arith.constant 0 : i32
    return %arg1, %c0_i32, %c0_i32_0, %c0_i32_1 : i32, i32, i32, i32
  }
  func.func @transform_5(%arg0: i32, %arg1: i32) -> (i32, i32, i32) {
    %c0_i32 = arith.constant 0 : i32
    %c0_i32_0 = arith.constant 0 : i32
    %c0_i32_1 = arith.constant 0 : i32
    return %arg1, %c0_i32, %c0_i32_0 : i32, i32, i32
  }
  func.func @transform_6(%arg0: i32, %arg1: i32) -> (i32, i32, i32, i32) {
    %c0_i32 = arith.constant 0 : i32
    %c0_i32_0 = arith.constant 0 : i32
    %c0_i32_1 = arith.constant 0 : i32
    %c0_i32_2 = arith.constant 0 : i32
    return %arg1, %c0_i32, %c0_i32_0, %c0_i32_1 : i32, i32, i32, i32
  }
  func.func @transform_7(%arg0: i32, %arg1: i32) -> (i32, i32, i32) {
    %c0_i32 = arith.constant 0 : i32
    %c0_i32_0 = arith.constant 0 : i32
    %c0_i32_1 = arith.constant 0 : i32
    return %arg1, %c0_i32, %c0_i32_0 : i32, i32, i32
  }
  func.func @transform_8(%arg0: i32, %arg1: i32) -> (i32, i32, i32, i32) {
    %c0_i32 = arith.constant 0 : i32
    %c0_i32_0 = arith.constant 0 : i32
    %c0_i32_1 = arith.constant 0 : i32
    %c0_i32_2 = arith.constant 0 : i32
    return %arg1, %c0_i32, %c0_i32_0, %c0_i32_1 : i32, i32, i32, i32
  }
  func.func @transform_9(%arg0: i32, %arg1: i32) -> (i32, i32, i32) {
    %c0_i32 = arith.constant 0 : i32
    %c0_i32_0 = arith.constant 0 : i32
    %c0_i32_1 = arith.constant 0 : i32
    return %arg1, %c0_i32, %c0_i32_0 : i32, i32, i32
  }
  func.func @transform_10(%arg0: i32, %arg1: i32) -> (i32, i32, i32) {
    %c0_i32 = arith.constant 0 : i32
    %c0_i32_0 = arith.constant 0 : i32
    %c0_i32_1 = arith.constant 0 : i32
    return %arg1, %c0_i32, %c0_i32_0 : i32, i32, i32
  }
  func.func @transform_11(%arg0: i32, %arg1: i32) -> (i32, i32, i32) {
    %c0_i32 = arith.constant 0 : i32
    %c0_i32_0 = arith.constant 0 : i32
    %c0_i32_1 = arith.constant 0 : i32
    return %arg1, %c0_i32, %c0_i32_0 : i32, i32, i32
  }
  func.func @transform_12(%arg0: i32, %arg1: i32) -> (i32, i32, i32) {
    %c0_i32 = arith.constant 0 : i32
    %c0_i32_0 = arith.constant 0 : i32
    %c0_i32_1 = arith.constant 0 : i32
    return %arg1, %c0_i32, %c0_i32_0 : i32, i32, i32
  }
  func.func @transform_13(%arg0: i32, %arg1: i32) -> (i32, i32, i32) {
    %c0_i32 = arith.constant 0 : i32
    %c0_i32_0 = arith.constant 0 : i32
    %c0_i32_1 = arith.constant 0 : i32
    return %arg1, %c0_i32, %c0_i32_0 : i32, i32, i32
  }
  func.func @transform_14(%arg0: i32, %arg1: i32) -> (i32, i32, i32) {
    %c0_i32 = arith.constant 0 : i32
    %c0_i32_0 = arith.constant 0 : i32
    %c0_i32_1 = arith.constant 0 : i32
    return %arg0, %c0_i32, %c0_i32_0 : i32, i32, i32
  }
  func.func @transform_15(%arg0: i32, %arg1: i32) -> (i32, i32, i32) {
    %c0_i32 = arith.constant 0 : i32
    %c0_i32_0 = arith.constant 0 : i32
    %c0_i32_1 = arith.constant 0 : i32
    return %arg0, %c0_i32, %c0_i32_0 : i32, i32, i32
  }
}

</mosaic_0001>

<llo_original>
// kernel: tpu_custom_call.1
$region0: #{tpu_custom_call.1}
  #allocation0 [shape = 'u32[]', space=smem, size = 0x4, offset = 0x4, fixed_abs, tag = 'smem constant byte address 0x4 - core index']
  #allocation1 [shape = 'u32[144,128]{1,0:T(1,128)}', space=vmem, size = 0x12000, scoped, tag = 'internal scratch']
  %s0 = inlined_call_operand.hbm [shape: f32[2,16,64], index: 0, kind: input, shape index: {}]
  %s1 = inlined_call_operand.hbm [shape: f32[2,4,64], index: 1, kind: input, shape index: {}]
  %s2 = inlined_call_operand.hbm [shape: f32[2,5,64], index: 2, kind: input, shape index: {}]
  %s3 = inlined_call_operand.hbm [shape: f32[2,5,64], index: 3, kind: input, shape index: {}]
  %s4 = inlined_call_operand.hbm [shape: bf16[2,3,64,64], index: 4, kind: input, shape index: {}]
  %s5 = inlined_call_operand.hbm [shape: f32[2,3,64], index: 5, kind: input, shape index: {}]
  %s6 = inlined_call_operand.hbm [shape: bf16[2,3,64,128], index: 6, kind: input, shape index: {}]
  %s7 = inlined_call_operand.hbm [shape: f32[2,3,128], index: 7, kind: input, shape index: {}]
  %s8 = inlined_call_operand.hbm [shape: bf16[2,3,64,64], index: 8, kind: input, shape index: {}]
  %s9 = inlined_call_operand.hbm [shape: f32[2,3,64], index: 9, kind: input, shape index: {}]
  %s10 = inlined_call_operand.hbm [shape: bf16[2,64,256], index: 10, kind: input, shape index: {}]
  %s11 = inlined_call_operand.hbm [shape: f32[2,1,256], index: 11, kind: input, shape index: {}]
  %s12 = inlined_call_operand.hbm [shape: bf16[2,256,64], index: 12, kind: input, shape index: {}]
  %s13 = inlined_call_operand.hbm [shape: f32[2,1,64], index: 13, kind: input, shape index: {}]
  %s14 = inlined_call_operand.hbm [shape: f32[2,16,64], index: 14, kind: output, shape index: {0}]
  %s15 = inlined_call_operand.hbm [shape: f32[2,4,64], index: 15, kind: output, shape index: {1}]
  %16 = xla_tuple %s14, %s15
  %s17 = sld [smem:[#allocation0]]
  $region157: #{tpu_custom_call.1} parent=0
    _
  %s19 = ssub.s32 1, %s17
  %s20 = scalar_select 0, %s19, %s17
  $region1: #{tpu_custom_call.1} parent=0
    #allocation2 [shape = 'u8[16384]{0}', space=vmem, size = 0x4000, scoped, tag = 'input window, operand 0, single buffered']
    #allocation3 [shape = 's32[2]{0}', space=sflag, size = 0x8, scoped, tag = 'scoped memory for tpu_custom_call.1']
    #allocation4 [shape = 's32[2]{0}', space=sflag, size = 0x8, scoped, tag = 'scoped memory for tpu_custom_call.1']
    #allocation5 [shape = 'u8[4096]{0}', space=vmem, size = 0x1000, scoped, tag = 'input window, operand 1, single buffered']
    #allocation6 [shape = 's32[1]{0}', space=sflag, size = 0x4, scoped, tag = 'scoped memory for tpu_custom_call.1']
    #allocation7 [shape = 'u8[8192]{0}', space=vmem, size = 0x2000, scoped, tag = 'input window, operand 2']
    #allocation8 [shape = 'u8[8192]{0}', space=vmem, size = 0x2000, scoped, tag = 'input window, operand 3']
    #allocation9 [shape = 'u8[98304]{0}', space=vmem, size = 0x18000, scoped, tag = 'input window, operand 4']
    #allocation10 [shape = 'u8[4096]{0}', space=vmem, size = 0x1000, scoped, tag = 'input window, operand 5']
    #allocation11 [shape = 'u8[98304]{0}', space=vmem, size = 0x18000, scoped, tag = 'input window, operand 6']
    #allocation12 [shape = 'u8[4096]{0}', space=vmem, size = 0x1000, scoped, tag = 'input window, operand 7']
    #allocation13 [shape = 'u8[98304]{0}', space=vmem, size = 0x18000, scoped, tag = 'input window, operand 8']
    #allocation14 [shape = 'u8[4096]{0}', space=vmem, size = 0x1000, scoped, tag = 'input window, operand 9']
    #allocation15 [shape = 'u8[65536]{0}', space=vmem, size = 0x10000, scoped, tag = 'input window, operand 10']
    #allocation16 [shape = 'u8[2048]{0}', space=vmem, size = 0x800, scoped, tag = 'input window, operand 11']
    #allocation17 [shape = 'u8[131072]{0}', space=vmem, size = 0x20000, scoped, tag = 'input window, operand 12']
    #allocation18 [shape = 'u8[1024]{0}', space=vmem, size = 0x400, scoped, tag = 'input window, operand 13']
    #allocation19 [shape = 'u8[16384]{0}', space=vmem, size = 0x4000, scoped, tag = 'output window, operand 0, single buffered']
    #allocation20 [shape = 'u8[4096]{0}', space=vmem, size = 0x1000, scoped, tag = 'output window, operand 1, single buffered']
    #allocation21 [shape = 's32[1]{0}', space=sflag, size = 0x4, scoped, tag = 'scoped memory for tpu_custom_call.1']
    %21 = vsyncpa [#allocation3], 0
    %22 = vsyncpa [#allocation6], 0
    %23 = vsyncpa [#allocation4], 0
    %24 = vsyncpa [#allocation21], 0
    loop: start=0, step=1, limit=4
    $region2: #{tpu_custom_call.1} parent=1 // loop_pre_header
      _
    $region3: #{tpu_custom_call.1} parent=1 // loop_header
      %s26 = sphi 0, %s30
      %p27 = scmp.ge.s32.totalorder %s26, 4
      %s33 = sphi 0, %s45
      %s34 = sphi 0, %s41
      %s35 = sphi 0, %s33
      %s36 = sphi 0, %s34
      %s37 = sphi 0, %s35
      %s38 = sphi 0, %s36
      %s48 = sphi 0, %s50
      %s51 = sphi 0, %s48
      %s52 = sphi 0, %s51
      %s68 = sphi 0, %s52
      %s74 = sphi 0, %s76
      %s77 = sphi 0, %s74
      %s78 = sphi 0, %s77
      %s94 = sphi 0, %s78
      %s100 = sphi 0, %s102
      %s103 = sphi 0, %s100
      %s104 = sphi 0, %s103
      %s120 = sphi 0, %s104
      %s126 = sphi 0, %s128
      %s129 = sphi 0, %s126
      %s130 = sphi 0, %s129
      %s146 = sphi 0, %s130
      %s152 = sphi 0, %s154
      %s155 = sphi 0, %s152
      %s156 = sphi 0, %s155
      %s172 = sphi 0, %s156
      %s178 = sphi 0, %s180
      %s181 = sphi 0, %s178
      %s182 = sphi 0, %s181
      %s198 = sphi 0, %s182
      %s204 = sphi 0, %s206
      %s207 = sphi 0, %s204
      %s208 = sphi 0, %s207
      %s224 = sphi 0, %s208
      %s230 = sphi 0, %s232
      %s233 = sphi 0, %s230
      %s234 = sphi 0, %s233
      %s250 = sphi 0, %s234
      %s256 = sphi 0, %s258
      %s259 = sphi 0, %s256
      %s260 = sphi 0, %s259
      %s276 = sphi 0, %s260
      %s282 = sphi 0, %s284
      %s285 = sphi 0, %s282
      %s286 = sphi 0, %s285
      %s302 = sphi 0, %s286
      %s308 = sphi 0, %s310
      %s311 = sphi 0, %s308
      %s312 = sphi 0, %s311
      %s328 = sphi 0, %s312
      %s334 = sphi 0, %s336
      %s337 = sphi 0, %s334
      %s338 = sphi 0, %s337
      %s354 = sphi 0, %s338
      %s360 = sphi 0, %s362
      %s363 = sphi 0, %s360
      %s364 = sphi 0, %s363
      %s380 = sphi 0, %s364
      %s386 = sphi 0, %s388
      %s389 = sphi 0, %s386
      %s390 = sphi 0, %s389
      %s406 = sphi 0, %s390
      %s412 = sphi 0, %s414
      %s415 = sphi 0, %s412
      %s416 = sphi 0, %s415
      %s432 = sphi 0, %s416
      %s438 = sphi 0, %s440
      %s441 = sphi 0, %s438
      %s442 = sphi 0, %s441
      %s458 = sphi 0, %s442
    $region4: #{tpu_custom_call.1} parent=1 // loop_header_branch
      %29 = sbr.rel (%p27) target = $region8
    $region5: #{tpu_custom_call.1} parent=1 // loop_body
      %s31 = ssub.s32 %s26, 1
      %s32 = ssub.s32 %s26, 2
      %s39 = sadd.s32 1, %s34
      %p40 = scmp.ge.s32.totalorder %s39, 2
      %s41 = scalar_select %p40, 0, %s39
      %s42 = sadd.s32 1, %s33
      %s43 = scalar_select %p40, %s42, %s33
      %p44 = scmp.ge.s32.totalorder %s43, 1
      %s45 = scalar_select %p44, 0, %s43
      %s46 = ssub.s32 %s33, %s45
      %p47 = scmp.eq.s32.totalorder %s46, 0
      %s49 = sadd.s32 %s48, 1
      %s50 = scalar_select %p47, %s48, %s49
      %p53 = pneg %p47
      %p54 = scmp.eq.s32.totalorder %s26, 1
      %p55 = por %p53, %p54
      %p56 = scmp.ne.s32.totalorder %s48, %s51
      %p57 = scmp.eq.s32.totalorder %s26, 0
      %p58 = por %p56, %p57
      %p59 = scmp.ne.s32.totalorder %s48, %s51
      %p60 = scmp.eq.s32.totalorder %s31, 1
      %p61 = por %p59, %p60
      %p62 = scmp.ne.s32.totalorder %s51, %s52
      %p63 = scmp.eq.s32.totalorder %s31, 0
      %p64 = por %p62, %p63
      %p65 = scmp.ne.s32.totalorder %s51, %s52
      %p66 = scmp.eq.s32.totalorder %s32, 1
      %p67 = por %p65, %p66
      %p69 = scmp.ne.s32.totalorder %s52, %s68
      %p70 = scmp.eq.s32.totalorder %s32, 0
      %p71 = por %p69, %p70
      %s72 = ssub.s32 %s33, %s45
      %p73 = scmp.eq.s32.totalorder %s72, 0
      %s75 = sadd.s32 %s74, 1
      %s76 = scalar_select %p73, %s74, %s75
      %p79 = pneg %p73
      %p80 = scmp.eq.s32.totalorder %s26, 1
      %p81 = por %p79, %p80
      %p82 = scmp.ne.s32.totalorder %s74, %s77
      %p83 = scmp.eq.s32.totalorder %s26, 0
      %p84 = por %p82, %p83
      %p85 = scmp.ne.s32.totalorder %s74, %s77
      %p86 = scmp.eq.s32.totalorder %s31, 1
      %p87 = por %p85, %p86
      %p88 = scmp.ne.s32.totalorder %s77, %s78
      %p89 = scmp.eq.s32.totalorder %s31, 0
      %p90 = por %p88, %p89
      %p91 = scmp.ne.s32.totalorder %s77, %s78
      %p92 = scmp.eq.s32.totalorder %s32, 1
      %p93 = por %p91, %p92
      %p95 = scmp.ne.s32.totalorder %s78, %s94
      %p96 = scmp.eq.s32.totalorder %s32, 0
      %p97 = por %p95, %p96
      %s98 = ssub.s32 %s34, %s41
      %p99 = scmp.eq.s32.totalorder %s98, 0
      %s101 = sadd.s32 %s100, 1
      %s102 = scalar_select %p99, %s100, %s101
      %p105 = pneg %p99
      %p106 = scmp.eq.s32.totalorder %s26, 1
      %p107 = por %p105, %p106
      %p108 = scmp.ne.s32.totalorder %s100, %s103
      %p109 = scmp.eq.s32.totalorder %s26, 0
      %p110 = por %p108, %p109
      %p111 = scmp.ne.s32.totalorder %s100, %s103
      %p112 = scmp.eq.s32.totalorder %s31, 1
      %p113 = por %p111, %p112
      %p114 = scmp.ne.s32.totalorder %s103, %s104
      %p115 = scmp.eq.s32.totalorder %s31, 0
      %p116 = por %p114, %p115
      %p117 = scmp.ne.s32.totalorder %s103, %s104
      %p118 = scmp.eq.s32.totalorder %s32, 1
      %p119 = por %p117, %p118
      %p121 = scmp.ne.s32.totalorder %s104, %s120
      %p122 = scmp.eq.s32.totalorder %s32, 0
      %p123 = por %p121, %p122
      %s124 = ssub.s32 %s34, %s41
      %p125 = scmp.eq.s32.totalorder %s124, 0
      %s127 = sadd.s32 %s126, 1
      %s128 = scalar_select %p125, %s126, %s127
      %p131 = pneg %p125
      %p132 = scmp.eq.s32.totalorder %s26, 1
      %p133 = por %p131, %p132
      %p134 = scmp.ne.s32.totalorder %s126, %s129
      %p135 = scmp.eq.s32.totalorder %s26, 0
      %p136 = por %p134, %p135
      %p137 = scmp.ne.s32.totalorder %s126, %s129
      %p138 = scmp.eq.s32.totalorder %s31, 1
      %p139 = por %p137, %p138
      %p140 = scmp.ne.s32.totalorder %s129, %s130
      %p141 = scmp.eq.s32.totalorder %s31, 0
      %p142 = por %p140, %p141
      %p143 = scmp.ne.s32.totalorder %s129, %s130
      %p144 = scmp.eq.s32.totalorder %s32, 1
      %p145 = por %p143, %p144
      %p147 = scmp.ne.s32.totalorder %s130, %s146
      %p148 = scmp.eq.s32.totalorder %s32, 0
      %p149 = por %p147, %p148
      %s150 = ssub.s32 %s34, %s41
      %p151 = scmp.eq.s32.totalorder %s150, 0
      %s153 = sadd.s32 %s152, 1
      %s154 = scalar_select %p151, %s152, %s153
      %p157 = pneg %p151
      %p158 = scmp.eq.s32.totalorder %s26, 1
      %p159 = por %p157, %p158
      %p160 = scmp.ne.s32.totalorder %s152, %s155
      %p161 = scmp.eq.s32.totalorder %s26, 0
      %p162 = por %p160, %p161
      %p163 = scmp.ne.s32.totalorder %s152, %s155
      %p164 = scmp.eq.s32.totalorder %s31, 1
      %p165 = por %p163, %p164
      %p166 = scmp.ne.s32.totalorder %s155, %s156
      %p167 = scmp.eq.s32.totalorder %s31, 0
      %p168 = por %p166, %p167
      %p169 = scmp.ne.s32.totalorder %s155, %s156
      %p170 = scmp.eq.s32.totalorder %s32, 1
      %p171 = por %p169, %p170
      %p173 = scmp.ne.s32.totalorder %s156, %s172
      %p174 = scmp.eq.s32.totalorder %s32, 0
      %p175 = por %p173, %p174
      %s176 = ssub.s32 %s34, %s41
      %p177 = scmp.eq.s32.totalorder %s176, 0
      %s179 = sadd.s32 %s178, 1
      %s180 = scalar_select %p177, %s178, %s179
      %p183 = pneg %p177
      %p184 = scmp.eq.s32.totalorder %s26, 1
      %p185 = por %p183, %p184
      %p186 = scmp.ne.s32.totalorder %s178, %s181
      %p187 = scmp.eq.s32.totalorder %s26, 0
      %p188 = por %p186, %p187
      %p189 = scmp.ne.s32.totalorder %s178, %s181
      %p190 = scmp.eq.s32.totalorder %s31, 1
      %p191 = por %p189, %p190
      %p192 = scmp.ne.s32.totalorder %s181, %s182
      %p193 = scmp.eq.s32.totalorder %s31, 0
      %p194 = por %p192, %p193
      %p195 = scmp.ne.s32.totalorder %s181, %s182
      %p196 = scmp.eq.s32.totalorder %s32, 1
      %p197 = por %p195, %p196
      %p199 = scmp.ne.s32.totalorder %s182, %s198
      %p200 = scmp.eq.s32.totalorder %s32, 0
      %p201 = por %p199, %p200
      %s202 = ssub.s32 %s34, %s41
      %p203 = scmp.eq.s32.totalorder %s202, 0
      %s205 = sadd.s32 %s204, 1
      %s206 = scalar_select %p203, %s204, %s205
      %p209 = pneg %p203
      %p210 = scmp.eq.s32.totalorder %s26, 1
      %p211 = por %p209, %p210
      %p212 = scmp.ne.s32.totalorder %s204, %s207
      %p213 = scmp.eq.s32.totalorder %s26, 0
      %p214 = por %p212, %p213
      %p215 = scmp.ne.s32.totalorder %s204, %s207
      %p216 = scmp.eq.s32.totalorder %s31, 1
      %p217 = por %p215, %p216
      %p218 = scmp.ne.s32.totalorder %s207, %s208
      %p219 = scmp.eq.s32.totalorder %s31, 0
      %p220 = por %p218, %p219
      %p221 = scmp.ne.s32.totalorder %s207, %s208
      %p222 = scmp.eq.s32.totalorder %s32, 1
      %p223 = por %p221, %p222
      %p225 = scmp.ne.s32.totalorder %s208, %s224
      %p226 = scmp.eq.s32.totalorder %s32, 0
      %p227 = por %p225, %p226
      %s228 = ssub.s32 %s34, %s41
      %p229 = scmp.eq.s32.totalorder %s228, 0
      %s231 = sadd.s32 %s230, 1
      %s232 = scalar_select %p229, %s230, %s231
      %p235 = pneg %p229
      %p236 = scmp.eq.s32.totalorder %s26, 1
      %p237 = por %p235, %p236
      %p238 = scmp.ne.s32.totalorder %s230, %s233
      %p239 = scmp.eq.s32.totalorder %s26, 0
      %p240 = por %p238, %p239
      %p241 = scmp.ne.s32.totalorder %s230, %s233
      %p242 = scmp.eq.s32.totalorder %s31, 1
      %p243 = por %p241, %p242
      %p244 = scmp.ne.s32.totalorder %s233, %s234
      %p245 = scmp.eq.s32.totalorder %s31, 0
      %p246 = por %p244, %p245
      %p247 = scmp.ne.s32.totalorder %s233, %s234
      %p248 = scmp.eq.s32.totalorder %s32, 1
      %p249 = por %p247, %p248
      %p251 = scmp.ne.s32.totalorder %s234, %s250
      %p252 = scmp.eq.s32.totalorder %s32, 0
      %p253 = por %p251, %p252
      %s254 = ssub.s32 %s34, %s41
      %p255 = scmp.eq.s32.totalorder %s254, 0
      %s257 = sadd.s32 %s256, 1
      %s258 = scalar_select %p255, %s256, %s257
      %p261 = pneg %p255
      %p262 = scmp.eq.s32.totalorder %s26, 1
      %p263 = por %p261, %p262
      %p264 = scmp.ne.s32.totalorder %s256, %s259
      %p265 = scmp.eq.s32.totalorder %s26, 0
      %p266 = por %p264, %p265
      %p267 = scmp.ne.s32.totalorder %s256, %s259
      %p268 = scmp.eq.s32.totalorder %s31, 1
      %p269 = por %p267, %p268
      %p270 = scmp.ne.s32.totalorder %s259, %s260
      %p271 = scmp.eq.s32.totalorder %s31, 0
      %p272 = por %p270, %p271
      %p273 = scmp.ne.s32.totalorder %s259, %s260
      %p274 = scmp.eq.s32.totalorder %s32, 1
      %p275 = por %p273, %p274
      %p277 = scmp.ne.s32.totalorder %s260, %s276
      %p278 = scmp.eq.s32.totalorder %s32, 0
      %p279 = por %p277, %p278
      %s280 = ssub.s32 %s34, %s41
      %p281 = scmp.eq.s32.totalorder %s280, 0
      %s283 = sadd.s32 %s282, 1
      %s284 = scalar_select %p281, %s282, %s283
      %p287 = pneg %p281
      %p288 = scmp.eq.s32.totalorder %s26, 1
      %p289 = por %p287, %p288
      %p290 = scmp.ne.s32.totalorder %s282, %s285
      %p291 = scmp.eq.s32.totalorder %s26, 0
      %p292 = por %p290, %p291
      %p293 = scmp.ne.s32.totalorder %s282, %s285
      %p294 = scmp.eq.s32.totalorder %s31, 1
      %p295 = por %p293, %p294
      %p296 = scmp.ne.s32.totalorder %s285, %s286
      %p297 = scmp.eq.s32.totalorder %s31, 0
      %p298 = por %p296, %p297
      %p299 = scmp.ne.s32.totalorder %s285, %s286
      %p300 = scmp.eq.s32.totalorder %s32, 1
      %p301 = por %p299, %p300
      %p303 = scmp.ne.s32.totalorder %s286, %s302
      %p304 = scmp.eq.s32.totalorder %s32, 0
      %p305 = por %p303, %p304
      %s306 = ssub.s32 %s34, %s41
      %p307 = scmp.eq.s32.totalorder %s306, 0
      %s309 = sadd.s32 %s308, 1
      %s310 = scalar_select %p307, %s308, %s309
      %p313 = pneg %p307
      %p314 = scmp.eq.s32.totalorder %s26, 1
      %p315 = por %p313, %p314
      %p316 = scmp.ne.s32.totalorder %s308, %s311
      %p317 = scmp.eq.s32.totalorder %s26, 0
      %p318 = por %p316, %p317
      %p319 = scmp.ne.s32.totalorder %s308, %s311
      %p320 = scmp.eq.s32.totalorder %s31, 1
      %p321 = por %p319, %p320
      %p322 = scmp.ne.s32.totalorder %s311, %s312
      %p323 = scmp.eq.s32.totalorder %s31, 0
      %p324 = por %p322, %p323
      %p325 = scmp.ne.s32.totalorder %s311, %s312
      %p326 = scmp.eq.s32.totalorder %s32, 1
      %p327 = por %p325, %p326
      %p329 = scmp.ne.s32.totalorder %s312, %s328
      %p330 = scmp.eq.s32.totalorder %s32, 0
      %p331 = por %p329, %p330
      %s332 = ssub.s32 %s34, %s41
      %p333 = scmp.eq.s32.totalorder %s332, 0
      %s335 = sadd.s32 %s334, 1
      %s336 = scalar_select %p333, %s334, %s335
      %p339 = pneg %p333
      %p340 = scmp.eq.s32.totalorder %s26, 1
      %p341 = por %p339, %p340
      %p342 = scmp.ne.s32.totalorder %s334, %s337
      %p343 = scmp.eq.s32.totalorder %s26, 0
      %p344 = por %p342, %p343
      %p345 = scmp.ne.s32.totalorder %s334, %s337
      %p346 = scmp.eq.s32.totalorder %s31, 1
      %p347 = por %p345, %p346
      %p348 = scmp.ne.s32.totalorder %s337, %s338
      %p349 = scmp.eq.s32.totalorder %s31, 0
      %p350 = por %p348, %p349
      %p351 = scmp.ne.s32.totalorder %s337, %s338
      %p352 = scmp.eq.s32.totalorder %s32, 1
      %p353 = por %p351, %p352
      %p355 = scmp.ne.s32.totalorder %s338, %s354
      %p356 = scmp.eq.s32.totalorder %s32, 0
      %p357 = por %p355, %p356
      %s358 = ssub.s32 %s34, %s41
      %p359 = scmp.eq.s32.totalorder %s358, 0
      %s361 = sadd.s32 %s360, 1
      %s362 = scalar_select %p359, %s360, %s361
      %p365 = pneg %p359
      %p366 = scmp.eq.s32.totalorder %s26, 1
      %p367 = por %p365, %p366
      %p368 = scmp.ne.s32.totalorder %s360, %s363
      %p369 = scmp.eq.s32.totalorder %s26, 0
      %p370 = por %p368, %p369
      %p371 = scmp.ne.s32.totalorder %s360, %s363
      %p372 = scmp.eq.s32.totalorder %s31, 1
      %p373 = por %p371, %p372
      %p374 = scmp.ne.s32.totalorder %s363, %s364
      %p375 = scmp.eq.s32.totalorder %s31, 0
      %p376 = por %p374, %p375
      %p377 = scmp.ne.s32.totalorder %s363, %s364
      %p378 = scmp.eq.s32.totalorder %s32, 1
      %p379 = por %p377, %p378
      %p381 = scmp.ne.s32.totalorder %s364, %s380
      %p382 = scmp.eq.s32.totalorder %s32, 0
      %p383 = por %p381, %p382
      %s384 = ssub.s32 %s34, %s41
      %p385 = scmp.eq.s32.totalorder %s384, 0
      %s387 = sadd.s32 %s386, 1
      %s388 = scalar_select %p385, %s386, %s387
      %p391 = pneg %p385
      %p392 = scmp.eq.s32.totalorder %s26, 1
      %p393 = por %p391, %p392
      %p394 = scmp.ne.s32.totalorder %s386, %s389
      %p395 = scmp.eq.s32.totalorder %s26, 0
      %p396 = por %p394, %p395
      %p397 = scmp.ne.s32.totalorder %s386, %s389
      %p398 = scmp.eq.s32.totalorder %s31, 1
      %p399 = por %p397, %p398
      %p400 = scmp.ne.s32.totalorder %s389, %s390
      %p401 = scmp.eq.s32.totalorder %s31, 0
      %p402 = por %p400, %p401
      %p403 = scmp.ne.s32.totalorder %s389, %s390
      %p404 = scmp.eq.s32.totalorder %s32, 1
      %p405 = por %p403, %p404
      %p407 = scmp.ne.s32.totalorder %s390, %s406
      %p408 = scmp.eq.s32.totalorder %s32, 0
      %p409 = por %p407, %p408
      %s410 = ssub.s32 %s33, %s45
      %p411 = scmp.eq.s32.totalorder %s410, 0
      %s413 = sadd.s32 %s412, 1
      %s414 = scalar_select %p411, %s412, %s413
      %p417 = pneg %p411
      %p418 = scmp.eq.s32.totalorder %s26, 1
      %p419 = por %p417, %p418
      %p420 = scmp.ne.s32.totalorder %s412, %s415
      %p421 = scmp.eq.s32.totalorder %s26, 0
      %p422 = por %p420, %p421
      %p423 = scmp.ne.s32.totalorder %s412, %s415
      %p424 = scmp.eq.s32.totalorder %s31, 1
      %p425 = por %p423, %p424
      %p426 = scmp.ne.s32.totalorder %s415, %s416
      %p427 = scmp.eq.s32.totalorder %s31, 0
      %p428 = por %p426, %p427
      %p429 = scmp.ne.s32.totalorder %s415, %s416
      %p430 = scmp.eq.s32.totalorder %s32, 1
      %p431 = por %p429, %p430
      %p433 = scmp.ne.s32.totalorder %s416, %s432
      %p434 = scmp.eq.s32.totalorder %s32, 0
      %p435 = por %p433, %p434
      %s436 = ssub.s32 %s33, %s45
      %p437 = scmp.eq.s32.totalorder %s436, 0
      %s439 = sadd.s32 %s438, 1
      %s440 = scalar_select %p437, %s438, %s439
      %p443 = pneg %p437
      %p444 = scmp.eq.s32.totalorder %s26, 1
      %p445 = por %p443, %p444
      %p446 = scmp.ne.s32.totalorder %s438, %s441
      %p447 = scmp.eq.s32.totalorder %s26, 0
      %p448 = por %p446, %p447
      %p449 = scmp.ne.s32.totalorder %s438, %s441
      %p450 = scmp.eq.s32.totalorder %s31, 1
      %p451 = por %p449, %p450
      %p452 = scmp.ne.s32.totalorder %s441, %s442
      %p453 = scmp.eq.s32.totalorder %s31, 0
      %p454 = por %p452, %p453
      %p455 = scmp.ne.s32.totalorder %s441, %s442
      %p456 = scmp.eq.s32.totalorder %s32, 1
      %p457 = por %p455, %p456
      %p459 = scmp.ne.s32.totalorder %s442, %s458
      %p460 = scmp.eq.s32.totalorder %s32, 0
      %p461 = por %p459, %p460
      %p462 = scmp.le.s32.totalorder 1, %s26
      %p463 = scmp.lt.s32.totalorder %s26, 3
      %p464 = pnand %p462, %p463
      %p465 = pneg %p464
      // Predicated region
      $region9: #{tpu_custom_call.1} parent=5 // pred_check
        _
      $region10: #{tpu_custom_call.1} parent=5 // pred_check_branch
        %467 = sbr.rel (%p464) target = $region12
      $region11: #{tpu_custom_call.1} parent=5 // pred_region
        %s468 = ssub.s32 %s26, 1
        // Predicated region
        $region13: #{tpu_custom_call.1} parent=11 // pred_check
          %p469 = pneg %p64
        $region14: #{tpu_custom_call.1} parent=11 // pred_check_branch
          %471 = sbr.rel (%p469) target = $region16
        $region15: #{tpu_custom_call.1} parent=11 // pred_region
          %s472 = smul.u32 2, %s35
          %s474 = ssub.s32 512, 512
          %475 = vsyncadd [#allocation3], %s474
          %s476 = smul.addr %s472, 2
          %s477 = smul.addr %s476, 128
          %s478 = scalar_lea.hbm %s0, %s477
          %s479 = sshll.u32 [#allocation2], 4
          %s480 = int_to_ptr.vmem [resolvable:$true] %s479
          %485 = dma.hbm_to_vmem [thread:$0]  %s478, 512, %s480, [#allocation3], 128, 128, 8
        $region16: #{tpu_custom_call.1} parent=11 // pred_fallthru
          _
        // Predicated region
        $region17: #{tpu_custom_call.1} parent=11 // pred_check
          %p486 = pneg %p90
        $region18: #{tpu_custom_call.1} parent=11 // pred_check_branch
          %488 = sbr.rel (%p486) target = $region20
        $region19: #{tpu_custom_call.1} parent=11 // pred_region
          %s489 = smul.u32 2, %s35
          %s491 = ssub.s32 128, 128
          %492 = vsyncadd [#allocation6], %s491
          %s493 = smul.addr %s489, 64
          %s494 = scalar_lea.hbm %s1, %s493
          %s495 = sshll.u32 [#allocation5], 4
          %s496 = int_to_ptr.vmem [resolvable:$true] %s495
          %501 = dma.hbm_to_vmem [thread:$0]  %s494, 128, %s496, [#allocation6], 64, 64, 4
        $region20: #{tpu_custom_call.1} parent=11 // pred_fallthru
          _
      $region12: #{tpu_custom_call.1} parent=5 // pred_fallthru
        _
      %p502 = scmp.lt.s32.totalorder %s26, 2
      // Predicated region
      $region21: #{tpu_custom_call.1} parent=5 // pred_check
        %p503 = pneg %p502
      $region22: #{tpu_custom_call.1} parent=5 // pred_check_branch
        %505 = sbr.rel (%p503) target = $region24
      $region23: #{tpu_custom_call.1} parent=5 // pred_region
        // Predicated region
        $region25: #{tpu_custom_call.1} parent=23 // pred_check
          %p506 = pneg %p110
        $region26: #{tpu_custom_call.1} parent=23 // pred_check_branch
          %508 = sbr.rel (%p506) target = $region28
        $region27: #{tpu_custom_call.1} parent=23 // pred_region
          %s509 = sand.u32 %s26, 1
          %s510 = scalar_lea.sflag [#allocation3], %s509
          %s511 = sand.u32 %s100, 1
          %s512 = smul.addr %s511, 8
          %s513 = scalar_lea.vmem [#allocation7], %s512
          %s515 = ssub.s32 128, 128
          %516 = vsyncadd %s510, %s515
          %s517 = smul.addr %s34, 128
          %s518 = scalar_lea.hbm %s2, %s517
          %s520 = sshll.u32 %s513, 4
          %s521 = int_to_ptr.vmem [resolvable:$true] %s520
          %523 = dma.hbm_to_vmem [thread:$0]  %s518, 128, %s521, %s510
        $region28: #{tpu_custom_call.1} parent=23 // pred_fallthru
          _
        // Predicated region
        $region29: #{tpu_custom_call.1} parent=23 // pred_check
          %p524 = pneg %p136
        $region30: #{tpu_custom_call.1} parent=23 // pred_check_branch
          %526 = sbr.rel (%p524) target = $region32
        $region31: #{tpu_custom_call.1} parent=23 // pred_region
          %s527 = sand.u32 %s26, 1
          %s528 = scalar_lea.sflag [#allocation3], %s527
          %s529 = sand.u32 %s126, 1
          %s530 = smul.addr %s529, 8
          %s531 = scalar_lea.vmem [#allocation8], %s530
          %s533 = ssub.s32 128, 128
          %534 = vsyncadd %s528, %s533
          %s535 = smul.addr %s34, 128
          %s536 = scalar_lea.hbm %s3, %s535
          %s538 = sshll.u32 %s531, 4
          %s539 = int_to_ptr.vmem [resolvable:$true] %s538
          %541 = dma.hbm_to_vmem [thread:$0]  %s536, 128, %s539, %s528
        $region32: #{tpu_custom_call.1} parent=23 // pred_fallthru
          _
        // Predicated region
        $region33: #{tpu_custom_call.1} parent=23 // pred_check
          %p542 = pneg %p162
        $region34: #{tpu_custom_call.1} parent=23 // pred_check_branch
          %544 = sbr.rel (%p542) target = $region36
        $region35: #{tpu_custom_call.1} parent=23 // pred_region
          %s545 = sand.u32 %s26, 1
          %s546 = scalar_lea.sflag [#allocation3], %s545
          %s547 = sand.u32 %s152, 1
          %s548 = smul.addr %s547, 96
          %s549 = scalar_lea.vmem [#allocation9], %s548
          %s551 = ssub.s32 1536, 1536
          %552 = vsyncadd %s546, %s551
          %s553 = smul.addr %s34, 24
          %s554 = smul.addr %s553, 64
          %s555 = scalar_lea.hbm %s4, %s554
          %s556 = sshll.u32 %s549, 4
          %s557 = int_to_ptr.vmem [resolvable:$true] %s556
          %562 = dma.hbm_to_vmem [thread:$0]  %s555, 1536, %s557, %s546, 64, 64, 4
        $region36: #{tpu_custom_call.1} parent=23 // pred_fallthru
          _
        // Predicated region
        $region37: #{tpu_custom_call.1} parent=23 // pred_check
          %p563 = pneg %p188
        $region38: #{tpu_custom_call.1} parent=23 // pred_check_branch
          %565 = sbr.rel (%p563) target = $region40
        $region39: #{tpu_custom_call.1} parent=23 // pred_region
          %s566 = sand.u32 %s26, 1
          %s567 = scalar_lea.sflag [#allocation3], %s566
          %s568 = sand.u32 %s178, 1
          %s569 = smul.addr %s568, 4
          %s570 = scalar_lea.vmem [#allocation10], %s569
          %s572 = ssub.s32 64, 64
          %573 = vsyncadd %s567, %s572
          %s574 = smul.addr %s34, 64
          %s575 = scalar_lea.hbm %s5, %s574
          %s577 = sshll.u32 %s570, 4
          %s578 = int_to_ptr.vmem [resolvable:$true] %s577
          %580 = dma.hbm_to_vmem [thread:$0]  %s575, 64, %s578, %s567
        $region40: #{tpu_custom_call.1} parent=23 // pred_fallthru
          _
        // Predicated region
        $region41: #{tpu_custom_call.1} parent=23 // pred_check
          %p581 = pneg %p214
        $region42: #{tpu_custom_call.1} parent=23 // pred_check_branch
          %583 = sbr.rel (%p581) target = $region44
        $region43: #{tpu_custom_call.1} parent=23 // pred_region
          %s584 = sand.u32 %s26, 1
          %s585 = scalar_lea.sflag [#allocation3], %s584
          %s586 = sand.u32 %s204, 1
          %s587 = smul.addr %s586, 96
          %s588 = scalar_lea.vmem [#allocation11], %s587
          %s590 = ssub.s32 1536, 1536
          %591 = vsyncadd %s585, %s590
          %s592 = smul.addr %s34, 24
          %s593 = smul.addr %s592, 64
          %s594 = scalar_lea.hbm %s6, %s593
          %s595 = sshll.u32 %s588, 4
          %s596 = int_to_ptr.vmem [resolvable:$true] %s595
          %601 = dma.hbm_to_vmem [thread:$0]  %s594, 1536, %s596, %s585, 64, 64, 4
        $region44: #{tpu_custom_call.1} parent=23 // pred_fallthru
          _
        // Predicated region
        $region45: #{tpu_custom_call.1} parent=23 // pred_check
          %p602 = pneg %p240
        $region46: #{tpu_custom_call.1} parent=23 // pred_check_branch
          %604 = sbr.rel (%p602) target = $region48
        $region47: #{tpu_custom_call.1} parent=23 // pred_region
          %s605 = sand.u32 %s26, 1
          %s606 = scalar_lea.sflag [#allocation3], %s605
          %s607 = sand.u32 %s230, 1
          %s608 = smul.addr %s607, 4
          %s609 = scalar_lea.vmem [#allocation12], %s608
          %s611 = ssub.s32 64, 64
          %612 = vsyncadd %s606, %s611
          %s613 = smul.addr %s34, 64
          %s614 = scalar_lea.hbm %s7, %s613
          %s616 = sshll.u32 %s609, 4
          %s617 = int_to_ptr.vmem [resolvable:$true] %s616
          %619 = dma.hbm_to_vmem [thread:$0]  %s614, 64, %s617, %s606
        $region48: #{tpu_custom_call.1} parent=23 // pred_fallthru
          _
        // Predicated region
        $region49: #{tpu_custom_call.1} parent=23 // pred_check
          %p620 = pneg %p266
        $region50: #{tpu_custom_call.1} parent=23 // pred_check_branch
          %622 = sbr.rel (%p620) target = $region52
        $region51: #{tpu_custom_call.1} parent=23 // pred_region
          %s623 = sand.u32 %s26, 1
          %s624 = scalar_lea.sflag [#allocation3], %s623
          %s625 = sand.u32 %s256, 1
          %s626 = smul.addr %s625, 96
          %s627 = scalar_lea.vmem [#allocation13], %s626
          %s629 = ssub.s32 1536, 1536
          %630 = vsyncadd %s624, %s629
          %s631 = smul.addr %s34, 24
          %s632 = smul.addr %s631, 64
          %s633 = scalar_lea.hbm %s8, %s632
          %s634 = sshll.u32 %s627, 4
          %s635 = int_to_ptr.vmem [resolvable:$true] %s634
          %640 = dma.hbm_to_vmem [thread:$0]  %s633, 1536, %s635, %s624, 64, 64, 4
        $region52: #{tpu_custom_call.1} parent=23 // pred_fallthru
          _
        // Predicated region
        $region53: #{tpu_custom_call.1} parent=23 // pred_check
          %p641 = pneg %p292
        $region54: #{tpu_custom_call.1} parent=23 // pred_check_branch
          %643 = sbr.rel (%p641) target = $region56
        $region55: #{tpu_custom_call.1} parent=23 // pred_region
          %s644 = sand.u32 %s26, 1
          %s645 = scalar_lea.sflag [#allocation3], %s644
          %s646 = sand.u32 %s282, 1
          %s647 = smul.addr %s646, 4
          %s648 = scalar_lea.vmem [#allocation14], %s647
          %s650 = ssub.s32 64, 64
          %651 = vsyncadd %s645, %s650
          %s652 = smul.addr %s34, 64
          %s653 = scalar_lea.hbm %s9, %s652
          %s655 = sshll.u32 %s648, 4
          %s656 = int_to_ptr.vmem [resolvable:$true] %s655
          %658 = dma.hbm_to_vmem [thread:$0]  %s653, 64, %s656, %s645
        $region56: #{tpu_custom_call.1} parent=23 // pred_fallthru
          _
        // Predicated region
        $region57: #{tpu_custom_call.1} parent=23 // pred_check
          %p659 = pneg %p318
        $region58: #{tpu_custom_call.1} parent=23 // pred_check_branch
          %661 = sbr.rel (%p659) target = $region60
        $region59: #{tpu_custom_call.1} parent=23 // pred_region
          %s662 = sand.u32 %s26, 1
          %s663 = scalar_lea.sflag [#allocation3], %s662
          %s664 = sand.u32 %s308, 1
          %s665 = smul.addr %s664, 64
          %s666 = scalar_lea.vmem [#allocation15], %s665
          %s668 = ssub.s32 1024, 1024
          %669 = vsyncadd %s663, %s668
          %s670 = smul.addr %s34, 16
          %s671 = smul.addr %s670, 64
          %s672 = scalar_lea.hbm %s10, %s671
          %s673 = sshll.u32 %s666, 4
          %s674 = int_to_ptr.vmem [resolvable:$true] %s673
          %679 = dma.hbm_to_vmem [thread:$0]  %s672, 1024, %s674, %s663, 128, 128, 8
        $region60: #{tpu_custom_call.1} parent=23 // pred_fallthru
          _
        // Predicated region
        $region61: #{tpu_custom_call.1} parent=23 // pred_check
          %p680 = pneg %p344
        $region62: #{tpu_custom_call.1} parent=23 // pred_check_branch
          %682 = sbr.rel (%p680) target = $region64
        $region63: #{tpu_custom_call.1} parent=23 // pred_region
          %s683 = sand.u32 %s26, 1
          %s684 = scalar_lea.sflag [#allocation3], %s683
          %s685 = sand.u32 %s334, 1
          %s686 = smul.addr %s685, 2
          %s687 = scalar_lea.vmem [#allocation16], %s686
          %s689 = ssub.s32 32, 32
          %690 = vsyncadd %s684, %s689
          %s691 = smul.addr %s34, 2
          %s692 = smul.addr %s691, 16
          %s693 = scalar_lea.hbm %s11, %s692
          %s695 = sshll.u32 %s687, 4
          %s696 = int_to_ptr.vmem [resolvable:$true] %s695
          %698 = dma.hbm_to_vmem [thread:$0]  %s693, 32, %s696, %s684
        $region64: #{tpu_custom_call.1} parent=23 // pred_fallthru
          _
        // Predicated region
        $region65: #{tpu_custom_call.1} parent=23 // pred_check
          %p699 = pneg %p370
        $region66: #{tpu_custom_call.1} parent=23 // pred_check_branch
          %701 = sbr.rel (%p699) target = $region68
        $region67: #{tpu_custom_call.1} parent=23 // pred_region
          %s702 = sand.u32 %s26, 1
          %s703 = scalar_lea.sflag [#allocation3], %s702
          %s704 = sand.u32 %s360, 1
          %s705 = smul.addr %s704, 128
          %s706 = scalar_lea.vmem [#allocation17], %s705
          %s708 = ssub.s32 2048, 2048
          %709 = vsyncadd %s703, %s708
          %s710 = smul.addr %s34, 32
          %s711 = smul.addr %s710, 64
          %s712 = scalar_lea.hbm %s12, %s711
          %s713 = sshll.u32 %s706, 4
          %s714 = int_to_ptr.vmem [resolvable:$true] %s713
          %719 = dma.hbm_to_vmem [thread:$0]  %s712, 2048, %s714, %s703, 64, 64, 4
        $region68: #{tpu_custom_call.1} parent=23 // pred_fallthru
          _
        // Predicated region
        $region69: #{tpu_custom_call.1} parent=23 // pred_check
          %p720 = pneg %p396
        $region70: #{tpu_custom_call.1} parent=23 // pred_check_branch
          %722 = sbr.rel (%p720) target = $region72
        $region71: #{tpu_custom_call.1} parent=23 // pred_region
          %s723 = sand.u32 %s26, 1
          %s724 = scalar_lea.sflag [#allocation3], %s723
          %s725 = sand.u32 %s386, 1
          %s726 = scalar_lea.vmem [#allocation18], %s725
          %s728 = ssub.s32 16, 16
          %729 = vsyncadd %s724, %s728
          %s730 = smul.addr %s34, 16
          %s731 = scalar_lea.hbm %s13, %s730
          %s733 = sshll.u32 %s726, 4
          %s734 = int_to_ptr.vmem [resolvable:$true] %s733
          %736 = dma.hbm_to_vmem [thread:$0]  %s731, 16, %s734, %s724
        $region72: #{tpu_custom_call.1} parent=23 // pred_fallthru
          _
      $region24: #{tpu_custom_call.1} parent=5 // pred_fallthru
        _
      %p737 = scmp.le.s32.totalorder 1, %s26
      %p738 = scmp.lt.s32.totalorder %s26, 3
      %p739 = pnand %p737, %p738
      %p740 = pneg %p739
      // Predicated region
      $region73: #{tpu_custom_call.1} parent=5 // pred_check
        _
      $region74: #{tpu_custom_call.1} parent=5 // pred_check_branch
        %742 = sbr.rel (%p739) target = $region76
      $region75: #{tpu_custom_call.1} parent=5 // pred_region
        %s743 = ssub.s32 %s26, 1
        // Predicated region
        $region77: #{tpu_custom_call.1} parent=75 // pred_check
          %p744 = pneg %p64
        $region78: #{tpu_custom_call.1} parent=75 // pred_check_branch
          %746 = sbr.rel (%p744) target = $region80
        $region79: #{tpu_custom_call.1} parent=75 // pred_region
          %747 = dma.done [#allocation3], 512
        $region80: #{tpu_custom_call.1} parent=75 // pred_fallthru
          _
        // Predicated region
        $region81: #{tpu_custom_call.1} parent=75 // pred_check
          %p748 = pneg %p90
        $region82: #{tpu_custom_call.1} parent=75 // pred_check_branch
          %750 = sbr.rel (%p748) target = $region84
        $region83: #{tpu_custom_call.1} parent=75 // pred_region
          %751 = dma.done [#allocation6], 128
        $region84: #{tpu_custom_call.1} parent=75 // pred_fallthru
          _
        %s752 = sand.u32 %s31, 1
        %s753 = scalar_lea.sflag [#allocation3], %s752
        %s754 = sand.u32 %s103, 1
        %s755 = smul.addr %s754, 8
        %s756 = scalar_lea.vmem [#allocation7], %s755
        // Predicated region
        $region85: #{tpu_custom_call.1} parent=75 // pred_check
          %p757 = pneg %p116
        $region86: #{tpu_custom_call.1} parent=75 // pred_check_branch
          %759 = sbr.rel (%p757) target = $region88
        $region87: #{tpu_custom_call.1} parent=75 // pred_region
          %760 = dma.done %s753, 128
        $region88: #{tpu_custom_call.1} parent=75 // pred_fallthru
          _
        %s761 = sand.u32 %s31, 1
        %s762 = scalar_lea.sflag [#allocation3], %s761
        %s763 = sand.u32 %s129, 1
        %s764 = smul.addr %s763, 8
        %s765 = scalar_lea.vmem [#allocation8], %s764
        // Predicated region
        $region89: #{tpu_custom_call.1} parent=75 // pred_check
          %p766 = pneg %p142
        $region90: #{tpu_custom_call.1} parent=75 // pred_check_branch
          %768 = sbr.rel (%p766) target = $region92
        $region91: #{tpu_custom_call.1} parent=75 // pred_region
          %769 = dma.done %s762, 128
        $region92: #{tpu_custom_call.1} parent=75 // pred_fallthru
          _
        %s770 = sand.u32 %s31, 1
        %s771 = scalar_lea.sflag [#allocation3], %s770
        %s772 = sand.u32 %s155, 1
        %s773 = smul.addr %s772, 96
        %s774 = scalar_lea.vmem [#allocation9], %s773
        // Predicated region
        $region93: #{tpu_custom_call.1} parent=75 // pred_check
          %p775 = pneg %p168
        $region94: #{tpu_custom_call.1} parent=75 // pred_check_branch
          %777 = sbr.rel (%p775) target = $region96
        $region95: #{tpu_custom_call.1} parent=75 // pred_region
          %778 = dma.done %s771, 1536
        $region96: #{tpu_custom_call.1} parent=75 // pred_fallthru
          _
        %s779 = sand.u32 %s31, 1
        %s780 = scalar_lea.sflag [#allocation3], %s779
        %s781 = sand.u32 %s181, 1
        %s782 = smul.addr %s781, 4
        %s783 = scalar_lea.vmem [#allocation10], %s782
        // Predicated region
        $region97: #{tpu_custom_call.1} parent=75 // pred_check
          %p784 = pneg %p194
        $region98: #{tpu_custom_call.1} parent=75 // pred_check_branch
          %786 = sbr.rel (%p784) target = $region100
        $region99: #{tpu_custom_call.1} parent=75 // pred_region
          %787 = dma.done %s780, 64
        $region100: #{tpu_custom_call.1} parent=75 // pred_fallthru
          _
        %s788 = sand.u32 %s31, 1
        %s789 = scalar_lea.sflag [#allocation3], %s788
        %s790 = sand.u32 %s207, 1
        %s791 = smul.addr %s790, 96
        %s792 = scalar_lea.vmem [#allocation11], %s791
        // Predicated region
        $region101: #{tpu_custom_call.1} parent=75 // pred_check
          %p793 = pneg %p220
        $region102: #{tpu_custom_call.1} parent=75 // pred_check_branch
          %795 = sbr.rel (%p793) target = $region104
        $region103: #{tpu_custom_call.1} parent=75 // pred_region
          %796 = dma.done %s789, 1536
        $region104: #{tpu_custom_call.1} parent=75 // pred_fallthru
          _
        %s797 = sand.u32 %s31, 1
        %s798 = scalar_lea.sflag [#allocation3], %s797
        %s799 = sand.u32 %s233, 1
        %s800 = smul.addr %s799, 4
        %s801 = scalar_lea.vmem [#allocation12], %s800
        // Predicated region
        $region105: #{tpu_custom_call.1} parent=75 // pred_check
          %p802 = pneg %p246
        $region106: #{tpu_custom_call.1} parent=75 // pred_check_branch
          %804 = sbr.rel (%p802) target = $region108
        $region107: #{tpu_custom_call.1} parent=75 // pred_region
          %805 = dma.done %s798, 64
        $region108: #{tpu_custom_call.1} parent=75 // pred_fallthru
          _
        %s806 = sand.u32 %s31, 1
        %s807 = scalar_lea.sflag [#allocation3], %s806
        %s808 = sand.u32 %s259, 1
        %s809 = smul.addr %s808, 96
        %s810 = scalar_lea.vmem [#allocation13], %s809
        // Predicated region
        $region109: #{tpu_custom_call.1} parent=75 // pred_check
          %p811 = pneg %p272
        $region110: #{tpu_custom_call.1} parent=75 // pred_check_branch
          %813 = sbr.rel (%p811) target = $region112
        $region111: #{tpu_custom_call.1} parent=75 // pred_region
          %814 = dma.done %s807, 1536
        $region112: #{tpu_custom_call.1} parent=75 // pred_fallthru
          _
        %s815 = sand.u32 %s31, 1
        %s816 = scalar_lea.sflag [#allocation3], %s815
        %s817 = sand.u32 %s285, 1
        %s818 = smul.addr %s817, 4
        %s819 = scalar_lea.vmem [#allocation14], %s818
        // Predicated region
        $region113: #{tpu_custom_call.1} parent=75 // pred_check
          %p820 = pneg %p298
        $region114: #{tpu_custom_call.1} parent=75 // pred_check_branch
          %822 = sbr.rel (%p820) target = $region116
        $region115: #{tpu_custom_call.1} parent=75 // pred_region
          %823 = dma.done %s816, 64
        $region116: #{tpu_custom_call.1} parent=75 // pred_fallthru
          _
        %s824 = sand.u32 %s31, 1
        %s825 = scalar_lea.sflag [#allocation3], %s824
        %s826 = sand.u32 %s311, 1
        %s827 = smul.addr %s826, 64
        %s828 = scalar_lea.vmem [#allocation15], %s827
        // Predicated region
        $region117: #{tpu_custom_call.1} parent=75 // pred_check
          %p829 = pneg %p324
        $region118: #{tpu_custom_call.1} parent=75 // pred_check_branch
          %831 = sbr.rel (%p829) target = $region120
        $region119: #{tpu_custom_call.1} parent=75 // pred_region
          %832 = dma.done %s825, 1024
        $region120: #{tpu_custom_call.1} parent=75 // pred_fallthru
          _
        %s833 = sand.u32 %s31, 1
        %s834 = scalar_lea.sflag [#allocation3], %s833
        %s835 = sand.u32 %s337, 1
        %s836 = smul.addr %s835, 2
        %s837 = scalar_lea.vmem [#allocation16], %s836
        // Predicated region
        $region121: #{tpu_custom_call.1} parent=75 // pred_check
          %p838 = pneg %p350
        $region122: #{tpu_custom_call.1} parent=75 // pred_check_branch
          %840 = sbr.rel (%p838) target = $region124
        $region123: #{tpu_custom_call.1} parent=75 // pred_region
          %841 = dma.done %s834, 32
        $region124: #{tpu_custom_call.1} parent=75 // pred_fallthru
          _
        %s842 = sand.u32 %s31, 1
        %s843 = scalar_lea.sflag [#allocation3], %s842
        %s844 = sand.u32 %s363, 1
        %s845 = smul.addr %s844, 128
        %s846 = scalar_lea.vmem [#allocation17], %s845
        // Predicated region
        $region125: #{tpu_custom_call.1} parent=75 // pred_check
          %p847 = pneg %p376
        $region126: #{tpu_custom_call.1} parent=75 // pred_check_branch
          %849 = sbr.rel (%p847) target = $region128
        $region127: #{tpu_custom_call.1} parent=75 // pred_region
          %850 = dma.done %s843, 2048
        $region128: #{tpu_custom_call.1} parent=75 // pred_fallthru
          _
        %s851 = sand.u32 %s31, 1
        %s852 = scalar_lea.sflag [#allocation3], %s851
        %s853 = sand.u32 %s389, 1
        %s854 = scalar_lea.vmem [#allocation18], %s853
        // Predicated region
        $region129: #{tpu_custom_call.1} parent=75 // pred_check
          %p855 = pneg %p402
        $region130: #{tpu_custom_call.1} parent=75 // pred_check_branch
          %857 = sbr.rel (%p855) target = $region132
        $region131: #{tpu_custom_call.1} parent=75 // pred_region
          %858 = dma.done %s852, 16
        $region132: #{tpu_custom_call.1} parent=75 // pred_fallthru
          _
        %p859 = pneg %p64
        %p860 = pneg %p61
        %p861 = pneg %p90
        %p862 = pneg %p87
        %s863 = sand.u32 %s31, 1
        %s864 = scalar_lea.sflag [#allocation3], %s863
        %s865 = sand.u32 %s103, 1
        %s866 = smul.addr %s865, 8
        %s867 = scalar_lea.vmem [#allocation7], %s866
        %p868 = pneg %p116
        %p869 = pneg %p113
        %s870 = sand.u32 %s31, 1
        %s871 = scalar_lea.sflag [#allocation3], %s870
        %s872 = sand.u32 %s129, 1
        %s873 = smul.addr %s872, 8
        %s874 = scalar_lea.vmem [#allocation8], %s873
        %p875 = pneg %p142
        %p876 = pneg %p139
        %s877 = sand.u32 %s31, 1
        %s878 = scalar_lea.sflag [#allocation3], %s877
        %s879 = sand.u32 %s155, 1
        %s880 = smul.addr %s879, 96
        %s881 = scalar_lea.vmem [#allocation9], %s880
        %p882 = pneg %p168
        %p883 = pneg %p165
        %s884 = sand.u32 %s31, 1
        %s885 = scalar_lea.sflag [#allocation3], %s884
        %s886 = sand.u32 %s181, 1
        %s887 = smul.addr %s886, 4
        %s888 = scalar_lea.vmem [#allocation10], %s887
        %p889 = pneg %p194
        %p890 = pneg %p191
        %s891 = sand.u32 %s31, 1
        %s892 = scalar_lea.sflag [#allocation3], %s891
        %s893 = sand.u32 %s207, 1
        %s894 = smul.addr %s893, 96
        %s895 = scalar_lea.vmem [#allocation11], %s894
        %p896 = pneg %p220
        %p897 = pneg %p217
        %s898 = sand.u32 %s31, 1
        %s899 = scalar_lea.sflag [#allocation3], %s898
        %s900 = sand.u32 %s233, 1
        %s901 = smul.addr %s900, 4
        %s902 = scalar_lea.vmem [#allocation12], %s901
        %p903 = pneg %p246
        %p904 = pneg %p243
        %s905 = sand.u32 %s31, 1
        %s906 = scalar_lea.sflag [#allocation3], %s905
        %s907 = sand.u32 %s259, 1
        %s908 = smul.addr %s907, 96
        %s909 = scalar_lea.vmem [#allocation13], %s908
        %p910 = pneg %p272
        %p911 = pneg %p269
        %s912 = sand.u32 %s31, 1
        %s913 = scalar_lea.sflag [#allocation3], %s912
        %s914 = sand.u32 %s285, 1
        %s915 = smul.addr %s914, 4
        %s916 = scalar_lea.vmem [#allocation14], %s915
        %p917 = pneg %p298
        %p918 = pneg %p295
        %s919 = sand.u32 %s31, 1
        %s920 = scalar_lea.sflag [#allocation3], %s919
        %s921 = sand.u32 %s311, 1
        %s922 = smul.addr %s921, 64
        %s923 = scalar_lea.vmem [#allocation15], %s922
        %p924 = pneg %p324
        %p925 = pneg %p321
        %s926 = sand.u32 %s31, 1
        %s927 = scalar_lea.sflag [#allocation3], %s926
        %s928 = sand.u32 %s337, 1
        %s929 = smul.addr %s928, 2
        %s930 = scalar_lea.vmem [#allocation16], %s929
        %p931 = pneg %p350
        %p932 = pneg %p347
        %s933 = sand.u32 %s31, 1
        %s934 = scalar_lea.sflag [#allocation3], %s933
        %s935 = sand.u32 %s363, 1
        %s936 = smul.addr %s935, 128
        %s937 = scalar_lea.vmem [#allocation17], %s936
        %p938 = pneg %p376
        %p939 = pneg %p373
        %s940 = sand.u32 %s31, 1
        %s941 = scalar_lea.sflag [#allocation3], %s940
        %s942 = sand.u32 %s389, 1
        %s943 = scalar_lea.vmem [#allocation18], %s942
        %p944 = pneg %p402
        %p945 = pneg %p399
        %p946 = pneg %p428
        %p947 = pneg %p425
        %p948 = pneg %p454
        %p949 = pneg %p451
        %s950 = smul.u32 2, %s35
        %s951 = smul.u32 2, %s35
        %s952 = smul.u32 2, %s35
        %s953 = smul.u32 2, %s35
        %p955 = scmp.eq.s32.totalorder %s36, 0
        // Predicated region
        $region133: #{tpu_custom_call.1} parent=75 // pred_check
          %p956 = pneg %p955
        $region134: #{tpu_custom_call.1} parent=75 // pred_check_branch
          %958 = sbr.rel (%p956) target = $region136
        $region135: #{tpu_custom_call.1} parent=75 // pred_region
          %v959 = vld [vmem:[#allocation2] sm:$0xff]
          %v960 = vld [vmem:[#allocation2 + $0x8] sm:$0xff]
          %v961 = vld [vmem:[#allocation2 + $0x10] sm:$0xff]
          %v962 = vld [vmem:[#allocation2 + $0x18] sm:$0xff]
          %vm963 = vcmask 523264
          %964 = vst.msk [vmem:[#allocation19] sm:$0xff] %vm963, %v959
          %965 = vst.msk [vmem:[#allocation19 + $0x8] sm:$0xff] %vm963, %v960
          %966 = vst.msk [vmem:[#allocation19 + $0x10] sm:$0xff] %vm963, %v961
          %967 = vst.msk [vmem:[#allocation19 + $0x18] sm:$0xff] %vm963, %v962
          %v968 = vld [vmem:[#allocation5] sm:$0xf]
          %v969 = vld [vmem:[#allocation5 + $0x4] sm:$0xf]
          %vm970 = vcmask 519168
          %971 = vst.msk [vmem:[#allocation20] sm:$0xf] %vm970, %v968
          %972 = vst.msk [vmem:[#allocation20 + $0x4] sm:$0xf] %vm970, %v969
        $region136: #{tpu_custom_call.1} parent=75 // pred_fallthru
          _
        %v973 = vld [vmem:[#allocation19] sm:$0xff]
        %v974 = vld [vmem:[#allocation19 + $0x8] sm:$0xff]
        %v975 = vld [vmem:[#allocation19 + $0x10] sm:$0xff]
        %v976 = vld [vmem:[#allocation19 + $0x18] sm:$0xff]
        %v977 = vld [vmem:[#allocation20] sm:$0xf]
        %v978 = vld [vmem:[#allocation20 + $0x4] sm:$0xf]
        %v979 = vld [vmem:[%s756] sm:$0x1]
        %v980 = vld [vmem:[%s765] sm:$0x1]
        %vm981 = vcmask 523264
        %v982 = vsel %vm981, %v973, 0.0
        %983 = vadd.xlane.f32.xlu0 %v982
        %v984 = vpop.xlane.xlu0 %983
        %v985 = vsel %vm981, %v974, 0.0
        %986 = vadd.xlane.f32.xlu0 %v985
        %v987 = vpop.xlane.xlu0 %986
        %v988 = vsel %vm981, %v975, 0.0
        %989 = vadd.xlane.f32.xlu0 %v988
        %v990 = vpop.xlane.xlu0 %989
        %v991 = vsel %vm981, %v976, 0.0
        %992 = vadd.xlane.f32.xlu0 %v991
        %v993 = vpop.xlane.xlu0 %992
        %v994 = vrcp.pop 64.0
        %v995 = vmul.f32 %v984, %v994
        %v996 = vmul.f32 %v987, %v994
        %v997 = vmul.f32 %v990, %v994
        %v998 = vmul.f32 %v993, %v994
        %v999 = vsub.f32 %v973, %v995
        %v1000 = vsub.f32 %v974, %v996
        %v1001 = vsub.f32 %v975, %v997
        %v1002 = vsub.f32 %v976, %v998
        %v1003 = vmul.f32 %v999, %v999
        %v1004 = vmul.f32 %v1000, %v1000
        %v1005 = vmul.f32 %v1001, %v1001
        %v1006 = vmul.f32 %v1002, %v1002
        %v1007 = vsel %vm981, %v1003, 0.0
        %1008 = vadd.xlane.f32.xlu0 %v1007
        %v1009 = vpop.xlane.xlu0 %1008
        %v1010 = vsel %vm981, %v1004, 0.0
        %1011 = vadd.xlane.f32.xlu0 %v1010
        %v1012 = vpop.xlane.xlu0 %1011
        %v1013 = vsel %vm981, %v1005, 0.0
        %1014 = vadd.xlane.f32.xlu0 %v1013
        %v1015 = vpop.xlane.xlu0 %1014
        %v1016 = vsel %vm981, %v1006, 0.0
        %1017 = vadd.xlane.f32.xlu0 %v1016
        %v1018 = vpop.xlane.xlu0 %1017
        %v1019 = vmul.f32 %v1009, %v994
        %v1020 = vmul.f32 %v1012, %v994
        %v1021 = vmul.f32 %v1015, %v994
        %v1022 = vmul.f32 %v1018, %v994
        %v1023 = vadd.f32 %v1019, 1e-05
        %v1024 = vadd.f32 %v1020, 1e-05
        %v1025 = vadd.f32 %v1021, 1e-05
        %v1026 = vadd.f32 %v1022, 1e-05
        %v1027 = vrsqrt.pop %v1023
        %v1028 = vrsqrt.pop %v1024
        %v1029 = vrsqrt.pop %v1025
        %v1030 = vrsqrt.pop %v1026
        %v1031 = vmul.f32 %v999, %v1027
        %v1032 = vmul.f32 %v1000, %v1028
        %v1033 = vmul.f32 %v1001, %v1029
        %v1034 = vmul.f32 %v1002, %v1030
        %v1035 = vlaneseq
        %v1036 = vshrl.u32 %v1035, 7
        %v1037 = vsub.s32 0, %v1036
        %v1038 = vrot.slane %v979, %v1037
        %v1039 = vmul.f32 %v1031, %v1038
        %v1040 = vmul.f32 %v1032, %v1038
        %v1041 = vmul.f32 %v1033, %v1038
        %v1042 = vmul.f32 %v1034, %v1038
        %v1043 = vlaneseq
        %v1044 = vshrl.u32 %v1043, 7
        %v1045 = vsub.s32 0, %v1044
        %v1046 = vrot.slane %v980, %v1045
        %v1047 = vadd.f32 %v1039, %v1046
        %v1048 = vadd.f32 %v1040, %v1046
        %v1049 = vadd.f32 %v1041, %v1046
        %v1050 = vadd.f32 %v1042, %v1046
        %v1051 = vld [vmem:[%s774] sm:$0xf]
        %v1052 = vld [vmem:[%s774 + $0x4] sm:$0xf]
        %v1053 = vld [vmem:[%s774 + $0x8] sm:$0xf]
        %v1054 = vld [vmem:[%s774 + $0xc] sm:$0xf]
        %v1055 = vld [vmem:[%s774 + $0x10] sm:$0xf]
        %v1056 = vld [vmem:[%s774 + $0x14] sm:$0xf]
        %v1057 = vld [vmem:[%s774 + $0x18] sm:$0xf]
        %v1058 = vld [vmem:[%s774 + $0x1c] sm:$0xf]
        %v1059 = vpack.c.bf16 %v1048, %v1047
        %v1060 = vpack.c.bf16 %v1050, %v1049
        %v1061 = vld [vmem:[%s783] sm:$0x1]
        %v1062 = vlaneseq
        %v1063 = vshrl.u32 %v1062, 7
        %v1064 = vsub.s32 0, %v1063
        %v1065 = vrot.slane %v1061, %v1064
        %v1074 = vunpack.c.l.b16 %v1051
        %v1075 = vunpack.c.l.b16 %v1052
        %v1076 = vunpack.c.l.b16 %v1053
        %v1077 = vunpack.c.l.b16 %v1054
        %v1078 = vunpack.c.l.b16 %v1055
        %v1079 = vunpack.c.l.b16 %v1056
        %v1080 = vunpack.c.l.b16 %v1057
        %v1081 = vunpack.c.l.b16 %v1058
        %v1082 = vpack.c.b16 %v1075, %v1074
        %v1083 = vpack.c.b16 %v1077, %v1076
        %v1084 = vpack.c.b16 %v1079, %v1078
        %v1085 = vpack.c.b16 %v1081, %v1080
        %v1091 = vsel %vm981, %v1059, 0
        %v1094 = vsel %vm981, %v1060, 0
        %1096 = vmatprep.subr.bf16.mxu0 0
        %1097 = vmatpush1.bf16.msra.mxu0 %v1082
        %1098 = vmatprep.subr.bf16.mxu0 0
        %1099 = vmatpush1.bf16.msra.mxu0 %v1083
        %1100 = vmatprep.subr.bf16.mxu0 0
        %1101 = vmatpush1.bf16.msra.mxu0 %v1084
        %1102 = vmatprep.subr.bf16.mxu0 0
        %1103 = vmatpush1.bf16.msra.mxu0 %v1085
        %1104 = vmatprep.subr.bf16.mxu0 0
        %1105 = vmatpush1.bf16.msra.mxu0 0
        %1106 = vmatprep.subr.bf16.mxu0 0
        %1107 = vmatpush1.bf16.msra.mxu0 0
        %1108 = vmatprep.subr.bf16.mxu0 0
        %1109 = vmatpush1.bf16.msra.mxu0 0
        %1110 = vmatprep.subr.bf16.mxu0 0
        %1111 = vmatpush1.bf16.msra.mxu0 0
        %1112 = vmatprep.subr.bf16.mxu0 0
        %1113 = vmatpush1.bf16.msra.mxu0 0
        %1114 = vmatprep.subr.bf16.mxu0 0
        %1115 = vmatpush1.bf16.msra.mxu0 0
        %1116 = vmatprep.subr.bf16.mxu0 0
        %1117 = vmatpush1.bf16.msra.mxu0 0
        %1118 = vmatprep.subr.bf16.mxu0 0
        %1119 = vmatpush1.bf16.msra.mxu0 0
        %1120 = vmatprep.subr.bf16.mxu0 0
        %1121 = vmatpush1.bf16.msra.mxu0 0
        %1122 = vmatprep.subr.bf16.mxu0 0
        %1123 = vmatpush1.bf16.msra.mxu0 0
        %1124 = vmatprep.subr.bf16.mxu0 0
        %1125 = vmatpush1.bf16.msra.mxu0 0
        %1126 = vmatprep.subr.bf16.mxu0 0
        %1127 = vmatpush1.bf16.msra.mxu0 0
        %1128 = vmatprep.mubr.bf16.mxu0 0
        %1129 = vmatmul.mubr.bf16.gmra.mrb[0].mxu0 %v1091
        %v1130 = vpop.f32.mrb[0].mxu0
        %v1131 = vadd.f32 %v1065, %v1130
        %v1132 = vpop.f32.mrb[0].mxu0
        %v1133 = vpop.f32.mrb[0].mxu0
        %v1134 = vadd.f32 %v1065, %v1133
        %v1135 = vpop.f32.mrb[0].mxu0
        %1136 = vmatprep.mubr.bf16.mxu0 0
        %1137 = vmatmul.mubr.bf16.gmra.mrb[0].mxu0 %v1094
        %v1138 = vpop.f32.mrb[0].mxu0
        %v1139 = vadd.f32 %v1065, %v1138
        %v1140 = vpop.f32.mrb[0].mxu0
        %v1141 = vpop.f32.mrb[0].mxu0
        %v1142 = vadd.f32 %v1065, %v1141
        %v1143 = vpop.f32.mrb[0].mxu0
        %1144 = vdwg.mxu0
        %v1145 = vld [vmem:[%s792] sm:$0xf]
        %v1146 = vld [vmem:[%s792 + $0x4] sm:$0xf]
        %v1147 = vld [vmem:[%s792 + $0x8] sm:$0xf]
        %v1148 = vld [vmem:[%s792 + $0xc] sm:$0xf]
        %v1149 = vld [vmem:[%s792 + $0x10] sm:$0xf]
        %v1150 = vld [vmem:[%s792 + $0x14] sm:$0xf]
        %v1151 = vld [vmem:[%s792 + $0x18] sm:$0xf]
        %v1152 = vld [vmem:[%s792 + $0x1c] sm:$0xf]
        %v1153 = vld [vmem:[%s801] sm:$0x1]
        %v1154 = vlaneseq
        %v1155 = vshrl.u32 %v1154, 7
        %v1156 = vsub.s32 0, %v1155
        %v1157 = vrot.slane %v1153, %v1156
        %v1166 = vunpack.c.l.b16 %v1145
        %v1167 = vunpack.c.l.b16 %v1146
        %v1168 = vunpack.c.l.b16 %v1147
        %v1169 = vunpack.c.l.b16 %v1148
        %v1170 = vunpack.c.l.b16 %v1149
        %v1171 = vunpack.c.l.b16 %v1150
        %v1172 = vunpack.c.l.b16 %v1151
        %v1173 = vunpack.c.l.b16 %v1152
        %v1174 = vpack.c.b16 %v1167, %v1166
        %v1175 = vpack.c.b16 %v1169, %v1168
        %v1176 = vpack.c.b16 %v1171, %v1170
        %v1177 = vpack.c.b16 %v1173, %v1172
        %1182 = vmatprep.subr.bf16.mxu0 0
        %1183 = vmatpush1.bf16.msra.mxu0 %v1174
        %1184 = vmatprep.subr.bf16.mxu0 0
        %1185 = vmatpush1.bf16.msra.mxu0 %v1175
        %1186 = vmatprep.subr.bf16.mxu0 0
        %1187 = vmatpush1.bf16.msra.mxu0 %v1176
        %1188 = vmatprep.subr.bf16.mxu0 0
        %1189 = vmatpush1.bf16.msra.mxu0 %v1177
        %1190 = vmatprep.subr.bf16.mxu0 0
        %1191 = vmatpush1.bf16.msra.mxu0 0
        %1192 = vmatprep.subr.bf16.mxu0 0
        %1193 = vmatpush1.bf16.msra.mxu0 0
        %1194 = vmatprep.subr.bf16.mxu0 0
        %1195 = vmatpush1.bf16.msra.mxu0 0
        %1196 = vmatprep.subr.bf16.mxu0 0
        %1197 = vmatpush1.bf16.msra.mxu0 0
        %1198 = vmatprep.subr.bf16.mxu0 0
        %1199 = vmatpush1.bf16.msra.mxu0 0
        %1200 = vmatprep.subr.bf16.mxu0 0
        %1201 = vmatpush1.bf16.msra.mxu0 0
        %1202 = vmatprep.subr.bf16.mxu0 0
        %1203 = vmatpush1.bf16.msra.mxu0 0
        %1204 = vmatprep.subr.bf16.mxu0 0
        %1205 = vmatpush1.bf16.msra.mxu0 0
        %1206 = vmatprep.subr.bf16.mxu0 0
        %1207 = vmatpush1.bf16.msra.mxu0 0
        %1208 = vmatprep.subr.bf16.mxu0 0
        %1209 = vmatpush1.bf16.msra.mxu0 0
        %1210 = vmatprep.subr.bf16.mxu0 0
        %1211 = vmatpush1.bf16.msra.mxu0 0
        %1212 = vmatprep.subr.bf16.mxu0 0
        %1213 = vmatpush1.bf16.msra.mxu0 0
        %1214 = vmatprep.mubr.bf16.mxu0 0
        %1215 = vmatmul.mubr.bf16.gmra.mrb[0].mxu0 %v1091
        %v1216 = vpop.f32.mrb[0].mxu0
        %v1217 = vadd.f32 %v1157, %v1216
        %v1218 = vpop.f32.mrb[0].mxu0
        %v1219 = vpop.f32.mrb[0].mxu0
        %v1220 = vadd.f32 %v1157, %v1219
        %v1221 = vpop.f32.mrb[0].mxu0
        %1222 = vmatprep.mubr.bf16.mxu0 0
        %1223 = vmatmul.mubr.bf16.gmra.mrb[0].mxu0 %v1094
        %v1224 = vpop.f32.mrb[0].mxu0
        %v1225 = vadd.f32 %v1157, %v1224
        %v1226 = vpop.f32.mrb[0].mxu0
        %v1227 = vpop.f32.mrb[0].mxu0
        %v1228 = vadd.f32 %v1157, %v1227
        %v1229 = vpop.f32.mrb[0].mxu0
        %1230 = vdwg.mxu0
        %1233 = vrot.lane.b32.xlu0 %v1131, 96
        %v1234 = vpop.permute.xlu0 %1233
        %1235 = vrot.lane.b32.xlu0 %v1134, 96
        %v1236 = vpop.permute.xlu0 %1235
        %1239 = vrot.lane.b32.xlu0 %v1217, 96
        %v1240 = vpop.permute.xlu0 %1239
        %1241 = vrot.lane.b32.xlu0 %v1220, 96
        %v1242 = vpop.permute.xlu0 %1241
        %1245 = vxpose.xlu0.b32.start [1/16] %v1217, 128
        %1246 = vxpose.xlu0.b32.cont [2/16] %v1220, 128
        %1247 = vxpose.xlu0.b32.cont [3/16] 0.0, 128
        %1248 = vxpose.xlu0.b32.cont [4/16] 0.0, 128
        %1249 = vxpose.xlu0.b32.cont [5/16] 0.0, 128
        %1250 = vxpose.xlu0.b32.cont [6/16] 0.0, 128
        %1251 = vxpose.xlu0.b32.cont [7/16] 0.0, 128
        %1252 = vxpose.xlu0.b32.cont [8/16] 0.0, 128
        %1253 = vxpose.xlu0.b32.cont [9/16] 0.0, 128
        %1254 = vxpose.xlu0.b32.cont [10/16] 0.0, 128
        %1255 = vxpose.xlu0.b32.cont [11/16] 0.0, 128
        %1256 = vxpose.xlu0.b32.cont [12/16] 0.0, 128
        %1257 = vxpose.xlu0.b32.cont [13/16] 0.0, 128
        %1258 = vxpose.xlu0.b32.cont [14/16] 0.0, 128
        %1259 = vxpose.xlu0.b32.cont [15/16] 0.0, 128
        %1260 = vxpose.xlu0.b32.end [16/16] 0.0, 128
        %v1261 = vpop.trf.xlu0
        %v1262 = vpop.trf.xlu0
        %v1263 = vpop.trf.xlu0
        %v1264 = vpop.trf.xlu0
        %v1265 = vpop.trf.xlu0
        %v1266 = vpop.trf.xlu0
        %v1267 = vpop.trf.xlu0
        %v1268 = vpop.trf.xlu0
        %v1269 = vpop.trf.xlu0
        %v1270 = vpop.trf.xlu0
        %v1271 = vpop.trf.xlu0
        %v1272 = vpop.trf.xlu0
        %v1273 = vpop.trf.xlu0
        %v1274 = vpop.trf.xlu0
        %v1275 = vpop.trf.xlu0
        %v1276 = vpop.trf.xlu0
        %1277 = vxpose.xlu0.b32.start [1/16] %v1240, 128
        %1278 = vxpose.xlu0.b32.cont [2/16] %v1242, 128
        %1279 = vxpose.xlu0.b32.cont [3/16] 0.0, 128
        %1280 = vxpose.xlu0.b32.cont [4/16] 0.0, 128
        %1281 = vxpose.xlu0.b32.cont [5/16] 0.0, 128
        %1282 = vxpose.xlu0.b32.cont [6/16] 0.0, 128
        %1283 = vxpose.xlu0.b32.cont [7/16] 0.0, 128
        %1284 = vxpose.xlu0.b32.cont [8/16] 0.0, 128
        %1285 = vxpose.xlu0.b32.cont [9/16] 0.0, 128
        %1286 = vxpose.xlu0.b32.cont [10/16] 0.0, 128
        %1287 = vxpose.xlu0.b32.cont [11/16] 0.0, 128
        %1288 = vxpose.xlu0.b32.cont [12/16] 0.0, 128
        %1289 = vxpose.xlu0.b32.cont [13/16] 0.0, 128
        %1290 = vxpose.xlu0.b32.cont [14/16] 0.0, 128
        %1291 = vxpose.xlu0.b32.cont [15/16] 0.0, 128
        %1292 = vxpose.xlu0.b32.end [16/16] 0.0, 128
        %v1293 = vpop.trf.xlu0
        %v1294 = vpop.trf.xlu0
        %v1295 = vpop.trf.xlu0
        %v1296 = vpop.trf.xlu0
        %v1297 = vpop.trf.xlu0
        %v1298 = vpop.trf.xlu0
        %v1299 = vpop.trf.xlu0
        %v1300 = vpop.trf.xlu0
        %v1301 = vpop.trf.xlu0
        %v1302 = vpop.trf.xlu0
        %v1303 = vpop.trf.xlu0
        %v1304 = vpop.trf.xlu0
        %v1305 = vpop.trf.xlu0
        %v1306 = vpop.trf.xlu0
        %v1307 = vpop.trf.xlu0
        %v1308 = vpop.trf.xlu0
        %vm1309 = vcmask 261120
        %v1310 = vsel %vm1309, %v1131, 0
        %v1312 = vsel %vm1309, %v1134, 0
        %1314 = vmatprep.subr.mxu0 0.0
        %1315 = vmatpush1.msra.mxu0 %v1261
        %1316 = vmatprep.subr.mxu0 0.0
        %1317 = vmatpush1.msra.mxu0 %v1262
        %1318 = vmatprep.subr.mxu0 0.0
        %1319 = vmatpush1.msra.mxu0 %v1263
        %1320 = vmatprep.subr.mxu0 0.0
        %1321 = vmatpush1.msra.mxu0 %v1264
        %1322 = vmatprep.subr.mxu0 0.0
        %1323 = vmatpush1.msra.mxu0 0.0
        %1324 = vmatprep.subr.mxu0 0.0
        %1325 = vmatpush1.msra.mxu0 0.0
        %1326 = vmatprep.subr.mxu0 0.0
        %1327 = vmatpush1.msra.mxu0 0.0
        %1328 = vmatprep.subr.mxu0 0.0
        %1329 = vmatpush1.msra.mxu0 0.0
        %1330 = vmatprep.subr.mxu0 0.0
        %1331 = vmatpush1.msra.mxu0 0.0
        %1332 = vmatprep.subr.mxu0 0.0
        %1333 = vmatpush1.msra.mxu0 0.0
        %1334 = vmatprep.subr.mxu0 0.0
        %1335 = vmatpush1.msra.mxu0 0.0
        %1336 = vmatprep.subr.mxu0 0.0
        %1337 = vmatpush1.msra.mxu0 0.0
        %1338 = vmatprep.subr.mxu0 0.0
        %1339 = vmatpush1.msra.mxu0 0.0
        %1340 = vmatprep.subr.mxu0 0.0
        %1341 = vmatpush1.msra.mxu0 0.0
        %1342 = vmatprep.subr.mxu0 0.0
        %1343 = vmatpush1.msra.mxu0 0.0
        %1344 = vmatprep.subr.mxu0 0.0
        %1345 = vmatpush1.msra.mxu0 0.0
        %1346 = vmatprep.subr.mxu0 0.0
        %1347 = vmatpush1.msra.mxu0 0.0
        %1348 = vmatprep.subr.mxu0 0.0
        %1349 = vmatpush1.msra.mxu0 0.0
        %1350 = vmatprep.subr.mxu0 0.0
        %1351 = vmatpush1.msra.mxu0 0.0
        %1352 = vmatprep.subr.mxu0 0.0
        %1353 = vmatpush1.msra.mxu0 0.0
        %1354 = vmatprep.subr.mxu0 0.0
        %1355 = vmatpush1.msra.mxu0 0.0
        %1356 = vmatprep.subr.mxu0 0.0
        %1357 = vmatpush1.msra.mxu0 0.0
        %1358 = vmatprep.subr.mxu0 0.0
        %1359 = vmatpush1.msra.mxu0 0.0
        %1360 = vmatprep.subr.mxu0 0.0
        %1361 = vmatpush1.msra.mxu0 0.0
        %1362 = vmatprep.subr.mxu0 0.0
        %1363 = vmatpush1.msra.mxu0 0.0
        %1364 = vmatprep.subr.mxu0 0.0
        %1365 = vmatpush1.msra.mxu0 0.0
        %1366 = vmatprep.subr.mxu0 0.0
        %1367 = vmatpush1.msra.mxu0 0.0
        %1368 = vmatprep.subr.mxu0 0.0
        %1369 = vmatpush1.msra.mxu0 0.0
        %1370 = vmatprep.subr.mxu0 0.0
        %1371 = vmatpush1.msra.mxu0 0.0
        %1372 = vmatprep.subr.mxu0 0.0
        %1373 = vmatpush1.msra.mxu0 0.0
        %1374 = vmatprep.subr.mxu0 0.0
        %1375 = vmatpush1.msra.mxu0 0.0
        %1376 = vmatprep.subr.mxu0 0.0
        %1377 = vmatpush1.msra.mxu0 0.0
        %1378 = vmatprep.mubr.f32.mxu0 0.0
        %1379 = vmatmul.mubr.f32.gmra.mrb[0].mxu0 %v1310
        %v1380 = vpop.f32.mrb[0].mxu0
        %v1381 = vadd.f32 0.0, %v1380
        %v1382 = vpop.f32.mrb[0].mxu0
        %1383 = vmatprep.mubr.f32.mxu0 0.0
        %1384 = vmatmul.mubr.f32.gmra.mrb[0].mxu0 %v1312
        %v1385 = vpop.f32.mrb[0].mxu0
        %v1386 = vadd.f32 0.0, %v1385
        %v1387 = vpop.f32.mrb[0].mxu0
        %1388 = vdwg.mxu0
        %v1389 = vsel %vm1309, %v1234, 0
        %v1391 = vsel %vm1309, %v1236, 0
        %1393 = vmatprep.subr.mxu0 0.0
        %1394 = vmatpush1.msra.mxu0 %v1293
        %1395 = vmatprep.subr.mxu0 0.0
        %1396 = vmatpush1.msra.mxu0 %v1294
        %1397 = vmatprep.subr.mxu0 0.0
        %1398 = vmatpush1.msra.mxu0 %v1295
        %1399 = vmatprep.subr.mxu0 0.0
        %1400 = vmatpush1.msra.mxu0 %v1296
        %1401 = vmatprep.subr.mxu0 0.0
        %1402 = vmatpush1.msra.mxu0 0.0
        %1403 = vmatprep.subr.mxu0 0.0
        %1404 = vmatpush1.msra.mxu0 0.0
        %1405 = vmatprep.subr.mxu0 0.0
        %1406 = vmatpush1.msra.mxu0 0.0
        %1407 = vmatprep.subr.mxu0 0.0
        %1408 = vmatpush1.msra.mxu0 0.0
        %1409 = vmatprep.subr.mxu0 0.0
        %1410 = vmatpush1.msra.mxu0 0.0
        %1411 = vmatprep.subr.mxu0 0.0
        %1412 = vmatpush1.msra.mxu0 0.0
        %1413 = vmatprep.subr.mxu0 0.0
        %1414 = vmatpush1.msra.mxu0 0.0
        %1415 = vmatprep.subr.mxu0 0.0
        %1416 = vmatpush1.msra.mxu0 0.0
        %1417 = vmatprep.subr.mxu0 0.0
        %1418 = vmatpush1.msra.mxu0 0.0
        %1419 = vmatprep.subr.mxu0 0.0
        %1420 = vmatpush1.msra.mxu0 0.0
        %1421 = vmatprep.subr.mxu0 0.0
        %1422 = vmatpush1.msra.mxu0 0.0
        %1423 = vmatprep.subr.mxu0 0.0
        %1424 = vmatpush1.msra.mxu0 0.0
        %1425 = vmatprep.subr.mxu0 0.0
        %1426 = vmatpush1.msra.mxu0 0.0
        %1427 = vmatprep.subr.mxu0 0.0
        %1428 = vmatpush1.msra.mxu0 0.0
        %1429 = vmatprep.subr.mxu0 0.0
        %1430 = vmatpush1.msra.mxu0 0.0
        %1431 = vmatprep.subr.mxu0 0.0
        %1432 = vmatpush1.msra.mxu0 0.0
        %1433 = vmatprep.subr.mxu0 0.0
        %1434 = vmatpush1.msra.mxu0 0.0
        %1435 = vmatprep.subr.mxu0 0.0
        %1436 = vmatpush1.msra.mxu0 0.0
        %1437 = vmatprep.subr.mxu0 0.0
        %1438 = vmatpush1.msra.mxu0 0.0
        %1439 = vmatprep.subr.mxu0 0.0
        %1440 = vmatpush1.msra.mxu0 0.0
        %1441 = vmatprep.subr.mxu0 0.0
        %1442 = vmatpush1.msra.mxu0 0.0
        %1443 = vmatprep.subr.mxu0 0.0
        %1444 = vmatpush1.msra.mxu0 0.0
        %1445 = vmatprep.subr.mxu0 0.0
        %1446 = vmatpush1.msra.mxu0 0.0
        %1447 = vmatprep.subr.mxu0 0.0
        %1448 = vmatpush1.msra.mxu0 0.0
        %1449 = vmatprep.subr.mxu0 0.0
        %1450 = vmatpush1.msra.mxu0 0.0
        %1451 = vmatprep.subr.mxu0 0.0
        %1452 = vmatpush1.msra.mxu0 0.0
        %1453 = vmatprep.subr.mxu0 0.0
        %1454 = vmatpush1.msra.mxu0 0.0
        %1455 = vmatprep.subr.mxu0 0.0
        %1456 = vmatpush1.msra.mxu0 0.0
        %1457 = vmatprep.mubr.f32.mxu0 0.0
        %1458 = vmatmul.mubr.f32.gmra.mrb[0].mxu0 %v1389
        %v1459 = vpop.f32.mrb[0].mxu0
        %v1460 = vadd.f32 0.0, %v1459
        %v1461 = vpop.f32.mrb[0].mxu0
        %1462 = vmatprep.mubr.f32.mxu0 0.0
        %1463 = vmatmul.mubr.f32.gmra.mrb[0].mxu0 %v1391
        %v1464 = vpop.f32.mrb[0].mxu0
        %v1465 = vadd.f32 0.0, %v1464
        %v1466 = vpop.f32.mrb[0].mxu0
        %1467 = vdwg.mxu0
        %v1468 = vmul.f32 %v1381, 0.17677669
        %v1469 = vmul.f32 %v1386, 0.17677669
        %v1470 = vmul.f32 %v1460, 0.17677669
        %v1471 = vmul.f32 %v1465, 0.17677669
        %vm1472 = vcmask 130048
        %v1473 = vsel %vm1472, %v1468, -inf
        %1474 = vmax.xlane.f32.xlu0 %v1473
        %v1475 = vpop.xlane.xlu0 %1474
        %v1476 = vsel %vm1472, %v1469, -inf
        %1477 = vmax.xlane.f32.xlu0 %v1476
        %v1478 = vpop.xlane.xlu0 %1477
        %v1479 = vsel %vm1472, %v1470, -inf
        %1480 = vmax.xlane.f32.xlu0 %v1479
        %v1481 = vpop.xlane.xlu0 %1480
        %v1482 = vsel %vm1472, %v1471, -inf
        %1483 = vmax.xlane.f32.xlu0 %v1482
        %v1484 = vpop.xlane.xlu0 %1483
        %v1485 = vsub.f32 %v1468, %v1475
        %v1486 = vsub.f32 %v1469, %v1478
        %v1487 = vsub.f32 %v1470, %v1481
        %v1488 = vsub.f32 %v1471, %v1484
        %v1489 = vmul.f32 %v1485, 1.442695
        %v1490 = vpow.pop %v1489
        %v1491 = vmul.f32 %v1486, 1.442695
        %v1492 = vpow.pop %v1491
        %v1493 = vmul.f32 %v1487, 1.442695
        %v1494 = vpow.pop %v1493
        %v1495 = vmul.f32 %v1488, 1.442695
        %v1496 = vpow.pop %v1495
        %v1497 = vsel %vm1472, %v1490, 0.0
        %1498 = vadd.xlane.f32.xlu0 %v1497
        %v1499 = vpop.xlane.xlu0 %1498
        %v1500 = vsel %vm1472, %v1492, 0.0
        %1501 = vadd.xlane.f32.xlu0 %v1500
        %v1502 = vpop.xlane.xlu0 %1501
        %v1503 = vsel %vm1472, %v1494, 0.0
        %1504 = vadd.xlane.f32.xlu0 %v1503
        %v1505 = vpop.xlane.xlu0 %1504
        %v1506 = vsel %vm1472, %v1496, 0.0
        %1507 = vadd.xlane.f32.xlu0 %v1506
        %v1508 = vpop.xlane.xlu0 %1507
        %v1509 = vrcp.pop %v1499
        %v1510 = vrcp.pop %v1502
        %v1511 = vrcp.pop %v1505
        %v1512 = vrcp.pop %v1508
        %v1513 = vmul.f32 %v1490, %v1509
        %v1514 = vmul.f32 %v1492, %v1510
        %v1515 = vmul.f32 %v1494, %v1511
        %v1516 = vmul.f32 %v1496, %v1512
        %1517 = vrot.lane.b32.xlu0 %v1217, 64
        %v1518 = vpop.permute.xlu0 %1517
        %1519 = vrot.lane.b32.xlu0 %v1220, 64
        %v1520 = vpop.permute.xlu0 %1519
        %1521 = vrot.lane.b32.xlu0 %v1240, 64
        %v1522 = vpop.permute.xlu0 %1521
        %1523 = vrot.lane.b32.xlu0 %v1242, 64
        %v1524 = vpop.permute.xlu0 %1523
        %1529 = vxpose.xlu0.b32.start [1/16] %v1518, 128
        %1530 = vxpose.xlu0.b32.cont [2/16] %v1520, 128
        %1531 = vxpose.xlu0.b32.cont [3/16] 0.0, 128
        %1532 = vxpose.xlu0.b32.cont [4/16] 0.0, 128
        %1533 = vxpose.xlu0.b32.cont [5/16] 0.0, 128
        %1534 = vxpose.xlu0.b32.cont [6/16] 0.0, 128
        %1535 = vxpose.xlu0.b32.cont [7/16] 0.0, 128
        %1536 = vxpose.xlu0.b32.cont [8/16] 0.0, 128
        %1537 = vxpose.xlu0.b32.cont [9/16] 0.0, 128
        %1538 = vxpose.xlu0.b32.cont [10/16] 0.0, 128
        %1539 = vxpose.xlu0.b32.cont [11/16] 0.0, 128
        %1540 = vxpose.xlu0.b32.cont [12/16] 0.0, 128
        %1541 = vxpose.xlu0.b32.cont [13/16] 0.0, 128
        %1542 = vxpose.xlu0.b32.cont [14/16] 0.0, 128
        %1543 = vxpose.xlu0.b32.cont [15/16] 0.0, 128
        %1544 = vxpose.xlu0.b32.end [16/16] 0.0, 128
        %v1545 = vpop.trf.xlu0
        %v1546 = vpop.trf.xlu0
        %v1547 = vpop.trf.xlu0
        %v1548 = vpop.trf.xlu0
        %v1549 = vpop.trf.xlu0
        %v1550 = vpop.trf.xlu0
        %v1551 = vpop.trf.xlu0
        %v1552 = vpop.trf.xlu0
        %v1553 = vpop.trf.xlu0
        %v1554 = vpop.trf.xlu0
        %v1555 = vpop.trf.xlu0
        %v1556 = vpop.trf.xlu0
        %v1557 = vpop.trf.xlu0
        %v1558 = vpop.trf.xlu0
        %v1559 = vpop.trf.xlu0
        %v1560 = vpop.trf.xlu0
        %1561 = vxpose.xlu0.b32.start [1/16] %v1522, 128
        %1562 = vxpose.xlu0.b32.cont [2/16] %v1524, 128
        %1563 = vxpose.xlu0.b32.cont [3/16] 0.0, 128
        %1564 = vxpose.xlu0.b32.cont [4/16] 0.0, 128
        %1565 = vxpose.xlu0.b32.cont [5/16] 0.0, 128
        %1566 = vxpose.xlu0.b32.cont [6/16] 0.0, 128
        %1567 = vxpose.xlu0.b32.cont [7/16] 0.0, 128
        %1568 = vxpose.xlu0.b32.cont [8/16] 0.0, 128
        %1569 = vxpose.xlu0.b32.cont [9/16] 0.0, 128
        %1570 = vxpose.xlu0.b32.cont [10/16] 0.0, 128
        %1571 = vxpose.xlu0.b32.cont [11/16] 0.0, 128
        %1572 = vxpose.xlu0.b32.cont [12/16] 0.0, 128
        %1573 = vxpose.xlu0.b32.cont [13/16] 0.0, 128
        %1574 = vxpose.xlu0.b32.cont [14/16] 0.0, 128
        %1575 = vxpose.xlu0.b32.cont [15/16] 0.0, 128
        %1576 = vxpose.xlu0.b32.end [16/16] 0.0, 128
        %v1577 = vpop.trf.xlu0
        %v1578 = vpop.trf.xlu0
        %v1579 = vpop.trf.xlu0
        %v1580 = vpop.trf.xlu0
        %v1581 = vpop.trf.xlu0
        %v1582 = vpop.trf.xlu0
        %v1583 = vpop.trf.xlu0
        %v1584 = vpop.trf.xlu0
        %v1585 = vpop.trf.xlu0
        %v1586 = vpop.trf.xlu0
        %v1587 = vpop.trf.xlu0
        %v1588 = vpop.trf.xlu0
        %v1589 = vpop.trf.xlu0
        %v1590 = vpop.trf.xlu0
        %v1591 = vpop.trf.xlu0
        %v1592 = vpop.trf.xlu0
        %v1594 = vsel %vm1472, %v1545, 0
        %v1597 = vsel %vm1472, %v1546, 0
        %v1600 = vsel %vm1472, %v1547, 0
        %v1603 = vsel %vm1472, %v1548, 0
        %v1606 = vsel %vm1472, %v1513, 0
        %v1609 = vsel %vm1472, %v1514, 0
        %1611 = vmatprep.subr.mxu0 0.0
        %1612 = vmatpush1.xpose.msra.mxu0 %v1606
        %1613 = vmatprep.subr.mxu0 0.0
        %1614 = vmatpush1.xpose.msra.mxu0 %v1609
        %1615 = vmatprep.subr.mxu0 0.0
        %1616 = vmatpush1.xpose.msra.mxu0 0.0
        %1617 = vmatprep.subr.mxu0 0.0
        %1618 = vmatpush1.xpose.msra.mxu0 0.0
        %1619 = vmatprep.subr.mxu0 0.0
        %1620 = vmatpush1.xpose.msra.mxu0 0.0
        %1621 = vmatprep.subr.mxu0 0.0
        %1622 = vmatpush1.xpose.msra.mxu0 0.0
        %1623 = vmatprep.subr.mxu0 0.0
        %1624 = vmatpush1.xpose.msra.mxu0 0.0
        %1625 = vmatprep.subr.mxu0 0.0
        %1626 = vmatpush1.xpose.msra.mxu0 0.0
        %1627 = vmatprep.subr.mxu0 0.0
        %1628 = vmatpush1.xpose.msra.mxu0 0.0
        %1629 = vmatprep.subr.mxu0 0.0
        %1630 = vmatpush1.xpose.msra.mxu0 0.0
        %1631 = vmatprep.subr.mxu0 0.0
        %1632 = vmatpush1.xpose.msra.mxu0 0.0
        %1633 = vmatprep.subr.mxu0 0.0
        %1634 = vmatpush1.xpose.msra.mxu0 0.0
        %1635 = vmatprep.subr.mxu0 0.0
        %1636 = vmatpush1.xpose.msra.mxu0 0.0
        %1637 = vmatprep.subr.mxu0 0.0
        %1638 = vmatpush1.xpose.msra.mxu0 0.0
        %1639 = vmatprep.subr.mxu0 0.0
        %1640 = vmatpush1.xpose.msra.mxu0 0.0
        %1641 = vmatprep.subr.mxu0 0.0
        %1642 = vmatpush1.xpose.msra.mxu0 0.0
        %1643 = vmatprep.subr.mxu0 0.0
        %1644 = vmatpush1.xpose.msra.mxu0 0.0
        %1645 = vmatprep.subr.mxu0 0.0
        %1646 = vmatpush1.xpose.msra.mxu0 0.0
        %1647 = vmatprep.subr.mxu0 0.0
        %1648 = vmatpush1.xpose.msra.mxu0 0.0
        %1649 = vmatprep.subr.mxu0 0.0
        %1650 = vmatpush1.xpose.msra.mxu0 0.0
        %1651 = vmatprep.subr.mxu0 0.0
        %1652 = vmatpush1.xpose.msra.mxu0 0.0
        %1653 = vmatprep.subr.mxu0 0.0
        %1654 = vmatpush1.xpose.msra.mxu0 0.0
        %1655 = vmatprep.subr.mxu0 0.0
        %1656 = vmatpush1.xpose.msra.mxu0 0.0
        %1657 = vmatprep.subr.mxu0 0.0
        %1658 = vmatpush1.xpose.msra.mxu0 0.0
        %1659 = vmatprep.subr.mxu0 0.0
        %1660 = vmatpush1.xpose.msra.mxu0 0.0
        %1661 = vmatprep.subr.mxu0 0.0
        %1662 = vmatpush1.xpose.msra.mxu0 0.0
        %1663 = vmatprep.subr.mxu0 0.0
        %1664 = vmatpush1.xpose.msra.mxu0 0.0
        %1665 = vmatprep.subr.mxu0 0.0
        %1666 = vmatpush1.xpose.msra.mxu0 0.0
        %1667 = vmatprep.subr.mxu0 0.0
        %1668 = vmatpush1.xpose.msra.mxu0 0.0
        %1669 = vmatprep.subr.mxu0 0.0
        %1670 = vmatpush1.xpose.msra.mxu0 0.0
        %1671 = vmatprep.subr.mxu0 0.0
        %1672 = vmatpush1.xpose.msra.mxu0 0.0
        %1673 = vmatprep.subr.mxu0 0.0
        %1674 = vmatpush1.xpose.msra.mxu0 0.0
        %1675 = vmatprep.mubr.f32.mxu0 0.0
        %1676 = vmatmul.mubr.f32.gmra.mrb[0].mxu0 %v1594
        %v1677 = vpop.f32.mrb[0].mxu0
        %v1678 = vadd.f32 0.0, %v1677
        %v1679 = vpop.f32.mrb[0].mxu0
        %1680 = vmatprep.mubr.f32.mxu0 0.0
        %1681 = vmatmul.mubr.f32.gmra.mrb[0].mxu0 %v1597
        %v1682 = vpop.f32.mrb[0].mxu0
        %v1683 = vadd.f32 0.0, %v1682
        %v1684 = vpop.f32.mrb[0].mxu0
        %1685 = vmatprep.mubr.f32.mxu0 0.0
        %1686 = vmatmul.mubr.f32.gmra.mrb[0].mxu0 %v1600
        %v1687 = vpop.f32.mrb[0].mxu0
        %v1688 = vadd.f32 0.0, %v1687
        %v1689 = vpop.f32.mrb[0].mxu0
        %1690 = vmatprep.mubr.f32.mxu0 0.0
        %1691 = vmatmul.mubr.f32.gmra.mrb[0].mxu0 %v1603
        %v1692 = vpop.f32.mrb[0].mxu0
        %v1693 = vadd.f32 0.0, %v1692
        %v1694 = vpop.f32.mrb[0].mxu0
        %1695 = vdwg.mxu0
        %v1697 = vsel %vm1472, %v1577, 0
        %v1700 = vsel %vm1472, %v1578, 0
        %v1703 = vsel %vm1472, %v1579, 0
        %v1706 = vsel %vm1472, %v1580, 0
        %v1709 = vsel %vm1472, %v1515, 0
        %v1712 = vsel %vm1472, %v1516, 0
        %1714 = vmatprep.subr.mxu0 0.0
        %1715 = vmatpush1.xpose.msra.mxu0 %v1709
        %1716 = vmatprep.subr.mxu0 0.0
        %1717 = vmatpush1.xpose.msra.mxu0 %v1712
        %1718 = vmatprep.subr.mxu0 0.0
        %1719 = vmatpush1.xpose.msra.mxu0 0.0
        %1720 = vmatprep.subr.mxu0 0.0
        %1721 = vmatpush1.xpose.msra.mxu0 0.0
        %1722 = vmatprep.subr.mxu0 0.0
        %1723 = vmatpush1.xpose.msra.mxu0 0.0
        %1724 = vmatprep.subr.mxu0 0.0
        %1725 = vmatpush1.xpose.msra.mxu0 0.0
        %1726 = vmatprep.subr.mxu0 0.0
        %1727 = vmatpush1.xpose.msra.mxu0 0.0
        %1728 = vmatprep.subr.mxu0 0.0
        %1729 = vmatpush1.xpose.msra.mxu0 0.0
        %1730 = vmatprep.subr.mxu0 0.0
        %1731 = vmatpush1.xpose.msra.mxu0 0.0
        %1732 = vmatprep.subr.mxu0 0.0
        %1733 = vmatpush1.xpose.msra.mxu0 0.0
        %1734 = vmatprep.subr.mxu0 0.0
        %1735 = vmatpush1.xpose.msra.mxu0 0.0
        %1736 = vmatprep.subr.mxu0 0.0
        %1737 = vmatpush1.xpose.msra.mxu0 0.0
        %1738 = vmatprep.subr.mxu0 0.0
        %1739 = vmatpush1.xpose.msra.mxu0 0.0
        %1740 = vmatprep.subr.mxu0 0.0
        %1741 = vmatpush1.xpose.msra.mxu0 0.0
        %1742 = vmatprep.subr.mxu0 0.0
        %1743 = vmatpush1.xpose.msra.mxu0 0.0
        %1744 = vmatprep.subr.mxu0 0.0
        %1745 = vmatpush1.xpose.msra.mxu0 0.0
        %1746 = vmatprep.subr.mxu0 0.0
        %1747 = vmatpush1.xpose.msra.mxu0 0.0
        %1748 = vmatprep.subr.mxu0 0.0
        %1749 = vmatpush1.xpose.msra.mxu0 0.0
        %1750 = vmatprep.subr.mxu0 0.0
        %1751 = vmatpush1.xpose.msra.mxu0 0.0
        %1752 = vmatprep.subr.mxu0 0.0
        %1753 = vmatpush1.xpose.msra.mxu0 0.0
        %1754 = vmatprep.subr.mxu0 0.0
        %1755 = vmatpush1.xpose.msra.mxu0 0.0
        %1756 = vmatprep.subr.mxu0 0.0
        %1757 = vmatpush1.xpose.msra.mxu0 0.0
        %1758 = vmatprep.subr.mxu0 0.0
        %1759 = vmatpush1.xpose.msra.mxu0 0.0
        %1760 = vmatprep.subr.mxu0 0.0
        %1761 = vmatpush1.xpose.msra.mxu0 0.0
        %1762 = vmatprep.subr.mxu0 0.0
        %1763 = vmatpush1.xpose.msra.mxu0 0.0
        %1764 = vmatprep.subr.mxu0 0.0
        %1765 = vmatpush1.xpose.msra.mxu0 0.0
        %1766 = vmatprep.subr.mxu0 0.0
        %1767 = vmatpush1.xpose.msra.mxu0 0.0
        %1768 = vmatprep.subr.mxu0 0.0
        %1769 = vmatpush1.xpose.msra.mxu0 0.0
        %1770 = vmatprep.subr.mxu0 0.0
        %1771 = vmatpush1.xpose.msra.mxu0 0.0
        %1772 = vmatprep.subr.mxu0 0.0
        %1773 = vmatpush1.xpose.msra.mxu0 0.0
        %1774 = vmatprep.subr.mxu0 0.0
        %1775 = vmatpush1.xpose.msra.mxu0 0.0
        %1776 = vmatprep.subr.mxu0 0.0
        %1777 = vmatpush1.xpose.msra.mxu0 0.0
        %1778 = vmatprep.mubr.f32.mxu0 0.0
        %1779 = vmatmul.mubr.f32.gmra.mrb[0].mxu0 %v1697
        %v1780 = vpop.f32.mrb[0].mxu0
        %v1781 = vadd.f32 0.0, %v1780
        %v1782 = vpop.f32.mrb[0].mxu0
        %1783 = vmatprep.mubr.f32.mxu0 0.0
        %1784 = vmatmul.mubr.f32.gmra.mrb[0].mxu0 %v1700
        %v1785 = vpop.f32.mrb[0].mxu0
        %v1786 = vadd.f32 0.0, %v1785
        %v1787 = vpop.f32.mrb[0].mxu0
        %1788 = vmatprep.mubr.f32.mxu0 0.0
        %1789 = vmatmul.mubr.f32.gmra.mrb[0].mxu0 %v1703
        %v1790 = vpop.f32.mrb[0].mxu0
        %v1791 = vadd.f32 0.0, %v1790
        %v1792 = vpop.f32.mrb[0].mxu0
        %1793 = vmatprep.mubr.f32.mxu0 0.0
        %1794 = vmatmul.mubr.f32.gmra.mrb[0].mxu0 %v1706
        %v1795 = vpop.f32.mrb[0].mxu0
        %v1796 = vadd.f32 0.0, %v1795
        %v1797 = vpop.f32.mrb[0].mxu0
        %1798 = vdwg.mxu0
        %1799 = vxpose.xlu0.b32.start [1/16] %v1678, 128
        %1800 = vxpose.xlu0.b32.cont [2/16] %v1683, 128
        %1801 = vxpose.xlu0.b32.cont [3/16] %v1688, 128
        %1802 = vxpose.xlu0.b32.cont [4/16] %v1693, 128
        %1803 = vxpose.xlu0.b32.cont [5/16] 0.0, 128
        %1804 = vxpose.xlu0.b32.cont [6/16] 0.0, 128
        %1805 = vxpose.xlu0.b32.cont [7/16] 0.0, 128
        %1806 = vxpose.xlu0.b32.cont [8/16] 0.0, 128
        %1807 = vxpose.xlu0.b32.cont [9/16] 0.0, 128
        %1808 = vxpose.xlu0.b32.cont [10/16] 0.0, 128
        %1809 = vxpose.xlu0.b32.cont [11/16] 0.0, 128
        %1810 = vxpose.xlu0.b32.cont [12/16] 0.0, 128
        %1811 = vxpose.xlu0.b32.cont [13/16] 0.0, 128
        %1812 = vxpose.xlu0.b32.cont [14/16] 0.0, 128
        %1813 = vxpose.xlu0.b32.cont [15/16] 0.0, 128
        %1814 = vxpose.xlu0.b32.end [16/16] 0.0, 128
        %v1815 = vpop.trf.xlu0
        %v1816 = vpop.trf.xlu0
        %v1817 = vpop.trf.xlu0
        %v1818 = vpop.trf.xlu0
        %v1819 = vpop.trf.xlu0
        %v1820 = vpop.trf.xlu0
        %v1821 = vpop.trf.xlu0
        %v1822 = vpop.trf.xlu0
        %v1823 = vpop.trf.xlu0
        %v1824 = vpop.trf.xlu0
        %v1825 = vpop.trf.xlu0
        %v1826 = vpop.trf.xlu0
        %v1827 = vpop.trf.xlu0
        %v1828 = vpop.trf.xlu0
        %v1829 = vpop.trf.xlu0
        %v1830 = vpop.trf.xlu0
        %1831 = vxpose.xlu0.b32.start [1/16] %v1781, 128
        %1832 = vxpose.xlu0.b32.cont [2/16] %v1786, 128
        %1833 = vxpose.xlu0.b32.cont [3/16] %v1791, 128
        %1834 = vxpose.xlu0.b32.cont [4/16] %v1796, 128
        %1835 = vxpose.xlu0.b32.cont [5/16] 0.0, 128
        %1836 = vxpose.xlu0.b32.cont [6/16] 0.0, 128
        %1837 = vxpose.xlu0.b32.cont [7/16] 0.0, 128
        %1838 = vxpose.xlu0.b32.cont [8/16] 0.0, 128
        %1839 = vxpose.xlu0.b32.cont [9/16] 0.0, 128
        %1840 = vxpose.xlu0.b32.cont [10/16] 0.0, 128
        %1841 = vxpose.xlu0.b32.cont [11/16] 0.0, 128
        %1842 = vxpose.xlu0.b32.cont [12/16] 0.0, 128
        %1843 = vxpose.xlu0.b32.cont [13/16] 0.0, 128
        %1844 = vxpose.xlu0.b32.cont [14/16] 0.0, 128
        %1845 = vxpose.xlu0.b32.cont [15/16] 0.0, 128
        %1846 = vxpose.xlu0.b32.end [16/16] 0.0, 128
        %v1847 = vpop.trf.xlu0
        %v1848 = vpop.trf.xlu0
        %v1849 = vpop.trf.xlu0
        %v1850 = vpop.trf.xlu0
        %v1851 = vpop.trf.xlu0
        %v1852 = vpop.trf.xlu0
        %v1853 = vpop.trf.xlu0
        %v1854 = vpop.trf.xlu0
        %v1855 = vpop.trf.xlu0
        %v1856 = vpop.trf.xlu0
        %v1857 = vpop.trf.xlu0
        %v1858 = vpop.trf.xlu0
        %v1859 = vpop.trf.xlu0
        %v1860 = vpop.trf.xlu0
        %v1861 = vpop.trf.xlu0
        %v1862 = vpop.trf.xlu0
        %v1863 = vcombine.high %v1815, 0.0
        %v1865 = vunpack.c.l.s4 1983009808
        %v1866 = vunpack.c.0.s8 %v1865
        %v1867 = vlaneseq
        %v1868 = vshrl.u32 %v1867, 7
        %v1869 = vsub.s32 %v1866, %v1868
        %v1870 = vrot.slane %v1815, %v1869
        %v1872 = vunpack.c.l.s4 1983009808
        %v1873 = vunpack.c.0.s8 %v1872
        %v1874 = vlaneseq
        %v1875 = vshrl.u32 %v1874, 7
        %v1876 = vsub.s32 %v1873, %v1875
        %v1877 = vrot.slane %v1863, %v1876
        %v1878 = vcombine.high %v1847, 0.0
        %v1880 = vunpack.c.l.s4 1983009808
        %v1881 = vunpack.c.0.s8 %v1880
        %v1882 = vlaneseq
        %v1883 = vshrl.u32 %v1882, 7
        %v1884 = vsub.s32 %v1881, %v1883
        %v1885 = vrot.slane %v1847, %v1884
        %v1887 = vunpack.c.l.s4 1983009808
        %v1888 = vunpack.c.0.s8 %v1887
        %v1889 = vlaneseq
        %v1890 = vshrl.u32 %v1889, 7
        %v1891 = vsub.s32 %v1888, %v1890
        %v1892 = vrot.slane %v1878, %v1891
        %v1893 = vcombine.low %v1870, %v1885
        %v1894 = vcombine.high %v1870, %v1885
        %v1896 = vunpack.c.l.s4 1934713408
        %v1897 = vunpack.c.0.s8 %v1896
        %v1898 = vlaneseq
        %v1899 = vshrl.u32 %v1898, 7
        %v1900 = vsub.s32 %v1897, %v1899
        %v1901 = vrot.slane %v1893, %v1900
        %v1903 = vunpack.c.l.s4 1934713408
        %v1904 = vunpack.c.0.s8 %v1903
        %v1905 = vlaneseq
        %v1906 = vshrl.u32 %v1905, 7
        %v1907 = vsub.s32 %v1904, %v1906
        %v1908 = vrot.slane %v1894, %v1907
        %v1909 = vcombine.low %v1877, %v1892
        %v1910 = vcombine.high %v1877, %v1892
        %v1912 = vunpack.c.l.s4 1934713408
        %v1913 = vunpack.c.0.s8 %v1912
        %v1914 = vlaneseq
        %v1915 = vshrl.u32 %v1914, 7
        %v1916 = vsub.s32 %v1913, %v1915
        %v1917 = vrot.slane %v1909, %v1916
        %v1919 = vunpack.c.l.s4 1934713408
        %v1920 = vunpack.c.0.s8 %v1919
        %v1921 = vlaneseq
        %v1922 = vshrl.u32 %v1921, 7
        %v1923 = vsub.s32 %v1920, %v1922
        %v1924 = vrot.slane %v1910, %v1923
        %v1925 = vcombine.high %v1901, 0.0
        %v1926 = vcombine.high %v1908, 0.0
        %v1927 = vcombine.high %v1917, 0.0
        %v1928 = vcombine.high %v1924, 0.0
        %v1929 = vcombine.high %v1816, 0.0
        %v1931 = vunpack.c.l.s4 1983009808
        %v1932 = vunpack.c.0.s8 %v1931
        %v1933 = vlaneseq
        %v1934 = vshrl.u32 %v1933, 7
        %v1935 = vsub.s32 %v1932, %v1934
        %v1936 = vrot.slane %v1816, %v1935
        %v1938 = vunpack.c.l.s4 1983009808
        %v1939 = vunpack.c.0.s8 %v1938
        %v1940 = vlaneseq
        %v1941 = vshrl.u32 %v1940, 7
        %v1942 = vsub.s32 %v1939, %v1941
        %v1943 = vrot.slane %v1929, %v1942
        %v1944 = vcombine.high %v1848, 0.0
        %v1946 = vunpack.c.l.s4 1983009808
        %v1947 = vunpack.c.0.s8 %v1946
        %v1948 = vlaneseq
        %v1949 = vshrl.u32 %v1948, 7
        %v1950 = vsub.s32 %v1947, %v1949
        %v1951 = vrot.slane %v1848, %v1950
        %v1953 = vunpack.c.l.s4 1983009808
        %v1954 = vunpack.c.0.s8 %v1953
        %v1955 = vlaneseq
        %v1956 = vshrl.u32 %v1955, 7
        %v1957 = vsub.s32 %v1954, %v1956
        %v1958 = vrot.slane %v1944, %v1957
        %v1959 = vcombine.low %v1936, %v1951
        %v1960 = vcombine.high %v1936, %v1951
        %v1962 = vunpack.c.l.s4 1934713408
        %v1963 = vunpack.c.0.s8 %v1962
        %v1964 = vlaneseq
        %v1965 = vshrl.u32 %v1964, 7
        %v1966 = vsub.s32 %v1963, %v1965
        %v1967 = vrot.slane %v1959, %v1966
        %v1969 = vunpack.c.l.s4 1934713408
        %v1970 = vunpack.c.0.s8 %v1969
        %v1971 = vlaneseq
        %v1972 = vshrl.u32 %v1971, 7
        %v1973 = vsub.s32 %v1970, %v1972
        %v1974 = vrot.slane %v1960, %v1973
        %v1975 = vcombine.low %v1943, %v1958
        %v1976 = vcombine.high %v1943, %v1958
        %v1978 = vunpack.c.l.s4 1934713408
        %v1979 = vunpack.c.0.s8 %v1978
        %v1980 = vlaneseq
        %v1981 = vshrl.u32 %v1980, 7
        %v1982 = vsub.s32 %v1979, %v1981
        %v1983 = vrot.slane %v1975, %v1982
        %v1985 = vunpack.c.l.s4 1934713408
        %v1986 = vunpack.c.0.s8 %v1985
        %v1987 = vlaneseq
        %v1988 = vshrl.u32 %v1987, 7
        %v1989 = vsub.s32 %v1986, %v1988
        %v1990 = vrot.slane %v1976, %v1989
        %v1991 = vcombine.high %v1967, 0.0
        %v1992 = vcombine.high %v1974, 0.0
        %v1993 = vcombine.high %v1983, 0.0
        %v1994 = vcombine.high %v1990, 0.0
        %v1995 = vcombine.low %v1901, %v1908
        %v1997 = vunpack.c.l.s4 1983009808
        %v1998 = vunpack.c.0.s8 %v1997
        %v1999 = vlaneseq
        %v2000 = vshrl.u32 %v1999, 7
        %v2001 = vsub.s32 %v1998, %v2000
        %v2002 = vrot.slane %v1995, %v2001
        %v2003 = vcombine.low %v1925, %v1926
        %v2005 = vunpack.c.l.s4 1983009808
        %v2006 = vunpack.c.0.s8 %v2005
        %v2007 = vlaneseq
        %v2008 = vshrl.u32 %v2007, 7
        %v2009 = vsub.s32 %v2006, %v2008
        %v2010 = vrot.slane %v2003, %v2009
        %v2011 = vcombine.low %v1917, %v1924
        %v2013 = vunpack.c.l.s4 1983009808
        %v2014 = vunpack.c.0.s8 %v2013
        %v2015 = vlaneseq
        %v2016 = vshrl.u32 %v2015, 7
        %v2017 = vsub.s32 %v2014, %v2016
        %v2018 = vrot.slane %v2011, %v2017
        %v2019 = vcombine.low %v1927, %v1928
        %v2021 = vunpack.c.l.s4 1983009808
        %v2022 = vunpack.c.0.s8 %v2021
        %v2023 = vlaneseq
        %v2024 = vshrl.u32 %v2023, 7
        %v2025 = vsub.s32 %v2022, %v2024
        %v2026 = vrot.slane %v2019, %v2025
        %v2027 = vcombine.low %v2002, %v2010
        %v2029 = vunpack.c.l.s4 1934713408
        %v2030 = vunpack.c.0.s8 %v2029
        %v2031 = vlaneseq
        %v2032 = vshrl.u32 %v2031, 7
        %v2033 = vsub.s32 %v2030, %v2032
        %v2034 = vrot.slane %v2027, %v2033
        %v2035 = vcombine.low %v2018, %v2026
        %v2037 = vunpack.c.l.s4 1934713408
        %v2038 = vunpack.c.0.s8 %v2037
        %v2039 = vlaneseq
        %v2040 = vshrl.u32 %v2039, 7
        %v2041 = vsub.s32 %v2038, %v2040
        %v2042 = vrot.slane %v2035, %v2041
        %v2043 = vcombine.low %v2034, %v2042
        %v2044 = vcombine.high %v2034, %v2042
        %v2045 = vcombine.low %v1967, %v1974
        %v2047 = vunpack.c.l.s4 1983009808
        %v2048 = vunpack.c.0.s8 %v2047
        %v2049 = vlaneseq
        %v2050 = vshrl.u32 %v2049, 7
        %v2051 = vsub.s32 %v2048, %v2050
        %v2052 = vrot.slane %v2045, %v2051
        %v2053 = vcombine.low %v1991, %v1992
        %v2055 = vunpack.c.l.s4 1983009808
        %v2056 = vunpack.c.0.s8 %v2055
        %v2057 = vlaneseq
        %v2058 = vshrl.u32 %v2057, 7
        %v2059 = vsub.s32 %v2056, %v2058
        %v2060 = vrot.slane %v2053, %v2059
        %v2061 = vcombine.low %v1983, %v1990
        %v2063 = vunpack.c.l.s4 1983009808
        %v2064 = vunpack.c.0.s8 %v2063
        %v2065 = vlaneseq
        %v2066 = vshrl.u32 %v2065, 7
        %v2067 = vsub.s32 %v2064, %v2066
        %v2068 = vrot.slane %v2061, %v2067
        %v2069 = vcombine.low %v1993, %v1994
        %v2071 = vunpack.c.l.s4 1983009808
        %v2072 = vunpack.c.0.s8 %v2071
        %v2073 = vlaneseq
        %v2074 = vshrl.u32 %v2073, 7
        %v2075 = vsub.s32 %v2072, %v2074
        %v2076 = vrot.slane %v2069, %v2075
        %v2077 = vcombine.low %v2052, %v2060
        %v2079 = vunpack.c.l.s4 1934713408
        %v2080 = vunpack.c.0.s8 %v2079
        %v2081 = vlaneseq
        %v2082 = vshrl.u32 %v2081, 7
        %v2083 = vsub.s32 %v2080, %v2082
        %v2084 = vrot.slane %v2077, %v2083
        %v2085 = vcombine.low %v2068, %v2076
        %v2087 = vunpack.c.l.s4 1934713408
        %v2088 = vunpack.c.0.s8 %v2087
        %v2089 = vlaneseq
        %v2090 = vshrl.u32 %v2089, 7
        %v2091 = vsub.s32 %v2088, %v2090
        %v2092 = vrot.slane %v2085, %v2091
        %v2093 = vcombine.low %v2084, %v2092
        %v2094 = vcombine.high %v2084, %v2092
        %2097 = vrot.lane.b32.xlu0 %v2044, 32
        %v2098 = vpop.permute.xlu0 %2097
        %2099 = vrot.lane.b32.xlu0 %v2094, 32
        %v2100 = vpop.permute.xlu0 %2099
        %v2103 = vsel %vm1309, %v2043, %v2098
        %v2104 = vsel %vm1309, %v2093, %v2100
        %2107 = vrot.lane.b32.xlu0 %v1139, 96
        %v2108 = vpop.permute.xlu0 %2107
        %2109 = vrot.lane.b32.xlu0 %v1142, 96
        %v2110 = vpop.permute.xlu0 %2109
        %2113 = vrot.lane.b32.xlu0 %v1225, 96
        %v2114 = vpop.permute.xlu0 %2113
        %2115 = vrot.lane.b32.xlu0 %v1228, 96
        %v2116 = vpop.permute.xlu0 %2115
        %2119 = vxpose.xlu0.b32.start [1/16] %v1225, 128
        %2120 = vxpose.xlu0.b32.cont [2/16] %v1228, 128
        %2121 = vxpose.xlu0.b32.cont [3/16] 0.0, 128
        %2122 = vxpose.xlu0.b32.cont [4/16] 0.0, 128
        %2123 = vxpose.xlu0.b32.cont [5/16] 0.0, 128
        %2124 = vxpose.xlu0.b32.cont [6/16] 0.0, 128
        %2125 = vxpose.xlu0.b32.cont [7/16] 0.0, 128
        %2126 = vxpose.xlu0.b32.cont [8/16] 0.0, 128
        %2127 = vxpose.xlu0.b32.cont [9/16] 0.0, 128
        %2128 = vxpose.xlu0.b32.cont [10/16] 0.0, 128
        %2129 = vxpose.xlu0.b32.cont [11/16] 0.0, 128
        %2130 = vxpose.xlu0.b32.cont [12/16] 0.0, 128
        %2131 = vxpose.xlu0.b32.cont [13/16] 0.0, 128
        %2132 = vxpose.xlu0.b32.cont [14/16] 0.0, 128
        %2133 = vxpose.xlu0.b32.cont [15/16] 0.0, 128
        %2134 = vxpose.xlu0.b32.end [16/16] 0.0, 128
        %v2135 = vpop.trf.xlu0
        %v2136 = vpop.trf.xlu0
        %v2137 = vpop.trf.xlu0
        %v2138 = vpop.trf.xlu0
        %v2139 = vpop.trf.xlu0
        %v2140 = vpop.trf.xlu0
        %v2141 = vpop.trf.xlu0
        %v2142 = vpop.trf.xlu0
        %v2143 = vpop.trf.xlu0
        %v2144 = vpop.trf.xlu0
        %v2145 = vpop.trf.xlu0
        %v2146 = vpop.trf.xlu0
        %v2147 = vpop.trf.xlu0
        %v2148 = vpop.trf.xlu0
        %v2149 = vpop.trf.xlu0
        %v2150 = vpop.trf.xlu0
        %2151 = vxpose.xlu0.b32.start [1/16] %v2114, 128
        %2152 = vxpose.xlu0.b32.cont [2/16] %v2116, 128
        %2153 = vxpose.xlu0.b32.cont [3/16] 0.0, 128
        %2154 = vxpose.xlu0.b32.cont [4/16] 0.0, 128
        %2155 = vxpose.xlu0.b32.cont [5/16] 0.0, 128
        %2156 = vxpose.xlu0.b32.cont [6/16] 0.0, 128
        %2157 = vxpose.xlu0.b32.cont [7/16] 0.0, 128
        %2158 = vxpose.xlu0.b32.cont [8/16] 0.0, 128
        %2159 = vxpose.xlu0.b32.cont [9/16] 0.0, 128
        %2160 = vxpose.xlu0.b32.cont [10/16] 0.0, 128
        %2161 = vxpose.xlu0.b32.cont [11/16] 0.0, 128
        %2162 = vxpose.xlu0.b32.cont [12/16] 0.0, 128
        %2163 = vxpose.xlu0.b32.cont [13/16] 0.0, 128
        %2164 = vxpose.xlu0.b32.cont [14/16] 0.0, 128
        %2165 = vxpose.xlu0.b32.cont [15/16] 0.0, 128
        %2166 = vxpose.xlu0.b32.end [16/16] 0.0, 128
        %v2167 = vpop.trf.xlu0
        %v2168 = vpop.trf.xlu0
        %v2169 = vpop.trf.xlu0
        %v2170 = vpop.trf.xlu0
        %v2171 = vpop.trf.xlu0
        %v2172 = vpop.trf.xlu0
        %v2173 = vpop.trf.xlu0
        %v2174 = vpop.trf.xlu0
        %v2175 = vpop.trf.xlu0
        %v2176 = vpop.trf.xlu0
        %v2177 = vpop.trf.xlu0
        %v2178 = vpop.trf.xlu0
        %v2179 = vpop.trf.xlu0
        %v2180 = vpop.trf.xlu0
        %v2181 = vpop.trf.xlu0
        %v2182 = vpop.trf.xlu0
        %v2183 = vsel %vm1309, %v1139, 0
        %v2185 = vsel %vm1309, %v1142, 0
        %2187 = vmatprep.subr.mxu0 0.0
        %2188 = vmatpush1.msra.mxu0 %v2135
        %2189 = vmatprep.subr.mxu0 0.0
        %2190 = vmatpush1.msra.mxu0 %v2136
        %2191 = vmatprep.subr.mxu0 0.0
        %2192 = vmatpush1.msra.mxu0 %v2137
        %2193 = vmatprep.subr.mxu0 0.0
        %2194 = vmatpush1.msra.mxu0 %v2138
        %2195 = vmatprep.subr.mxu0 0.0
        %2196 = vmatpush1.msra.mxu0 0.0
        %2197 = vmatprep.subr.mxu0 0.0
        %2198 = vmatpush1.msra.mxu0 0.0
        %2199 = vmatprep.subr.mxu0 0.0
        %2200 = vmatpush1.msra.mxu0 0.0
        %2201 = vmatprep.subr.mxu0 0.0
        %2202 = vmatpush1.msra.mxu0 0.0
        %2203 = vmatprep.subr.mxu0 0.0
        %2204 = vmatpush1.msra.mxu0 0.0
        %2205 = vmatprep.subr.mxu0 0.0
        %2206 = vmatpush1.msra.mxu0 0.0
        %2207 = vmatprep.subr.mxu0 0.0
        %2208 = vmatpush1.msra.mxu0 0.0
        %2209 = vmatprep.subr.mxu0 0.0
        %2210 = vmatpush1.msra.mxu0 0.0
        %2211 = vmatprep.subr.mxu0 0.0
        %2212 = vmatpush1.msra.mxu0 0.0
        %2213 = vmatprep.subr.mxu0 0.0
        %2214 = vmatpush1.msra.mxu0 0.0
        %2215 = vmatprep.subr.mxu0 0.0
        %2216 = vmatpush1.msra.mxu0 0.0
        %2217 = vmatprep.subr.mxu0 0.0
        %2218 = vmatpush1.msra.mxu0 0.0
        %2219 = vmatprep.subr.mxu0 0.0
        %2220 = vmatpush1.msra.mxu0 0.0
        %2221 = vmatprep.subr.mxu0 0.0
        %2222 = vmatpush1.msra.mxu0 0.0
        %2223 = vmatprep.subr.mxu0 0.0
        %2224 = vmatpush1.msra.mxu0 0.0
        %2225 = vmatprep.subr.mxu0 0.0
        %2226 = vmatpush1.msra.mxu0 0.0
        %2227 = vmatprep.subr.mxu0 0.0
        %2228 = vmatpush1.msra.mxu0 0.0
        %2229 = vmatprep.subr.mxu0 0.0
        %2230 = vmatpush1.msra.mxu0 0.0
        %2231 = vmatprep.subr.mxu0 0.0
        %2232 = vmatpush1.msra.mxu0 0.0
        %2233 = vmatprep.subr.mxu0 0.0
        %2234 = vmatpush1.msra.mxu0 0.0
        %2235 = vmatprep.subr.mxu0 0.0
        %2236 = vmatpush1.msra.mxu0 0.0
        %2237 = vmatprep.subr.mxu0 0.0
        %2238 = vmatpush1.msra.mxu0 0.0
        %2239 = vmatprep.subr.mxu0 0.0
        %2240 = vmatpush1.msra.mxu0 0.0
        %2241 = vmatprep.subr.mxu0 0.0
        %2242 = vmatpush1.msra.mxu0 0.0
        %2243 = vmatprep.subr.mxu0 0.0
        %2244 = vmatpush1.msra.mxu0 0.0
        %2245 = vmatprep.subr.mxu0 0.0
        %2246 = vmatpush1.msra.mxu0 0.0
        %2247 = vmatprep.subr.mxu0 0.0
        %2248 = vmatpush1.msra.mxu0 0.0
        %2249 = vmatprep.subr.mxu0 0.0
        %2250 = vmatpush1.msra.mxu0 0.0
        %2251 = vmatprep.mubr.f32.mxu0 0.0
        %2252 = vmatmul.mubr.f32.gmra.mrb[0].mxu0 %v2183
        %v2253 = vpop.f32.mrb[0].mxu0
        %v2254 = vadd.f32 0.0, %v2253
        %v2255 = vpop.f32.mrb[0].mxu0
        %2256 = vmatprep.mubr.f32.mxu0 0.0
        %2257 = vmatmul.mubr.f32.gmra.mrb[0].mxu0 %v2185
        %v2258 = vpop.f32.mrb[0].mxu0
        %v2259 = vadd.f32 0.0, %v2258
        %v2260 = vpop.f32.mrb[0].mxu0
        %2261 = vdwg.mxu0
        %v2262 = vsel %vm1309, %v2108, 0
        %v2264 = vsel %vm1309, %v2110, 0
        %2266 = vmatprep.subr.mxu0 0.0
        %2267 = vmatpush1.msra.mxu0 %v2167
        %2268 = vmatprep.subr.mxu0 0.0
        %2269 = vmatpush1.msra.mxu0 %v2168
        %2270 = vmatprep.subr.mxu0 0.0
        %2271 = vmatpush1.msra.mxu0 %v2169
        %2272 = vmatprep.subr.mxu0 0.0
        %2273 = vmatpush1.msra.mxu0 %v2170
        %2274 = vmatprep.subr.mxu0 0.0
        %2275 = vmatpush1.msra.mxu0 0.0
        %2276 = vmatprep.subr.mxu0 0.0
        %2277 = vmatpush1.msra.mxu0 0.0
        %2278 = vmatprep.subr.mxu0 0.0
        %2279 = vmatpush1.msra.mxu0 0.0
        %2280 = vmatprep.subr.mxu0 0.0
        %2281 = vmatpush1.msra.mxu0 0.0
        %2282 = vmatprep.subr.mxu0 0.0
        %2283 = vmatpush1.msra.mxu0 0.0
        %2284 = vmatprep.subr.mxu0 0.0
        %2285 = vmatpush1.msra.mxu0 0.0
        %2286 = vmatprep.subr.mxu0 0.0
        %2287 = vmatpush1.msra.mxu0 0.0
        %2288 = vmatprep.subr.mxu0 0.0
        %2289 = vmatpush1.msra.mxu0 0.0
        %2290 = vmatprep.subr.mxu0 0.0
        %2291 = vmatpush1.msra.mxu0 0.0
        %2292 = vmatprep.subr.mxu0 0.0
        %2293 = vmatpush1.msra.mxu0 0.0
        %2294 = vmatprep.subr.mxu0 0.0
        %2295 = vmatpush1.msra.mxu0 0.0
        %2296 = vmatprep.subr.mxu0 0.0
        %2297 = vmatpush1.msra.mxu0 0.0
        %2298 = vmatprep.subr.mxu0 0.0
        %2299 = vmatpush1.msra.mxu0 0.0
        %2300 = vmatprep.subr.mxu0 0.0
        %2301 = vmatpush1.msra.mxu0 0.0
        %2302 = vmatprep.subr.mxu0 0.0
        %2303 = vmatpush1.msra.mxu0 0.0
        %2304 = vmatprep.subr.mxu0 0.0
        %2305 = vmatpush1.msra.mxu0 0.0
        %2306 = vmatprep.subr.mxu0 0.0
        %2307 = vmatpush1.msra.mxu0 0.0
        %2308 = vmatprep.subr.mxu0 0.0
        %2309 = vmatpush1.msra.mxu0 0.0
        %2310 = vmatprep.subr.mxu0 0.0
        %2311 = vmatpush1.msra.mxu0 0.0
        %2312 = vmatprep.subr.mxu0 0.0
        %2313 = vmatpush1.msra.mxu0 0.0
        %2314 = vmatprep.subr.mxu0 0.0
        %2315 = vmatpush1.msra.mxu0 0.0
        %2316 = vmatprep.subr.mxu0 0.0
        %2317 = vmatpush1.msra.mxu0 0.0
        %2318 = vmatprep.subr.mxu0 0.0
        %2319 = vmatpush1.msra.mxu0 0.0
        %2320 = vmatprep.subr.mxu0 0.0
        %2321 = vmatpush1.msra.mxu0 0.0
        %2322 = vmatprep.subr.mxu0 0.0
        %2323 = vmatpush1.msra.mxu0 0.0
        %2324 = vmatprep.subr.mxu0 0.0
        %2325 = vmatpush1.msra.mxu0 0.0
        %2326 = vmatprep.subr.mxu0 0.0
        %2327 = vmatpush1.msra.mxu0 0.0
        %2328 = vmatprep.subr.mxu0 0.0
        %2329 = vmatpush1.msra.mxu0 0.0
        %2330 = vmatprep.mubr.f32.mxu0 0.0
        %2331 = vmatmul.mubr.f32.gmra.mrb[0].mxu0 %v2262
        %v2332 = vpop.f32.mrb[0].mxu0
        %v2333 = vadd.f32 0.0, %v2332
        %v2334 = vpop.f32.mrb[0].mxu0
        %2335 = vmatprep.mubr.f32.mxu0 0.0
        %2336 = vmatmul.mubr.f32.gmra.mrb[0].mxu0 %v2264
        %v2337 = vpop.f32.mrb[0].mxu0
        %v2338 = vadd.f32 0.0, %v2337
        %v2339 = vpop.f32.mrb[0].mxu0
        %2340 = vdwg.mxu0
        %v2341 = vmul.f32 %v2254, 0.17677669
        %v2342 = vmul.f32 %v2259, 0.17677669
        %v2343 = vmul.f32 %v2333, 0.17677669
        %v2344 = vmul.f32 %v2338, 0.17677669
        %v2345 = vsel %vm1472, %v2341, -inf
        %2346 = vmax.xlane.f32.xlu0 %v2345
        %v2347 = vpop.xlane.xlu0 %2346
        %v2348 = vsel %vm1472, %v2342, -inf
        %2349 = vmax.xlane.f32.xlu0 %v2348
        %v2350 = vpop.xlane.xlu0 %2349
        %v2351 = vsel %vm1472, %v2343, -inf
        %2352 = vmax.xlane.f32.xlu0 %v2351
        %v2353 = vpop.xlane.xlu0 %2352
        %v2354 = vsel %vm1472, %v2344, -inf
        %2355 = vmax.xlane.f32.xlu0 %v2354
        %v2356 = vpop.xlane.xlu0 %2355
        %v2357 = vsub.f32 %v2341, %v2347
        %v2358 = vsub.f32 %v2342, %v2350
        %v2359 = vsub.f32 %v2343, %v2353
        %v2360 = vsub.f32 %v2344, %v2356
        %v2361 = vmul.f32 %v2357, 1.442695
        %v2362 = vpow.pop %v2361
        %v2363 = vmul.f32 %v2358, 1.442695
        %v2364 = vpow.pop %v2363
        %v2365 = vmul.f32 %v2359, 1.442695
        %v2366 = vpow.pop %v2365
        %v2367 = vmul.f32 %v2360, 1.442695
        %v2368 = vpow.pop %v2367
        %v2369 = vsel %vm1472, %v2362, 0.0
        %2370 = vadd.xlane.f32.xlu0 %v2369
        %v2371 = vpop.xlane.xlu0 %2370
        %v2372 = vsel %vm1472, %v2364, 0.0
        %2373 = vadd.xlane.f32.xlu0 %v2372
        %v2374 = vpop.xlane.xlu0 %2373
        %v2375 = vsel %vm1472, %v2366, 0.0
        %2376 = vadd.xlane.f32.xlu0 %v2375
        %v2377 = vpop.xlane.xlu0 %2376
        %v2378 = vsel %vm1472, %v2368, 0.0
        %2379 = vadd.xlane.f32.xlu0 %v2378
        %v2380 = vpop.xlane.xlu0 %2379
        %v2381 = vrcp.pop %v2371
        %v2382 = vrcp.pop %v2374
        %v2383 = vrcp.pop %v2377
        %v2384 = vrcp.pop %v2380
        %v2385 = vmul.f32 %v2362, %v2381
        %v2386 = vmul.f32 %v2364, %v2382
        %v2387 = vmul.f32 %v2366, %v2383
        %v2388 = vmul.f32 %v2368, %v2384
        %2389 = vrot.lane.b32.xlu0 %v1225, 64
        %v2390 = vpop.permute.xlu0 %2389
        %2391 = vrot.lane.b32.xlu0 %v1228, 64
        %v2392 = vpop.permute.xlu0 %2391
        %2393 = vrot.lane.b32.xlu0 %v2114, 64
        %v2394 = vpop.permute.xlu0 %2393
        %2395 = vrot.lane.b32.xlu0 %v2116, 64
        %v2396 = vpop.permute.xlu0 %2395
        %2401 = vxpose.xlu0.b32.start [1/16] %v2390, 128
        %2402 = vxpose.xlu0.b32.cont [2/16] %v2392, 128
        %2403 = vxpose.xlu0.b32.cont [3/16] 0.0, 128
        %2404 = vxpose.xlu0.b32.cont [4/16] 0.0, 128
        %2405 = vxpose.xlu0.b32.cont [5/16] 0.0, 128
        %2406 = vxpose.xlu0.b32.cont [6/16] 0.0, 128
        %2407 = vxpose.xlu0.b32.cont [7/16] 0.0, 128
        %2408 = vxpose.xlu0.b32.cont [8/16] 0.0, 128
        %2409 = vxpose.xlu0.b32.cont [9/16] 0.0, 128
        %2410 = vxpose.xlu0.b32.cont [10/16] 0.0, 128
        %2411 = vxpose.xlu0.b32.cont [11/16] 0.0, 128
        %2412 = vxpose.xlu0.b32.cont [12/16] 0.0, 128
        %2413 = vxpose.xlu0.b32.cont [13/16] 0.0, 128
        %2414 = vxpose.xlu0.b32.cont [14/16] 0.0, 128
        %2415 = vxpose.xlu0.b32.cont [15/16] 0.0, 128
        %2416 = vxpose.xlu0.b32.end [16/16] 0.0, 128
        %v2417 = vpop.trf.xlu0
        %v2418 = vpop.trf.xlu0
        %v2419 = vpop.trf.xlu0
        %v2420 = vpop.trf.xlu0
        %v2421 = vpop.trf.xlu0
        %v2422 = vpop.trf.xlu0
        %v2423 = vpop.trf.xlu0
        %v2424 = vpop.trf.xlu0
        %v2425 = vpop.trf.xlu0
        %v2426 = vpop.trf.xlu0
        %v2427 = vpop.trf.xlu0
        %v2428 = vpop.trf.xlu0
        %v2429 = vpop.trf.xlu0
        %v2430 = vpop.trf.xlu0
        %v2431 = vpop.trf.xlu0
        %v2432 = vpop.trf.xlu0
        %2433 = vxpose.xlu0.b32.start [1/16] %v2394, 128
        %2434 = vxpose.xlu0.b32.cont [2/16] %v2396, 128
        %2435 = vxpose.xlu0.b32.cont [3/16] 0.0, 128
        %2436 = vxpose.xlu0.b32.cont [4/16] 0.0, 128
        %2437 = vxpose.xlu0.b32.cont [5/16] 0.0, 128
        %2438 = vxpose.xlu0.b32.cont [6/16] 0.0, 128
        %2439 = vxpose.xlu0.b32.cont [7/16] 0.0, 128
        %2440 = vxpose.xlu0.b32.cont [8/16] 0.0, 128
        %2441 = vxpose.xlu0.b32.cont [9/16] 0.0, 128
        %2442 = vxpose.xlu0.b32.cont [10/16] 0.0, 128
        %2443 = vxpose.xlu0.b32.cont [11/16] 0.0, 128
        %2444 = vxpose.xlu0.b32.cont [12/16] 0.0, 128
        %2445 = vxpose.xlu0.b32.cont [13/16] 0.0, 128
        %2446 = vxpose.xlu0.b32.cont [14/16] 0.0, 128
        %2447 = vxpose.xlu0.b32.cont [15/16] 0.0, 128
        %2448 = vxpose.xlu0.b32.end [16/16] 0.0, 128
        %v2449 = vpop.trf.xlu0
        %v2450 = vpop.trf.xlu0
        %v2451 = vpop.trf.xlu0
        %v2452 = vpop.trf.xlu0
        %v2453 = vpop.trf.xlu0
        %v2454 = vpop.trf.xlu0
        %v2455 = vpop.trf.xlu0
        %v2456 = vpop.trf.xlu0
        %v2457 = vpop.trf.xlu0
        %v2458 = vpop.trf.xlu0
        %v2459 = vpop.trf.xlu0
        %v2460 = vpop.trf.xlu0
        %v2461 = vpop.trf.xlu0
        %v2462 = vpop.trf.xlu0
        %v2463 = vpop.trf.xlu0
        %v2464 = vpop.trf.xlu0
        %v2466 = vsel %vm1472, %v2417, 0
        %v2469 = vsel %vm1472, %v2418, 0
        %v2472 = vsel %vm1472, %v2419, 0
        %v2475 = vsel %vm1472, %v2420, 0
        %v2478 = vsel %vm1472, %v2385, 0
        %v2481 = vsel %vm1472, %v2386, 0
        %2483 = vmatprep.subr.mxu0 0.0
        %2484 = vmatpush1.xpose.msra.mxu0 %v2478
        %2485 = vmatprep.subr.mxu0 0.0
        %2486 = vmatpush1.xpose.msra.mxu0 %v2481
        %2487 = vmatprep.subr.mxu0 0.0
        %2488 = vmatpush1.xpose.msra.mxu0 0.0
        %2489 = vmatprep.subr.mxu0 0.0
        %2490 = vmatpush1.xpose.msra.mxu0 0.0
        %2491 = vmatprep.subr.mxu0 0.0
        %2492 = vmatpush1.xpose.msra.mxu0 0.0
        %2493 = vmatprep.subr.mxu0 0.0
        %2494 = vmatpush1.xpose.msra.mxu0 0.0
        %2495 = vmatprep.subr.mxu0 0.0
        %2496 = vmatpush1.xpose.msra.mxu0 0.0
        %2497 = vmatprep.subr.mxu0 0.0
        %2498 = vmatpush1.xpose.msra.mxu0 0.0
        %2499 = vmatprep.subr.mxu0 0.0
        %2500 = vmatpush1.xpose.msra.mxu0 0.0
        %2501 = vmatprep.subr.mxu0 0.0
        %2502 = vmatpush1.xpose.msra.mxu0 0.0
        %2503 = vmatprep.subr.mxu0 0.0
        %2504 = vmatpush1.xpose.msra.mxu0 0.0
        %2505 = vmatprep.subr.mxu0 0.0
        %2506 = vmatpush1.xpose.msra.mxu0 0.0
        %2507 = vmatprep.subr.mxu0 0.0
        %2508 = vmatpush1.xpose.msra.mxu0 0.0
        %2509 = vmatprep.subr.mxu0 0.0
        %2510 = vmatpush1.xpose.msra.mxu0 0.0
        %2511 = vmatprep.subr.mxu0 0.0
        %2512 = vmatpush1.xpose.msra.mxu0 0.0
        %2513 = vmatprep.subr.mxu0 0.0
        %2514 = vmatpush1.xpose.msra.mxu0 0.0
        %2515 = vmatprep.subr.mxu0 0.0
        %2516 = vmatpush1.xpose.msra.mxu0 0.0
        %2517 = vmatprep.subr.mxu0 0.0
        %2518 = vmatpush1.xpose.msra.mxu0 0.0
        %2519 = vmatprep.subr.mxu0 0.0
        %2520 = vmatpush1.xpose.msra.mxu0 0.0
        %2521 = vmatprep.subr.mxu0 0.0
        %2522 = vmatpush1.xpose.msra.mxu0 0.0
        %2523 = vmatprep.subr.mxu0 0.0
        %2524 = vmatpush1.xpose.msra.mxu0 0.0
        %2525 = vmatprep.subr.mxu0 0.0
        %2526 = vmatpush1.xpose.msra.mxu0 0.0
        %2527 = vmatprep.subr.mxu0 0.0
        %2528 = vmatpush1.xpose.msra.mxu0 0.0
        %2529 = vmatprep.subr.mxu0 0.0
        %2530 = vmatpush1.xpose.msra.mxu0 0.0
        %2531 = vmatprep.subr.mxu0 0.0
        %2532 = vmatpush1.xpose.msra.mxu0 0.0
        %2533 = vmatprep.subr.mxu0 0.0
        %2534 = vmatpush1.xpose.msra.mxu0 0.0
        %2535 = vmatprep.subr.mxu0 0.0
        %2536 = vmatpush1.xpose.msra.mxu0 0.0
        %2537 = vmatprep.subr.mxu0 0.0
        %2538 = vmatpush1.xpose.msra.mxu0 0.0
        %2539 = vmatprep.subr.mxu0 0.0
        %2540 = vmatpush1.xpose.msra.mxu0 0.0
        %2541 = vmatprep.subr.mxu0 0.0
        %2542 = vmatpush1.xpose.msra.mxu0 0.0
        %2543 = vmatprep.subr.mxu0 0.0
        %2544 = vmatpush1.xpose.msra.mxu0 0.0
        %2545 = vmatprep.subr.mxu0 0.0
        %2546 = vmatpush1.xpose.msra.mxu0 0.0
        %2547 = vmatprep.mubr.f32.mxu0 0.0
        %2548 = vmatmul.mubr.f32.gmra.mrb[0].mxu0 %v2466
        %v2549 = vpop.f32.mrb[0].mxu0
        %v2550 = vadd.f32 0.0, %v2549
        %v2551 = vpop.f32.mrb[0].mxu0
        %2552 = vmatprep.mubr.f32.mxu0 0.0
        %2553 = vmatmul.mubr.f32.gmra.mrb[0].mxu0 %v2469
        %v2554 = vpop.f32.mrb[0].mxu0
        %v2555 = vadd.f32 0.0, %v2554
        %v2556 = vpop.f32.mrb[0].mxu0
        %2557 = vmatprep.mubr.f32.mxu0 0.0
        %2558 = vmatmul.mubr.f32.gmra.mrb[0].mxu0 %v2472
        %v2559 = vpop.f32.mrb[0].mxu0
        %v2560 = vadd.f32 0.0, %v2559
        %v2561 = vpop.f32.mrb[0].mxu0
        %2562 = vmatprep.mubr.f32.mxu0 0.0
        %2563 = vmatmul.mubr.f32.gmra.mrb[0].mxu0 %v2475
        %v2564 = vpop.f32.mrb[0].mxu0
        %v2565 = vadd.f32 0.0, %v2564
        %v2566 = vpop.f32.mrb[0].mxu0
        %2567 = vdwg.mxu0
        %v2569 = vsel %vm1472, %v2449, 0
        %v2572 = vsel %vm1472, %v2450, 0
        %v2575 = vsel %vm1472, %v2451, 0
        %v2578 = vsel %vm1472, %v2452, 0
        %v2581 = vsel %vm1472, %v2387, 0
        %v2584 = vsel %vm1472, %v2388, 0
        %2586 = vmatprep.subr.mxu0 0.0
        %2587 = vmatpush1.xpose.msra.mxu0 %v2581
        %2588 = vmatprep.subr.mxu0 0.0
        %2589 = vmatpush1.xpose.msra.mxu0 %v2584
        %2590 = vmatprep.subr.mxu0 0.0
        %2591 = vmatpush1.xpose.msra.mxu0 0.0
        %2592 = vmatprep.subr.mxu0 0.0
        %2593 = vmatpush1.xpose.msra.mxu0 0.0
        %2594 = vmatprep.subr.mxu0 0.0
        %2595 = vmatpush1.xpose.msra.mxu0 0.0
        %2596 = vmatprep.subr.mxu0 0.0
        %2597 = vmatpush1.xpose.msra.mxu0 0.0
        %2598 = vmatprep.subr.mxu0 0.0
        %2599 = vmatpush1.xpose.msra.mxu0 0.0
        %2600 = vmatprep.subr.mxu0 0.0
        %2601 = vmatpush1.xpose.msra.mxu0 0.0
        %2602 = vmatprep.subr.mxu0 0.0
        %2603 = vmatpush1.xpose.msra.mxu0 0.0
        %2604 = vmatprep.subr.mxu0 0.0
        %2605 = vmatpush1.xpose.msra.mxu0 0.0
        %2606 = vmatprep.subr.mxu0 0.0
        %2607 = vmatpush1.xpose.msra.mxu0 0.0
        %2608 = vmatprep.subr.mxu0 0.0
        %2609 = vmatpush1.xpose.msra.mxu0 0.0
        %2610 = vmatprep.subr.mxu0 0.0
        %2611 = vmatpush1.xpose.msra.mxu0 0.0
        %2612 = vmatprep.subr.mxu0 0.0
        %2613 = vmatpush1.xpose.msra.mxu0 0.0
        %2614 = vmatprep.subr.mxu0 0.0
        %2615 = vmatpush1.xpose.msra.mxu0 0.0
        %2616 = vmatprep.subr.mxu0 0.0
        %2617 = vmatpush1.xpose.msra.mxu0 0.0
        %2618 = vmatprep.subr.mxu0 0.0
        %2619 = vmatpush1.xpose.msra.mxu0 0.0
        %2620 = vmatprep.subr.mxu0 0.0
        %2621 = vmatpush1.xpose.msra.mxu0 0.0
        %2622 = vmatprep.subr.mxu0 0.0
        %2623 = vmatpush1.xpose.msra.mxu0 0.0
        %2624 = vmatprep.subr.mxu0 0.0
        %2625 = vmatpush1.xpose.msra.mxu0 0.0
        %2626 = vmatprep.subr.mxu0 0.0
        %2627 = vmatpush1.xpose.msra.mxu0 0.0
        %2628 = vmatprep.subr.mxu0 0.0
        %2629 = vmatpush1.xpose.msra.mxu0 0.0
        %2630 = vmatprep.subr.mxu0 0.0
        %2631 = vmatpush1.xpose.msra.mxu0 0.0
        %2632 = vmatprep.subr.mxu0 0.0
        %2633 = vmatpush1.xpose.msra.mxu0 0.0
        %2634 = vmatprep.subr.mxu0 0.0
        %2635 = vmatpush1.xpose.msra.mxu0 0.0
        %2636 = vmatprep.subr.mxu0 0.0
        %2637 = vmatpush1.xpose.msra.mxu0 0.0
        %2638 = vmatprep.subr.mxu0 0.0
        %2639 = vmatpush1.xpose.msra.mxu0 0.0
        %2640 = vmatprep.subr.mxu0 0.0
        %2641 = vmatpush1.xpose.msra.mxu0 0.0
        %2642 = vmatprep.subr.mxu0 0.0
        %2643 = vmatpush1.xpose.msra.mxu0 0.0
        %2644 = vmatprep.subr.mxu0 0.0
        %2645 = vmatpush1.xpose.msra.mxu0 0.0
        %2646 = vmatprep.subr.mxu0 0.0
        %2647 = vmatpush1.xpose.msra.mxu0 0.0
        %2648 = vmatprep.subr.mxu0 0.0
        %2649 = vmatpush1.xpose.msra.mxu0 0.0
        %2650 = vmatprep.mubr.f32.mxu0 0.0
        %2651 = vmatmul.mubr.f32.gmra.mrb[0].mxu0 %v2569
        %v2652 = vpop.f32.mrb[0].mxu0
        %v2653 = vadd.f32 0.0, %v2652
        %v2654 = vpop.f32.mrb[0].mxu0
        %2655 = vmatprep.mubr.f32.mxu0 0.0
        %2656 = vmatmul.mubr.f32.gmra.mrb[0].mxu0 %v2572
        %v2657 = vpop.f32.mrb[0].mxu0
        %v2658 = vadd.f32 0.0, %v2657
        %v2659 = vpop.f32.mrb[0].mxu0
        %2660 = vmatprep.mubr.f32.mxu0 0.0
        %2661 = vmatmul.mubr.f32.gmra.mrb[0].mxu0 %v2575
        %v2662 = vpop.f32.mrb[0].mxu0
        %v2663 = vadd.f32 0.0, %v2662
        %v2664 = vpop.f32.mrb[0].mxu0
        %2665 = vmatprep.mubr.f32.mxu0 0.0
        %2666 = vmatmul.mubr.f32.gmra.mrb[0].mxu0 %v2578
        %v2667 = vpop.f32.mrb[0].mxu0
        %v2668 = vadd.f32 0.0, %v2667
        %v2669 = vpop.f32.mrb[0].mxu0
        %2670 = vdwg.mxu0
        %2671 = vxpose.xlu0.b32.start [1/16] %v2550, 128
        %2672 = vxpose.xlu0.b32.cont [2/16] %v2555, 128
        %2673 = vxpose.xlu0.b32.cont [3/16] %v2560, 128
        %2674 = vxpose.xlu0.b32.cont [4/16] %v2565, 128
        %2675 = vxpose.xlu0.b32.cont [5/16] 0.0, 128
        %2676 = vxpose.xlu0.b32.cont [6/16] 0.0, 128
        %2677 = vxpose.xlu0.b32.cont [7/16] 0.0, 128
        %2678 = vxpose.xlu0.b32.cont [8/16] 0.0, 128
        %2679 = vxpose.xlu0.b32.cont [9/16] 0.0, 128
        %2680 = vxpose.xlu0.b32.cont [10/16] 0.0, 128
        %2681 = vxpose.xlu0.b32.cont [11/16] 0.0, 128
        %2682 = vxpose.xlu0.b32.cont [12/16] 0.0, 128
        %2683 = vxpose.xlu0.b32.cont [13/16] 0.0, 128
        %2684 = vxpose.xlu0.b32.cont [14/16] 0.0, 128
        %2685 = vxpose.xlu0.b32.cont [15/16] 0.0, 128
        %2686 = vxpose.xlu0.b32.end [16/16] 0.0, 128
        %v2687 = vpop.trf.xlu0
        %v2688 = vpop.trf.xlu0
        %v2689 = vpop.trf.xlu0
        %v2690 = vpop.trf.xlu0
        %v2691 = vpop.trf.xlu0
        %v2692 = vpop.trf.xlu0
        %v2693 = vpop.trf.xlu0
        %v2694 = vpop.trf.xlu0
        %v2695 = vpop.trf.xlu0
        %v2696 = vpop.trf.xlu0
        %v2697 = vpop.trf.xlu0
        %v2698 = vpop.trf.xlu0
        %v2699 = vpop.trf.xlu0
        %v2700 = vpop.trf.xlu0
        %v2701 = vpop.trf.xlu0
        %v2702 = vpop.trf.xlu0
        %2703 = vxpose.xlu0.b32.start [1/16] %v2653, 128
        %2704 = vxpose.xlu0.b32.cont [2/16] %v2658, 128
        %2705 = vxpose.xlu0.b32.cont [3/16] %v2663, 128
        %2706 = vxpose.xlu0.b32.cont [4/16] %v2668, 128
        %2707 = vxpose.xlu0.b32.cont [5/16] 0.0, 128
        %2708 = vxpose.xlu0.b32.cont [6/16] 0.0, 128
        %2709 = vxpose.xlu0.b32.cont [7/16] 0.0, 128
        %2710 = vxpose.xlu0.b32.cont [8/16] 0.0, 128
        %2711 = vxpose.xlu0.b32.cont [9/16] 0.0, 128
        %2712 = vxpose.xlu0.b32.cont [10/16] 0.0, 128
        %2713 = vxpose.xlu0.b32.cont [11/16] 0.0, 128
        %2714 = vxpose.xlu0.b32.cont [12/16] 0.0, 128
        %2715 = vxpose.xlu0.b32.cont [13/16] 0.0, 128
        %2716 = vxpose.xlu0.b32.cont [14/16] 0.0, 128
        %2717 = vxpose.xlu0.b32.cont [15/16] 0.0, 128
        %2718 = vxpose.xlu0.b32.end [16/16] 0.0, 128
        %v2719 = vpop.trf.xlu0
        %v2720 = vpop.trf.xlu0
        %v2721 = vpop.trf.xlu0
        %v2722 = vpop.trf.xlu0
        %v2723 = vpop.trf.xlu0
        %v2724 = vpop.trf.xlu0
        %v2725 = vpop.trf.xlu0
        %v2726 = vpop.trf.xlu0
        %v2727 = vpop.trf.xlu0
        %v2728 = vpop.trf.xlu0
        %v2729 = vpop.trf.xlu0
        %v2730 = vpop.trf.xlu0
        %v2731 = vpop.trf.xlu0
        %v2732 = vpop.trf.xlu0
        %v2733 = vpop.trf.xlu0
        %v2734 = vpop.trf.xlu0
        %v2735 = vcombine.high %v2687, 0.0
        %v2737 = vunpack.c.l.s4 1983009808
        %v2738 = vunpack.c.0.s8 %v2737
        %v2739 = vlaneseq
        %v2740 = vshrl.u32 %v2739, 7
        %v2741 = vsub.s32 %v2738, %v2740
        %v2742 = vrot.slane %v2687, %v2741
        %v2744 = vunpack.c.l.s4 1983009808
        %v2745 = vunpack.c.0.s8 %v2744
        %v2746 = vlaneseq
        %v2747 = vshrl.u32 %v2746, 7
        %v2748 = vsub.s32 %v2745, %v2747
        %v2749 = vrot.slane %v2735, %v2748
        %v2750 = vcombine.high %v2719, 0.0
        %v2752 = vunpack.c.l.s4 1983009808
        %v2753 = vunpack.c.0.s8 %v2752
        %v2754 = vlaneseq
        %v2755 = vshrl.u32 %v2754, 7
        %v2756 = vsub.s32 %v2753, %v2755
        %v2757 = vrot.slane %v2719, %v2756
        %v2759 = vunpack.c.l.s4 1983009808
        %v2760 = vunpack.c.0.s8 %v2759
        %v2761 = vlaneseq
        %v2762 = vshrl.u32 %v2761, 7
        %v2763 = vsub.s32 %v2760, %v2762
        %v2764 = vrot.slane %v2750, %v2763
        %v2765 = vcombine.low %v2742, %v2757
        %v2766 = vcombine.high %v2742, %v2757
        %v2768 = vunpack.c.l.s4 1934713408
        %v2769 = vunpack.c.0.s8 %v2768
        %v2770 = vlaneseq
        %v2771 = vshrl.u32 %v2770, 7
        %v2772 = vsub.s32 %v2769, %v2771
        %v2773 = vrot.slane %v2765, %v2772
        %v2775 = vunpack.c.l.s4 1934713408
        %v2776 = vunpack.c.0.s8 %v2775
        %v2777 = vlaneseq
        %v2778 = vshrl.u32 %v2777, 7
        %v2779 = vsub.s32 %v2776, %v2778
        %v2780 = vrot.slane %v2766, %v2779
        %v2781 = vcombine.low %v2749, %v2764
        %v2782 = vcombine.high %v2749, %v2764
        %v2784 = vunpack.c.l.s4 1934713408
        %v2785 = vunpack.c.0.s8 %v2784
        %v2786 = vlaneseq
        %v2787 = vshrl.u32 %v2786, 7
        %v2788 = vsub.s32 %v2785, %v2787
        %v2789 = vrot.slane %v2781, %v2788
        %v2791 = vunpack.c.l.s4 1934713408
        %v2792 = vunpack.c.0.s8 %v2791
        %v2793 = vlaneseq
        %v2794 = vshrl.u32 %v2793, 7
        %v2795 = vsub.s32 %v2792, %v2794
        %v2796 = vrot.slane %v2782, %v2795
        %v2797 = vcombine.high %v2773, 0.0
        %v2798 = vcombine.high %v2780, 0.0
        %v2799 = vcombine.high %v2789, 0.0
        %v2800 = vcombine.high %v2796, 0.0
        %v2801 = vcombine.high %v2688, 0.0
        %v2803 = vunpack.c.l.s4 1983009808
        %v2804 = vunpack.c.0.s8 %v2803
        %v2805 = vlaneseq
        %v2806 = vshrl.u32 %v2805, 7
        %v2807 = vsub.s32 %v2804, %v2806
        %v2808 = vrot.slane %v2688, %v2807
        %v2810 = vunpack.c.l.s4 1983009808
        %v2811 = vunpack.c.0.s8 %v2810
        %v2812 = vlaneseq
        %v2813 = vshrl.u32 %v2812, 7
        %v2814 = vsub.s32 %v2811, %v2813
        %v2815 = vrot.slane %v2801, %v2814
        %v2816 = vcombine.high %v2720, 0.0
        %v2818 = vunpack.c.l.s4 1983009808
        %v2819 = vunpack.c.0.s8 %v2818
        %v2820 = vlaneseq
        %v2821 = vshrl.u32 %v2820, 7
        %v2822 = vsub.s32 %v2819, %v2821
        %v2823 = vrot.slane %v2720, %v2822
        %v2825 = vunpack.c.l.s4 1983009808
        %v2826 = vunpack.c.0.s8 %v2825
        %v2827 = vlaneseq
        %v2828 = vshrl.u32 %v2827, 7
        %v2829 = vsub.s32 %v2826, %v2828
        %v2830 = vrot.slane %v2816, %v2829
        %v2831 = vcombine.low %v2808, %v2823
        %v2832 = vcombine.high %v2808, %v2823
        %v2834 = vunpack.c.l.s4 1934713408
        %v2835 = vunpack.c.0.s8 %v2834
        %v2836 = vlaneseq
        %v2837 = vshrl.u32 %v2836, 7
        %v2838 = vsub.s32 %v2835, %v2837
        %v2839 = vrot.slane %v2831, %v2838
        %v2841 = vunpack.c.l.s4 1934713408
        %v2842 = vunpack.c.0.s8 %v2841
        %v2843 = vlaneseq
        %v2844 = vshrl.u32 %v2843, 7
        %v2845 = vsub.s32 %v2842, %v2844
        %v2846 = vrot.slane %v2832, %v2845
        %v2847 = vcombine.low %v2815, %v2830
        %v2848 = vcombine.high %v2815, %v2830
        %v2850 = vunpack.c.l.s4 1934713408
        %v2851 = vunpack.c.0.s8 %v2850
        %v2852 = vlaneseq
        %v2853 = vshrl.u32 %v2852, 7
        %v2854 = vsub.s32 %v2851, %v2853
        %v2855 = vrot.slane %v2847, %v2854
        %v2857 = vunpack.c.l.s4 1934713408
        %v2858 = vunpack.c.0.s8 %v2857
        %v2859 = vlaneseq
        %v2860 = vshrl.u32 %v2859, 7
        %v2861 = vsub.s32 %v2858, %v2860
        %v2862 = vrot.slane %v2848, %v2861
        %v2863 = vcombine.high %v2839, 0.0
        %v2864 = vcombine.high %v2846, 0.0
        %v2865 = vcombine.high %v2855, 0.0
        %v2866 = vcombine.high %v2862, 0.0
        %v2867 = vcombine.low %v2773, %v2780
        %v2869 = vunpack.c.l.s4 1983009808
        %v2870 = vunpack.c.0.s8 %v2869
        %v2871 = vlaneseq
        %v2872 = vshrl.u32 %v2871, 7
        %v2873 = vsub.s32 %v2870, %v2872
        %v2874 = vrot.slane %v2867, %v2873
        %v2875 = vcombine.low %v2797, %v2798
        %v2877 = vunpack.c.l.s4 1983009808
        %v2878 = vunpack.c.0.s8 %v2877
        %v2879 = vlaneseq
        %v2880 = vshrl.u32 %v2879, 7
        %v2881 = vsub.s32 %v2878, %v2880
        %v2882 = vrot.slane %v2875, %v2881
        %v2883 = vcombine.low %v2789, %v2796
        %v2885 = vunpack.c.l.s4 1983009808
        %v2886 = vunpack.c.0.s8 %v2885
        %v2887 = vlaneseq
        %v2888 = vshrl.u32 %v2887, 7
        %v2889 = vsub.s32 %v2886, %v2888
        %v2890 = vrot.slane %v2883, %v2889
        %v2891 = vcombine.low %v2799, %v2800
        %v2893 = vunpack.c.l.s4 1983009808
        %v2894 = vunpack.c.0.s8 %v2893
        %v2895 = vlaneseq
        %v2896 = vshrl.u32 %v2895, 7
        %v2897 = vsub.s32 %v2894, %v2896
        %v2898 = vrot.slane %v2891, %v2897
        %v2899 = vcombine.low %v2874, %v2882
        %v2901 = vunpack.c.l.s4 1934713408
        %v2902 = vunpack.c.0.s8 %v2901
        %v2903 = vlaneseq
        %v2904 = vshrl.u32 %v2903, 7
        %v2905 = vsub.s32 %v2902, %v2904
        %v2906 = vrot.slane %v2899, %v2905
        %v2907 = vcombine.low %v2890, %v2898
        %v2909 = vunpack.c.l.s4 1934713408
        %v2910 = vunpack.c.0.s8 %v2909
        %v2911 = vlaneseq
        %v2912 = vshrl.u32 %v2911, 7
        %v2913 = vsub.s32 %v2910, %v2912
        %v2914 = vrot.slane %v2907, %v2913
        %v2915 = vcombine.low %v2906, %v2914
        %v2916 = vcombine.high %v2906, %v2914
        %v2917 = vcombine.low %v2839, %v2846
        %v2919 = vunpack.c.l.s4 1983009808
        %v2920 = vunpack.c.0.s8 %v2919
        %v2921 = vlaneseq
        %v2922 = vshrl.u32 %v2921, 7
        %v2923 = vsub.s32 %v2920, %v2922
        %v2924 = vrot.slane %v2917, %v2923
        %v2925 = vcombine.low %v2863, %v2864
        %v2927 = vunpack.c.l.s4 1983009808
        %v2928 = vunpack.c.0.s8 %v2927
        %v2929 = vlaneseq
        %v2930 = vshrl.u32 %v2929, 7
        %v2931 = vsub.s32 %v2928, %v2930
        %v2932 = vrot.slane %v2925, %v2931
        %v2933 = vcombine.low %v2855, %v2862
        %v2935 = vunpack.c.l.s4 1983009808
        %v2936 = vunpack.c.0.s8 %v2935
        %v2937 = vlaneseq
        %v2938 = vshrl.u32 %v2937, 7
        %v2939 = vsub.s32 %v2936, %v2938
        %v2940 = vrot.slane %v2933, %v2939
        %v2941 = vcombine.low %v2865, %v2866
        %v2943 = vunpack.c.l.s4 1983009808
        %v2944 = vunpack.c.0.s8 %v2943
        %v2945 = vlaneseq
        %v2946 = vshrl.u32 %v2945, 7
        %v2947 = vsub.s32 %v2944, %v2946
        %v2948 = vrot.slane %v2941, %v2947
        %v2949 = vcombine.low %v2924, %v2932
        %v2951 = vunpack.c.l.s4 1934713408
        %v2952 = vunpack.c.0.s8 %v2951
        %v2953 = vlaneseq
        %v2954 = vshrl.u32 %v2953, 7
        %v2955 = vsub.s32 %v2952, %v2954
        %v2956 = vrot.slane %v2949, %v2955
        %v2957 = vcombine.low %v2940, %v2948
        %v2959 = vunpack.c.l.s4 1934713408
        %v2960 = vunpack.c.0.s8 %v2959
        %v2961 = vlaneseq
        %v2962 = vshrl.u32 %v2961, 7
        %v2963 = vsub.s32 %v2960, %v2962
        %v2964 = vrot.slane %v2957, %v2963
        %v2965 = vcombine.low %v2956, %v2964
        %v2966 = vcombine.high %v2956, %v2964
        %2969 = vrot.lane.b32.xlu0 %v2916, 32
        %v2970 = vpop.permute.xlu0 %2969
        %2971 = vrot.lane.b32.xlu0 %v2966, 32
        %v2972 = vpop.permute.xlu0 %2971
        %v2975 = vsel %vm1309, %v2915, %v2970
        %v2976 = vsel %vm1309, %v2965, %v2972
        %v2977 = vld [vmem:[%s810] sm:$0xf]
        %v2978 = vld [vmem:[%s810 + $0x4] sm:$0xf]
        %v2979 = vld [vmem:[%s810 + $0x8] sm:$0xf]
        %v2980 = vld [vmem:[%s810 + $0xc] sm:$0xf]
        %v2981 = vld [vmem:[%s810 + $0x10] sm:$0xf]
        %v2982 = vld [vmem:[%s810 + $0x14] sm:$0xf]
        %v2983 = vld [vmem:[%s810 + $0x18] sm:$0xf]
        %v2984 = vld [vmem:[%s810 + $0x1c] sm:$0xf]
        %v2985 = vpack.c.bf16 %v2104, %v2103
        %v2986 = vpack.c.bf16 %v2976, %v2975
        %v2987 = vld [vmem:[%s819] sm:$0x1]
        %v2988 = vlaneseq
        %v2989 = vshrl.u32 %v2988, 7
        %v2990 = vsub.s32 0, %v2989
        %v2991 = vrot.slane %v2987, %v2990
        %v3000 = vunpack.c.l.b16 %v2977
        %v3001 = vunpack.c.l.b16 %v2978
        %v3002 = vunpack.c.l.b16 %v2979
        %v3003 = vunpack.c.l.b16 %v2980
        %v3004 = vunpack.c.l.b16 %v2981
        %v3005 = vunpack.c.l.b16 %v2982
        %v3006 = vunpack.c.l.b16 %v2983
        %v3007 = vunpack.c.l.b16 %v2984
        %v3008 = vpack.c.b16 %v3001, %v3000
        %v3009 = vpack.c.b16 %v3003, %v3002
        %v3010 = vpack.c.b16 %v3005, %v3004
        %v3011 = vpack.c.b16 %v3007, %v3006
        %v3017 = vsel %vm981, %v2985, 0
        %v3020 = vsel %vm981, %v2986, 0
        %3022 = vmatprep.subr.bf16.mxu0 0
        %3023 = vmatpush1.bf16.msra.mxu0 %v3008
        %3024 = vmatprep.subr.bf16.mxu0 0
        %3025 = vmatpush1.bf16.msra.mxu0 %v3009
        %3026 = vmatprep.subr.bf16.mxu0 0
        %3027 = vmatpush1.bf16.msra.mxu0 %v3010
        %3028 = vmatprep.subr.bf16.mxu0 0
        %3029 = vmatpush1.bf16.msra.mxu0 %v3011
        %3030 = vmatprep.subr.bf16.mxu0 0
        %3031 = vmatpush1.bf16.msra.mxu0 0
        %3032 = vmatprep.subr.bf16.mxu0 0
        %3033 = vmatpush1.bf16.msra.mxu0 0
        %3034 = vmatprep.subr.bf16.mxu0 0
        %3035 = vmatpush1.bf16.msra.mxu0 0
        %3036 = vmatprep.subr.bf16.mxu0 0
        %3037 = vmatpush1.bf16.msra.mxu0 0
        %3038 = vmatprep.subr.bf16.mxu0 0
        %3039 = vmatpush1.bf16.msra.mxu0 0
        %3040 = vmatprep.subr.bf16.mxu0 0
        %3041 = vmatpush1.bf16.msra.mxu0 0
        %3042 = vmatprep.subr.bf16.mxu0 0
        %3043 = vmatpush1.bf16.msra.mxu0 0
        %3044 = vmatprep.subr.bf16.mxu0 0
        %3045 = vmatpush1.bf16.msra.mxu0 0
        %3046 = vmatprep.subr.bf16.mxu0 0
        %3047 = vmatpush1.bf16.msra.mxu0 0
        %3048 = vmatprep.subr.bf16.mxu0 0
        %3049 = vmatpush1.bf16.msra.mxu0 0
        %3050 = vmatprep.subr.bf16.mxu0 0
        %3051 = vmatpush1.bf16.msra.mxu0 0
        %3052 = vmatprep.subr.bf16.mxu0 0
        %3053 = vmatpush1.bf16.msra.mxu0 0
        %3054 = vmatprep.mubr.bf16.mxu0 0
        %3055 = vmatmul.mubr.bf16.gmra.mrb[0].mxu0 %v3017
        %v3056 = vpop.f32.mrb[0].mxu0
        %v3057 = vadd.f32 %v2991, %v3056
        %v3058 = vpop.f32.mrb[0].mxu0
        %v3059 = vpop.f32.mrb[0].mxu0
        %v3060 = vadd.f32 %v2991, %v3059
        %v3061 = vpop.f32.mrb[0].mxu0
        %3062 = vmatprep.mubr.bf16.mxu0 0
        %3063 = vmatmul.mubr.bf16.gmra.mrb[0].mxu0 %v3020
        %v3064 = vpop.f32.mrb[0].mxu0
        %v3065 = vadd.f32 %v2991, %v3064
        %v3066 = vpop.f32.mrb[0].mxu0
        %v3067 = vpop.f32.mrb[0].mxu0
        %v3068 = vadd.f32 %v2991, %v3067
        %v3069 = vpop.f32.mrb[0].mxu0
        %3070 = vdwg.mxu0
        %v3071 = vadd.f32 %v973, %v3057
        %v3072 = vadd.f32 %v974, %v3060
        %v3073 = vadd.f32 %v975, %v3065
        %v3074 = vadd.f32 %v976, %v3068
        %v3075 = vld [vmem:[%s756 + $0x1] sm:$0x1]
        %v3076 = vld [vmem:[%s765 + $0x1] sm:$0x1]
        %v3079 = vcombine.low %v977, %v978
        %v3081 = vsel %vm981, %v3079, 0.0
        %3082 = vadd.xlane.f32.xlu0 %v3081
        %v3083 = vpop.xlane.xlu0 %3082
        %v3084 = vmul.f32 %v3083, %v994
        %v3087 = vunpack.c.l.s4 839922192
        %v3088 = vunpack.c.0.s8 %v3087
        %v3089 = vlaneseq
        %v3090 = vshrl.u32 %v3089, 7
        %v3091 = vsub.s32 %v3088, %v3090
        %v3092 = vrot.slane %v3084, %v3091
        %v3094 = vunpack.c.l.s4 1985246804
        %v3095 = vunpack.c.0.s8 %v3094
        %v3096 = vlaneseq
        %v3097 = vshrl.u32 %v3096, 7
        %v3098 = vsub.s32 %v3095, %v3097
        %v3099 = vrot.slane %v3084, %v3098
        %v3102 = vsub.f32 %v977, %v3092
        %v3103 = vsub.f32 %v978, %v3099
        %v3104 = vmul.f32 %v3102, %v3102
        %v3105 = vmul.f32 %v3103, %v3103
        %v3108 = vcombine.low %v3104, %v3105
        %v3110 = vsel %vm981, %v3108, 0.0
        %3111 = vadd.xlane.f32.xlu0 %v3110
        %v3112 = vpop.xlane.xlu0 %3111
        %v3113 = vmul.f32 %v3112, %v994
        %v3114 = vadd.f32 %v3113, 1e-05
        %v3115 = vrsqrt.pop %v3114
        %v3118 = vunpack.c.l.s4 839922192
        %v3119 = vunpack.c.0.s8 %v3118
        %v3120 = vlaneseq
        %v3121 = vshrl.u32 %v3120, 7
        %v3122 = vsub.s32 %v3119, %v3121
        %v3123 = vrot.slane %v3115, %v3122
        %v3125 = vunpack.c.l.s4 1985246804
        %v3126 = vunpack.c.0.s8 %v3125
        %v3127 = vlaneseq
        %v3128 = vshrl.u32 %v3127, 7
        %v3129 = vsub.s32 %v3126, %v3128
        %v3130 = vrot.slane %v3115, %v3129
        %v3133 = vmul.f32 %v3102, %v3123
        %v3134 = vmul.f32 %v3103, %v3130
        %v3135 = vlaneseq
        %v3136 = vshrl.u32 %v3135, 7
        %v3137 = vsub.s32 0, %v3136
        %v3138 = vrot.slane %v3075, %v3137
        %v3140 = vcombine.high %v3138, %v3138
        %v3142 = vmul.f32 %v3133, %v3138
        %v3143 = vmul.f32 %v3134, %v3140
        %v3144 = vlaneseq
        %v3145 = vshrl.u32 %v3144, 7
        %v3146 = vsub.s32 0, %v3145
        %v3147 = vrot.slane %v3076, %v3146
        %v3149 = vcombine.high %v3147, %v3147
        %v3151 = vadd.f32 %v3142, %v3147
        %v3152 = vadd.f32 %v3143, %v3149
        %s3153 = scalar_lea.vmem %s774, 32 [#allocation9]
        %v3154 = vld [vmem:[%s3153] sm:$0xf]
        %v3155 = vld [vmem:[%s3153 + $0x4] sm:$0xf]
        %v3156 = vld [vmem:[%s3153 + $0x8] sm:$0xf]
        %v3157 = vld [vmem:[%s3153 + $0xc] sm:$0xf]
        %v3158 = vld [vmem:[%s3153 + $0x10] sm:$0xf]
        %v3159 = vld [vmem:[%s3153 + $0x14] sm:$0xf]
        %v3160 = vld [vmem:[%s3153 + $0x18] sm:$0xf]
        %v3161 = vld [vmem:[%s3153 + $0x1c] sm:$0xf]
        %v3164 = vcombine.low %v3151, %v3152
        %v3166 = vpack.c.bf16 %v3164, %v3164
        %v3167 = vld [vmem:[%s783 + $0x1] sm:$0x1]
        %v3168 = vlaneseq
        %v3169 = vshrl.u32 %v3168, 7
        %v3170 = vsub.s32 0, %v3169
        %v3171 = vrot.slane %v3167, %v3170
        %v3180 = vunpack.c.l.b16 %v3154
        %v3181 = vunpack.c.l.b16 %v3155
        %v3182 = vunpack.c.l.b16 %v3156
        %v3183 = vunpack.c.l.b16 %v3157
        %v3184 = vunpack.c.l.b16 %v3158
        %v3185 = vunpack.c.l.b16 %v3159
        %v3186 = vunpack.c.l.b16 %v3160
        %v3187 = vunpack.c.l.b16 %v3161
        %v3188 = vpack.c.b16 %v3181, %v3180
        %v3189 = vpack.c.b16 %v3183, %v3182
        %v3190 = vpack.c.b16 %v3185, %v3184
        %v3191 = vpack.c.b16 %v3187, %v3186
        %v3197 = vsel %vm981, %v3166, 0
        %3199 = vmatprep.subr.bf16.mxu0 0
        %3200 = vmatpush1.bf16.msra.mxu0 %v3188
        %3201 = vmatprep.subr.bf16.mxu0 0
        %3202 = vmatpush1.bf16.msra.mxu0 %v3189
        %3203 = vmatprep.subr.bf16.mxu0 0
        %3204 = vmatpush1.bf16.msra.mxu0 %v3190
        %3205 = vmatprep.subr.bf16.mxu0 0
        %3206 = vmatpush1.bf16.msra.mxu0 %v3191
        %3207 = vmatprep.subr.bf16.mxu0 0
        %3208 = vmatpush1.bf16.msra.mxu0 0
        %3209 = vmatprep.subr.bf16.mxu0 0
        %3210 = vmatpush1.bf16.msra.mxu0 0
        %3211 = vmatprep.subr.bf16.mxu0 0
        %3212 = vmatpush1.bf16.msra.mxu0 0
        %3213 = vmatprep.subr.bf16.mxu0 0
        %3214 = vmatpush1.bf16.msra.mxu0 0
        %3215 = vmatprep.subr.bf16.mxu0 0
        %3216 = vmatpush1.bf16.msra.mxu0 0
        %3217 = vmatprep.subr.bf16.mxu0 0
        %3218 = vmatpush1.bf16.msra.mxu0 0
        %3219 = vmatprep.subr.bf16.mxu0 0
        %3220 = vmatpush1.bf16.msra.mxu0 0
        %3221 = vmatprep.subr.bf16.mxu0 0
        %3222 = vmatpush1.bf16.msra.mxu0 0
        %3223 = vmatprep.subr.bf16.mxu0 0
        %3224 = vmatpush1.bf16.msra.mxu0 0
        %3225 = vmatprep.subr.bf16.mxu0 0
        %3226 = vmatpush1.bf16.msra.mxu0 0
        %3227 = vmatprep.subr.bf16.mxu0 0
        %3228 = vmatpush1.bf16.msra.mxu0 0
        %3229 = vmatprep.subr.bf16.mxu0 0
        %3230 = vmatpush1.bf16.msra.mxu0 0
        %3231 = vmatprep.mubr.bf16.mxu0 0
        %3232 = vmatmul.mubr.bf16.gmra.mrb[0].mxu0 %v3197
        %v3233 = vpop.f32.mrb[0].mxu0
        %v3234 = vadd.f32 %v3171, %v3233
        %v3235 = vpop.f32.mrb[0].mxu0
        %v3236 = vpop.f32.mrb[0].mxu0
        %v3237 = vpop.f32.mrb[0].mxu0
        %3238 = vdwg.mxu0
        %s3239 = scalar_lea.vmem %s792, 32 [#allocation11]
        %v3240 = vld [vmem:[%s3239] sm:$0xf]
        %v3241 = vld [vmem:[%s3239 + $0x4] sm:$0xf]
        %v3242 = vld [vmem:[%s3239 + $0x8] sm:$0xf]
        %v3243 = vld [vmem:[%s3239 + $0xc] sm:$0xf]
        %v3244 = vld [vmem:[%s3239 + $0x10] sm:$0xf]
        %v3245 = vld [vmem:[%s3239 + $0x14] sm:$0xf]
        %v3246 = vld [vmem:[%s3239 + $0x18] sm:$0xf]
        %v3247 = vld [vmem:[%s3239 + $0x1c] sm:$0xf]
        %v3248 = vld [vmem:[%s801 + $0x1] sm:$0x1]
        %v3249 = vlaneseq
        %v3250 = vshrl.u32 %v3249, 7
        %v3251 = vsub.s32 0, %v3250
        %v3252 = vrot.slane %v3248, %v3251
        %v3261 = vunpack.c.l.b16 %v3240
        %v3262 = vunpack.c.l.b16 %v3241
        %v3263 = vunpack.c.l.b16 %v3242
        %v3264 = vunpack.c.l.b16 %v3243
        %v3265 = vunpack.c.l.b16 %v3244
        %v3266 = vunpack.c.l.b16 %v3245
        %v3267 = vunpack.c.l.b16 %v3246
        %v3268 = vunpack.c.l.b16 %v3247
        %v3269 = vpack.c.b16 %v3262, %v3261
        %v3270 = vpack.c.b16 %v3264, %v3263
        %v3271 = vpack.c.b16 %v3266, %v3265
        %v3272 = vpack.c.b16 %v3268, %v3267
        %3277 = vmatprep.subr.bf16.mxu0 0
        %3278 = vmatpush1.bf16.msra.mxu0 %v3269
        %3279 = vmatprep.subr.bf16.mxu0 0
        %3280 = vmatpush1.bf16.msra.mxu0 %v3270
        %3281 = vmatprep.subr.bf16.mxu0 0
        %3282 = vmatpush1.bf16.msra.mxu0 %v3271
        %3283 = vmatprep.subr.bf16.mxu0 0
        %3284 = vmatpush1.bf16.msra.mxu0 %v3272
        %3285 = vmatprep.subr.bf16.mxu0 0
        %3286 = vmatpush1.bf16.msra.mxu0 0
        %3287 = vmatprep.subr.bf16.mxu0 0
        %3288 = vmatpush1.bf16.msra.mxu0 0
        %3289 = vmatprep.subr.bf16.mxu0 0
        %3290 = vmatpush1.bf16.msra.mxu0 0
        %3291 = vmatprep.subr.bf16.mxu0 0
        %3292 = vmatpush1.bf16.msra.mxu0 0
        %3293 = vmatprep.subr.bf16.mxu0 0
        %3294 = vmatpush1.bf16.msra.mxu0 0
        %3295 = vmatprep.subr.bf16.mxu0 0
        %3296 = vmatpush1.bf16.msra.mxu0 0
        %3297 = vmatprep.subr.bf16.mxu0 0
        %3298 = vmatpush1.bf16.msra.mxu0 0
        %3299 = vmatprep.subr.bf16.mxu0 0
        %3300 = vmatpush1.bf16.msra.mxu0 0
        %3301 = vmatprep.subr.bf16.mxu0 0
        %3302 = vmatpush1.bf16.msra.mxu0 0
        %3303 = vmatprep.subr.bf16.mxu0 0
        %3304 = vmatpush1.bf16.msra.mxu0 0
        %3305 = vmatprep.subr.bf16.mxu0 0
        %3306 = vmatpush1.bf16.msra.mxu0 0
        %3307 = vmatprep.subr.bf16.mxu0 0
        %3308 = vmatpush1.bf16.msra.mxu0 0
        %3309 = vmatprep.mubr.bf16.mxu0 0
        %3310 = vmatmul.mubr.bf16.gmra.mrb[0].mxu0 %v3197
        %v3311 = vpop.f32.mrb[0].mxu0
        %v3312 = vadd.f32 %v3252, %v3311
        %v3313 = vpop.f32.mrb[0].mxu0
        %v3314 = vpop.f32.mrb[0].mxu0
        %v3315 = vpop.f32.mrb[0].mxu0
        %3316 = vdwg.mxu0
        %3318 = vrot.lane.b32.xlu0 %v3234, 96
        %v3319 = vpop.permute.xlu0 %3318
        %3321 = vrot.lane.b32.xlu0 %v3312, 96
        %v3322 = vpop.permute.xlu0 %3321
        %3324 = vxpose.xlu0.b32.start [1/16] %v3312, 128
        %3325 = vxpose.xlu0.b32.cont [2/16] 0.0, 128
        %3326 = vxpose.xlu0.b32.cont [3/16] 0.0, 128
        %3327 = vxpose.xlu0.b32.cont [4/16] 0.0, 128
        %3328 = vxpose.xlu0.b32.cont [5/16] 0.0, 128
        %3329 = vxpose.xlu0.b32.cont [6/16] 0.0, 128
        %3330 = vxpose.xlu0.b32.cont [7/16] 0.0, 128
        %3331 = vxpose.xlu0.b32.cont [8/16] 0.0, 128
        %3332 = vxpose.xlu0.b32.cont [9/16] 0.0, 128
        %3333 = vxpose.xlu0.b32.cont [10/16] 0.0, 128
        %3334 = vxpose.xlu0.b32.cont [11/16] 0.0, 128
        %3335 = vxpose.xlu0.b32.cont [12/16] 0.0, 128
        %3336 = vxpose.xlu0.b32.cont [13/16] 0.0, 128
        %3337 = vxpose.xlu0.b32.cont [14/16] 0.0, 128
        %3338 = vxpose.xlu0.b32.cont [15/16] 0.0, 128
        %3339 = vxpose.xlu0.b32.end [16/16] 0.0, 128
        %v3340 = vpop.trf.xlu0
        %v3341 = vpop.trf.xlu0
        %v3342 = vpop.trf.xlu0
        %v3343 = vpop.trf.xlu0
        %v3344 = vpop.trf.xlu0
        %v3345 = vpop.trf.xlu0
        %v3346 = vpop.trf.xlu0
        %v3347 = vpop.trf.xlu0
        %v3348 = vpop.trf.xlu0
        %v3349 = vpop.trf.xlu0
        %v3350 = vpop.trf.xlu0
        %v3351 = vpop.trf.xlu0
        %v3352 = vpop.trf.xlu0
        %v3353 = vpop.trf.xlu0
        %v3354 = vpop.trf.xlu0
        %v3355 = vpop.trf.xlu0
        %3356 = vxpose.xlu0.b32.start [1/16] %v3322, 128
        %3357 = vxpose.xlu0.b32.cont [2/16] 0.0, 128
        %3358 = vxpose.xlu0.b32.cont [3/16] 0.0, 128
        %3359 = vxpose.xlu0.b32.cont [4/16] 0.0, 128
        %3360 = vxpose.xlu0.b32.cont [5/16] 0.0, 128
        %3361 = vxpose.xlu0.b32.cont [6/16] 0.0, 128
        %3362 = vxpose.xlu0.b32.cont [7/16] 0.0, 128
        %3363 = vxpose.xlu0.b32.cont [8/16] 0.0, 128
        %3364 = vxpose.xlu0.b32.cont [9/16] 0.0, 128
        %3365 = vxpose.xlu0.b32.cont [10/16] 0.0, 128
        %3366 = vxpose.xlu0.b32.cont [11/16] 0.0, 128
        %3367 = vxpose.xlu0.b32.cont [12/16] 0.0, 128
        %3368 = vxpose.xlu0.b32.cont [13/16] 0.0, 128
        %3369 = vxpose.xlu0.b32.cont [14/16] 0.0, 128
        %3370 = vxpose.xlu0.b32.cont [15/16] 0.0, 128
        %3371 = vxpose.xlu0.b32.end [16/16] 0.0, 128
        %v3372 = vpop.trf.xlu0
        %v3373 = vpop.trf.xlu0
        %v3374 = vpop.trf.xlu0
        %v3375 = vpop.trf.xlu0
        %v3376 = vpop.trf.xlu0
        %v3377 = vpop.trf.xlu0
        %v3378 = vpop.trf.xlu0
        %v3379 = vpop.trf.xlu0
        %v3380 = vpop.trf.xlu0
        %v3381 = vpop.trf.xlu0
        %v3382 = vpop.trf.xlu0
        %v3383 = vpop.trf.xlu0
        %v3384 = vpop.trf.xlu0
        %v3385 = vpop.trf.xlu0
        %v3386 = vpop.trf.xlu0
        %v3387 = vpop.trf.xlu0
        %v3388 = vsel %vm1309, %v3234, 0
        %3390 = vmatprep.subr.mxu0 0.0
        %3391 = vmatpush1.msra.mxu0 %v3340
        %3392 = vmatprep.subr.mxu0 0.0
        %3393 = vmatpush1.msra.mxu0 %v3341
        %3394 = vmatprep.subr.mxu0 0.0
        %3395 = vmatpush1.msra.mxu0 %v3342
        %3396 = vmatprep.subr.mxu0 0.0
        %3397 = vmatpush1.msra.mxu0 %v3343
        %3398 = vmatprep.subr.mxu0 0.0
        %3399 = vmatpush1.msra.mxu0 0.0
        %3400 = vmatprep.subr.mxu0 0.0
        %3401 = vmatpush1.msra.mxu0 0.0
        %3402 = vmatprep.subr.mxu0 0.0
        %3403 = vmatpush1.msra.mxu0 0.0
        %3404 = vmatprep.subr.mxu0 0.0
        %3405 = vmatpush1.msra.mxu0 0.0
        %3406 = vmatprep.subr.mxu0 0.0
        %3407 = vmatpush1.msra.mxu0 0.0
        %3408 = vmatprep.subr.mxu0 0.0
        %3409 = vmatpush1.msra.mxu0 0.0
        %3410 = vmatprep.subr.mxu0 0.0
        %3411 = vmatpush1.msra.mxu0 0.0
        %3412 = vmatprep.subr.mxu0 0.0
        %3413 = vmatpush1.msra.mxu0 0.0
        %3414 = vmatprep.subr.mxu0 0.0
        %3415 = vmatpush1.msra.mxu0 0.0
        %3416 = vmatprep.subr.mxu0 0.0
        %3417 = vmatpush1.msra.mxu0 0.0
        %3418 = vmatprep.subr.mxu0 0.0
        %3419 = vmatpush1.msra.mxu0 0.0
        %3420 = vmatprep.subr.mxu0 0.0
        %3421 = vmatpush1.msra.mxu0 0.0
        %3422 = vmatprep.subr.mxu0 0.0
        %3423 = vmatpush1.msra.mxu0 0.0
        %3424 = vmatprep.subr.mxu0 0.0
        %3425 = vmatpush1.msra.mxu0 0.0
        %3426 = vmatprep.subr.mxu0 0.0
        %3427 = vmatpush1.msra.mxu0 0.0
        %3428 = vmatprep.subr.mxu0 0.0
        %3429 = vmatpush1.msra.mxu0 0.0
        %3430 = vmatprep.subr.mxu0 0.0
        %3431 = vmatpush1.msra.mxu0 0.0
        %3432 = vmatprep.subr.mxu0 0.0
        %3433 = vmatpush1.msra.mxu0 0.0
        %3434 = vmatprep.subr.mxu0 0.0
        %3435 = vmatpush1.msra.mxu0 0.0
        %3436 = vmatprep.subr.mxu0 0.0
        %3437 = vmatpush1.msra.mxu0 0.0
        %3438 = vmatprep.subr.mxu0 0.0
        %3439 = vmatpush1.msra.mxu0 0.0
        %3440 = vmatprep.subr.mxu0 0.0
        %3441 = vmatpush1.msra.mxu0 0.0
        %3442 = vmatprep.subr.mxu0 0.0
        %3443 = vmatpush1.msra.mxu0 0.0
        %3444 = vmatprep.subr.mxu0 0.0
        %3445 = vmatpush1.msra.mxu0 0.0
        %3446 = vmatprep.subr.mxu0 0.0
        %3447 = vmatpush1.msra.mxu0 0.0
        %3448 = vmatprep.subr.mxu0 0.0
        %3449 = vmatpush1.msra.mxu0 0.0
        %3450 = vmatprep.subr.mxu0 0.0
        %3451 = vmatpush1.msra.mxu0 0.0
        %3452 = vmatprep.subr.mxu0 0.0
        %3453 = vmatpush1.msra.mxu0 0.0
        %3454 = vmatprep.mubr.f32.mxu0 0.0
        %3455 = vmatmul.mubr.f32.gmra.mrb[0].mxu0 %v3388
        %v3456 = vpop.f32.mrb[0].mxu0
        %v3457 = vadd.f32 0.0, %v3456
        %v3458 = vpop.f32.mrb[0].mxu0
        %3459 = vdwg.mxu0
        %v3460 = vsel %vm1309, %v3319, 0
        %3462 = vmatprep.subr.mxu0 0.0
        %3463 = vmatpush1.msra.mxu0 %v3372
        %3464 = vmatprep.subr.mxu0 0.0
        %3465 = vmatpush1.msra.mxu0 %v3373
        %3466 = vmatprep.subr.mxu0 0.0
        %3467 = vmatpush1.msra.mxu0 %v3374
        %3468 = vmatprep.subr.mxu0 0.0
        %3469 = vmatpush1.msra.mxu0 %v3375
        %3470 = vmatprep.subr.mxu0 0.0
        %3471 = vmatpush1.msra.mxu0 0.0
        %3472 = vmatprep.subr.mxu0 0.0
        %3473 = vmatpush1.msra.mxu0 0.0
        %3474 = vmatprep.subr.mxu0 0.0
        %3475 = vmatpush1.msra.mxu0 0.0
        %3476 = vmatprep.subr.mxu0 0.0
        %3477 = vmatpush1.msra.mxu0 0.0
        %3478 = vmatprep.subr.mxu0 0.0
        %3479 = vmatpush1.msra.mxu0 0.0
        %3480 = vmatprep.subr.mxu0 0.0
        %3481 = vmatpush1.msra.mxu0 0.0
        %3482 = vmatprep.subr.mxu0 0.0
        %3483 = vmatpush1.msra.mxu0 0.0
        %3484 = vmatprep.subr.mxu0 0.0
        %3485 = vmatpush1.msra.mxu0 0.0
        %3486 = vmatprep.subr.mxu0 0.0
        %3487 = vmatpush1.msra.mxu0 0.0
        %3488 = vmatprep.subr.mxu0 0.0
        %3489 = vmatpush1.msra.mxu0 0.0
        %3490 = vmatprep.subr.mxu0 0.0
        %3491 = vmatpush1.msra.mxu0 0.0
        %3492 = vmatprep.subr.mxu0 0.0
        %3493 = vmatpush1.msra.mxu0 0.0
        %3494 = vmatprep.subr.mxu0 0.0
        %3495 = vmatpush1.msra.mxu0 0.0
        %3496 = vmatprep.subr.mxu0 0.0
        %3497 = vmatpush1.msra.mxu0 0.0
        %3498 = vmatprep.subr.mxu0 0.0
        %3499 = vmatpush1.msra.mxu0 0.0
        %3500 = vmatprep.subr.mxu0 0.0
        %3501 = vmatpush1.msra.mxu0 0.0
        %3502 = vmatprep.subr.mxu0 0.0
        %3503 = vmatpush1.msra.mxu0 0.0
        %3504 = vmatprep.subr.mxu0 0.0
        %3505 = vmatpush1.msra.mxu0 0.0
        %3506 = vmatprep.subr.mxu0 0.0
        %3507 = vmatpush1.msra.mxu0 0.0
        %3508 = vmatprep.subr.mxu0 0.0
        %3509 = vmatpush1.msra.mxu0 0.0
        %3510 = vmatprep.subr.mxu0 0.0
        %3511 = vmatpush1.msra.mxu0 0.0
        %3512 = vmatprep.subr.mxu0 0.0
        %3513 = vmatpush1.msra.mxu0 0.0
        %3514 = vmatprep.subr.mxu0 0.0
        %3515 = vmatpush1.msra.mxu0 0.0
        %3516 = vmatprep.subr.mxu0 0.0
        %3517 = vmatpush1.msra.mxu0 0.0
        %3518 = vmatprep.subr.mxu0 0.0
        %3519 = vmatpush1.msra.mxu0 0.0
        %3520 = vmatprep.subr.mxu0 0.0
        %3521 = vmatpush1.msra.mxu0 0.0
        %3522 = vmatprep.subr.mxu0 0.0
        %3523 = vmatpush1.msra.mxu0 0.0
        %3524 = vmatprep.subr.mxu0 0.0
        %3525 = vmatpush1.msra.mxu0 0.0
        %3526 = vmatprep.mubr.f32.mxu0 0.0
        %3527 = vmatmul.mubr.f32.gmra.mrb[0].mxu0 %v3460
        %v3528 = vpop.f32.mrb[0].mxu0
        %v3529 = vadd.f32 0.0, %v3528
        %v3530 = vpop.f32.mrb[0].mxu0
        %3531 = vdwg.mxu0
        %v3532 = vmul.f32 %v3457, 0.17677669
        %v3533 = vmul.f32 %v3529, 0.17677669
        %vm3534 = vcmask 27648
        %v3535 = vsel %vm3534, %v3532, -inf
        %3536 = vmax.xlane.f32.xlu0 %v3535
        %v3537 = vpop.xlane.xlu0 %3536
        %v3538 = vsel %vm3534, %v3533, -inf
        %3539 = vmax.xlane.f32.xlu0 %v3538
        %v3540 = vpop.xlane.xlu0 %3539
        %v3541 = vsub.f32 %v3532, %v3537
        %v3542 = vsub.f32 %v3533, %v3540
        %v3543 = vmul.f32 %v3541, 1.442695
        %v3544 = vpow.pop %v3543
        %v3545 = vmul.f32 %v3542, 1.442695
        %v3546 = vpow.pop %v3545
        %v3547 = vsel %vm3534, %v3544, 0.0
        %3548 = vadd.xlane.f32.xlu0 %v3547
        %v3549 = vpop.xlane.xlu0 %3548
        %v3550 = vsel %vm3534, %v3546, 0.0
        %3551 = vadd.xlane.f32.xlu0 %v3550
        %v3552 = vpop.xlane.xlu0 %3551
        %v3553 = vrcp.pop %v3549
        %v3554 = vrcp.pop %v3552
        %v3555 = vmul.f32 %v3544, %v3553
        %v3556 = vmul.f32 %v3546, %v3554
        %3557 = vrot.lane.b32.xlu0 %v3312, 64
        %v3558 = vpop.permute.xlu0 %3557
        %3559 = vrot.lane.b32.xlu0 %v3322, 64
        %v3560 = vpop.permute.xlu0 %3559
        %3563 = vxpose.xlu0.b32.start [1/16] %v3558, 128
        %3564 = vxpose.xlu0.b32.cont [2/16] 0.0, 128
        %3565 = vxpose.xlu0.b32.cont [3/16] 0.0, 128
        %3566 = vxpose.xlu0.b32.cont [4/16] 0.0, 128
        %3567 = vxpose.xlu0.b32.cont [5/16] 0.0, 128
        %3568 = vxpose.xlu0.b32.cont [6/16] 0.0, 128
        %3569 = vxpose.xlu0.b32.cont [7/16] 0.0, 128
        %3570 = vxpose.xlu0.b32.cont [8/16] 0.0, 128
        %3571 = vxpose.xlu0.b32.cont [9/16] 0.0, 128
        %3572 = vxpose.xlu0.b32.cont [10/16] 0.0, 128
        %3573 = vxpose.xlu0.b32.cont [11/16] 0.0, 128
        %3574 = vxpose.xlu0.b32.cont [12/16] 0.0, 128
        %3575 = vxpose.xlu0.b32.cont [13/16] 0.0, 128
        %3576 = vxpose.xlu0.b32.cont [14/16] 0.0, 128
        %3577 = vxpose.xlu0.b32.cont [15/16] 0.0, 128
        %3578 = vxpose.xlu0.b32.end [16/16] 0.0, 128
        %v3579 = vpop.trf.xlu0
        %v3580 = vpop.trf.xlu0
        %v3581 = vpop.trf.xlu0
        %v3582 = vpop.trf.xlu0
        %v3583 = vpop.trf.xlu0
        %v3584 = vpop.trf.xlu0
        %v3585 = vpop.trf.xlu0
        %v3586 = vpop.trf.xlu0
        %v3587 = vpop.trf.xlu0
        %v3588 = vpop.trf.xlu0
        %v3589 = vpop.trf.xlu0
        %v3590 = vpop.trf.xlu0
        %v3591 = vpop.trf.xlu0
        %v3592 = vpop.trf.xlu0
        %v3593 = vpop.trf.xlu0
        %v3594 = vpop.trf.xlu0
        %3595 = vxpose.xlu0.b32.start [1/16] %v3560, 128
        %3596 = vxpose.xlu0.b32.cont [2/16] 0.0, 128
        %3597 = vxpose.xlu0.b32.cont [3/16] 0.0, 128
        %3598 = vxpose.xlu0.b32.cont [4/16] 0.0, 128
        %3599 = vxpose.xlu0.b32.cont [5/16] 0.0, 128
        %3600 = vxpose.xlu0.b32.cont [6/16] 0.0, 128
        %3601 = vxpose.xlu0.b32.cont [7/16] 0.0, 128
        %3602 = vxpose.xlu0.b32.cont [8/16] 0.0, 128
        %3603 = vxpose.xlu0.b32.cont [9/16] 0.0, 128
        %3604 = vxpose.xlu0.b32.cont [10/16] 0.0, 128
        %3605 = vxpose.xlu0.b32.cont [11/16] 0.0, 128
        %3606 = vxpose.xlu0.b32.cont [12/16] 0.0, 128
        %3607 = vxpose.xlu0.b32.cont [13/16] 0.0, 128
        %3608 = vxpose.xlu0.b32.cont [14/16] 0.0, 128
        %3609 = vxpose.xlu0.b32.cont [15/16] 0.0, 128
        %3610 = vxpose.xlu0.b32.end [16/16] 0.0, 128
        %v3611 = vpop.trf.xlu0
        %v3612 = vpop.trf.xlu0
        %v3613 = vpop.trf.xlu0
        %v3614 = vpop.trf.xlu0
        %v3615 = vpop.trf.xlu0
        %v3616 = vpop.trf.xlu0
        %v3617 = vpop.trf.xlu0
        %v3618 = vpop.trf.xlu0
        %v3619 = vpop.trf.xlu0
        %v3620 = vpop.trf.xlu0
        %v3621 = vpop.trf.xlu0
        %v3622 = vpop.trf.xlu0
        %v3623 = vpop.trf.xlu0
        %v3624 = vpop.trf.xlu0
        %v3625 = vpop.trf.xlu0
        %v3626 = vpop.trf.xlu0
        %vm3627 = vcmask 31744
        %v3629 = vsel %vm3627, %v3579, 0
        %v3632 = vsel %vm3627, %v3580, 0
        %v3635 = vsel %vm3627, %v3581, 0
        %v3638 = vsel %vm3627, %v3582, 0
        %v3641 = vsel %vm3627, %v3555, 0
        %3643 = vmatprep.subr.mxu0 0.0
        %3644 = vmatpush1.xpose.msra.mxu0 %v3641
        %3645 = vmatprep.subr.mxu0 0.0
        %3646 = vmatpush1.xpose.msra.mxu0 0.0
        %3647 = vmatprep.subr.mxu0 0.0
        %3648 = vmatpush1.xpose.msra.mxu0 0.0
        %3649 = vmatprep.subr.mxu0 0.0
        %3650 = vmatpush1.xpose.msra.mxu0 0.0
        %3651 = vmatprep.subr.mxu0 0.0
        %3652 = vmatpush1.xpose.msra.mxu0 0.0
        %3653 = vmatprep.subr.mxu0 0.0
        %3654 = vmatpush1.xpose.msra.mxu0 0.0
        %3655 = vmatprep.subr.mxu0 0.0
        %3656 = vmatpush1.xpose.msra.mxu0 0.0
        %3657 = vmatprep.subr.mxu0 0.0
        %3658 = vmatpush1.xpose.msra.mxu0 0.0
        %3659 = vmatprep.subr.mxu0 0.0
        %3660 = vmatpush1.xpose.msra.mxu0 0.0
        %3661 = vmatprep.subr.mxu0 0.0
        %3662 = vmatpush1.xpose.msra.mxu0 0.0
        %3663 = vmatprep.subr.mxu0 0.0
        %3664 = vmatpush1.xpose.msra.mxu0 0.0
        %3665 = vmatprep.subr.mxu0 0.0
        %3666 = vmatpush1.xpose.msra.mxu0 0.0
        %3667 = vmatprep.subr.mxu0 0.0
        %3668 = vmatpush1.xpose.msra.mxu0 0.0
        %3669 = vmatprep.subr.mxu0 0.0
        %3670 = vmatpush1.xpose.msra.mxu0 0.0
        %3671 = vmatprep.subr.mxu0 0.0
        %3672 = vmatpush1.xpose.msra.mxu0 0.0
        %3673 = vmatprep.subr.mxu0 0.0
        %3674 = vmatpush1.xpose.msra.mxu0 0.0
        %3675 = vmatprep.subr.mxu0 0.0
        %3676 = vmatpush1.xpose.msra.mxu0 0.0
        %3677 = vmatprep.subr.mxu0 0.0
        %3678 = vmatpush1.xpose.msra.mxu0 0.0
        %3679 = vmatprep.subr.mxu0 0.0
        %3680 = vmatpush1.xpose.msra.mxu0 0.0
        %3681 = vmatprep.subr.mxu0 0.0
        %3682 = vmatpush1.xpose.msra.mxu0 0.0
        %3683 = vmatprep.subr.mxu0 0.0
        %3684 = vmatpush1.xpose.msra.mxu0 0.0
        %3685 = vmatprep.subr.mxu0 0.0
        %3686 = vmatpush1.xpose.msra.mxu0 0.0
        %3687 = vmatprep.subr.mxu0 0.0
        %3688 = vmatpush1.xpose.msra.mxu0 0.0
        %3689 = vmatprep.subr.mxu0 0.0
        %3690 = vmatpush1.xpose.msra.mxu0 0.0
        %3691 = vmatprep.subr.mxu0 0.0
        %3692 = vmatpush1.xpose.msra.mxu0 0.0
        %3693 = vmatprep.subr.mxu0 0.0
        %3694 = vmatpush1.xpose.msra.mxu0 0.0
        %3695 = vmatprep.subr.mxu0 0.0
        %3696 = vmatpush1.xpose.msra.mxu0 0.0
        %3697 = vmatprep.subr.mxu0 0.0
        %3698 = vmatpush1.xpose.msra.mxu0 0.0
        %3699 = vmatprep.subr.mxu0 0.0
        %3700 = vmatpush1.xpose.msra.mxu0 0.0
        %3701 = vmatprep.subr.mxu0 0.0
        %3702 = vmatpush1.xpose.msra.mxu0 0.0
        %3703 = vmatprep.subr.mxu0 0.0
        %3704 = vmatpush1.xpose.msra.mxu0 0.0
        %3705 = vmatprep.subr.mxu0 0.0
        %3706 = vmatpush1.xpose.msra.mxu0 0.0
        %3707 = vmatprep.mubr.f32.mxu0 0.0
        %3708 = vmatmul.mubr.f32.gmra.mrb[0].mxu0 %v3629
        %v3709 = vpop.f32.mrb[0].mxu0
        %v3710 = vadd.f32 0.0, %v3709
        %v3711 = vpop.f32.mrb[0].mxu0
        %3712 = vmatprep.mubr.f32.mxu0 0.0
        %3713 = vmatmul.mubr.f32.gmra.mrb[0].mxu0 %v3632
        %v3714 = vpop.f32.mrb[0].mxu0
        %v3715 = vadd.f32 0.0, %v3714
        %v3716 = vpop.f32.mrb[0].mxu0
        %3717 = vmatprep.mubr.f32.mxu0 0.0
        %3718 = vmatmul.mubr.f32.gmra.mrb[0].mxu0 %v3635
        %v3719 = vpop.f32.mrb[0].mxu0
        %v3720 = vadd.f32 0.0, %v3719
        %v3721 = vpop.f32.mrb[0].mxu0
        %3722 = vmatprep.mubr.f32.mxu0 0.0
        %3723 = vmatmul.mubr.f32.gmra.mrb[0].mxu0 %v3638
        %v3724 = vpop.f32.mrb[0].mxu0
        %v3725 = vadd.f32 0.0, %v3724
        %v3726 = vpop.f32.mrb[0].mxu0
        %3727 = vdwg.mxu0
        %v3729 = vsel %vm3627, %v3611, 0
        %v3732 = vsel %vm3627, %v3612, 0
        %v3735 = vsel %vm3627, %v3613, 0
        %v3738 = vsel %vm3627, %v3614, 0
        %v3741 = vsel %vm3627, %v3556, 0
        %3743 = vmatprep.subr.mxu0 0.0
        %3744 = vmatpush1.xpose.msra.mxu0 %v3741
        %3745 = vmatprep.subr.mxu0 0.0
        %3746 = vmatpush1.xpose.msra.mxu0 0.0
        %3747 = vmatprep.subr.mxu0 0.0
        %3748 = vmatpush1.xpose.msra.mxu0 0.0
        %3749 = vmatprep.subr.mxu0 0.0
        %3750 = vmatpush1.xpose.msra.mxu0 0.0
        %3751 = vmatprep.subr.mxu0 0.0
        %3752 = vmatpush1.xpose.msra.mxu0 0.0
        %3753 = vmatprep.subr.mxu0 0.0
        %3754 = vmatpush1.xpose.msra.mxu0 0.0
        %3755 = vmatprep.subr.mxu0 0.0
        %3756 = vmatpush1.xpose.msra.mxu0 0.0
        %3757 = vmatprep.subr.mxu0 0.0
        %3758 = vmatpush1.xpose.msra.mxu0 0.0
        %3759 = vmatprep.subr.mxu0 0.0
        %3760 = vmatpush1.xpose.msra.mxu0 0.0
        %3761 = vmatprep.subr.mxu0 0.0
        %3762 = vmatpush1.xpose.msra.mxu0 0.0
        %3763 = vmatprep.subr.mxu0 0.0
        %3764 = vmatpush1.xpose.msra.mxu0 0.0
        %3765 = vmatprep.subr.mxu0 0.0
        %3766 = vmatpush1.xpose.msra.mxu0 0.0
        %3767 = vmatprep.subr.mxu0 0.0
        %3768 = vmatpush1.xpose.msra.mxu0 0.0
        %3769 = vmatprep.subr.mxu0 0.0
        %3770 = vmatpush1.xpose.msra.mxu0 0.0
        %3771 = vmatprep.subr.mxu0 0.0
        %3772 = vmatpush1.xpose.msra.mxu0 0.0
        %3773 = vmatprep.subr.mxu0 0.0
        %3774 = vmatpush1.xpose.msra.mxu0 0.0
        %3775 = vmatprep.subr.mxu0 0.0
        %3776 = vmatpush1.xpose.msra.mxu0 0.0
        %3777 = vmatprep.subr.mxu0 0.0
        %3778 = vmatpush1.xpose.msra.mxu0 0.0
        %3779 = vmatprep.subr.mxu0 0.0
        %3780 = vmatpush1.xpose.msra.mxu0 0.0
        %3781 = vmatprep.subr.mxu0 0.0
        %3782 = vmatpush1.xpose.msra.mxu0 0.0
        %3783 = vmatprep.subr.mxu0 0.0
        %3784 = vmatpush1.xpose.msra.mxu0 0.0
        %3785 = vmatprep.subr.mxu0 0.0
        %3786 = vmatpush1.xpose.msra.mxu0 0.0
        %3787 = vmatprep.subr.mxu0 0.0
        %3788 = vmatpush1.xpose.msra.mxu0 0.0
        %3789 = vmatprep.subr.mxu0 0.0
        %3790 = vmatpush1.xpose.msra.mxu0 0.0
        %3791 = vmatprep.subr.mxu0 0.0
        %3792 = vmatpush1.xpose.msra.mxu0 0.0
        %3793 = vmatprep.subr.mxu0 0.0
        %3794 = vmatpush1.xpose.msra.mxu0 0.0
        %3795 = vmatprep.subr.mxu0 0.0
        %3796 = vmatpush1.xpose.msra.mxu0 0.0
        %3797 = vmatprep.subr.mxu0 0.0
        %3798 = vmatpush1.xpose.msra.mxu0 0.0
        %3799 = vmatprep.subr.mxu0 0.0
        %3800 = vmatpush1.xpose.msra.mxu0 0.0
        %3801 = vmatprep.subr.mxu0 0.0
        %3802 = vmatpush1.xpose.msra.mxu0 0.0
        %3803 = vmatprep.subr.mxu0 0.0
        %3804 = vmatpush1.xpose.msra.mxu0 0.0
        %3805 = vmatprep.subr.mxu0 0.0
        %3806 = vmatpush1.xpose.msra.mxu0 0.0
        %3807 = vmatprep.mubr.f32.mxu0 0.0
        %3808 = vmatmul.mubr.f32.gmra.mrb[0].mxu0 %v3729
        %v3809 = vpop.f32.mrb[0].mxu0
        %v3810 = vadd.f32 0.0, %v3809
        %v3811 = vpop.f32.mrb[0].mxu0
        %3812 = vmatprep.mubr.f32.mxu0 0.0
        %3813 = vmatmul.mubr.f32.gmra.mrb[0].mxu0 %v3732
        %v3814 = vpop.f32.mrb[0].mxu0
        %v3815 = vadd.f32 0.0, %v3814
        %v3816 = vpop.f32.mrb[0].mxu0
        %3817 = vmatprep.mubr.f32.mxu0 0.0
        %3818 = vmatmul.mubr.f32.gmra.mrb[0].mxu0 %v3735
        %v3819 = vpop.f32.mrb[0].mxu0
        %v3820 = vadd.f32 0.0, %v3819
        %v3821 = vpop.f32.mrb[0].mxu0
        %3822 = vmatprep.mubr.f32.mxu0 0.0
        %3823 = vmatmul.mubr.f32.gmra.mrb[0].mxu0 %v3738
        %v3824 = vpop.f32.mrb[0].mxu0
        %v3825 = vadd.f32 0.0, %v3824
        %v3826 = vpop.f32.mrb[0].mxu0
        %3827 = vdwg.mxu0
        %3828 = vxpose.xlu0.b32.start [1/16] %v3710, 128
        %3829 = vxpose.xlu0.b32.cont [2/16] %v3715, 128
        %3830 = vxpose.xlu0.b32.cont [3/16] %v3720, 128
        %3831 = vxpose.xlu0.b32.cont [4/16] %v3725, 128
        %3832 = vxpose.xlu0.b32.cont [5/16] 0.0, 128
        %3833 = vxpose.xlu0.b32.cont [6/16] 0.0, 128
        %3834 = vxpose.xlu0.b32.cont [7/16] 0.0, 128
        %3835 = vxpose.xlu0.b32.cont [8/16] 0.0, 128
        %3836 = vxpose.xlu0.b32.cont [9/16] 0.0, 128
        %3837 = vxpose.xlu0.b32.cont [10/16] 0.0, 128
        %3838 = vxpose.xlu0.b32.cont [11/16] 0.0, 128
        %3839 = vxpose.xlu0.b32.cont [12/16] 0.0, 128
        %3840 = vxpose.xlu0.b32.cont [13/16] 0.0, 128
        %3841 = vxpose.xlu0.b32.cont [14/16] 0.0, 128
        %3842 = vxpose.xlu0.b32.cont [15/16] 0.0, 128
        %3843 = vxpose.xlu0.b32.end [16/16] 0.0, 128
        %v3844 = vpop.trf.xlu0
        %v3845 = vpop.trf.xlu0
        %v3846 = vpop.trf.xlu0
        %v3847 = vpop.trf.xlu0
        %v3848 = vpop.trf.xlu0
        %v3849 = vpop.trf.xlu0
        %v3850 = vpop.trf.xlu0
        %v3851 = vpop.trf.xlu0
        %v3852 = vpop.trf.xlu0
        %v3853 = vpop.trf.xlu0
        %v3854 = vpop.trf.xlu0
        %v3855 = vpop.trf.xlu0
        %v3856 = vpop.trf.xlu0
        %v3857 = vpop.trf.xlu0
        %v3858 = vpop.trf.xlu0
        %v3859 = vpop.trf.xlu0
        %3860 = vxpose.xlu0.b32.start [1/16] %v3810, 128
        %3861 = vxpose.xlu0.b32.cont [2/16] %v3815, 128
        %3862 = vxpose.xlu0.b32.cont [3/16] %v3820, 128
        %3863 = vxpose.xlu0.b32.cont [4/16] %v3825, 128
        %3864 = vxpose.xlu0.b32.cont [5/16] 0.0, 128
        %3865 = vxpose.xlu0.b32.cont [6/16] 0.0, 128
        %3866 = vxpose.xlu0.b32.cont [7/16] 0.0, 128
        %3867 = vxpose.xlu0.b32.cont [8/16] 0.0, 128
        %3868 = vxpose.xlu0.b32.cont [9/16] 0.0, 128
        %3869 = vxpose.xlu0.b32.cont [10/16] 0.0, 128
        %3870 = vxpose.xlu0.b32.cont [11/16] 0.0, 128
        %3871 = vxpose.xlu0.b32.cont [12/16] 0.0, 128
        %3872 = vxpose.xlu0.b32.cont [13/16] 0.0, 128
        %3873 = vxpose.xlu0.b32.cont [14/16] 0.0, 128
        %3874 = vxpose.xlu0.b32.cont [15/16] 0.0, 128
        %3875 = vxpose.xlu0.b32.end [16/16] 0.0, 128
        %v3876 = vpop.trf.xlu0
        %v3877 = vpop.trf.xlu0
        %v3878 = vpop.trf.xlu0
        %v3879 = vpop.trf.xlu0
        %v3880 = vpop.trf.xlu0
        %v3881 = vpop.trf.xlu0
        %v3882 = vpop.trf.xlu0
        %v3883 = vpop.trf.xlu0
        %v3884 = vpop.trf.xlu0
        %v3885 = vpop.trf.xlu0
        %v3886 = vpop.trf.xlu0
        %v3887 = vpop.trf.xlu0
        %v3888 = vpop.trf.xlu0
        %v3889 = vpop.trf.xlu0
        %v3890 = vpop.trf.xlu0
        %v3891 = vpop.trf.xlu0
        %v3893 = vunpack.c.l.s4 1983009808
        %v3894 = vunpack.c.0.s8 %v3893
        %v3895 = vlaneseq
        %v3896 = vshrl.u32 %v3895, 7
        %v3897 = vsub.s32 %v3894, %v3896
        %v3898 = vrot.slane %v3844, %v3897
        %v3900 = vunpack.c.l.s4 1983009808
        %v3901 = vunpack.c.0.s8 %v3900
        %v3902 = vlaneseq
        %v3903 = vshrl.u32 %v3902, 7
        %v3904 = vsub.s32 %v3901, %v3903
        %v3905 = vrot.slane %v3876, %v3904
        %v3906 = vcombine.low %v3898, %v3905
        %v3907 = vcombine.high %v3898, %v3905
        %v3909 = vunpack.c.l.s4 1934713408
        %v3910 = vunpack.c.0.s8 %v3909
        %v3911 = vlaneseq
        %v3912 = vshrl.u32 %v3911, 7
        %v3913 = vsub.s32 %v3910, %v3912
        %v3914 = vrot.slane %v3906, %v3913
        %v3916 = vunpack.c.l.s4 1934713408
        %v3917 = vunpack.c.0.s8 %v3916
        %v3918 = vlaneseq
        %v3919 = vshrl.u32 %v3918, 7
        %v3920 = vsub.s32 %v3917, %v3919
        %v3921 = vrot.slane %v3907, %v3920
        %v3922 = vcombine.high %v3914, 0.0
        %v3923 = vcombine.high %v3921, 0.0
        %v3924 = vcombine.low %v3914, %v3921
        %v3926 = vunpack.c.l.s4 1983009808
        %v3927 = vunpack.c.0.s8 %v3926
        %v3928 = vlaneseq
        %v3929 = vshrl.u32 %v3928, 7
        %v3930 = vsub.s32 %v3927, %v3929
        %v3931 = vrot.slane %v3924, %v3930
        %v3932 = vcombine.low %v3922, %v3923
        %v3934 = vunpack.c.l.s4 1983009808
        %v3935 = vunpack.c.0.s8 %v3934
        %v3936 = vlaneseq
        %v3937 = vshrl.u32 %v3936, 7
        %v3938 = vsub.s32 %v3935, %v3937
        %v3939 = vrot.slane %v3932, %v3938
        %v3940 = vcombine.low %v3931, %v3939
        %v3942 = vunpack.c.l.s4 1934713408
        %v3943 = vunpack.c.0.s8 %v3942
        %v3944 = vlaneseq
        %v3945 = vshrl.u32 %v3944, 7
        %v3946 = vsub.s32 %v3943, %v3945
        %v3947 = vrot.slane %v3940, %v3946
        %v3948 = vcombine.high %v3947, 0.0
        %3950 = vrot.lane.b32.xlu0 %v3948, 32
        %v3951 = vpop.permute.xlu0 %3950
        %v3953 = vsel %vm1309, %v3947, %v3951
        %v3954 = vrot.slane %v3312, 4
        %v3955 = vrot.slane %v3322, 4
        %3958 = vxpose.xlu0.b32.start [1/16] %v3954, 128
        %3959 = vxpose.xlu0.b32.cont [2/16] 0.0, 128
        %3960 = vxpose.xlu0.b32.cont [3/16] 0.0, 128
        %3961 = vxpose.xlu0.b32.cont [4/16] 0.0, 128
        %3962 = vxpose.xlu0.b32.cont [5/16] 0.0, 128
        %3963 = vxpose.xlu0.b32.cont [6/16] 0.0, 128
        %3964 = vxpose.xlu0.b32.cont [7/16] 0.0, 128
        %3965 = vxpose.xlu0.b32.cont [8/16] 0.0, 128
        %3966 = vxpose.xlu0.b32.cont [9/16] 0.0, 128
        %3967 = vxpose.xlu0.b32.cont [10/16] 0.0, 128
        %3968 = vxpose.xlu0.b32.cont [11/16] 0.0, 128
        %3969 = vxpose.xlu0.b32.cont [12/16] 0.0, 128
        %3970 = vxpose.xlu0.b32.cont [13/16] 0.0, 128
        %3971 = vxpose.xlu0.b32.cont [14/16] 0.0, 128
        %3972 = vxpose.xlu0.b32.cont [15/16] 0.0, 128
        %3973 = vxpose.xlu0.b32.end [16/16] 0.0, 128
        %v3974 = vpop.trf.xlu0
        %v3975 = vpop.trf.xlu0
        %v3976 = vpop.trf.xlu0
        %v3977 = vpop.trf.xlu0
        %v3978 = vpop.trf.xlu0
        %v3979 = vpop.trf.xlu0
        %v3980 = vpop.trf.xlu0
        %v3981 = vpop.trf.xlu0
        %v3982 = vpop.trf.xlu0
        %v3983 = vpop.trf.xlu0
        %v3984 = vpop.trf.xlu0
        %v3985 = vpop.trf.xlu0
        %v3986 = vpop.trf.xlu0
        %v3987 = vpop.trf.xlu0
        %v3988 = vpop.trf.xlu0
        %v3989 = vpop.trf.xlu0
        %3990 = vxpose.xlu0.b32.start [1/16] %v3955, 128
        %3991 = vxpose.xlu0.b32.cont [2/16] 0.0, 128
        %3992 = vxpose.xlu0.b32.cont [3/16] 0.0, 128
        %3993 = vxpose.xlu0.b32.cont [4/16] 0.0, 128
        %3994 = vxpose.xlu0.b32.cont [5/16] 0.0, 128
        %3995 = vxpose.xlu0.b32.cont [6/16] 0.0, 128
        %3996 = vxpose.xlu0.b32.cont [7/16] 0.0, 128
        %3997 = vxpose.xlu0.b32.cont [8/16] 0.0, 128
        %3998 = vxpose.xlu0.b32.cont [9/16] 0.0, 128
        %3999 = vxpose.xlu0.b32.cont [10/16] 0.0, 128
        %4000 = vxpose.xlu0.b32.cont [11/16] 0.0, 128
        %4001 = vxpose.xlu0.b32.cont [12/16] 0.0, 128
        %4002 = vxpose.xlu0.b32.cont [13/16] 0.0, 128
        %4003 = vxpose.xlu0.b32.cont [14/16] 0.0, 128
        %4004 = vxpose.xlu0.b32.cont [15/16] 0.0, 128
        %4005 = vxpose.xlu0.b32.end [16/16] 0.0, 128
        %v4006 = vpop.trf.xlu0
        %v4007 = vpop.trf.xlu0
        %v4008 = vpop.trf.xlu0
        %v4009 = vpop.trf.xlu0
        %v4010 = vpop.trf.xlu0
        %v4011 = vpop.trf.xlu0
        %v4012 = vpop.trf.xlu0
        %v4013 = vpop.trf.xlu0
        %v4014 = vpop.trf.xlu0
        %v4015 = vpop.trf.xlu0
        %v4016 = vpop.trf.xlu0
        %v4017 = vpop.trf.xlu0
        %v4018 = vpop.trf.xlu0
        %v4019 = vpop.trf.xlu0
        %v4020 = vpop.trf.xlu0
        %v4021 = vpop.trf.xlu0
        %v4022 = vrot.slane %v3234, 4
        %v4023 = vsel %vm1309, %v4022, 0
        %4025 = vmatprep.subr.mxu0 0.0
        %4026 = vmatpush1.msra.mxu0 %v3974
        %4027 = vmatprep.subr.mxu0 0.0
        %4028 = vmatpush1.msra.mxu0 %v3975
        %4029 = vmatprep.subr.mxu0 0.0
        %4030 = vmatpush1.msra.mxu0 %v3976
        %4031 = vmatprep.subr.mxu0 0.0
        %4032 = vmatpush1.msra.mxu0 %v3977
        %4033 = vmatprep.subr.mxu0 0.0
        %4034 = vmatpush1.msra.mxu0 0.0
        %4035 = vmatprep.subr.mxu0 0.0
        %4036 = vmatpush1.msra.mxu0 0.0
        %4037 = vmatprep.subr.mxu0 0.0
        %4038 = vmatpush1.msra.mxu0 0.0
        %4039 = vmatprep.subr.mxu0 0.0
        %4040 = vmatpush1.msra.mxu0 0.0
        %4041 = vmatprep.subr.mxu0 0.0
        %4042 = vmatpush1.msra.mxu0 0.0
        %4043 = vmatprep.subr.mxu0 0.0
        %4044 = vmatpush1.msra.mxu0 0.0
        %4045 = vmatprep.subr.mxu0 0.0
        %4046 = vmatpush1.msra.mxu0 0.0
        %4047 = vmatprep.subr.mxu0 0.0
        %4048 = vmatpush1.msra.mxu0 0.0
        %4049 = vmatprep.subr.mxu0 0.0
        %4050 = vmatpush1.msra.mxu0 0.0
        %4051 = vmatprep.subr.mxu0 0.0
        %4052 = vmatpush1.msra.mxu0 0.0
        %4053 = vmatprep.subr.mxu0 0.0
        %4054 = vmatpush1.msra.mxu0 0.0
        %4055 = vmatprep.subr.mxu0 0.0
        %4056 = vmatpush1.msra.mxu0 0.0
        %4057 = vmatprep.subr.mxu0 0.0
        %4058 = vmatpush1.msra.mxu0 0.0
        %4059 = vmatprep.subr.mxu0 0.0
        %4060 = vmatpush1.msra.mxu0 0.0
        %4061 = vmatprep.subr.mxu0 0.0
        %4062 = vmatpush1.msra.mxu0 0.0
        %4063 = vmatprep.subr.mxu0 0.0
        %4064 = vmatpush1.msra.mxu0 0.0
        %4065 = vmatprep.subr.mxu0 0.0
        %4066 = vmatpush1.msra.mxu0 0.0
        %4067 = vmatprep.subr.mxu0 0.0
        %4068 = vmatpush1.msra.mxu0 0.0
        %4069 = vmatprep.subr.mxu0 0.0
        %4070 = vmatpush1.msra.mxu0 0.0
        %4071 = vmatprep.subr.mxu0 0.0
        %4072 = vmatpush1.msra.mxu0 0.0
        %4073 = vmatprep.subr.mxu0 0.0
        %4074 = vmatpush1.msra.mxu0 0.0
        %4075 = vmatprep.subr.mxu0 0.0
        %4076 = vmatpush1.msra.mxu0 0.0
        %4077 = vmatprep.subr.mxu0 0.0
        %4078 = vmatpush1.msra.mxu0 0.0
        %4079 = vmatprep.subr.mxu0 0.0
        %4080 = vmatpush1.msra.mxu0 0.0
        %4081 = vmatprep.subr.mxu0 0.0
        %4082 = vmatpush1.msra.mxu0 0.0
        %4083 = vmatprep.subr.mxu0 0.0
        %4084 = vmatpush1.msra.mxu0 0.0
        %4085 = vmatprep.subr.mxu0 0.0
        %4086 = vmatpush1.msra.mxu0 0.0
        %4087 = vmatprep.subr.mxu0 0.0
        %4088 = vmatpush1.msra.mxu0 0.0
        %4089 = vmatprep.mubr.f32.mxu0 0.0
        %4090 = vmatmul.mubr.f32.gmra.mrb[0].mxu0 %v4023
        %v4091 = vpop.f32.mrb[0].mxu0
        %v4092 = vadd.f32 0.0, %v4091
        %v4093 = vpop.f32.mrb[0].mxu0
        %4094 = vdwg.mxu0
        %v4095 = vrot.slane %v3319, 4
        %v4096 = vsel %vm1309, %v4095, 0
        %4098 = vmatprep.subr.mxu0 0.0
        %4099 = vmatpush1.msra.mxu0 %v4006
        %4100 = vmatprep.subr.mxu0 0.0
        %4101 = vmatpush1.msra.mxu0 %v4007
        %4102 = vmatprep.subr.mxu0 0.0
        %4103 = vmatpush1.msra.mxu0 %v4008
        %4104 = vmatprep.subr.mxu0 0.0
        %4105 = vmatpush1.msra.mxu0 %v4009
        %4106 = vmatprep.subr.mxu0 0.0
        %4107 = vmatpush1.msra.mxu0 0.0
        %4108 = vmatprep.subr.mxu0 0.0
        %4109 = vmatpush1.msra.mxu0 0.0
        %4110 = vmatprep.subr.mxu0 0.0
        %4111 = vmatpush1.msra.mxu0 0.0
        %4112 = vmatprep.subr.mxu0 0.0
        %4113 = vmatpush1.msra.mxu0 0.0
        %4114 = vmatprep.subr.mxu0 0.0
        %4115 = vmatpush1.msra.mxu0 0.0
        %4116 = vmatprep.subr.mxu0 0.0
        %4117 = vmatpush1.msra.mxu0 0.0
        %4118 = vmatprep.subr.mxu0 0.0
        %4119 = vmatpush1.msra.mxu0 0.0
        %4120 = vmatprep.subr.mxu0 0.0
        %4121 = vmatpush1.msra.mxu0 0.0
        %4122 = vmatprep.subr.mxu0 0.0
        %4123 = vmatpush1.msra.mxu0 0.0
        %4124 = vmatprep.subr.mxu0 0.0
        %4125 = vmatpush1.msra.mxu0 0.0
        %4126 = vmatprep.subr.mxu0 0.0
        %4127 = vmatpush1.msra.mxu0 0.0
        %4128 = vmatprep.subr.mxu0 0.0
        %4129 = vmatpush1.msra.mxu0 0.0
        %4130 = vmatprep.subr.mxu0 0.0
        %4131 = vmatpush1.msra.mxu0 0.0
        %4132 = vmatprep.subr.mxu0 0.0
        %4133 = vmatpush1.msra.mxu0 0.0
        %4134 = vmatprep.subr.mxu0 0.0
        %4135 = vmatpush1.msra.mxu0 0.0
        %4136 = vmatprep.subr.mxu0 0.0
        %4137 = vmatpush1.msra.mxu0 0.0
        %4138 = vmatprep.subr.mxu0 0.0
        %4139 = vmatpush1.msra.mxu0 0.0
        %4140 = vmatprep.subr.mxu0 0.0
        %4141 = vmatpush1.msra.mxu0 0.0
        %4142 = vmatprep.subr.mxu0 0.0
        %4143 = vmatpush1.msra.mxu0 0.0
        %4144 = vmatprep.subr.mxu0 0.0
        %4145 = vmatpush1.msra.mxu0 0.0
        %4146 = vmatprep.subr.mxu0 0.0
        %4147 = vmatpush1.msra.mxu0 0.0
        %4148 = vmatprep.subr.mxu0 0.0
        %4149 = vmatpush1.msra.mxu0 0.0
        %4150 = vmatprep.subr.mxu0 0.0
        %4151 = vmatpush1.msra.mxu0 0.0
        %4152 = vmatprep.subr.mxu0 0.0
        %4153 = vmatpush1.msra.mxu0 0.0
        %4154 = vmatprep.subr.mxu0 0.0
        %4155 = vmatpush1.msra.mxu0 0.0
        %4156 = vmatprep.subr.mxu0 0.0
        %4157 = vmatpush1.msra.mxu0 0.0
        %4158 = vmatprep.subr.mxu0 0.0
        %4159 = vmatpush1.msra.mxu0 0.0
        %4160 = vmatprep.subr.mxu0 0.0
        %4161 = vmatpush1.msra.mxu0 0.0
        %4162 = vmatprep.mubr.f32.mxu0 0.0
        %4163 = vmatmul.mubr.f32.gmra.mrb[0].mxu0 %v4096
        %v4164 = vpop.f32.mrb[0].mxu0
        %v4165 = vadd.f32 0.0, %v4164
        %v4166 = vpop.f32.mrb[0].mxu0
        %4167 = vdwg.mxu0
        %v4168 = vmul.f32 %v4092, 0.17677669
        %v4169 = vmul.f32 %v4165, 0.17677669
        %v4170 = vsel %vm3534, %v4168, -inf
        %4171 = vmax.xlane.f32.xlu0 %v4170
        %v4172 = vpop.xlane.xlu0 %4171
        %v4173 = vsel %vm3534, %v4169, -inf
        %4174 = vmax.xlane.f32.xlu0 %v4173
        %v4175 = vpop.xlane.xlu0 %4174
        %v4176 = vsub.f32 %v4168, %v4172
        %v4177 = vsub.f32 %v4169, %v4175
        %v4178 = vmul.f32 %v4176, 1.442695
        %v4179 = vpow.pop %v4178
        %v4180 = vmul.f32 %v4177, 1.442695
        %v4181 = vpow.pop %v4180
        %v4182 = vsel %vm3534, %v4179, 0.0
        %4183 = vadd.xlane.f32.xlu0 %v4182
        %v4184 = vpop.xlane.xlu0 %4183
        %v4185 = vsel %vm3534, %v4181, 0.0
        %4186 = vadd.xlane.f32.xlu0 %v4185
        %v4187 = vpop.xlane.xlu0 %4186
        %v4188 = vrcp.pop %v4184
        %v4189 = vrcp.pop %v4187
        %v4190 = vmul.f32 %v4179, %v4188
        %v4191 = vmul.f32 %v4181, %v4189
        %4192 = vrot.lane.b32.xlu0 %v3954, 64
        %v4193 = vpop.permute.xlu0 %4192
        %4194 = vrot.lane.b32.xlu0 %v3955, 64
        %v4195 = vpop.permute.xlu0 %4194
        %4198 = vxpose.xlu0.b32.start [1/16] %v4193, 128
        %4199 = vxpose.xlu0.b32.cont [2/16] 0.0, 128
        %4200 = vxpose.xlu0.b32.cont [3/16] 0.0, 128
        %4201 = vxpose.xlu0.b32.cont [4/16] 0.0, 128
        %4202 = vxpose.xlu0.b32.cont [5/16] 0.0, 128
        %4203 = vxpose.xlu0.b32.cont [6/16] 0.0, 128
        %4204 = vxpose.xlu0.b32.cont [7/16] 0.0, 128
        %4205 = vxpose.xlu0.b32.cont [8/16] 0.0, 128
        %4206 = vxpose.xlu0.b32.cont [9/16] 0.0, 128
        %4207 = vxpose.xlu0.b32.cont [10/16] 0.0, 128
        %4208 = vxpose.xlu0.b32.cont [11/16] 0.0, 128
        %4209 = vxpose.xlu0.b32.cont [12/16] 0.0, 128
        %4210 = vxpose.xlu0.b32.cont [13/16] 0.0, 128
        %4211 = vxpose.xlu0.b32.cont [14/16] 0.0, 128
        %4212 = vxpose.xlu0.b32.cont [15/16] 0.0, 128
        %4213 = vxpose.xlu0.b32.end [16/16] 0.0, 128
        %v4214 = vpop.trf.xlu0
        %v4215 = vpop.trf.xlu0
        %v4216 = vpop.trf.xlu0
        %v4217 = vpop.trf.xlu0
        %v4218 = vpop.trf.xlu0
        %v4219 = vpop.trf.xlu0
        %v4220 = vpop.trf.xlu0
        %v4221 = vpop.trf.xlu0
        %v4222 = vpop.trf.xlu0
        %v4223 = vpop.trf.xlu0
        %v4224 = vpop.trf.xlu0
        %v4225 = vpop.trf.xlu0
        %v4226 = vpop.trf.xlu0
        %v4227 = vpop.trf.xlu0
        %v4228 = vpop.trf.xlu0
        %v4229 = vpop.trf.xlu0
        %4230 = vxpose.xlu0.b32.start [1/16] %v4195, 128
        %4231 = vxpose.xlu0.b32.cont [2/16] 0.0, 128
        %4232 = vxpose.xlu0.b32.cont [3/16] 0.0, 128
        %4233 = vxpose.xlu0.b32.cont [4/16] 0.0, 128
        %4234 = vxpose.xlu0.b32.cont [5/16] 0.0, 128
        %4235 = vxpose.xlu0.b32.cont [6/16] 0.0, 128
        %4236 = vxpose.xlu0.b32.cont [7/16] 0.0, 128
        %4237 = vxpose.xlu0.b32.cont [8/16] 0.0, 128
        %4238 = vxpose.xlu0.b32.cont [9/16] 0.0, 128
        %4239 = vxpose.xlu0.b32.cont [10/16] 0.0, 128
        %4240 = vxpose.xlu0.b32.cont [11/16] 0.0, 128
        %4241 = vxpose.xlu0.b32.cont [12/16] 0.0, 128
        %4242 = vxpose.xlu0.b32.cont [13/16] 0.0, 128
        %4243 = vxpose.xlu0.b32.cont [14/16] 0.0, 128
        %4244 = vxpose.xlu0.b32.cont [15/16] 0.0, 128
        %4245 = vxpose.xlu0.b32.end [16/16] 0.0, 128
        %v4246 = vpop.trf.xlu0
        %v4247 = vpop.trf.xlu0
        %v4248 = vpop.trf.xlu0
        %v4249 = vpop.trf.xlu0
        %v4250 = vpop.trf.xlu0
        %v4251 = vpop.trf.xlu0
        %v4252 = vpop.trf.xlu0
        %v4253 = vpop.trf.xlu0
        %v4254 = vpop.trf.xlu0
        %v4255 = vpop.trf.xlu0
        %v4256 = vpop.trf.xlu0
        %v4257 = vpop.trf.xlu0
        %v4258 = vpop.trf.xlu0
        %v4259 = vpop.trf.xlu0
        %v4260 = vpop.trf.xlu0
        %v4261 = vpop.trf.xlu0
        %v4263 = vsel %vm3627, %v4214, 0
        %v4266 = vsel %vm3627, %v4215, 0
        %v4269 = vsel %vm3627, %v4216, 0
        %v4272 = vsel %vm3627, %v4217, 0
        %v4275 = vsel %vm3627, %v4190, 0
        %4277 = vmatprep.subr.mxu0 0.0
        %4278 = vmatpush1.xpose.msra.mxu0 %v4275
        %4279 = vmatprep.subr.mxu0 0.0
        %4280 = vmatpush1.xpose.msra.mxu0 0.0
        %4281 = vmatprep.subr.mxu0 0.0
        %4282 = vmatpush1.xpose.msra.mxu0 0.0
        %4283 = vmatprep.subr.mxu0 0.0
        %4284 = vmatpush1.xpose.msra.mxu0 0.0
        %4285 = vmatprep.subr.mxu0 0.0
        %4286 = vmatpush1.xpose.msra.mxu0 0.0
        %4287 = vmatprep.subr.mxu0 0.0
        %4288 = vmatpush1.xpose.msra.mxu0 0.0
        %4289 = vmatprep.subr.mxu0 0.0
        %4290 = vmatpush1.xpose.msra.mxu0 0.0
        %4291 = vmatprep.subr.mxu0 0.0
        %4292 = vmatpush1.xpose.msra.mxu0 0.0
        %4293 = vmatprep.subr.mxu0 0.0
        %4294 = vmatpush1.xpose.msra.mxu0 0.0
        %4295 = vmatprep.subr.mxu0 0.0
        %4296 = vmatpush1.xpose.msra.mxu0 0.0
        %4297 = vmatprep.subr.mxu0 0.0
        %4298 = vmatpush1.xpose.msra.mxu0 0.0
        %4299 = vmatprep.subr.mxu0 0.0
        %4300 = vmatpush1.xpose.msra.mxu0 0.0
        %4301 = vmatprep.subr.mxu0 0.0
        %4302 = vmatpush1.xpose.msra.mxu0 0.0
        %4303 = vmatprep.subr.mxu0 0.0
        %4304 = vmatpush1.xpose.msra.mxu0 0.0
        %4305 = vmatprep.subr.mxu0 0.0
        %4306 = vmatpush1.xpose.msra.mxu0 0.0
        %4307 = vmatprep.subr.mxu0 0.0
        %4308 = vmatpush1.xpose.msra.mxu0 0.0
        %4309 = vmatprep.subr.mxu0 0.0
        %4310 = vmatpush1.xpose.msra.mxu0 0.0
        %4311 = vmatprep.subr.mxu0 0.0
        %4312 = vmatpush1.xpose.msra.mxu0 0.0
        %4313 = vmatprep.subr.mxu0 0.0
        %4314 = vmatpush1.xpose.msra.mxu0 0.0
        %4315 = vmatprep.subr.mxu0 0.0
        %4316 = vmatpush1.xpose.msra.mxu0 0.0
        %4317 = vmatprep.subr.mxu0 0.0
        %4318 = vmatpush1.xpose.msra.mxu0 0.0
        %4319 = vmatprep.subr.mxu0 0.0
        %4320 = vmatpush1.xpose.msra.mxu0 0.0
        %4321 = vmatprep.subr.mxu0 0.0
        %4322 = vmatpush1.xpose.msra.mxu0 0.0
        %4323 = vmatprep.subr.mxu0 0.0
        %4324 = vmatpush1.xpose.msra.mxu0 0.0
        %4325 = vmatprep.subr.mxu0 0.0
        %4326 = vmatpush1.xpose.msra.mxu0 0.0
        %4327 = vmatprep.subr.mxu0 0.0
        %4328 = vmatpush1.xpose.msra.mxu0 0.0
        %4329 = vmatprep.subr.mxu0 0.0
        %4330 = vmatpush1.xpose.msra.mxu0 0.0
        %4331 = vmatprep.subr.mxu0 0.0
        %4332 = vmatpush1.xpose.msra.mxu0 0.0
        %4333 = vmatprep.subr.mxu0 0.0
        %4334 = vmatpush1.xpose.msra.mxu0 0.0
        %4335 = vmatprep.subr.mxu0 0.0
        %4336 = vmatpush1.xpose.msra.mxu0 0.0
        %4337 = vmatprep.subr.mxu0 0.0
        %4338 = vmatpush1.xpose.msra.mxu0 0.0
        %4339 = vmatprep.subr.mxu0 0.0
        %4340 = vmatpush1.xpose.msra.mxu0 0.0
        %4341 = vmatprep.mubr.f32.mxu0 0.0
        %4342 = vmatmul.mubr.f32.gmra.mrb[0].mxu0 %v4263
        %v4343 = vpop.f32.mrb[0].mxu0
        %v4344 = vadd.f32 0.0, %v4343
        %v4345 = vpop.f32.mrb[0].mxu0
        %4346 = vmatprep.mubr.f32.mxu0 0.0
        %4347 = vmatmul.mubr.f32.gmra.mrb[0].mxu0 %v4266
        %v4348 = vpop.f32.mrb[0].mxu0
        %v4349 = vadd.f32 0.0, %v4348
        %v4350 = vpop.f32.mrb[0].mxu0
        %4351 = vmatprep.mubr.f32.mxu0 0.0
        %4352 = vmatmul.mubr.f32.gmra.mrb[0].mxu0 %v4269
        %v4353 = vpop.f32.mrb[0].mxu0
        %v4354 = vadd.f32 0.0, %v4353
        %v4355 = vpop.f32.mrb[0].mxu0
        %4356 = vmatprep.mubr.f32.mxu0 0.0
        %4357 = vmatmul.mubr.f32.gmra.mrb[0].mxu0 %v4272
        %v4358 = vpop.f32.mrb[0].mxu0
        %v4359 = vadd.f32 0.0, %v4358
        %v4360 = vpop.f32.mrb[0].mxu0
        %4361 = vdwg.mxu0
        %v4363 = vsel %vm3627, %v4246, 0
        %v4366 = vsel %vm3627, %v4247, 0
        %v4369 = vsel %vm3627, %v4248, 0
        %v4372 = vsel %vm3627, %v4249, 0
        %v4375 = vsel %vm3627, %v4191, 0
        %4377 = vmatprep.subr.mxu0 0.0
        %4378 = vmatpush1.xpose.msra.mxu0 %v4375
        %4379 = vmatprep.subr.mxu0 0.0
        %4380 = vmatpush1.xpose.msra.mxu0 0.0
        %4381 = vmatprep.subr.mxu0 0.0
        %4382 = vmatpush1.xpose.msra.mxu0 0.0
        %4383 = vmatprep.subr.mxu0 0.0
        %4384 = vmatpush1.xpose.msra.mxu0 0.0
        %4385 = vmatprep.subr.mxu0 0.0
        %4386 = vmatpush1.xpose.msra.mxu0 0.0
        %4387 = vmatprep.subr.mxu0 0.0
        %4388 = vmatpush1.xpose.msra.mxu0 0.0
        %4389 = vmatprep.subr.mxu0 0.0
        %4390 = vmatpush1.xpose.msra.mxu0 0.0
        %4391 = vmatprep.subr.mxu0 0.0
        %4392 = vmatpush1.xpose.msra.mxu0 0.0
        %4393 = vmatprep.subr.mxu0 0.0
        %4394 = vmatpush1.xpose.msra.mxu0 0.0
        %4395 = vmatprep.subr.mxu0 0.0
        %4396 = vmatpush1.xpose.msra.mxu0 0.0
        %4397 = vmatprep.subr.mxu0 0.0
        %4398 = vmatpush1.xpose.msra.mxu0 0.0
        %4399 = vmatprep.subr.mxu0 0.0
        %4400 = vmatpush1.xpose.msra.mxu0 0.0
        %4401 = vmatprep.subr.mxu0 0.0
        %4402 = vmatpush1.xpose.msra.mxu0 0.0
        %4403 = vmatprep.subr.mxu0 0.0
        %4404 = vmatpush1.xpose.msra.mxu0 0.0
        %4405 = vmatprep.subr.mxu0 0.0
        %4406 = vmatpush1.xpose.msra.mxu0 0.0
        %4407 = vmatprep.subr.mxu0 0.0
        %4408 = vmatpush1.xpose.msra.mxu0 0.0
        %4409 = vmatprep.subr.mxu0 0.0
        %4410 = vmatpush1.xpose.msra.mxu0 0.0
        %4411 = vmatprep.subr.mxu0 0.0
        %4412 = vmatpush1.xpose.msra.mxu0 0.0
        %4413 = vmatprep.subr.mxu0 0.0
        %4414 = vmatpush1.xpose.msra.mxu0 0.0
        %4415 = vmatprep.subr.mxu0 0.0
        %4416 = vmatpush1.xpose.msra.mxu0 0.0
        %4417 = vmatprep.subr.mxu0 0.0
        %4418 = vmatpush1.xpose.msra.mxu0 0.0
        %4419 = vmatprep.subr.mxu0 0.0
        %4420 = vmatpush1.xpose.msra.mxu0 0.0
        %4421 = vmatprep.subr.mxu0 0.0
        %4422 = vmatpush1.xpose.msra.mxu0 0.0
        %4423 = vmatprep.subr.mxu0 0.0
        %4424 = vmatpush1.xpose.msra.mxu0 0.0
        %4425 = vmatprep.subr.mxu0 0.0
        %4426 = vmatpush1.xpose.msra.mxu0 0.0
        %4427 = vmatprep.subr.mxu0 0.0
        %4428 = vmatpush1.xpose.msra.mxu0 0.0
        %4429 = vmatprep.subr.mxu0 0.0
        %4430 = vmatpush1.xpose.msra.mxu0 0.0
        %4431 = vmatprep.subr.mxu0 0.0
        %4432 = vmatpush1.xpose.msra.mxu0 0.0
        %4433 = vmatprep.subr.mxu0 0.0
        %4434 = vmatpush1.xpose.msra.mxu0 0.0
        %4435 = vmatprep.subr.mxu0 0.0
        %4436 = vmatpush1.xpose.msra.mxu0 0.0
        %4437 = vmatprep.subr.mxu0 0.0
        %4438 = vmatpush1.xpose.msra.mxu0 0.0
        %4439 = vmatprep.subr.mxu0 0.0
        %4440 = vmatpush1.xpose.msra.mxu0 0.0
        %4441 = vmatprep.mubr.f32.mxu0 0.0
        %4442 = vmatmul.mubr.f32.gmra.mrb[0].mxu0 %v4363
        %v4443 = vpop.f32.mrb[0].mxu0
        %v4444 = vadd.f32 0.0, %v4443
        %v4445 = vpop.f32.mrb[0].mxu0
        %4446 = vmatprep.mubr.f32.mxu0 0.0
        %4447 = vmatmul.mubr.f32.gmra.mrb[0].mxu0 %v4366
        %v4448 = vpop.f32.mrb[0].mxu0
        %v4449 = vadd.f32 0.0, %v4448
        %v4450 = vpop.f32.mrb[0].mxu0
        %4451 = vmatprep.mubr.f32.mxu0 0.0
        %4452 = vmatmul.mubr.f32.gmra.mrb[0].mxu0 %v4369
        %v4453 = vpop.f32.mrb[0].mxu0
        %v4454 = vadd.f32 0.0, %v4453
        %v4455 = vpop.f32.mrb[0].mxu0
        %4456 = vmatprep.mubr.f32.mxu0 0.0
        %4457 = vmatmul.mubr.f32.gmra.mrb[0].mxu0 %v4372
        %v4458 = vpop.f32.mrb[0].mxu0
        %v4459 = vadd.f32 0.0, %v4458
        %v4460 = vpop.f32.mrb[0].mxu0
        %4461 = vdwg.mxu0
        %4462 = vxpose.xlu0.b32.start [1/16] %v4344, 128
        %4463 = vxpose.xlu0.b32.cont [2/16] %v4349, 128
        %4464 = vxpose.xlu0.b32.cont [3/16] %v4354, 128
        %4465 = vxpose.xlu0.b32.cont [4/16] %v4359, 128
        %4466 = vxpose.xlu0.b32.cont [5/16] 0.0, 128
        %4467 = vxpose.xlu0.b32.cont [6/16] 0.0, 128
        %4468 = vxpose.xlu0.b32.cont [7/16] 0.0, 128
        %4469 = vxpose.xlu0.b32.cont [8/16] 0.0, 128
        %4470 = vxpose.xlu0.b32.cont [9/16] 0.0, 128
        %4471 = vxpose.xlu0.b32.cont [10/16] 0.0, 128
        %4472 = vxpose.xlu0.b32.cont [11/16] 0.0, 128
        %4473 = vxpose.xlu0.b32.cont [12/16] 0.0, 128
        %4474 = vxpose.xlu0.b32.cont [13/16] 0.0, 128
        %4475 = vxpose.xlu0.b32.cont [14/16] 0.0, 128
        %4476 = vxpose.xlu0.b32.cont [15/16] 0.0, 128
        %4477 = vxpose.xlu0.b32.end [16/16] 0.0, 128
        %v4478 = vpop.trf.xlu0
        %v4479 = vpop.trf.xlu0
        %v4480 = vpop.trf.xlu0
        %v4481 = vpop.trf.xlu0
        %v4482 = vpop.trf.xlu0
        %v4483 = vpop.trf.xlu0
        %v4484 = vpop.trf.xlu0
        %v4485 = vpop.trf.xlu0
        %v4486 = vpop.trf.xlu0
        %v4487 = vpop.trf.xlu0
        %v4488 = vpop.trf.xlu0
        %v4489 = vpop.trf.xlu0
        %v4490 = vpop.trf.xlu0
        %v4491 = vpop.trf.xlu0
        %v4492 = vpop.trf.xlu0
        %v4493 = vpop.trf.xlu0
        %4494 = vxpose.xlu0.b32.start [1/16] %v4444, 128
        %4495 = vxpose.xlu0.b32.cont [2/16] %v4449, 128
        %4496 = vxpose.xlu0.b32.cont [3/16] %v4454, 128
        %4497 = vxpose.xlu0.b32.cont [4/16] %v4459, 128
        %4498 = vxpose.xlu0.b32.cont [5/16] 0.0, 128
        %4499 = vxpose.xlu0.b32.cont [6/16] 0.0, 128
        %4500 = vxpose.xlu0.b32.cont [7/16] 0.0, 128
        %4501 = vxpose.xlu0.b32.cont [8/16] 0.0, 128
        %4502 = vxpose.xlu0.b32.cont [9/16] 0.0, 128
        %4503 = vxpose.xlu0.b32.cont [10/16] 0.0, 128
        %4504 = vxpose.xlu0.b32.cont [11/16] 0.0, 128
        %4505 = vxpose.xlu0.b32.cont [12/16] 0.0, 128
        %4506 = vxpose.xlu0.b32.cont [13/16] 0.0, 128
        %4507 = vxpose.xlu0.b32.cont [14/16] 0.0, 128
        %4508 = vxpose.xlu0.b32.cont [15/16] 0.0, 128
        %4509 = vxpose.xlu0.b32.end [16/16] 0.0, 128
        %v4510 = vpop.trf.xlu0
        %v4511 = vpop.trf.xlu0
        %v4512 = vpop.trf.xlu0
        %v4513 = vpop.trf.xlu0
        %v4514 = vpop.trf.xlu0
        %v4515 = vpop.trf.xlu0
        %v4516 = vpop.trf.xlu0
        %v4517 = vpop.trf.xlu0
        %v4518 = vpop.trf.xlu0
        %v4519 = vpop.trf.xlu0
        %v4520 = vpop.trf.xlu0
        %v4521 = vpop.trf.xlu0
        %v4522 = vpop.trf.xlu0
        %v4523 = vpop.trf.xlu0
        %v4524 = vpop.trf.xlu0
        %v4525 = vpop.trf.xlu0
        %v4527 = vunpack.c.l.s4 1983009808
        %v4528 = vunpack.c.0.s8 %v4527
        %v4529 = vlaneseq
        %v4530 = vshrl.u32 %v4529, 7
        %v4531 = vsub.s32 %v4528, %v4530
        %v4532 = vrot.slane %v4478, %v4531
        %v4534 = vunpack.c.l.s4 1983009808
        %v4535 = vunpack.c.0.s8 %v4534
        %v4536 = vlaneseq
        %v4537 = vshrl.u32 %v4536, 7
        %v4538 = vsub.s32 %v4535, %v4537
        %v4539 = vrot.slane %v4510, %v4538
        %v4540 = vcombine.low %v4532, %v4539
        %v4541 = vcombine.high %v4532, %v4539
        %v4543 = vunpack.c.l.s4 1934713408
        %v4544 = vunpack.c.0.s8 %v4543
        %v4545 = vlaneseq
        %v4546 = vshrl.u32 %v4545, 7
        %v4547 = vsub.s32 %v4544, %v4546
        %v4548 = vrot.slane %v4540, %v4547
        %v4550 = vunpack.c.l.s4 1934713408
        %v4551 = vunpack.c.0.s8 %v4550
        %v4552 = vlaneseq
        %v4553 = vshrl.u32 %v4552, 7
        %v4554 = vsub.s32 %v4551, %v4553
        %v4555 = vrot.slane %v4541, %v4554
        %v4556 = vcombine.high %v4548, 0.0
        %v4557 = vcombine.high %v4555, 0.0
        %v4558 = vcombine.low %v4548, %v4555
        %v4560 = vunpack.c.l.s4 1983009808
        %v4561 = vunpack.c.0.s8 %v4560
        %v4562 = vlaneseq
        %v4563 = vshrl.u32 %v4562, 7
        %v4564 = vsub.s32 %v4561, %v4563
        %v4565 = vrot.slane %v4558, %v4564
        %v4566 = vcombine.low %v4556, %v4557
        %v4568 = vunpack.c.l.s4 1983009808
        %v4569 = vunpack.c.0.s8 %v4568
        %v4570 = vlaneseq
        %v4571 = vshrl.u32 %v4570, 7
        %v4572 = vsub.s32 %v4569, %v4571
        %v4573 = vrot.slane %v4566, %v4572
        %v4574 = vcombine.low %v4565, %v4573
        %v4576 = vunpack.c.l.s4 1934713408
        %v4577 = vunpack.c.0.s8 %v4576
        %v4578 = vlaneseq
        %v4579 = vshrl.u32 %v4578, 7
        %v4580 = vsub.s32 %v4577, %v4579
        %v4581 = vrot.slane %v4574, %v4580
        %v4582 = vcombine.high %v4581, 0.0
        %4584 = vrot.lane.b32.xlu0 %v4582, 32
        %v4585 = vpop.permute.xlu0 %4584
        %v4587 = vsel %vm1309, %v4581, %v4585
        %v4589 = vrot.slane %v4587, 4
        %vm4591 = vcmask 1043456
        %v4592 = vsel %vm4591, %v3953, %v4589
        %s4593 = scalar_lea.vmem %s810, 32 [#allocation13]
        %v4594 = vld [vmem:[%s4593] sm:$0xf]
        %v4595 = vld [vmem:[%s4593 + $0x4] sm:$0xf]
        %v4596 = vld [vmem:[%s4593 + $0x8] sm:$0xf]
        %v4597 = vld [vmem:[%s4593 + $0xc] sm:$0xf]
        %v4598 = vld [vmem:[%s4593 + $0x10] sm:$0xf]
        %v4599 = vld [vmem:[%s4593 + $0x14] sm:$0xf]
        %v4600 = vld [vmem:[%s4593 + $0x18] sm:$0xf]
        %v4601 = vld [vmem:[%s4593 + $0x1c] sm:$0xf]
        %v4602 = vpack.c.bf16 %v4592, %v4592
        %v4603 = vld [vmem:[%s819 + $0x1] sm:$0x1]
        %v4604 = vlaneseq
        %v4605 = vshrl.u32 %v4604, 7
        %v4606 = vsub.s32 0, %v4605
        %v4607 = vrot.slane %v4603, %v4606
        %v4616 = vunpack.c.l.b16 %v4594
        %v4617 = vunpack.c.l.b16 %v4595
        %v4618 = vunpack.c.l.b16 %v4596
        %v4619 = vunpack.c.l.b16 %v4597
        %v4620 = vunpack.c.l.b16 %v4598
        %v4621 = vunpack.c.l.b16 %v4599
        %v4622 = vunpack.c.l.b16 %v4600
        %v4623 = vunpack.c.l.b16 %v4601
        %v4624 = vpack.c.b16 %v4617, %v4616
        %v4625 = vpack.c.b16 %v4619, %v4618
        %v4626 = vpack.c.b16 %v4621, %v4620
        %v4627 = vpack.c.b16 %v4623, %v4622
        %v4633 = vsel %vm981, %v4602, 0
        %4635 = vmatprep.subr.bf16.mxu0 0
        %4636 = vmatpush1.bf16.msra.mxu0 %v4624
        %4637 = vmatprep.subr.bf16.mxu0 0
        %4638 = vmatpush1.bf16.msra.mxu0 %v4625
        %4639 = vmatprep.subr.bf16.mxu0 0
        %4640 = vmatpush1.bf16.msra.mxu0 %v4626
        %4641 = vmatprep.subr.bf16.mxu0 0
        %4642 = vmatpush1.bf16.msra.mxu0 %v4627
        %4643 = vmatprep.subr.bf16.mxu0 0
        %4644 = vmatpush1.bf16.msra.mxu0 0
        %4645 = vmatprep.subr.bf16.mxu0 0
        %4646 = vmatpush1.bf16.msra.mxu0 0
        %4647 = vmatprep.subr.bf16.mxu0 0
        %4648 = vmatpush1.bf16.msra.mxu0 0
        %4649 = vmatprep.subr.bf16.mxu0 0
        %4650 = vmatpush1.bf16.msra.mxu0 0
        %4651 = vmatprep.subr.bf16.mxu0 0
        %4652 = vmatpush1.bf16.msra.mxu0 0
        %4653 = vmatprep.subr.bf16.mxu0 0
        %4654 = vmatpush1.bf16.msra.mxu0 0
        %4655 = vmatprep.subr.bf16.mxu0 0
        %4656 = vmatpush1.bf16.msra.mxu0 0
        %4657 = vmatprep.subr.bf16.mxu0 0
        %4658 = vmatpush1.bf16.msra.mxu0 0
        %4659 = vmatprep.subr.bf16.mxu0 0
        %4660 = vmatpush1.bf16.msra.mxu0 0
        %4661 = vmatprep.subr.bf16.mxu0 0
        %4662 = vmatpush1.bf16.msra.mxu0 0
        %4663 = vmatprep.subr.bf16.mxu0 0
        %4664 = vmatpush1.bf16.msra.mxu0 0
        %4665 = vmatprep.subr.bf16.mxu0 0
        %4666 = vmatpush1.bf16.msra.mxu0 0
        %4667 = vmatprep.mubr.bf16.mxu0 0
        %4668 = vmatmul.mubr.bf16.gmra.mrb[0].mxu0 %v4633
        %v4669 = vpop.f32.mrb[0].mxu0
        %v4670 = vadd.f32 %v4607, %v4669
        %v4671 = vpop.f32.mrb[0].mxu0
        %v4672 = vpop.f32.mrb[0].mxu0
        %v4673 = vpop.f32.mrb[0].mxu0
        %4674 = vdwg.mxu0
        %v4675 = vld [vmem:[%s756 + $0x3] sm:$0x1]
        %v4676 = vld [vmem:[%s765 + $0x3] sm:$0x1]
        %v4677 = vsel %vm981, %v4670, 0.0
        %4678 = vadd.xlane.f32.xlu0 %v4677
        %v4679 = vpop.xlane.xlu0 %4678
        %v4680 = vmul.f32 %v4679, %v994
        %v4681 = vsub.f32 %v4670, %v4680
        %v4682 = vmul.f32 %v4681, %v4681
        %v4683 = vsel %vm981, %v4682, 0.0
        %4684 = vadd.xlane.f32.xlu0 %v4683
        %v4685 = vpop.xlane.xlu0 %4684
        %v4686 = vmul.f32 %v4685, %v994
        %v4687 = vadd.f32 %v4686, 1e-05
        %v4688 = vrsqrt.pop %v4687
        %v4689 = vmul.f32 %v4681, %v4688
        %v4690 = vlaneseq
        %v4691 = vshrl.u32 %v4690, 7
        %v4692 = vsub.s32 0, %v4691
        %v4693 = vrot.slane %v4675, %v4692
        %v4694 = vmul.f32 %v4689, %v4693
        %v4695 = vlaneseq
        %v4696 = vshrl.u32 %v4695, 7
        %v4697 = vsub.s32 0, %v4696
        %v4698 = vrot.slane %v4676, %v4697
        %v4699 = vadd.f32 %v4694, %v4698
        %v4700 = vld [vmem:[%s756 + $0x2] sm:$0x1]
        %v4701 = vld [vmem:[%s765 + $0x2] sm:$0x1]
        %v4702 = vlaneseq
        %v4703 = vshrl.u32 %v4702, 7
        %v4704 = vsub.s32 0, %v4703
        %v4705 = vrot.slane %v4700, %v4704
        %v4706 = vmul.f32 %v1031, %v4705
        %v4707 = vmul.f32 %v1032, %v4705
        %v4708 = vmul.f32 %v1033, %v4705
        %v4709 = vmul.f32 %v1034, %v4705
        %v4710 = vlaneseq
        %v4711 = vshrl.u32 %v4710, 7
        %v4712 = vsub.s32 0, %v4711
        %v4713 = vrot.slane %v4701, %v4712
        %v4714 = vadd.f32 %v4706, %v4713
        %v4715 = vadd.f32 %v4707, %v4713
        %v4716 = vadd.f32 %v4708, %v4713
        %v4717 = vadd.f32 %v4709, %v4713
        %s4718 = scalar_lea.vmem %s774, 64 [#allocation9]
        %v4719 = vld [vmem:[%s4718] sm:$0xf]
        %v4720 = vld [vmem:[%s4718 + $0x4] sm:$0xf]
        %v4721 = vld [vmem:[%s4718 + $0x8] sm:$0xf]
        %v4722 = vld [vmem:[%s4718 + $0xc] sm:$0xf]
        %v4723 = vld [vmem:[%s4718 + $0x10] sm:$0xf]
        %v4724 = vld [vmem:[%s4718 + $0x14] sm:$0xf]
        %v4725 = vld [vmem:[%s4718 + $0x18] sm:$0xf]
        %v4726 = vld [vmem:[%s4718 + $0x1c] sm:$0xf]
        %v4727 = vpack.c.bf16 %v4699, %v4699
        %v4728 = vld [vmem:[%s783 + $0x2] sm:$0x1]
        %v4729 = vlaneseq
        %v4730 = vshrl.u32 %v4729, 7
        %v4731 = vsub.s32 0, %v4730
        %v4732 = vrot.slane %v4728, %v4731
        %v4741 = vunpack.c.l.b16 %v4719
        %v4742 = vunpack.c.l.b16 %v4720
        %v4743 = vunpack.c.l.b16 %v4721
        %v4744 = vunpack.c.l.b16 %v4722
        %v4745 = vunpack.c.l.b16 %v4723
        %v4746 = vunpack.c.l.b16 %v4724
        %v4747 = vunpack.c.l.b16 %v4725
        %v4748 = vunpack.c.l.b16 %v4726
        %v4749 = vpack.c.b16 %v4742, %v4741
        %v4750 = vpack.c.b16 %v4744, %v4743
        %v4751 = vpack.c.b16 %v4746, %v4745
        %v4752 = vpack.c.b16 %v4748, %v4747
        %v4758 = vsel %vm981, %v4727, 0
        %4760 = vmatprep.subr.bf16.mxu0 0
        %4761 = vmatpush1.bf16.msra.mxu0 %v4749
        %4762 = vmatprep.subr.bf16.mxu0 0
        %4763 = vmatpush1.bf16.msra.mxu0 %v4750
        %4764 = vmatprep.subr.bf16.mxu0 0
        %4765 = vmatpush1.bf16.msra.mxu0 %v4751
        %4766 = vmatprep.subr.bf16.mxu0 0
        %4767 = vmatpush1.bf16.msra.mxu0 %v4752
        %4768 = vmatprep.subr.bf16.mxu0 0
        %4769 = vmatpush1.bf16.msra.mxu0 0
        %4770 = vmatprep.subr.bf16.mxu0 0
        %4771 = vmatpush1.bf16.msra.mxu0 0
        %4772 = vmatprep.subr.bf16.mxu0 0
        %4773 = vmatpush1.bf16.msra.mxu0 0
        %4774 = vmatprep.subr.bf16.mxu0 0
        %4775 = vmatpush1.bf16.msra.mxu0 0
        %4776 = vmatprep.subr.bf16.mxu0 0
        %4777 = vmatpush1.bf16.msra.mxu0 0
        %4778 = vmatprep.subr.bf16.mxu0 0
        %4779 = vmatpush1.bf16.msra.mxu0 0
        %4780 = vmatprep.subr.bf16.mxu0 0
        %4781 = vmatpush1.bf16.msra.mxu0 0
        %4782 = vmatprep.subr.bf16.mxu0 0
        %4783 = vmatpush1.bf16.msra.mxu0 0
        %4784 = vmatprep.subr.bf16.mxu0 0
        %4785 = vmatpush1.bf16.msra.mxu0 0
        %4786 = vmatprep.subr.bf16.mxu0 0
        %4787 = vmatpush1.bf16.msra.mxu0 0
        %4788 = vmatprep.subr.bf16.mxu0 0
        %4789 = vmatpush1.bf16.msra.mxu0 0
        %4790 = vmatprep.subr.bf16.mxu0 0
        %4791 = vmatpush1.bf16.msra.mxu0 0
        %4792 = vmatprep.mubr.bf16.mxu0 0
        %4793 = vmatmul.mubr.bf16.gmra.mrb[0].mxu0 %v4758
        %v4794 = vpop.f32.mrb[0].mxu0
        %v4795 = vadd.f32 %v4732, %v4794
        %v4796 = vpop.f32.mrb[0].mxu0
        %v4797 = vpop.f32.mrb[0].mxu0
        %v4798 = vpop.f32.mrb[0].mxu0
        %4799 = vdwg.mxu0
        %s4800 = scalar_lea.vmem %s792, 64 [#allocation11]
        %v4801 = vld [vmem:[%s4800] sm:$0xf]
        %v4802 = vld [vmem:[%s4800 + $0x4] sm:$0xf]
        %v4803 = vld [vmem:[%s4800 + $0x8] sm:$0xf]
        %v4804 = vld [vmem:[%s4800 + $0xc] sm:$0xf]
        %v4805 = vld [vmem:[%s4800 + $0x10] sm:$0xf]
        %v4806 = vld [vmem:[%s4800 + $0x14] sm:$0xf]
        %v4807 = vld [vmem:[%s4800 + $0x18] sm:$0xf]
        %v4808 = vld [vmem:[%s4800 + $0x1c] sm:$0xf]
        %v4809 = vpack.c.bf16 %v4715, %v4714
        %v4810 = vpack.c.bf16 %v4717, %v4716
        %v4811 = vld [vmem:[%s801 + $0x2] sm:$0x1]
        %v4812 = vlaneseq
        %v4813 = vshrl.u32 %v4812, 7
        %v4814 = vsub.s32 0, %v4813
        %v4815 = vrot.slane %v4811, %v4814
        %v4824 = vunpack.c.l.b16 %v4801
        %v4825 = vunpack.c.l.b16 %v4802
        %v4826 = vunpack.c.l.b16 %v4803
        %v4827 = vunpack.c.l.b16 %v4804
        %v4828 = vunpack.c.l.b16 %v4805
        %v4829 = vunpack.c.l.b16 %v4806
        %v4830 = vunpack.c.l.b16 %v4807
        %v4831 = vunpack.c.l.b16 %v4808
        %v4832 = vpack.c.b16 %v4825, %v4824
        %v4833 = vpack.c.b16 %v4827, %v4826
        %v4834 = vpack.c.b16 %v4829, %v4828
        %v4835 = vpack.c.b16 %v4831, %v4830
        %v4841 = vsel %vm981, %v4809, 0
        %v4844 = vsel %vm981, %v4810, 0
        %4846 = vmatprep.subr.bf16.mxu0 0
        %4847 = vmatpush1.bf16.msra.mxu0 %v4832
        %4848 = vmatprep.subr.bf16.mxu0 0
        %4849 = vmatpush1.bf16.msra.mxu0 %v4833
        %4850 = vmatprep.subr.bf16.mxu0 0
        %4851 = vmatpush1.bf16.msra.mxu0 %v4834
        %4852 = vmatprep.subr.bf16.mxu0 0
        %4853 = vmatpush1.bf16.msra.mxu0 %v4835
        %4854 = vmatprep.subr.bf16.mxu0 0
        %4855 = vmatpush1.bf16.msra.mxu0 0
        %4856 = vmatprep.subr.bf16.mxu0 0
        %4857 = vmatpush1.bf16.msra.mxu0 0
        %4858 = vmatprep.subr.bf16.mxu0 0
        %4859 = vmatpush1.bf16.msra.mxu0 0
        %4860 = vmatprep.subr.bf16.mxu0 0
        %4861 = vmatpush1.bf16.msra.mxu0 0
        %4862 = vmatprep.subr.bf16.mxu0 0
        %4863 = vmatpush1.bf16.msra.mxu0 0
        %4864 = vmatprep.subr.bf16.mxu0 0
        %4865 = vmatpush1.bf16.msra.mxu0 0
        %4866 = vmatprep.subr.bf16.mxu0 0
        %4867 = vmatpush1.bf16.msra.mxu0 0
        %4868 = vmatprep.subr.bf16.mxu0 0
        %4869 = vmatpush1.bf16.msra.mxu0 0
        %4870 = vmatprep.subr.bf16.mxu0 0
        %4871 = vmatpush1.bf16.msra.mxu0 0
        %4872 = vmatprep.subr.bf16.mxu0 0
        %4873 = vmatpush1.bf16.msra.mxu0 0
        %4874 = vmatprep.subr.bf16.mxu0 0
        %4875 = vmatpush1.bf16.msra.mxu0 0
        %4876 = vmatprep.subr.bf16.mxu0 0
        %4877 = vmatpush1.bf16.msra.mxu0 0
        %4878 = vmatprep.mubr.bf16.mxu0 0
        %4879 = vmatmul.mubr.bf16.gmra.mrb[0].mxu0 %v4841
        %v4880 = vpop.f32.mrb[0].mxu0
        %v4881 = vadd.f32 %v4815, %v4880
        %v4882 = vpop.f32.mrb[0].mxu0
        %v4883 = vpop.f32.mrb[0].mxu0
        %v4884 = vadd.f32 %v4815, %v4883
        %v4885 = vpop.f32.mrb[0].mxu0
        %4886 = vmatprep.mubr.bf16.mxu0 0
        %4887 = vmatmul.mubr.bf16.gmra.mrb[0].mxu0 %v4844
        %v4888 = vpop.f32.mrb[0].mxu0
        %v4889 = vadd.f32 %v4815, %v4888
        %v4890 = vpop.f32.mrb[0].mxu0
        %v4891 = vpop.f32.mrb[0].mxu0
        %v4892 = vadd.f32 %v4815, %v4891
        %v4893 = vpop.f32.mrb[0].mxu0
        %4894 = vdwg.mxu0
        %4896 = vrot.lane.b32.xlu0 %v4795, 96
        %v4897 = vpop.permute.xlu0 %4896
        %4900 = vrot.lane.b32.xlu0 %v4881, 96
        %v4901 = vpop.permute.xlu0 %4900
        %4902 = vrot.lane.b32.xlu0 %v4884, 96
        %v4903 = vpop.permute.xlu0 %4902
        %4906 = vxpose.xlu0.b32.start [1/16] %v4881, 128
        %4907 = vxpose.xlu0.b32.cont [2/16] %v4884, 128
        %4908 = vxpose.xlu0.b32.cont [3/16] 0.0, 128
        %4909 = vxpose.xlu0.b32.cont [4/16] 0.0, 128
        %4910 = vxpose.xlu0.b32.cont [5/16] 0.0, 128
        %4911 = vxpose.xlu0.b32.cont [6/16] 0.0, 128
        %4912 = vxpose.xlu0.b32.cont [7/16] 0.0, 128
        %4913 = vxpose.xlu0.b32.cont [8/16] 0.0, 128
        %4914 = vxpose.xlu0.b32.cont [9/16] 0.0, 128
        %4915 = vxpose.xlu0.b32.cont [10/16] 0.0, 128
        %4916 = vxpose.xlu0.b32.cont [11/16] 0.0, 128
        %4917 = vxpose.xlu0.b32.cont [12/16] 0.0, 128
        %4918 = vxpose.xlu0.b32.cont [13/16] 0.0, 128
        %4919 = vxpose.xlu0.b32.cont [14/16] 0.0, 128
        %4920 = vxpose.xlu0.b32.cont [15/16] 0.0, 128
        %4921 = vxpose.xlu0.b32.end [16/16] 0.0, 128
        %v4922 = vpop.trf.xlu0
        %v4923 = vpop.trf.xlu0
        %v4924 = vpop.trf.xlu0
        %v4925 = vpop.trf.xlu0
        %v4926 = vpop.trf.xlu0
        %v4927 = vpop.trf.xlu0
        %v4928 = vpop.trf.xlu0
        %v4929 = vpop.trf.xlu0
        %v4930 = vpop.trf.xlu0
        %v4931 = vpop.trf.xlu0
        %v4932 = vpop.trf.xlu0
        %v4933 = vpop.trf.xlu0
        %v4934 = vpop.trf.xlu0
        %v4935 = vpop.trf.xlu0
        %v4936 = vpop.trf.xlu0
        %v4937 = vpop.trf.xlu0
        %4938 = vxpose.xlu0.b32.start [1/16] %v4901, 128
        %4939 = vxpose.xlu0.b32.cont [2/16] %v4903, 128
        %4940 = vxpose.xlu0.b32.cont [3/16] 0.0, 128
        %4941 = vxpose.xlu0.b32.cont [4/16] 0.0, 128
        %4942 = vxpose.xlu0.b32.cont [5/16] 0.0, 128
        %4943 = vxpose.xlu0.b32.cont [6/16] 0.0, 128
        %4944 = vxpose.xlu0.b32.cont [7/16] 0.0, 128
        %4945 = vxpose.xlu0.b32.cont [8/16] 0.0, 128
        %4946 = vxpose.xlu0.b32.cont [9/16] 0.0, 128
        %4947 = vxpose.xlu0.b32.cont [10/16] 0.0, 128
        %4948 = vxpose.xlu0.b32.cont [11/16] 0.0, 128
        %4949 = vxpose.xlu0.b32.cont [12/16] 0.0, 128
        %4950 = vxpose.xlu0.b32.cont [13/16] 0.0, 128
        %4951 = vxpose.xlu0.b32.cont [14/16] 0.0, 128
        %4952 = vxpose.xlu0.b32.cont [15/16] 0.0, 128
        %4953 = vxpose.xlu0.b32.end [16/16] 0.0, 128
        %v4954 = vpop.trf.xlu0
        %v4955 = vpop.trf.xlu0
        %v4956 = vpop.trf.xlu0
        %v4957 = vpop.trf.xlu0
        %v4958 = vpop.trf.xlu0
        %v4959 = vpop.trf.xlu0
        %v4960 = vpop.trf.xlu0
        %v4961 = vpop.trf.xlu0
        %v4962 = vpop.trf.xlu0
        %v4963 = vpop.trf.xlu0
        %v4964 = vpop.trf.xlu0
        %v4965 = vpop.trf.xlu0
        %v4966 = vpop.trf.xlu0
        %v4967 = vpop.trf.xlu0
        %v4968 = vpop.trf.xlu0
        %v4969 = vpop.trf.xlu0
        %v4970 = vsel %vm1309, %v4795, 0
        %4972 = vmatprep.subr.mxu0 0.0
        %4973 = vmatpush1.msra.mxu0 %v4922
        %4974 = vmatprep.subr.mxu0 0.0
        %4975 = vmatpush1.msra.mxu0 %v4923
        %4976 = vmatprep.subr.mxu0 0.0
        %4977 = vmatpush1.msra.mxu0 %v4924
        %4978 = vmatprep.subr.mxu0 0.0
        %4979 = vmatpush1.msra.mxu0 %v4925
        %4980 = vmatprep.subr.mxu0 0.0
        %4981 = vmatpush1.msra.mxu0 0.0
        %4982 = vmatprep.subr.mxu0 0.0
        %4983 = vmatpush1.msra.mxu0 0.0
        %4984 = vmatprep.subr.mxu0 0.0
        %4985 = vmatpush1.msra.mxu0 0.0
        %4986 = vmatprep.subr.mxu0 0.0
        %4987 = vmatpush1.msra.mxu0 0.0
        %4988 = vmatprep.subr.mxu0 0.0
        %4989 = vmatpush1.msra.mxu0 0.0
        %4990 = vmatprep.subr.mxu0 0.0
        %4991 = vmatpush1.msra.mxu0 0.0
        %4992 = vmatprep.subr.mxu0 0.0
        %4993 = vmatpush1.msra.mxu0 0.0
        %4994 = vmatprep.subr.mxu0 0.0
        %4995 = vmatpush1.msra.mxu0 0.0
        %4996 = vmatprep.subr.mxu0 0.0
        %4997 = vmatpush1.msra.mxu0 0.0
        %4998 = vmatprep.subr.mxu0 0.0
        %4999 = vmatpush1.msra.mxu0 0.0
        %5000 = vmatprep.subr.mxu0 0.0
        %5001 = vmatpush1.msra.mxu0 0.0
        %5002 = vmatprep.subr.mxu0 0.0
        %5003 = vmatpush1.msra.mxu0 0.0
        %5004 = vmatprep.subr.mxu0 0.0
        %5005 = vmatpush1.msra.mxu0 0.0
        %5006 = vmatprep.subr.mxu0 0.0
        %5007 = vmatpush1.msra.mxu0 0.0
        %5008 = vmatprep.subr.mxu0 0.0
        %5009 = vmatpush1.msra.mxu0 0.0
        %5010 = vmatprep.subr.mxu0 0.0
        %5011 = vmatpush1.msra.mxu0 0.0
        %5012 = vmatprep.subr.mxu0 0.0
        %5013 = vmatpush1.msra.mxu0 0.0
        %5014 = vmatprep.subr.mxu0 0.0
        %5015 = vmatpush1.msra.mxu0 0.0
        %5016 = vmatprep.subr.mxu0 0.0
        %5017 = vmatpush1.msra.mxu0 0.0
        %5018 = vmatprep.subr.mxu0 0.0
        %5019 = vmatpush1.msra.mxu0 0.0
        %5020 = vmatprep.subr.mxu0 0.0
        %5021 = vmatpush1.msra.mxu0 0.0
        %5022 = vmatprep.subr.mxu0 0.0
        %5023 = vmatpush1.msra.mxu0 0.0
        %5024 = vmatprep.subr.mxu0 0.0
        %5025 = vmatpush1.msra.mxu0 0.0
        %5026 = vmatprep.subr.mxu0 0.0
        %5027 = vmatpush1.msra.mxu0 0.0
        %5028 = vmatprep.subr.mxu0 0.0
        %5029 = vmatpush1.msra.mxu0 0.0
        %5030 = vmatprep.subr.mxu0 0.0
        %5031 = vmatpush1.msra.mxu0 0.0
        %5032 = vmatprep.subr.mxu0 0.0
        %5033 = vmatpush1.msra.mxu0 0.0
        %5034 = vmatprep.subr.mxu0 0.0
        %5035 = vmatpush1.msra.mxu0 0.0
        %5036 = vmatprep.mubr.f32.mxu0 0.0
        %5037 = vmatmul.mubr.f32.gmra.mrb[0].mxu0 %v4970
        %v5038 = vpop.f32.mrb[0].mxu0
        %v5039 = vadd.f32 0.0, %v5038
        %v5040 = vpop.f32.mrb[0].mxu0
        %5041 = vdwg.mxu0
        %v5042 = vsel %vm1309, %v4897, 0
        %5044 = vmatprep.subr.mxu0 0.0
        %5045 = vmatpush1.msra.mxu0 %v4954
        %5046 = vmatprep.subr.mxu0 0.0
        %5047 = vmatpush1.msra.mxu0 %v4955
        %5048 = vmatprep.subr.mxu0 0.0
        %5049 = vmatpush1.msra.mxu0 %v4956
        %5050 = vmatprep.subr.mxu0 0.0
        %5051 = vmatpush1.msra.mxu0 %v4957
        %5052 = vmatprep.subr.mxu0 0.0
        %5053 = vmatpush1.msra.mxu0 0.0
        %5054 = vmatprep.subr.mxu0 0.0
        %5055 = vmatpush1.msra.mxu0 0.0
        %5056 = vmatprep.subr.mxu0 0.0
        %5057 = vmatpush1.msra.mxu0 0.0
        %5058 = vmatprep.subr.mxu0 0.0
        %5059 = vmatpush1.msra.mxu0 0.0
        %5060 = vmatprep.subr.mxu0 0.0
        %5061 = vmatpush1.msra.mxu0 0.0
        %5062 = vmatprep.subr.mxu0 0.0
        %5063 = vmatpush1.msra.mxu0 0.0
        %5064 = vmatprep.subr.mxu0 0.0
        %5065 = vmatpush1.msra.mxu0 0.0
        %5066 = vmatprep.subr.mxu0 0.0
        %5067 = vmatpush1.msra.mxu0 0.0
        %5068 = vmatprep.subr.mxu0 0.0
        %5069 = vmatpush1.msra.mxu0 0.0
        %5070 = vmatprep.subr.mxu0 0.0
        %5071 = vmatpush1.msra.mxu0 0.0
        %5072 = vmatprep.subr.mxu0 0.0
        %5073 = vmatpush1.msra.mxu0 0.0
        %5074 = vmatprep.subr.mxu0 0.0
        %5075 = vmatpush1.msra.mxu0 0.0
        %5076 = vmatprep.subr.mxu0 0.0
        %5077 = vmatpush1.msra.mxu0 0.0
        %5078 = vmatprep.subr.mxu0 0.0
        %5079 = vmatpush1.msra.mxu0 0.0
        %5080 = vmatprep.subr.mxu0 0.0
        %5081 = vmatpush1.msra.mxu0 0.0
        %5082 = vmatprep.subr.mxu0 0.0
        %5083 = vmatpush1.msra.mxu0 0.0
        %5084 = vmatprep.subr.mxu0 0.0
        %5085 = vmatpush1.msra.mxu0 0.0
        %5086 = vmatprep.subr.mxu0 0.0
        %5087 = vmatpush1.msra.mxu0 0.0
        %5088 = vmatprep.subr.mxu0 0.0
        %5089 = vmatpush1.msra.mxu0 0.0
        %5090 = vmatprep.subr.mxu0 0.0
        %5091 = vmatpush1.msra.mxu0 0.0
        %5092 = vmatprep.subr.mxu0 0.0
        %5093 = vmatpush1.msra.mxu0 0.0
        %5094 = vmatprep.subr.mxu0 0.0
        %5095 = vmatpush1.msra.mxu0 0.0
        %5096 = vmatprep.subr.mxu0 0.0
        %5097 = vmatpush1.msra.mxu0 0.0
        %5098 = vmatprep.subr.mxu0 0.0
        %5099 = vmatpush1.msra.mxu0 0.0
        %5100 = vmatprep.subr.mxu0 0.0
        %5101 = vmatpush1.msra.mxu0 0.0
        %5102 = vmatprep.subr.mxu0 0.0
        %5103 = vmatpush1.msra.mxu0 0.0
        %5104 = vmatprep.subr.mxu0 0.0
        %5105 = vmatpush1.msra.mxu0 0.0
        %5106 = vmatprep.subr.mxu0 0.0
        %5107 = vmatpush1.msra.mxu0 0.0
        %5108 = vmatprep.mubr.f32.mxu0 0.0
        %5109 = vmatmul.mubr.f32.gmra.mrb[0].mxu0 %v5042
        %v5110 = vpop.f32.mrb[0].mxu0
        %v5111 = vadd.f32 0.0, %v5110
        %v5112 = vpop.f32.mrb[0].mxu0
        %5113 = vdwg.mxu0
        %v5114 = vmul.f32 %v5039, 0.17677669
        %v5115 = vmul.f32 %v5111, 0.17677669
        %vm5116 = vcmask 125952
        %v5117 = vsel %vm5116, %v5114, -inf
        %5118 = vmax.xlane.f32.xlu0 %v5117
        %v5119 = vpop.xlane.xlu0 %5118
        %v5120 = vsel %vm5116, %v5115, -inf
        %5121 = vmax.xlane.f32.xlu0 %v5120
        %v5122 = vpop.xlane.xlu0 %5121
        %v5123 = vsub.f32 %v5114, %v5119
        %v5124 = vsub.f32 %v5115, %v5122
        %v5125 = vmul.f32 %v5123, 1.442695
        %v5126 = vpow.pop %v5125
        %v5127 = vmul.f32 %v5124, 1.442695
        %v5128 = vpow.pop %v5127
        %v5129 = vsel %vm5116, %v5126, 0.0
        %5130 = vadd.xlane.f32.xlu0 %v5129
        %v5131 = vpop.xlane.xlu0 %5130
        %v5132 = vsel %vm5116, %v5128, 0.0
        %5133 = vadd.xlane.f32.xlu0 %v5132
        %v5134 = vpop.xlane.xlu0 %5133
        %v5135 = vrcp.pop %v5131
        %v5136 = vrcp.pop %v5134
        %v5137 = vmul.f32 %v5126, %v5135
        %v5138 = vmul.f32 %v5128, %v5136
        %5139 = vrot.lane.b32.xlu0 %v4881, 64
        %v5140 = vpop.permute.xlu0 %5139
        %5141 = vrot.lane.b32.xlu0 %v4884, 64
        %v5142 = vpop.permute.xlu0 %5141
        %5143 = vrot.lane.b32.xlu0 %v4901, 64
        %v5144 = vpop.permute.xlu0 %5143
        %5145 = vrot.lane.b32.xlu0 %v4903, 64
        %v5146 = vpop.permute.xlu0 %5145
        %5151 = vxpose.xlu0.b32.start [1/16] %v5140, 128
        %5152 = vxpose.xlu0.b32.cont [2/16] %v5142, 128
        %5153 = vxpose.xlu0.b32.cont [3/16] 0.0, 128
        %5154 = vxpose.xlu0.b32.cont [4/16] 0.0, 128
        %5155 = vxpose.xlu0.b32.cont [5/16] 0.0, 128
        %5156 = vxpose.xlu0.b32.cont [6/16] 0.0, 128
        %5157 = vxpose.xlu0.b32.cont [7/16] 0.0, 128
        %5158 = vxpose.xlu0.b32.cont [8/16] 0.0, 128
        %5159 = vxpose.xlu0.b32.cont [9/16] 0.0, 128
        %5160 = vxpose.xlu0.b32.cont [10/16] 0.0, 128
        %5161 = vxpose.xlu0.b32.cont [11/16] 0.0, 128
        %5162 = vxpose.xlu0.b32.cont [12/16] 0.0, 128
        %5163 = vxpose.xlu0.b32.cont [13/16] 0.0, 128
        %5164 = vxpose.xlu0.b32.cont [14/16] 0.0, 128
        %5165 = vxpose.xlu0.b32.cont [15/16] 0.0, 128
        %5166 = vxpose.xlu0.b32.end [16/16] 0.0, 128
        %v5167 = vpop.trf.xlu0
        %v5168 = vpop.trf.xlu0
        %v5169 = vpop.trf.xlu0
        %v5170 = vpop.trf.xlu0
        %v5171 = vpop.trf.xlu0
        %v5172 = vpop.trf.xlu0
        %v5173 = vpop.trf.xlu0
        %v5174 = vpop.trf.xlu0
        %v5175 = vpop.trf.xlu0
        %v5176 = vpop.trf.xlu0
        %v5177 = vpop.trf.xlu0
        %v5178 = vpop.trf.xlu0
        %v5179 = vpop.trf.xlu0
        %v5180 = vpop.trf.xlu0
        %v5181 = vpop.trf.xlu0
        %v5182 = vpop.trf.xlu0
        %5183 = vxpose.xlu0.b32.start [1/16] %v5144, 128
        %5184 = vxpose.xlu0.b32.cont [2/16] %v5146, 128
        %5185 = vxpose.xlu0.b32.cont [3/16] 0.0, 128
        %5186 = vxpose.xlu0.b32.cont [4/16] 0.0, 128
        %5187 = vxpose.xlu0.b32.cont [5/16] 0.0, 128
        %5188 = vxpose.xlu0.b32.cont [6/16] 0.0, 128
        %5189 = vxpose.xlu0.b32.cont [7/16] 0.0, 128
        %5190 = vxpose.xlu0.b32.cont [8/16] 0.0, 128
        %5191 = vxpose.xlu0.b32.cont [9/16] 0.0, 128
        %5192 = vxpose.xlu0.b32.cont [10/16] 0.0, 128
        %5193 = vxpose.xlu0.b32.cont [11/16] 0.0, 128
        %5194 = vxpose.xlu0.b32.cont [12/16] 0.0, 128
        %5195 = vxpose.xlu0.b32.cont [13/16] 0.0, 128
        %5196 = vxpose.xlu0.b32.cont [14/16] 0.0, 128
        %5197 = vxpose.xlu0.b32.cont [15/16] 0.0, 128
        %5198 = vxpose.xlu0.b32.end [16/16] 0.0, 128
        %v5199 = vpop.trf.xlu0
        %v5200 = vpop.trf.xlu0
        %v5201 = vpop.trf.xlu0
        %v5202 = vpop.trf.xlu0
        %v5203 = vpop.trf.xlu0
        %v5204 = vpop.trf.xlu0
        %v5205 = vpop.trf.xlu0
        %v5206 = vpop.trf.xlu0
        %v5207 = vpop.trf.xlu0
        %v5208 = vpop.trf.xlu0
        %v5209 = vpop.trf.xlu0
        %v5210 = vpop.trf.xlu0
        %v5211 = vpop.trf.xlu0
        %v5212 = vpop.trf.xlu0
        %v5213 = vpop.trf.xlu0
        %v5214 = vpop.trf.xlu0
        %v5216 = vsel %vm1472, %v5167, 0
        %v5219 = vsel %vm1472, %v5168, 0
        %v5222 = vsel %vm1472, %v5169, 0
        %v5225 = vsel %vm1472, %v5170, 0
        %v5228 = vsel %vm1472, %v5137, 0
        %5230 = vmatprep.subr.mxu0 0.0
        %5231 = vmatpush1.xpose.msra.mxu0 %v5228
        %5232 = vmatprep.subr.mxu0 0.0
        %5233 = vmatpush1.xpose.msra.mxu0 0.0
        %5234 = vmatprep.subr.mxu0 0.0
        %5235 = vmatpush1.xpose.msra.mxu0 0.0
        %5236 = vmatprep.subr.mxu0 0.0
        %5237 = vmatpush1.xpose.msra.mxu0 0.0
        %5238 = vmatprep.subr.mxu0 0.0
        %5239 = vmatpush1.xpose.msra.mxu0 0.0
        %5240 = vmatprep.subr.mxu0 0.0
        %5241 = vmatpush1.xpose.msra.mxu0 0.0
        %5242 = vmatprep.subr.mxu0 0.0
        %5243 = vmatpush1.xpose.msra.mxu0 0.0
        %5244 = vmatprep.subr.mxu0 0.0
        %5245 = vmatpush1.xpose.msra.mxu0 0.0
        %5246 = vmatprep.subr.mxu0 0.0
        %5247 = vmatpush1.xpose.msra.mxu0 0.0
        %5248 = vmatprep.subr.mxu0 0.0
        %5249 = vmatpush1.xpose.msra.mxu0 0.0
        %5250 = vmatprep.subr.mxu0 0.0
        %5251 = vmatpush1.xpose.msra.mxu0 0.0
        %5252 = vmatprep.subr.mxu0 0.0
        %5253 = vmatpush1.xpose.msra.mxu0 0.0
        %5254 = vmatprep.subr.mxu0 0.0
        %5255 = vmatpush1.xpose.msra.mxu0 0.0
        %5256 = vmatprep.subr.mxu0 0.0
        %5257 = vmatpush1.xpose.msra.mxu0 0.0
        %5258 = vmatprep.subr.mxu0 0.0
        %5259 = vmatpush1.xpose.msra.mxu0 0.0
        %5260 = vmatprep.subr.mxu0 0.0
        %5261 = vmatpush1.xpose.msra.mxu0 0.0
        %5262 = vmatprep.subr.mxu0 0.0
        %5263 = vmatpush1.xpose.msra.mxu0 0.0
        %5264 = vmatprep.subr.mxu0 0.0
        %5265 = vmatpush1.xpose.msra.mxu0 0.0
        %5266 = vmatprep.subr.mxu0 0.0
        %5267 = vmatpush1.xpose.msra.mxu0 0.0
        %5268 = vmatprep.subr.mxu0 0.0
        %5269 = vmatpush1.xpose.msra.mxu0 0.0
        %5270 = vmatprep.subr.mxu0 0.0
        %5271 = vmatpush1.xpose.msra.mxu0 0.0
        %5272 = vmatprep.subr.mxu0 0.0
        %5273 = vmatpush1.xpose.msra.mxu0 0.0
        %5274 = vmatprep.subr.mxu0 0.0
        %5275 = vmatpush1.xpose.msra.mxu0 0.0
        %5276 = vmatprep.subr.mxu0 0.0
        %5277 = vmatpush1.xpose.msra.mxu0 0.0
        %5278 = vmatprep.subr.mxu0 0.0
        %5279 = vmatpush1.xpose.msra.mxu0 0.0
        %5280 = vmatprep.subr.mxu0 0.0
        %5281 = vmatpush1.xpose.msra.mxu0 0.0
        %5282 = vmatprep.subr.mxu0 0.0
        %5283 = vmatpush1.xpose.msra.mxu0 0.0
        %5284 = vmatprep.subr.mxu0 0.0
        %5285 = vmatpush1.xpose.msra.mxu0 0.0
        %5286 = vmatprep.subr.mxu0 0.0
        %5287 = vmatpush1.xpose.msra.mxu0 0.0
        %5288 = vmatprep.subr.mxu0 0.0
        %5289 = vmatpush1.xpose.msra.mxu0 0.0
        %5290 = vmatprep.subr.mxu0 0.0
        %5291 = vmatpush1.xpose.msra.mxu0 0.0
        %5292 = vmatprep.subr.mxu0 0.0
        %5293 = vmatpush1.xpose.msra.mxu0 0.0
        %5294 = vmatprep.mubr.f32.mxu0 0.0
        %5295 = vmatmul.mubr.f32.gmra.mrb[0].mxu0 %v5216
        %v5296 = vpop.f32.mrb[0].mxu0
        %v5297 = vadd.f32 0.0, %v5296
        %v5298 = vpop.f32.mrb[0].mxu0
        %5299 = vmatprep.mubr.f32.mxu0 0.0
        %5300 = vmatmul.mubr.f32.gmra.mrb[0].mxu0 %v5219
        %v5301 = vpop.f32.mrb[0].mxu0
        %v5302 = vadd.f32 0.0, %v5301
        %v5303 = vpop.f32.mrb[0].mxu0
        %5304 = vmatprep.mubr.f32.mxu0 0.0
        %5305 = vmatmul.mubr.f32.gmra.mrb[0].mxu0 %v5222
        %v5306 = vpop.f32.mrb[0].mxu0
        %v5307 = vadd.f32 0.0, %v5306
        %v5308 = vpop.f32.mrb[0].mxu0
        %5309 = vmatprep.mubr.f32.mxu0 0.0
        %5310 = vmatmul.mubr.f32.gmra.mrb[0].mxu0 %v5225
        %v5311 = vpop.f32.mrb[0].mxu0
        %v5312 = vadd.f32 0.0, %v5311
        %v5313 = vpop.f32.mrb[0].mxu0
        %5314 = vdwg.mxu0
        %v5316 = vsel %vm1472, %v5199, 0
        %v5319 = vsel %vm1472, %v5200, 0
        %v5322 = vsel %vm1472, %v5201, 0
        %v5325 = vsel %vm1472, %v5202, 0
        %v5328 = vsel %vm1472, %v5138, 0
        %5330 = vmatprep.subr.mxu0 0.0
        %5331 = vmatpush1.xpose.msra.mxu0 %v5328
        %5332 = vmatprep.subr.mxu0 0.0
        %5333 = vmatpush1.xpose.msra.mxu0 0.0
        %5334 = vmatprep.subr.mxu0 0.0
        %5335 = vmatpush1.xpose.msra.mxu0 0.0
        %5336 = vmatprep.subr.mxu0 0.0
        %5337 = vmatpush1.xpose.msra.mxu0 0.0
        %5338 = vmatprep.subr.mxu0 0.0
        %5339 = vmatpush1.xpose.msra.mxu0 0.0
        %5340 = vmatprep.subr.mxu0 0.0
        %5341 = vmatpush1.xpose.msra.mxu0 0.0
        %5342 = vmatprep.subr.mxu0 0.0
        %5343 = vmatpush1.xpose.msra.mxu0 0.0
        %5344 = vmatprep.subr.mxu0 0.0
        %5345 = vmatpush1.xpose.msra.mxu0 0.0
        %5346 = vmatprep.subr.mxu0 0.0
        %5347 = vmatpush1.xpose.msra.mxu0 0.0
        %5348 = vmatprep.subr.mxu0 0.0
        %5349 = vmatpush1.xpose.msra.mxu0 0.0
        %5350 = vmatprep.subr.mxu0 0.0
        %5351 = vmatpush1.xpose.msra.mxu0 0.0
        %5352 = vmatprep.subr.mxu0 0.0
        %5353 = vmatpush1.xpose.msra.mxu0 0.0
        %5354 = vmatprep.subr.mxu0 0.0
        %5355 = vmatpush1.xpose.msra.mxu0 0.0
        %5356 = vmatprep.subr.mxu0 0.0
        %5357 = vmatpush1.xpose.msra.mxu0 0.0
        %5358 = vmatprep.subr.mxu0 0.0
        %5359 = vmatpush1.xpose.msra.mxu0 0.0
        %5360 = vmatprep.subr.mxu0 0.0
        %5361 = vmatpush1.xpose.msra.mxu0 0.0
        %5362 = vmatprep.subr.mxu0 0.0
        %5363 = vmatpush1.xpose.msra.mxu0 0.0
        %5364 = vmatprep.subr.mxu0 0.0
        %5365 = vmatpush1.xpose.msra.mxu0 0.0
        %5366 = vmatprep.subr.mxu0 0.0
        %5367 = vmatpush1.xpose.msra.mxu0 0.0
        %5368 = vmatprep.subr.mxu0 0.0
        %5369 = vmatpush1.xpose.msra.mxu0 0.0
        %5370 = vmatprep.subr.mxu0 0.0
        %5371 = vmatpush1.xpose.msra.mxu0 0.0
        %5372 = vmatprep.subr.mxu0 0.0
        %5373 = vmatpush1.xpose.msra.mxu0 0.0
        %5374 = vmatprep.subr.mxu0 0.0
        %5375 = vmatpush1.xpose.msra.mxu0 0.0
        %5376 = vmatprep.subr.mxu0 0.0
        %5377 = vmatpush1.xpose.msra.mxu0 0.0
        %5378 = vmatprep.subr.mxu0 0.0
        %5379 = vmatpush1.xpose.msra.mxu0 0.0
        %5380 = vmatprep.subr.mxu0 0.0
        %5381 = vmatpush1.xpose.msra.mxu0 0.0
        %5382 = vmatprep.subr.mxu0 0.0
        %5383 = vmatpush1.xpose.msra.mxu0 0.0
        %5384 = vmatprep.subr.mxu0 0.0
        %5385 = vmatpush1.xpose.msra.mxu0 0.0
        %5386 = vmatprep.subr.mxu0 0.0
        %5387 = vmatpush1.xpose.msra.mxu0 0.0
        %5388 = vmatprep.subr.mxu0 0.0
        %5389 = vmatpush1.xpose.msra.mxu0 0.0
        %5390 = vmatprep.subr.mxu0 0.0
        %5391 = vmatpush1.xpose.msra.mxu0 0.0
        %5392 = vmatprep.subr.mxu0 0.0
        %5393 = vmatpush1.xpose.msra.mxu0 0.0
        %5394 = vmatprep.mubr.f32.mxu0 0.0
        %5395 = vmatmul.mubr.f32.gmra.mrb[0].mxu0 %v5316
        %v5396 = vpop.f32.mrb[0].mxu0
        %v5397 = vadd.f32 0.0, %v5396
        %v5398 = vpop.f32.mrb[0].mxu0
        %5399 = vmatprep.mubr.f32.mxu0 0.0
        %5400 = vmatmul.mubr.f32.gmra.mrb[0].mxu0 %v5319
        %v5401 = vpop.f32.mrb[0].mxu0
        %v5402 = vadd.f32 0.0, %v5401
        %v5403 = vpop.f32.mrb[0].mxu0
        %5404 = vmatprep.mubr.f32.mxu0 0.0
        %5405 = vmatmul.mubr.f32.gmra.mrb[0].mxu0 %v5322
        %v5406 = vpop.f32.mrb[0].mxu0
        %v5407 = vadd.f32 0.0, %v5406
        %v5408 = vpop.f32.mrb[0].mxu0
        %5409 = vmatprep.mubr.f32.mxu0 0.0
        %5410 = vmatmul.mubr.f32.gmra.mrb[0].mxu0 %v5325
        %v5411 = vpop.f32.mrb[0].mxu0
        %v5412 = vadd.f32 0.0, %v5411
        %v5413 = vpop.f32.mrb[0].mxu0
        %5414 = vdwg.mxu0
        %5415 = vxpose.xlu0.b32.start [1/16] %v5297, 128
        %5416 = vxpose.xlu0.b32.cont [2/16] %v5302, 128
        %5417 = vxpose.xlu0.b32.cont [3/16] %v5307, 128
        %5418 = vxpose.xlu0.b32.cont [4/16] %v5312, 128
        %5419 = vxpose.xlu0.b32.cont [5/16] 0.0, 128
        %5420 = vxpose.xlu0.b32.cont [6/16] 0.0, 128
        %5421 = vxpose.xlu0.b32.cont [7/16] 0.0, 128
        %5422 = vxpose.xlu0.b32.cont [8/16] 0.0, 128
        %5423 = vxpose.xlu0.b32.cont [9/16] 0.0, 128
        %5424 = vxpose.xlu0.b32.cont [10/16] 0.0, 128
        %5425 = vxpose.xlu0.b32.cont [11/16] 0.0, 128
        %5426 = vxpose.xlu0.b32.cont [12/16] 0.0, 128
        %5427 = vxpose.xlu0.b32.cont [13/16] 0.0, 128
        %5428 = vxpose.xlu0.b32.cont [14/16] 0.0, 128
        %5429 = vxpose.xlu0.b32.cont [15/16] 0.0, 128
        %5430 = vxpose.xlu0.b32.end [16/16] 0.0, 128
        %v5431 = vpop.trf.xlu0
        %v5432 = vpop.trf.xlu0
        %v5433 = vpop.trf.xlu0
        %v5434 = vpop.trf.xlu0
        %v5435 = vpop.trf.xlu0
        %v5436 = vpop.trf.xlu0
        %v5437 = vpop.trf.xlu0
        %v5438 = vpop.trf.xlu0
        %v5439 = vpop.trf.xlu0
        %v5440 = vpop.trf.xlu0
        %v5441 = vpop.trf.xlu0
        %v5442 = vpop.trf.xlu0
        %v5443 = vpop.trf.xlu0
        %v5444 = vpop.trf.xlu0
        %v5445 = vpop.trf.xlu0
        %v5446 = vpop.trf.xlu0
        %5447 = vxpose.xlu0.b32.start [1/16] %v5397, 128
        %5448 = vxpose.xlu0.b32.cont [2/16] %v5402, 128
        %5449 = vxpose.xlu0.b32.cont [3/16] %v5407, 128
        %5450 = vxpose.xlu0.b32.cont [4/16] %v5412, 128
        %5451 = vxpose.xlu0.b32.cont [5/16] 0.0, 128
        %5452 = vxpose.xlu0.b32.cont [6/16] 0.0, 128
        %5453 = vxpose.xlu0.b32.cont [7/16] 0.0, 128
        %5454 = vxpose.xlu0.b32.cont [8/16] 0.0, 128
        %5455 = vxpose.xlu0.b32.cont [9/16] 0.0, 128
        %5456 = vxpose.xlu0.b32.cont [10/16] 0.0, 128
        %5457 = vxpose.xlu0.b32.cont [11/16] 0.0, 128
        %5458 = vxpose.xlu0.b32.cont [12/16] 0.0, 128
        %5459 = vxpose.xlu0.b32.cont [13/16] 0.0, 128
        %5460 = vxpose.xlu0.b32.cont [14/16] 0.0, 128
        %5461 = vxpose.xlu0.b32.cont [15/16] 0.0, 128
        %5462 = vxpose.xlu0.b32.end [16/16] 0.0, 128
        %v5463 = vpop.trf.xlu0
        %v5464 = vpop.trf.xlu0
        %v5465 = vpop.trf.xlu0
        %v5466 = vpop.trf.xlu0
        %v5467 = vpop.trf.xlu0
        %v5468 = vpop.trf.xlu0
        %v5469 = vpop.trf.xlu0
        %v5470 = vpop.trf.xlu0
        %v5471 = vpop.trf.xlu0
        %v5472 = vpop.trf.xlu0
        %v5473 = vpop.trf.xlu0
        %v5474 = vpop.trf.xlu0
        %v5475 = vpop.trf.xlu0
        %v5476 = vpop.trf.xlu0
        %v5477 = vpop.trf.xlu0
        %v5478 = vpop.trf.xlu0
        %v5480 = vunpack.c.l.s4 1983009808
        %v5481 = vunpack.c.0.s8 %v5480
        %v5482 = vlaneseq
        %v5483 = vshrl.u32 %v5482, 7
        %v5484 = vsub.s32 %v5481, %v5483
        %v5485 = vrot.slane %v5431, %v5484
        %v5487 = vunpack.c.l.s4 1983009808
        %v5488 = vunpack.c.0.s8 %v5487
        %v5489 = vlaneseq
        %v5490 = vshrl.u32 %v5489, 7
        %v5491 = vsub.s32 %v5488, %v5490
        %v5492 = vrot.slane %v5463, %v5491
        %v5493 = vcombine.low %v5485, %v5492
        %v5494 = vcombine.high %v5485, %v5492
        %v5496 = vunpack.c.l.s4 1934713408
        %v5497 = vunpack.c.0.s8 %v5496
        %v5498 = vlaneseq
        %v5499 = vshrl.u32 %v5498, 7
        %v5500 = vsub.s32 %v5497, %v5499
        %v5501 = vrot.slane %v5493, %v5500
        %v5503 = vunpack.c.l.s4 1934713408
        %v5504 = vunpack.c.0.s8 %v5503
        %v5505 = vlaneseq
        %v5506 = vshrl.u32 %v5505, 7
        %v5507 = vsub.s32 %v5504, %v5506
        %v5508 = vrot.slane %v5494, %v5507
        %v5509 = vcombine.high %v5501, 0.0
        %v5510 = vcombine.high %v5508, 0.0
        %v5511 = vcombine.low %v5501, %v5508
        %v5513 = vunpack.c.l.s4 1983009808
        %v5514 = vunpack.c.0.s8 %v5513
        %v5515 = vlaneseq
        %v5516 = vshrl.u32 %v5515, 7
        %v5517 = vsub.s32 %v5514, %v5516
        %v5518 = vrot.slane %v5511, %v5517
        %v5519 = vcombine.low %v5509, %v5510
        %v5521 = vunpack.c.l.s4 1983009808
        %v5522 = vunpack.c.0.s8 %v5521
        %v5523 = vlaneseq
        %v5524 = vshrl.u32 %v5523, 7
        %v5525 = vsub.s32 %v5522, %v5524
        %v5526 = vrot.slane %v5519, %v5525
        %v5527 = vcombine.low %v5518, %v5526
        %v5529 = vunpack.c.l.s4 1934713408
        %v5530 = vunpack.c.0.s8 %v5529
        %v5531 = vlaneseq
        %v5532 = vshrl.u32 %v5531, 7
        %v5533 = vsub.s32 %v5530, %v5532
        %v5534 = vrot.slane %v5527, %v5533
        %v5535 = vcombine.high %v5534, 0.0
        %5537 = vrot.lane.b32.xlu0 %v5535, 32
        %v5538 = vpop.permute.xlu0 %5537
        %v5540 = vsel %vm1309, %v5534, %v5538
        %5543 = vrot.lane.b32.xlu0 %v4889, 96
        %v5544 = vpop.permute.xlu0 %5543
        %5545 = vrot.lane.b32.xlu0 %v4892, 96
        %v5546 = vpop.permute.xlu0 %5545
        %5549 = vxpose.xlu0.b32.start [1/16] %v4889, 128
        %5550 = vxpose.xlu0.b32.cont [2/16] %v4892, 128
        %5551 = vxpose.xlu0.b32.cont [3/16] 0.0, 128
        %5552 = vxpose.xlu0.b32.cont [4/16] 0.0, 128
        %5553 = vxpose.xlu0.b32.cont [5/16] 0.0, 128
        %5554 = vxpose.xlu0.b32.cont [6/16] 0.0, 128
        %5555 = vxpose.xlu0.b32.cont [7/16] 0.0, 128
        %5556 = vxpose.xlu0.b32.cont [8/16] 0.0, 128
        %5557 = vxpose.xlu0.b32.cont [9/16] 0.0, 128
        %5558 = vxpose.xlu0.b32.cont [10/16] 0.0, 128
        %5559 = vxpose.xlu0.b32.cont [11/16] 0.0, 128
        %5560 = vxpose.xlu0.b32.cont [12/16] 0.0, 128
        %5561 = vxpose.xlu0.b32.cont [13/16] 0.0, 128
        %5562 = vxpose.xlu0.b32.cont [14/16] 0.0, 128
        %5563 = vxpose.xlu0.b32.cont [15/16] 0.0, 128
        %5564 = vxpose.xlu0.b32.end [16/16] 0.0, 128
        %v5565 = vpop.trf.xlu0
        %v5566 = vpop.trf.xlu0
        %v5567 = vpop.trf.xlu0
        %v5568 = vpop.trf.xlu0
        %v5569 = vpop.trf.xlu0
        %v5570 = vpop.trf.xlu0
        %v5571 = vpop.trf.xlu0
        %v5572 = vpop.trf.xlu0
        %v5573 = vpop.trf.xlu0
        %v5574 = vpop.trf.xlu0
        %v5575 = vpop.trf.xlu0
        %v5576 = vpop.trf.xlu0
        %v5577 = vpop.trf.xlu0
        %v5578 = vpop.trf.xlu0
        %v5579 = vpop.trf.xlu0
        %v5580 = vpop.trf.xlu0
        %5581 = vxpose.xlu0.b32.start [1/16] %v5544, 128
        %5582 = vxpose.xlu0.b32.cont [2/16] %v5546, 128
        %5583 = vxpose.xlu0.b32.cont [3/16] 0.0, 128
        %5584 = vxpose.xlu0.b32.cont [4/16] 0.0, 128
        %5585 = vxpose.xlu0.b32.cont [5/16] 0.0, 128
        %5586 = vxpose.xlu0.b32.cont [6/16] 0.0, 128
        %5587 = vxpose.xlu0.b32.cont [7/16] 0.0, 128
        %5588 = vxpose.xlu0.b32.cont [8/16] 0.0, 128
        %5589 = vxpose.xlu0.b32.cont [9/16] 0.0, 128
        %5590 = vxpose.xlu0.b32.cont [10/16] 0.0, 128
        %5591 = vxpose.xlu0.b32.cont [11/16] 0.0, 128
        %5592 = vxpose.xlu0.b32.cont [12/16] 0.0, 128
        %5593 = vxpose.xlu0.b32.cont [13/16] 0.0, 128
        %5594 = vxpose.xlu0.b32.cont [14/16] 0.0, 128
        %5595 = vxpose.xlu0.b32.cont [15/16] 0.0, 128
        %5596 = vxpose.xlu0.b32.end [16/16] 0.0, 128
        %v5597 = vpop.trf.xlu0
        %v5598 = vpop.trf.xlu0
        %v5599 = vpop.trf.xlu0
        %v5600 = vpop.trf.xlu0
        %v5601 = vpop.trf.xlu0
        %v5602 = vpop.trf.xlu0
        %v5603 = vpop.trf.xlu0
        %v5604 = vpop.trf.xlu0
        %v5605 = vpop.trf.xlu0
        %v5606 = vpop.trf.xlu0
        %v5607 = vpop.trf.xlu0
        %v5608 = vpop.trf.xlu0
        %v5609 = vpop.trf.xlu0
        %v5610 = vpop.trf.xlu0
        %v5611 = vpop.trf.xlu0
        %v5612 = vpop.trf.xlu0
        %v5613 = vrot.slane %v4795, 4
        %v5614 = vsel %vm1309, %v5613, 0
        %5616 = vmatprep.subr.mxu0 0.0
        %5617 = vmatpush1.msra.mxu0 %v5565
        %5618 = vmatprep.subr.mxu0 0.0
        %5619 = vmatpush1.msra.mxu0 %v5566
        %5620 = vmatprep.subr.mxu0 0.0
        %5621 = vmatpush1.msra.mxu0 %v5567
        %5622 = vmatprep.subr.mxu0 0.0
        %5623 = vmatpush1.msra.mxu0 %v5568
        %5624 = vmatprep.subr.mxu0 0.0
        %5625 = vmatpush1.msra.mxu0 0.0
        %5626 = vmatprep.subr.mxu0 0.0
        %5627 = vmatpush1.msra.mxu0 0.0
        %5628 = vmatprep.subr.mxu0 0.0
        %5629 = vmatpush1.msra.mxu0 0.0
        %5630 = vmatprep.subr.mxu0 0.0
        %5631 = vmatpush1.msra.mxu0 0.0
        %5632 = vmatprep.subr.mxu0 0.0
        %5633 = vmatpush1.msra.mxu0 0.0
        %5634 = vmatprep.subr.mxu0 0.0
        %5635 = vmatpush1.msra.mxu0 0.0
        %5636 = vmatprep.subr.mxu0 0.0
        %5637 = vmatpush1.msra.mxu0 0.0
        %5638 = vmatprep.subr.mxu0 0.0
        %5639 = vmatpush1.msra.mxu0 0.0
        %5640 = vmatprep.subr.mxu0 0.0
        %5641 = vmatpush1.msra.mxu0 0.0
        %5642 = vmatprep.subr.mxu0 0.0
        %5643 = vmatpush1.msra.mxu0 0.0
        %5644 = vmatprep.subr.mxu0 0.0
        %5645 = vmatpush1.msra.mxu0 0.0
        %5646 = vmatprep.subr.mxu0 0.0
        %5647 = vmatpush1.msra.mxu0 0.0
        %5648 = vmatprep.subr.mxu0 0.0
        %5649 = vmatpush1.msra.mxu0 0.0
        %5650 = vmatprep.subr.mxu0 0.0
        %5651 = vmatpush1.msra.mxu0 0.0
        %5652 = vmatprep.subr.mxu0 0.0
        %5653 = vmatpush1.msra.mxu0 0.0
        %5654 = vmatprep.subr.mxu0 0.0
        %5655 = vmatpush1.msra.mxu0 0.0
        %5656 = vmatprep.subr.mxu0 0.0
        %5657 = vmatpush1.msra.mxu0 0.0
        %5658 = vmatprep.subr.mxu0 0.0
        %5659 = vmatpush1.msra.mxu0 0.0
        %5660 = vmatprep.subr.mxu0 0.0
        %5661 = vmatpush1.msra.mxu0 0.0
        %5662 = vmatprep.subr.mxu0 0.0
        %5663 = vmatpush1.msra.mxu0 0.0
        %5664 = vmatprep.subr.mxu0 0.0
        %5665 = vmatpush1.msra.mxu0 0.0
        %5666 = vmatprep.subr.mxu0 0.0
        %5667 = vmatpush1.msra.mxu0 0.0
        %5668 = vmatprep.subr.mxu0 0.0
        %5669 = vmatpush1.msra.mxu0 0.0
        %5670 = vmatprep.subr.mxu0 0.0
        %5671 = vmatpush1.msra.mxu0 0.0
        %5672 = vmatprep.subr.mxu0 0.0
        %5673 = vmatpush1.msra.mxu0 0.0
        %5674 = vmatprep.subr.mxu0 0.0
        %5675 = vmatpush1.msra.mxu0 0.0
        %5676 = vmatprep.subr.mxu0 0.0
        %5677 = vmatpush1.msra.mxu0 0.0
        %5678 = vmatprep.subr.mxu0 0.0
        %5679 = vmatpush1.msra.mxu0 0.0
        %5680 = vmatprep.mubr.f32.mxu0 0.0
        %5681 = vmatmul.mubr.f32.gmra.mrb[0].mxu0 %v5614
        %v5682 = vpop.f32.mrb[0].mxu0
        %v5683 = vadd.f32 0.0, %v5682
        %v5684 = vpop.f32.mrb[0].mxu0
        %5685 = vdwg.mxu0
        %v5686 = vrot.slane %v4897, 4
        %v5687 = vsel %vm1309, %v5686, 0
        %5689 = vmatprep.subr.mxu0 0.0
        %5690 = vmatpush1.msra.mxu0 %v5597
        %5691 = vmatprep.subr.mxu0 0.0
        %5692 = vmatpush1.msra.mxu0 %v5598
        %5693 = vmatprep.subr.mxu0 0.0
        %5694 = vmatpush1.msra.mxu0 %v5599
        %5695 = vmatprep.subr.mxu0 0.0
        %5696 = vmatpush1.msra.mxu0 %v5600
        %5697 = vmatprep.subr.mxu0 0.0
        %5698 = vmatpush1.msra.mxu0 0.0
        %5699 = vmatprep.subr.mxu0 0.0
        %5700 = vmatpush1.msra.mxu0 0.0
        %5701 = vmatprep.subr.mxu0 0.0
        %5702 = vmatpush1.msra.mxu0 0.0
        %5703 = vmatprep.subr.mxu0 0.0
        %5704 = vmatpush1.msra.mxu0 0.0
        %5705 = vmatprep.subr.mxu0 0.0
        %5706 = vmatpush1.msra.mxu0 0.0
        %5707 = vmatprep.subr.mxu0 0.0
        %5708 = vmatpush1.msra.mxu0 0.0
        %5709 = vmatprep.subr.mxu0 0.0
        %5710 = vmatpush1.msra.mxu0 0.0
        %5711 = vmatprep.subr.mxu0 0.0
        %5712 = vmatpush1.msra.mxu0 0.0
        %5713 = vmatprep.subr.mxu0 0.0
        %5714 = vmatpush1.msra.mxu0 0.0
        %5715 = vmatprep.subr.mxu0 0.0
        %5716 = vmatpush1.msra.mxu0 0.0
        %5717 = vmatprep.subr.mxu0 0.0
        %5718 = vmatpush1.msra.mxu0 0.0
        %5719 = vmatprep.subr.mxu0 0.0
        %5720 = vmatpush1.msra.mxu0 0.0
        %5721 = vmatprep.subr.mxu0 0.0
        %5722 = vmatpush1.msra.mxu0 0.0
        %5723 = vmatprep.subr.mxu0 0.0
        %5724 = vmatpush1.msra.mxu0 0.0
        %5725 = vmatprep.subr.mxu0 0.0
        %5726 = vmatpush1.msra.mxu0 0.0
        %5727 = vmatprep.subr.mxu0 0.0
        %5728 = vmatpush1.msra.mxu0 0.0
        %5729 = vmatprep.subr.mxu0 0.0
        %5730 = vmatpush1.msra.mxu0 0.0
        %5731 = vmatprep.subr.mxu0 0.0
        %5732 = vmatpush1.msra.mxu0 0.0
        %5733 = vmatprep.subr.mxu0 0.0
        %5734 = vmatpush1.msra.mxu0 0.0
        %5735 = vmatprep.subr.mxu0 0.0
        %5736 = vmatpush1.msra.mxu0 0.0
        %5737 = vmatprep.subr.mxu0 0.0
        %5738 = vmatpush1.msra.mxu0 0.0
        %5739 = vmatprep.subr.mxu0 0.0
        %5740 = vmatpush1.msra.mxu0 0.0
        %5741 = vmatprep.subr.mxu0 0.0
        %5742 = vmatpush1.msra.mxu0 0.0
        %5743 = vmatprep.subr.mxu0 0.0
        %5744 = vmatpush1.msra.mxu0 0.0
        %5745 = vmatprep.subr.mxu0 0.0
        %5746 = vmatpush1.msra.mxu0 0.0
        %5747 = vmatprep.subr.mxu0 0.0
        %5748 = vmatpush1.msra.mxu0 0.0
        %5749 = vmatprep.subr.mxu0 0.0
        %5750 = vmatpush1.msra.mxu0 0.0
        %5751 = vmatprep.subr.mxu0 0.0
        %5752 = vmatpush1.msra.mxu0 0.0
        %5753 = vmatprep.mubr.f32.mxu0 0.0
        %5754 = vmatmul.mubr.f32.gmra.mrb[0].mxu0 %v5687
        %v5755 = vpop.f32.mrb[0].mxu0
        %v5756 = vadd.f32 0.0, %v5755
        %v5757 = vpop.f32.mrb[0].mxu0
        %5758 = vdwg.mxu0
        %v5759 = vmul.f32 %v5683, 0.17677669
        %v5760 = vmul.f32 %v5756, 0.17677669
        %v5761 = vsel %vm5116, %v5759, -inf
        %5762 = vmax.xlane.f32.xlu0 %v5761
        %v5763 = vpop.xlane.xlu0 %5762
        %v5764 = vsel %vm5116, %v5760, -inf
        %5765 = vmax.xlane.f32.xlu0 %v5764
        %v5766 = vpop.xlane.xlu0 %5765
        %v5767 = vsub.f32 %v5759, %v5763
        %v5768 = vsub.f32 %v5760, %v5766
        %v5769 = vmul.f32 %v5767, 1.442695
        %v5770 = vpow.pop %v5769
        %v5771 = vmul.f32 %v5768, 1.442695
        %v5772 = vpow.pop %v5771
        %v5773 = vsel %vm5116, %v5770, 0.0
        %5774 = vadd.xlane.f32.xlu0 %v5773
        %v5775 = vpop.xlane.xlu0 %5774
        %v5776 = vsel %vm5116, %v5772, 0.0
        %5777 = vadd.xlane.f32.xlu0 %v5776
        %v5778 = vpop.xlane.xlu0 %5777
        %v5779 = vrcp.pop %v5775
        %v5780 = vrcp.pop %v5778
        %v5781 = vmul.f32 %v5770, %v5779
        %v5782 = vmul.f32 %v5772, %v5780
        %5783 = vrot.lane.b32.xlu0 %v4889, 64
        %v5784 = vpop.permute.xlu0 %5783
        %5785 = vrot.lane.b32.xlu0 %v4892, 64
        %v5786 = vpop.permute.xlu0 %5785
        %5787 = vrot.lane.b32.xlu0 %v5544, 64
        %v5788 = vpop.permute.xlu0 %5787
        %5789 = vrot.lane.b32.xlu0 %v5546, 64
        %v5790 = vpop.permute.xlu0 %5789
        %5795 = vxpose.xlu0.b32.start [1/16] %v5784, 128
        %5796 = vxpose.xlu0.b32.cont [2/16] %v5786, 128
        %5797 = vxpose.xlu0.b32.cont [3/16] 0.0, 128
        %5798 = vxpose.xlu0.b32.cont [4/16] 0.0, 128
        %5799 = vxpose.xlu0.b32.cont [5/16] 0.0, 128
        %5800 = vxpose.xlu0.b32.cont [6/16] 0.0, 128
        %5801 = vxpose.xlu0.b32.cont [7/16] 0.0, 128
        %5802 = vxpose.xlu0.b32.cont [8/16] 0.0, 128
        %5803 = vxpose.xlu0.b32.cont [9/16] 0.0, 128
        %5804 = vxpose.xlu0.b32.cont [10/16] 0.0, 128
        %5805 = vxpose.xlu0.b32.cont [11/16] 0.0, 128
        %5806 = vxpose.xlu0.b32.cont [12/16] 0.0, 128
        %5807 = vxpose.xlu0.b32.cont [13/16] 0.0, 128
        %5808 = vxpose.xlu0.b32.cont [14/16] 0.0, 128
        %5809 = vxpose.xlu0.b32.cont [15/16] 0.0, 128
        %5810 = vxpose.xlu0.b32.end [16/16] 0.0, 128
        %v5811 = vpop.trf.xlu0
        %v5812 = vpop.trf.xlu0
        %v5813 = vpop.trf.xlu0
        %v5814 = vpop.trf.xlu0
        %v5815 = vpop.trf.xlu0
        %v5816 = vpop.trf.xlu0
        %v5817 = vpop.trf.xlu0
        %v5818 = vpop.trf.xlu0
        %v5819 = vpop.trf.xlu0
        %v5820 = vpop.trf.xlu0
        %v5821 = vpop.trf.xlu0
        %v5822 = vpop.trf.xlu0
        %v5823 = vpop.trf.xlu0
        %v5824 = vpop.trf.xlu0
        %v5825 = vpop.trf.xlu0
        %v5826 = vpop.trf.xlu0
        %5827 = vxpose.xlu0.b32.start [1/16] %v5788, 128
        %5828 = vxpose.xlu0.b32.cont [2/16] %v5790, 128
        %5829 = vxpose.xlu0.b32.cont [3/16] 0.0, 128
        %5830 = vxpose.xlu0.b32.cont [4/16] 0.0, 128
        %5831 = vxpose.xlu0.b32.cont [5/16] 0.0, 128
        %5832 = vxpose.xlu0.b32.cont [6/16] 0.0, 128
        %5833 = vxpose.xlu0.b32.cont [7/16] 0.0, 128
        %5834 = vxpose.xlu0.b32.cont [8/16] 0.0, 128
        %5835 = vxpose.xlu0.b32.cont [9/16] 0.0, 128
        %5836 = vxpose.xlu0.b32.cont [10/16] 0.0, 128
        %5837 = vxpose.xlu0.b32.cont [11/16] 0.0, 128
        %5838 = vxpose.xlu0.b32.cont [12/16] 0.0, 128
        %5839 = vxpose.xlu0.b32.cont [13/16] 0.0, 128
        %5840 = vxpose.xlu0.b32.cont [14/16] 0.0, 128
        %5841 = vxpose.xlu0.b32.cont [15/16] 0.0, 128
        %5842 = vxpose.xlu0.b32.end [16/16] 0.0, 128
        %v5843 = vpop.trf.xlu0
        %v5844 = vpop.trf.xlu0
        %v5845 = vpop.trf.xlu0
        %v5846 = vpop.trf.xlu0
        %v5847 = vpop.trf.xlu0
        %v5848 = vpop.trf.xlu0
        %v5849 = vpop.trf.xlu0
        %v5850 = vpop.trf.xlu0
        %v5851 = vpop.trf.xlu0
        %v5852 = vpop.trf.xlu0
        %v5853 = vpop.trf.xlu0
        %v5854 = vpop.trf.xlu0
        %v5855 = vpop.trf.xlu0
        %v5856 = vpop.trf.xlu0
        %v5857 = vpop.trf.xlu0
        %v5858 = vpop.trf.xlu0
        %v5860 = vsel %vm1472, %v5811, 0
        %v5863 = vsel %vm1472, %v5812, 0
        %v5866 = vsel %vm1472, %v5813, 0
        %v5869 = vsel %vm1472, %v5814, 0
        %v5872 = vsel %vm1472, %v5781, 0
        %5874 = vmatprep.subr.mxu0 0.0
        %5875 = vmatpush1.xpose.msra.mxu0 %v5872
        %5876 = vmatprep.subr.mxu0 0.0
        %5877 = vmatpush1.xpose.msra.mxu0 0.0
        %5878 = vmatprep.subr.mxu0 0.0
        %5879 = vmatpush1.xpose.msra.mxu0 0.0
        %5880 = vmatprep.subr.mxu0 0.0
        %5881 = vmatpush1.xpose.msra.mxu0 0.0
        %5882 = vmatprep.subr.mxu0 0.0
        %5883 = vmatpush1.xpose.msra.mxu0 0.0
        %5884 = vmatprep.subr.mxu0 0.0
        %5885 = vmatpush1.xpose.msra.mxu0 0.0
        %5886 = vmatprep.subr.mxu0 0.0
        %5887 = vmatpush1.xpose.msra.mxu0 0.0
        %5888 = vmatprep.subr.mxu0 0.0
        %5889 = vmatpush1.xpose.msra.mxu0 0.0
        %5890 = vmatprep.subr.mxu0 0.0
        %5891 = vmatpush1.xpose.msra.mxu0 0.0
        %5892 = vmatprep.subr.mxu0 0.0
        %5893 = vmatpush1.xpose.msra.mxu0 0.0
        %5894 = vmatprep.subr.mxu0 0.0
        %5895 = vmatpush1.xpose.msra.mxu0 0.0
        %5896 = vmatprep.subr.mxu0 0.0
        %5897 = vmatpush1.xpose.msra.mxu0 0.0
        %5898 = vmatprep.subr.mxu0 0.0
        %5899 = vmatpush1.xpose.msra.mxu0 0.0
        %5900 = vmatprep.subr.mxu0 0.0
        %5901 = vmatpush1.xpose.msra.mxu0 0.0
        %5902 = vmatprep.subr.mxu0 0.0
        %5903 = vmatpush1.xpose.msra.mxu0 0.0
        %5904 = vmatprep.subr.mxu0 0.0
        %5905 = vmatpush1.xpose.msra.mxu0 0.0
        %5906 = vmatprep.subr.mxu0 0.0
        %5907 = vmatpush1.xpose.msra.mxu0 0.0
        %5908 = vmatprep.subr.mxu0 0.0
        %5909 = vmatpush1.xpose.msra.mxu0 0.0
        %5910 = vmatprep.subr.mxu0 0.0
        %5911 = vmatpush1.xpose.msra.mxu0 0.0
        %5912 = vmatprep.subr.mxu0 0.0
        %5913 = vmatpush1.xpose.msra.mxu0 0.0
        %5914 = vmatprep.subr.mxu0 0.0
        %5915 = vmatpush1.xpose.msra.mxu0 0.0
        %5916 = vmatprep.subr.mxu0 0.0
        %5917 = vmatpush1.xpose.msra.mxu0 0.0
        %5918 = vmatprep.subr.mxu0 0.0
        %5919 = vmatpush1.xpose.msra.mxu0 0.0
        %5920 = vmatprep.subr.mxu0 0.0
        %5921 = vmatpush1.xpose.msra.mxu0 0.0
        %5922 = vmatprep.subr.mxu0 0.0
        %5923 = vmatpush1.xpose.msra.mxu0 0.0
        %5924 = vmatprep.subr.mxu0 0.0
        %5925 = vmatpush1.xpose.msra.mxu0 0.0
        %5926 = vmatprep.subr.mxu0 0.0
        %5927 = vmatpush1.xpose.msra.mxu0 0.0
        %5928 = vmatprep.subr.mxu0 0.0
        %5929 = vmatpush1.xpose.msra.mxu0 0.0
        %5930 = vmatprep.subr.mxu0 0.0
        %5931 = vmatpush1.xpose.msra.mxu0 0.0
        %5932 = vmatprep.subr.mxu0 0.0
        %5933 = vmatpush1.xpose.msra.mxu0 0.0
        %5934 = vmatprep.subr.mxu0 0.0
        %5935 = vmatpush1.xpose.msra.mxu0 0.0
        %5936 = vmatprep.subr.mxu0 0.0
        %5937 = vmatpush1.xpose.msra.mxu0 0.0
        %5938 = vmatprep.mubr.f32.mxu0 0.0
        %5939 = vmatmul.mubr.f32.gmra.mrb[0].mxu0 %v5860
        %v5940 = vpop.f32.mrb[0].mxu0
        %v5941 = vadd.f32 0.0, %v5940
        %v5942 = vpop.f32.mrb[0].mxu0
        %5943 = vmatprep.mubr.f32.mxu0 0.0
        %5944 = vmatmul.mubr.f32.gmra.mrb[0].mxu0 %v5863
        %v5945 = vpop.f32.mrb[0].mxu0
        %v5946 = vadd.f32 0.0, %v5945
        %v5947 = vpop.f32.mrb[0].mxu0
        %5948 = vmatprep.mubr.f32.mxu0 0.0
        %5949 = vmatmul.mubr.f32.gmra.mrb[0].mxu0 %v5866
        %v5950 = vpop.f32.mrb[0].mxu0
        %v5951 = vadd.f32 0.0, %v5950
        %v5952 = vpop.f32.mrb[0].mxu0
        %5953 = vmatprep.mubr.f32.mxu0 0.0
        %5954 = vmatmul.mubr.f32.gmra.mrb[0].mxu0 %v5869
        %v5955 = vpop.f32.mrb[0].mxu0
        %v5956 = vadd.f32 0.0, %v5955
        %v5957 = vpop.f32.mrb[0].mxu0
        %5958 = vdwg.mxu0
        %v5960 = vsel %vm1472, %v5843, 0
        %v5963 = vsel %vm1472, %v5844, 0
        %v5966 = vsel %vm1472, %v5845, 0
        %v5969 = vsel %vm1472, %v5846, 0
        %v5972 = vsel %vm1472, %v5782, 0
        %5974 = vmatprep.subr.mxu0 0.0
        %5975 = vmatpush1.xpose.msra.mxu0 %v5972
        %5976 = vmatprep.subr.mxu0 0.0
        %5977 = vmatpush1.xpose.msra.mxu0 0.0
        %5978 = vmatprep.subr.mxu0 0.0
        %5979 = vmatpush1.xpose.msra.mxu0 0.0
        %5980 = vmatprep.subr.mxu0 0.0
        %5981 = vmatpush1.xpose.msra.mxu0 0.0
        %5982 = vmatprep.subr.mxu0 0.0
        %5983 = vmatpush1.xpose.msra.mxu0 0.0
        %5984 = vmatprep.subr.mxu0 0.0
        %5985 = vmatpush1.xpose.msra.mxu0 0.0
        %5986 = vmatprep.subr.mxu0 0.0
        %5987 = vmatpush1.xpose.msra.mxu0 0.0
        %5988 = vmatprep.subr.mxu0 0.0
        %5989 = vmatpush1.xpose.msra.mxu0 0.0
        %5990 = vmatprep.subr.mxu0 0.0
        %5991 = vmatpush1.xpose.msra.mxu0 0.0
        %5992 = vmatprep.subr.mxu0 0.0
        %5993 = vmatpush1.xpose.msra.mxu0 0.0
        %5994 = vmatprep.subr.mxu0 0.0
        %5995 = vmatpush1.xpose.msra.mxu0 0.0
        %5996 = vmatprep.subr.mxu0 0.0
        %5997 = vmatpush1.xpose.msra.mxu0 0.0
        %5998 = vmatprep.subr.mxu0 0.0
        %5999 = vmatpush1.xpose.msra.mxu0 0.0
        %6000 = vmatprep.subr.mxu0 0.0
        %6001 = vmatpush1.xpose.msra.mxu0 0.0
        %6002 = vmatprep.subr.mxu0 0.0
        %6003 = vmatpush1.xpose.msra.mxu0 0.0
        %6004 = vmatprep.subr.mxu0 0.0
        %6005 = vmatpush1.xpose.msra.mxu0 0.0
        %6006 = vmatprep.subr.mxu0 0.0
        %6007 = vmatpush1.xpose.msra.mxu0 0.0
        %6008 = vmatprep.subr.mxu0 0.0
        %6009 = vmatpush1.xpose.msra.mxu0 0.0
        %6010 = vmatprep.subr.mxu0 0.0
        %6011 = vmatpush1.xpose.msra.mxu0 0.0
        %6012 = vmatprep.subr.mxu0 0.0
        %6013 = vmatpush1.xpose.msra.mxu0 0.0
        %6014 = vmatprep.subr.mxu0 0.0
        %6015 = vmatpush1.xpose.msra.mxu0 0.0
        %6016 = vmatprep.subr.mxu0 0.0
        %6017 = vmatpush1.xpose.msra.mxu0 0.0
        %6018 = vmatprep.subr.mxu0 0.0
        %6019 = vmatpush1.xpose.msra.mxu0 0.0
        %6020 = vmatprep.subr.mxu0 0.0
        %6021 = vmatpush1.xpose.msra.mxu0 0.0
        %6022 = vmatprep.subr.mxu0 0.0
        %6023 = vmatpush1.xpose.msra.mxu0 0.0
        %6024 = vmatprep.subr.mxu0 0.0
        %6025 = vmatpush1.xpose.msra.mxu0 0.0
        %6026 = vmatprep.subr.mxu0 0.0
        %6027 = vmatpush1.xpose.msra.mxu0 0.0
        %6028 = vmatprep.subr.mxu0 0.0
        %6029 = vmatpush1.xpose.msra.mxu0 0.0
        %6030 = vmatprep.subr.mxu0 0.0
        %6031 = vmatpush1.xpose.msra.mxu0 0.0
        %6032 = vmatprep.subr.mxu0 0.0
        %6033 = vmatpush1.xpose.msra.mxu0 0.0
        %6034 = vmatprep.subr.mxu0 0.0
        %6035 = vmatpush1.xpose.msra.mxu0 0.0
        %6036 = vmatprep.subr.mxu0 0.0
        %6037 = vmatpush1.xpose.msra.mxu0 0.0
        %6038 = vmatprep.mubr.f32.mxu0 0.0
        %6039 = vmatmul.mubr.f32.gmra.mrb[0].mxu0 %v5960
        %v6040 = vpop.f32.mrb[0].mxu0
        %v6041 = vadd.f32 0.0, %v6040
        %v6042 = vpop.f32.mrb[0].mxu0
        %6043 = vmatprep.mubr.f32.mxu0 0.0
        %6044 = vmatmul.mubr.f32.gmra.mrb[0].mxu0 %v5963
        %v6045 = vpop.f32.mrb[0].mxu0
        %v6046 = vadd.f32 0.0, %v6045
        %v6047 = vpop.f32.mrb[0].mxu0
        %6048 = vmatprep.mubr.f32.mxu0 0.0
        %6049 = vmatmul.mubr.f32.gmra.mrb[0].mxu0 %v5966
        %v6050 = vpop.f32.mrb[0].mxu0
        %v6051 = vadd.f32 0.0, %v6050
        %v6052 = vpop.f32.mrb[0].mxu0
        %6053 = vmatprep.mubr.f32.mxu0 0.0
        %6054 = vmatmul.mubr.f32.gmra.mrb[0].mxu0 %v5969
        %v6055 = vpop.f32.mrb[0].mxu0
        %v6056 = vadd.f32 0.0, %v6055
        %v6057 = vpop.f32.mrb[0].mxu0
        %6058 = vdwg.mxu0
        %6059 = vxpose.xlu0.b32.start [1/16] %v5941, 128
        %6060 = vxpose.xlu0.b32.cont [2/16] %v5946, 128
        %6061 = vxpose.xlu0.b32.cont [3/16] %v5951, 128
        %6062 = vxpose.xlu0.b32.cont [4/16] %v5956, 128
        %6063 = vxpose.xlu0.b32.cont [5/16] 0.0, 128
        %6064 = vxpose.xlu0.b32.cont [6/16] 0.0, 128
        %6065 = vxpose.xlu0.b32.cont [7/16] 0.0, 128
        %6066 = vxpose.xlu0.b32.cont [8/16] 0.0, 128
        %6067 = vxpose.xlu0.b32.cont [9/16] 0.0, 128
        %6068 = vxpose.xlu0.b32.cont [10/16] 0.0, 128
        %6069 = vxpose.xlu0.b32.cont [11/16] 0.0, 128
        %6070 = vxpose.xlu0.b32.cont [12/16] 0.0, 128
        %6071 = vxpose.xlu0.b32.cont [13/16] 0.0, 128
        %6072 = vxpose.xlu0.b32.cont [14/16] 0.0, 128
        %6073 = vxpose.xlu0.b32.cont [15/16] 0.0, 128
        %6074 = vxpose.xlu0.b32.end [16/16] 0.0, 128
        %v6075 = vpop.trf.xlu0
        %v6076 = vpop.trf.xlu0
        %v6077 = vpop.trf.xlu0
        %v6078 = vpop.trf.xlu0
        %v6079 = vpop.trf.xlu0
        %v6080 = vpop.trf.xlu0
        %v6081 = vpop.trf.xlu0
        %v6082 = vpop.trf.xlu0
        %v6083 = vpop.trf.xlu0
        %v6084 = vpop.trf.xlu0
        %v6085 = vpop.trf.xlu0
        %v6086 = vpop.trf.xlu0
        %v6087 = vpop.trf.xlu0
        %v6088 = vpop.trf.xlu0
        %v6089 = vpop.trf.xlu0
        %v6090 = vpop.trf.xlu0
        %6091 = vxpose.xlu0.b32.start [1/16] %v6041, 128
        %6092 = vxpose.xlu0.b32.cont [2/16] %v6046, 128
        %6093 = vxpose.xlu0.b32.cont [3/16] %v6051, 128
        %6094 = vxpose.xlu0.b32.cont [4/16] %v6056, 128
        %6095 = vxpose.xlu0.b32.cont [5/16] 0.0, 128
        %6096 = vxpose.xlu0.b32.cont [6/16] 0.0, 128
        %6097 = vxpose.xlu0.b32.cont [7/16] 0.0, 128
        %6098 = vxpose.xlu0.b32.cont [8/16] 0.0, 128
        %6099 = vxpose.xlu0.b32.cont [9/16] 0.0, 128
        %6100 = vxpose.xlu0.b32.cont [10/16] 0.0, 128
        %6101 = vxpose.xlu0.b32.cont [11/16] 0.0, 128
        %6102 = vxpose.xlu0.b32.cont [12/16] 0.0, 128
        %6103 = vxpose.xlu0.b32.cont [13/16] 0.0, 128
        %6104 = vxpose.xlu0.b32.cont [14/16] 0.0, 128
        %6105 = vxpose.xlu0.b32.cont [15/16] 0.0, 128
        %6106 = vxpose.xlu0.b32.end [16/16] 0.0, 128
        %v6107 = vpop.trf.xlu0
        %v6108 = vpop.trf.xlu0
        %v6109 = vpop.trf.xlu0
        %v6110 = vpop.trf.xlu0
        %v6111 = vpop.trf.xlu0
        %v6112 = vpop.trf.xlu0
        %v6113 = vpop.trf.xlu0
        %v6114 = vpop.trf.xlu0
        %v6115 = vpop.trf.xlu0
        %v6116 = vpop.trf.xlu0
        %v6117 = vpop.trf.xlu0
        %v6118 = vpop.trf.xlu0
        %v6119 = vpop.trf.xlu0
        %v6120 = vpop.trf.xlu0
        %v6121 = vpop.trf.xlu0
        %v6122 = vpop.trf.xlu0
        %v6124 = vunpack.c.l.s4 1983009808
        %v6125 = vunpack.c.0.s8 %v6124
        %v6126 = vlaneseq
        %v6127 = vshrl.u32 %v6126, 7
        %v6128 = vsub.s32 %v6125, %v6127
        %v6129 = vrot.slane %v6075, %v6128
        %v6131 = vunpack.c.l.s4 1983009808
        %v6132 = vunpack.c.0.s8 %v6131
        %v6133 = vlaneseq
        %v6134 = vshrl.u32 %v6133, 7
        %v6135 = vsub.s32 %v6132, %v6134
        %v6136 = vrot.slane %v6107, %v6135
        %v6137 = vcombine.low %v6129, %v6136
        %v6138 = vcombine.high %v6129, %v6136
        %v6140 = vunpack.c.l.s4 1934713408
        %v6141 = vunpack.c.0.s8 %v6140
        %v6142 = vlaneseq
        %v6143 = vshrl.u32 %v6142, 7
        %v6144 = vsub.s32 %v6141, %v6143
        %v6145 = vrot.slane %v6137, %v6144
        %v6147 = vunpack.c.l.s4 1934713408
        %v6148 = vunpack.c.0.s8 %v6147
        %v6149 = vlaneseq
        %v6150 = vshrl.u32 %v6149, 7
        %v6151 = vsub.s32 %v6148, %v6150
        %v6152 = vrot.slane %v6138, %v6151
        %v6153 = vcombine.high %v6145, 0.0
        %v6154 = vcombine.high %v6152, 0.0
        %v6155 = vcombine.low %v6145, %v6152
        %v6157 = vunpack.c.l.s4 1983009808
        %v6158 = vunpack.c.0.s8 %v6157
        %v6159 = vlaneseq
        %v6160 = vshrl.u32 %v6159, 7
        %v6161 = vsub.s32 %v6158, %v6160
        %v6162 = vrot.slane %v6155, %v6161
        %v6163 = vcombine.low %v6153, %v6154
        %v6165 = vunpack.c.l.s4 1983009808
        %v6166 = vunpack.c.0.s8 %v6165
        %v6167 = vlaneseq
        %v6168 = vshrl.u32 %v6167, 7
        %v6169 = vsub.s32 %v6166, %v6168
        %v6170 = vrot.slane %v6163, %v6169
        %v6171 = vcombine.low %v6162, %v6170
        %v6173 = vunpack.c.l.s4 1934713408
        %v6174 = vunpack.c.0.s8 %v6173
        %v6175 = vlaneseq
        %v6176 = vshrl.u32 %v6175, 7
        %v6177 = vsub.s32 %v6174, %v6176
        %v6178 = vrot.slane %v6171, %v6177
        %v6179 = vcombine.high %v6178, 0.0
        %6181 = vrot.lane.b32.xlu0 %v6179, 32
        %v6182 = vpop.permute.xlu0 %6181
        %v6184 = vsel %vm1309, %v6178, %v6182
        %v6186 = vrot.slane %v6184, 4
        %v6188 = vsel %vm4591, %v5540, %v6186
        %s6189 = scalar_lea.vmem %s810, 64 [#allocation13]
        %v6190 = vld [vmem:[%s6189] sm:$0xf]
        %v6191 = vld [vmem:[%s6189 + $0x4] sm:$0xf]
        %v6192 = vld [vmem:[%s6189 + $0x8] sm:$0xf]
        %v6193 = vld [vmem:[%s6189 + $0xc] sm:$0xf]
        %v6194 = vld [vmem:[%s6189 + $0x10] sm:$0xf]
        %v6195 = vld [vmem:[%s6189 + $0x14] sm:$0xf]
        %v6196 = vld [vmem:[%s6189 + $0x18] sm:$0xf]
        %v6197 = vld [vmem:[%s6189 + $0x1c] sm:$0xf]
        %v6198 = vpack.c.bf16 %v6188, %v6188
        %v6199 = vld [vmem:[%s819 + $0x2] sm:$0x1]
        %v6200 = vlaneseq
        %v6201 = vshrl.u32 %v6200, 7
        %v6202 = vsub.s32 0, %v6201
        %v6203 = vrot.slane %v6199, %v6202
        %v6212 = vunpack.c.l.b16 %v6190
        %v6213 = vunpack.c.l.b16 %v6191
        %v6214 = vunpack.c.l.b16 %v6192
        %v6215 = vunpack.c.l.b16 %v6193
        %v6216 = vunpack.c.l.b16 %v6194
        %v6217 = vunpack.c.l.b16 %v6195
        %v6218 = vunpack.c.l.b16 %v6196
        %v6219 = vunpack.c.l.b16 %v6197
        %v6220 = vpack.c.b16 %v6213, %v6212
        %v6221 = vpack.c.b16 %v6215, %v6214
        %v6222 = vpack.c.b16 %v6217, %v6216
        %v6223 = vpack.c.b16 %v6219, %v6218
        %v6229 = vsel %vm981, %v6198, 0
        %6231 = vmatprep.subr.bf16.mxu0 0
        %6232 = vmatpush1.bf16.msra.mxu0 %v6220
        %6233 = vmatprep.subr.bf16.mxu0 0
        %6234 = vmatpush1.bf16.msra.mxu0 %v6221
        %6235 = vmatprep.subr.bf16.mxu0 0
        %6236 = vmatpush1.bf16.msra.mxu0 %v6222
        %6237 = vmatprep.subr.bf16.mxu0 0
        %6238 = vmatpush1.bf16.msra.mxu0 %v6223
        %6239 = vmatprep.subr.bf16.mxu0 0
        %6240 = vmatpush1.bf16.msra.mxu0 0
        %6241 = vmatprep.subr.bf16.mxu0 0
        %6242 = vmatpush1.bf16.msra.mxu0 0
        %6243 = vmatprep.subr.bf16.mxu0 0
        %6244 = vmatpush1.bf16.msra.mxu0 0
        %6245 = vmatprep.subr.bf16.mxu0 0
        %6246 = vmatpush1.bf16.msra.mxu0 0
        %6247 = vmatprep.subr.bf16.mxu0 0
        %6248 = vmatpush1.bf16.msra.mxu0 0
        %6249 = vmatprep.subr.bf16.mxu0 0
        %6250 = vmatpush1.bf16.msra.mxu0 0
        %6251 = vmatprep.subr.bf16.mxu0 0
        %6252 = vmatpush1.bf16.msra.mxu0 0
        %6253 = vmatprep.subr.bf16.mxu0 0
        %6254 = vmatpush1.bf16.msra.mxu0 0
        %6255 = vmatprep.subr.bf16.mxu0 0
        %6256 = vmatpush1.bf16.msra.mxu0 0
        %6257 = vmatprep.subr.bf16.mxu0 0
        %6258 = vmatpush1.bf16.msra.mxu0 0
        %6259 = vmatprep.subr.bf16.mxu0 0
        %6260 = vmatpush1.bf16.msra.mxu0 0
        %6261 = vmatprep.subr.bf16.mxu0 0
        %6262 = vmatpush1.bf16.msra.mxu0 0
        %6263 = vmatprep.mubr.bf16.mxu0 0
        %6264 = vmatmul.mubr.bf16.gmra.mrb[0].mxu0 %v6229
        %v6265 = vpop.f32.mrb[0].mxu0
        %v6266 = vadd.f32 %v6203, %v6265
        %v6267 = vpop.f32.mrb[0].mxu0
        %v6268 = vpop.f32.mrb[0].mxu0
        %v6269 = vpop.f32.mrb[0].mxu0
        %6270 = vdwg.mxu0
        %v6272 = vcombine.high %v6266, %v6266
        %v6274 = vadd.f32 %v977, %v6266
        %v6275 = vadd.f32 %v978, %v6272
        %v6278 = vcombine.low %v6274, %v6275
        %v6280 = vld [vmem:[%s756 + $0x4] sm:$0x1]
        %v6281 = vld [vmem:[%s765 + $0x4] sm:$0x1]
        %v6282 = vsel %vm981, %v3071, 0.0
        %6283 = vadd.xlane.f32.xlu0 %v6282
        %v6284 = vpop.xlane.xlu0 %6283
        %v6285 = vsel %vm981, %v3072, 0.0
        %6286 = vadd.xlane.f32.xlu0 %v6285
        %v6287 = vpop.xlane.xlu0 %6286
        %v6288 = vsel %vm981, %v3073, 0.0
        %6289 = vadd.xlane.f32.xlu0 %v6288
        %v6290 = vpop.xlane.xlu0 %6289
        %v6291 = vsel %vm981, %v3074, 0.0
        %6292 = vadd.xlane.f32.xlu0 %v6291
        %v6293 = vpop.xlane.xlu0 %6292
        %v6294 = vsel %vm981, %v6278, 0.0
        %6295 = vadd.xlane.f32.xlu0 %v6294
        %v6296 = vpop.xlane.xlu0 %6295
        %v6297 = vmul.f32 %v6284, %v994
        %v6298 = vmul.f32 %v6287, %v994
        %v6299 = vmul.f32 %v6290, %v994
        %v6300 = vmul.f32 %v6293, %v994
        %v6301 = vmul.f32 %v6296, %v994
        %v6302 = vsub.f32 %v3071, %v6297
        %v6303 = vsub.f32 %v3072, %v6298
        %v6304 = vsub.f32 %v3073, %v6299
        %v6305 = vsub.f32 %v3074, %v6300
        %v6306 = vsub.f32 %v6278, %v6301
        %v6307 = vmul.f32 %v6302, %v6302
        %v6308 = vmul.f32 %v6303, %v6303
        %v6309 = vmul.f32 %v6304, %v6304
        %v6310 = vmul.f32 %v6305, %v6305
        %v6311 = vmul.f32 %v6306, %v6306
        %v6312 = vsel %vm981, %v6307, 0.0
        %6313 = vadd.xlane.f32.xlu0 %v6312
        %v6314 = vpop.xlane.xlu0 %6313
        %v6315 = vsel %vm981, %v6308, 0.0
        %6316 = vadd.xlane.f32.xlu0 %v6315
        %v6317 = vpop.xlane.xlu0 %6316
        %v6318 = vsel %vm981, %v6309, 0.0
        %6319 = vadd.xlane.f32.xlu0 %v6318
        %v6320 = vpop.xlane.xlu0 %6319
        %v6321 = vsel %vm981, %v6310, 0.0
        %6322 = vadd.xlane.f32.xlu0 %v6321
        %v6323 = vpop.xlane.xlu0 %6322
        %v6324 = vsel %vm981, %v6311, 0.0
        %6325 = vadd.xlane.f32.xlu0 %v6324
        %v6326 = vpop.xlane.xlu0 %6325
        %v6327 = vmul.f32 %v6314, %v994
        %v6328 = vmul.f32 %v6317, %v994
        %v6329 = vmul.f32 %v6320, %v994
        %v6330 = vmul.f32 %v6323, %v994
        %v6331 = vmul.f32 %v6326, %v994
        %v6332 = vadd.f32 %v6327, 1e-05
        %v6333 = vadd.f32 %v6328, 1e-05
        %v6334 = vadd.f32 %v6329, 1e-05
        %v6335 = vadd.f32 %v6330, 1e-05
        %v6336 = vadd.f32 %v6331, 1e-05
        %v6337 = vrsqrt.pop %v6332
        %v6338 = vrsqrt.pop %v6333
        %v6339 = vrsqrt.pop %v6334
        %v6340 = vrsqrt.pop %v6335
        %v6341 = vrsqrt.pop %v6336
        %v6342 = vmul.f32 %v6302, %v6337
        %v6343 = vmul.f32 %v6303, %v6338
        %v6344 = vmul.f32 %v6304, %v6339
        %v6345 = vmul.f32 %v6305, %v6340
        %v6346 = vmul.f32 %v6306, %v6341
        %v6347 = vlaneseq
        %v6348 = vshrl.u32 %v6347, 7
        %v6349 = vsub.s32 0, %v6348
        %v6350 = vrot.slane %v6280, %v6349
        %v6351 = vmul.f32 %v6342, %v6350
        %v6352 = vmul.f32 %v6343, %v6350
        %v6353 = vmul.f32 %v6344, %v6350
        %v6354 = vmul.f32 %v6345, %v6350
        %v6355 = vmul.f32 %v6346, %v6350
        %v6356 = vlaneseq
        %v6357 = vshrl.u32 %v6356, 7
        %v6358 = vsub.s32 0, %v6357
        %v6359 = vrot.slane %v6281, %v6358
        %v6360 = vadd.f32 %v6351, %v6359
        %v6361 = vadd.f32 %v6352, %v6359
        %v6362 = vadd.f32 %v6353, %v6359
        %v6363 = vadd.f32 %v6354, %v6359
        %v6364 = vadd.f32 %v6355, %v6359
        %v6365 = vld [vmem:[%s828] sm:$0xff]
        %v6366 = vld [vmem:[%s828 + $0x8] sm:$0xff]
        %v6367 = vld [vmem:[%s828 + $0x10] sm:$0xff]
        %v6368 = vld [vmem:[%s828 + $0x18] sm:$0xff]
        %v6369 = vld [vmem:[%s828 + $0x20] sm:$0xff]
        %v6370 = vld [vmem:[%s828 + $0x28] sm:$0xff]
        %v6371 = vld [vmem:[%s828 + $0x30] sm:$0xff]
        %v6372 = vld [vmem:[%s828 + $0x38] sm:$0xff]
        %v6373 = vpack.c.bf16 %v6361, %v6360
        %v6374 = vpack.c.bf16 %v6363, %v6362
        %v6375 = vpack.c.bf16 %v6364, %v6364
        %v6376 = vld [vmem:[%s837] sm:$0x3]
        %v6378 = vlaneseq
        %v6379 = vshrl.u32 %v6378, 7
        %v6380 = vsub.s32 0, %v6379
        %v6381 = vrot.slane %v6376, %v6380
        %v6382 = vlaneseq
        %v6383 = vshrl.u32 %v6382, 7
        %v6384 = vsub.s32 1, %v6383
        %v6385 = vrot.slane %v6376, %v6384
        %v6396 = vunpack.c.l.b16 %v6365
        %v6397 = vunpack.c.h.b16 %v6365
        %v6398 = vunpack.c.l.b16 %v6366
        %v6399 = vunpack.c.h.b16 %v6366
        %v6400 = vunpack.c.l.b16 %v6367
        %v6401 = vunpack.c.h.b16 %v6367
        %v6402 = vunpack.c.l.b16 %v6368
        %v6403 = vunpack.c.h.b16 %v6368
        %v6404 = vunpack.c.l.b16 %v6369
        %v6405 = vunpack.c.h.b16 %v6369
        %v6406 = vunpack.c.l.b16 %v6370
        %v6407 = vunpack.c.h.b16 %v6370
        %v6408 = vunpack.c.l.b16 %v6371
        %v6409 = vunpack.c.h.b16 %v6371
        %v6410 = vunpack.c.l.b16 %v6372
        %v6411 = vunpack.c.h.b16 %v6372
        %v6412 = vpack.c.b16 %v6398, %v6396
        %v6413 = vpack.c.b16 %v6399, %v6397
        %v6414 = vpack.c.b16 %v6402, %v6400
        %v6415 = vpack.c.b16 %v6403, %v6401
        %v6416 = vpack.c.b16 %v6406, %v6404
        %v6417 = vpack.c.b16 %v6407, %v6405
        %v6418 = vpack.c.b16 %v6410, %v6408
        %v6419 = vpack.c.b16 %v6411, %v6409
        %v6429 = vsel %vm981, %v6373, 0
        %v6432 = vsel %vm981, %v6374, 0
        %v6435 = vsel %vm981, %v6375, 0
        %6437 = vmatprep.subr.bf16.mxu0 %v6413
        %6438 = vmatpush1.bf16.msra.mxu0 %v6412
        %6439 = vmatprep.subr.bf16.mxu0 %v6415
        %6440 = vmatpush1.bf16.msra.mxu0 %v6414
        %6441 = vmatprep.subr.bf16.mxu0 %v6417
        %6442 = vmatpush1.bf16.msra.mxu0 %v6416
        %6443 = vmatprep.subr.bf16.mxu0 %v6419
        %6444 = vmatpush1.bf16.msra.mxu0 %v6418
        %6445 = vmatprep.subr.bf16.mxu0 0
        %6446 = vmatpush1.bf16.msra.mxu0 0
        %6447 = vmatprep.subr.bf16.mxu0 0
        %6448 = vmatpush1.bf16.msra.mxu0 0
        %6449 = vmatprep.subr.bf16.mxu0 0
        %6450 = vmatpush1.bf16.msra.mxu0 0
        %6451 = vmatprep.subr.bf16.mxu0 0
        %6452 = vmatpush1.bf16.msra.mxu0 0
        %6453 = vmatprep.subr.bf16.mxu0 0
        %6454 = vmatpush1.bf16.msra.mxu0 0
        %6455 = vmatprep.subr.bf16.mxu0 0
        %6456 = vmatpush1.bf16.msra.mxu0 0
        %6457 = vmatprep.subr.bf16.mxu0 0
        %6458 = vmatpush1.bf16.msra.mxu0 0
        %6459 = vmatprep.subr.bf16.mxu0 0
        %6460 = vmatpush1.bf16.msra.mxu0 0
        %6461 = vmatprep.subr.bf16.mxu0 0
        %6462 = vmatpush1.bf16.msra.mxu0 0
        %6463 = vmatprep.subr.bf16.mxu0 0
        %6464 = vmatpush1.bf16.msra.mxu0 0
        %6465 = vmatprep.subr.bf16.mxu0 0
        %6466 = vmatpush1.bf16.msra.mxu0 0
        %6467 = vmatprep.subr.bf16.mxu0 0
        %6468 = vmatpush1.bf16.msra.mxu0 0
        %6469 = vmatprep.mubr.bf16.mxu0 0
        %6470 = vmatmul.mubr.bf16.gmra.mrb[0].mxu0 %v6429
        %v6471 = vpop.f32.mrb[0].mxu0
        %v6472 = vadd.f32 %v6381, %v6471
        %v6473 = vpop.f32.mrb[0].mxu0
        %v6474 = vadd.f32 %v6385, %v6473
        %v6475 = vpop.f32.mrb[0].mxu0
        %v6476 = vadd.f32 %v6381, %v6475
        %v6477 = vpop.f32.mrb[0].mxu0
        %v6478 = vadd.f32 %v6385, %v6477
        %6479 = vmatprep.mubr.bf16.mxu0 0
        %6480 = vmatmul.mubr.bf16.gmra.mrb[0].mxu0 %v6432
        %v6481 = vpop.f32.mrb[0].mxu0
        %v6482 = vadd.f32 %v6381, %v6481
        %v6483 = vpop.f32.mrb[0].mxu0
        %v6484 = vadd.f32 %v6385, %v6483
        %v6485 = vpop.f32.mrb[0].mxu0
        %v6486 = vadd.f32 %v6381, %v6485
        %v6487 = vpop.f32.mrb[0].mxu0
        %v6488 = vadd.f32 %v6385, %v6487
        %6489 = vmatprep.mubr.bf16.mxu0 0
        %6490 = vmatmul.mubr.bf16.gmra.mrb[0].mxu0 %v6435
        %v6491 = vpop.f32.mrb[0].mxu0
        %v6492 = vadd.f32 %v6381, %v6491
        %v6493 = vpop.f32.mrb[0].mxu0
        %v6494 = vadd.f32 %v6385, %v6493
        %v6495 = vpop.f32.mrb[0].mxu0
        %v6496 = vpop.f32.mrb[0].mxu0
        %6497 = vdwg.mxu0
        %v6498 = vmul.f32 %v6472, 0.5
        %v6499 = vmul.f32 %v6474, 0.5
        %v6500 = vmul.f32 %v6476, 0.5
        %v6501 = vmul.f32 %v6478, 0.5
        %v6502 = vmul.f32 %v6482, 0.5
        %v6503 = vmul.f32 %v6484, 0.5
        %v6504 = vmul.f32 %v6486, 0.5
        %v6505 = vmul.f32 %v6488, 0.5
        %v6506 = vmul.f32 %v6492, 0.5
        %v6507 = vmul.f32 %v6494, 0.5
        %v6508 = vmul.f32 %v6472, 0.044715
        %v6509 = vmul.f32 %v6474, 0.044715
        %v6510 = vmul.f32 %v6476, 0.044715
        %v6511 = vmul.f32 %v6478, 0.044715
        %v6512 = vmul.f32 %v6482, 0.044715
        %v6513 = vmul.f32 %v6484, 0.044715
        %v6514 = vmul.f32 %v6486, 0.044715
        %v6515 = vmul.f32 %v6488, 0.044715
        %v6516 = vmul.f32 %v6492, 0.044715
        %v6517 = vmul.f32 %v6494, 0.044715
        %v6518 = vmul.f32 %v6508, %v6472
        %v6519 = vmul.f32 %v6509, %v6474
        %v6520 = vmul.f32 %v6510, %v6476
        %v6521 = vmul.f32 %v6511, %v6478
        %v6522 = vmul.f32 %v6512, %v6482
        %v6523 = vmul.f32 %v6513, %v6484
        %v6524 = vmul.f32 %v6514, %v6486
        %v6525 = vmul.f32 %v6515, %v6488
        %v6526 = vmul.f32 %v6516, %v6492
        %v6527 = vmul.f32 %v6517, %v6494
        %v6528 = vmul.f32 %v6518, %v6472
        %v6529 = vmul.f32 %v6519, %v6474
        %v6530 = vmul.f32 %v6520, %v6476
        %v6531 = vmul.f32 %v6521, %v6478
        %v6532 = vmul.f32 %v6522, %v6482
        %v6533 = vmul.f32 %v6523, %v6484
        %v6534 = vmul.f32 %v6524, %v6486
        %v6535 = vmul.f32 %v6525, %v6488
        %v6536 = vmul.f32 %v6526, %v6492
        %v6537 = vmul.f32 %v6527, %v6494
        %v6538 = vadd.f32 %v6472, %v6528
        %v6539 = vadd.f32 %v6474, %v6529
        %v6540 = vadd.f32 %v6476, %v6530
        %v6541 = vadd.f32 %v6478, %v6531
        %v6542 = vadd.f32 %v6482, %v6532
        %v6543 = vadd.f32 %v6484, %v6533
        %v6544 = vadd.f32 %v6486, %v6534
        %v6545 = vadd.f32 %v6488, %v6535
        %v6546 = vadd.f32 %v6492, %v6536
        %v6547 = vadd.f32 %v6494, %v6537
        %v6548 = vmul.f32 %v6538, 0.7978846
        %v6549 = vmul.f32 %v6539, 0.7978846
        %v6550 = vmul.f32 %v6540, 0.7978846
        %v6551 = vmul.f32 %v6541, 0.7978846
        %v6552 = vmul.f32 %v6542, 0.7978846
        %v6553 = vmul.f32 %v6543, 0.7978846
        %v6554 = vmul.f32 %v6544, 0.7978846
        %v6555 = vmul.f32 %v6545, 0.7978846
        %v6556 = vmul.f32 %v6546, 0.7978846
        %v6557 = vmul.f32 %v6547, 0.7978846
        %v6558 = vtanh.pop %v6548
        %v6559 = vtanh.pop %v6549
        %v6560 = vtanh.pop %v6550
        %v6561 = vtanh.pop %v6551
        %v6562 = vtanh.pop %v6552
        %v6563 = vtanh.pop %v6553
        %v6564 = vtanh.pop %v6554
        %v6565 = vtanh.pop %v6555
        %v6566 = vtanh.pop %v6556
        %v6567 = vtanh.pop %v6557
        %v6568 = vadd.f32 %v6558, 1.0
        %v6569 = vadd.f32 %v6559, 1.0
        %v6570 = vadd.f32 %v6560, 1.0
        %v6571 = vadd.f32 %v6561, 1.0
        %v6572 = vadd.f32 %v6562, 1.0
        %v6573 = vadd.f32 %v6563, 1.0
        %v6574 = vadd.f32 %v6564, 1.0
        %v6575 = vadd.f32 %v6565, 1.0
        %v6576 = vadd.f32 %v6566, 1.0
        %v6577 = vadd.f32 %v6567, 1.0
        %v6578 = vmul.f32 %v6498, %v6568
        %v6579 = vmul.f32 %v6499, %v6569
        %v6580 = vmul.f32 %v6500, %v6570
        %v6581 = vmul.f32 %v6501, %v6571
        %v6582 = vmul.f32 %v6502, %v6572
        %v6583 = vmul.f32 %v6503, %v6573
        %v6584 = vmul.f32 %v6504, %v6574
        %v6585 = vmul.f32 %v6505, %v6575
        %v6586 = vmul.f32 %v6506, %v6576
        %v6587 = vmul.f32 %v6507, %v6577
        %v6588 = vld [vmem:[%s846] sm:$0xf]
        %v6589 = vld [vmem:[%s846 + $0x4] sm:$0xf]
        %v6590 = vld [vmem:[%s846 + $0x8] sm:$0xf]
        %v6591 = vld [vmem:[%s846 + $0xc] sm:$0xf]
        %v6592 = vld [vmem:[%s846 + $0x10] sm:$0xf]
        %v6593 = vld [vmem:[%s846 + $0x14] sm:$0xf]
        %v6594 = vld [vmem:[%s846 + $0x18] sm:$0xf]
        %v6595 = vld [vmem:[%s846 + $0x1c] sm:$0xf]
        %v6596 = vld [vmem:[%s846 + $0x20] sm:$0xf]
        %v6597 = vld [vmem:[%s846 + $0x24] sm:$0xf]
        %v6598 = vld [vmem:[%s846 + $0x28] sm:$0xf]
        %v6599 = vld [vmem:[%s846 + $0x2c] sm:$0xf]
        %v6600 = vld [vmem:[%s846 + $0x30] sm:$0xf]
        %v6601 = vld [vmem:[%s846 + $0x34] sm:$0xf]
        %v6602 = vld [vmem:[%s846 + $0x38] sm:$0xf]
        %v6603 = vld [vmem:[%s846 + $0x3c] sm:$0xf]
        %v6604 = vld [vmem:[%s846 + $0x40] sm:$0xf]
        %v6605 = vld [vmem:[%s846 + $0x44] sm:$0xf]
        %v6606 = vld [vmem:[%s846 + $0x48] sm:$0xf]
        %v6607 = vld [vmem:[%s846 + $0x4c] sm:$0xf]
        %v6608 = vld [vmem:[%s846 + $0x50] sm:$0xf]
        %v6609 = vld [vmem:[%s846 + $0x54] sm:$0xf]
        %v6610 = vld [vmem:[%s846 + $0x58] sm:$0xf]
        %v6611 = vld [vmem:[%s846 + $0x5c] sm:$0xf]
        %v6612 = vld [vmem:[%s846 + $0x60] sm:$0xf]
        %v6613 = vld [vmem:[%s846 + $0x64] sm:$0xf]
        %v6614 = vld [vmem:[%s846 + $0x68] sm:$0xf]
        %v6615 = vld [vmem:[%s846 + $0x6c] sm:$0xf]
        %v6616 = vld [vmem:[%s846 + $0x70] sm:$0xf]
        %v6617 = vld [vmem:[%s846 + $0x74] sm:$0xf]
        %v6618 = vld [vmem:[%s846 + $0x78] sm:$0xf]
        %v6619 = vld [vmem:[%s846 + $0x7c] sm:$0xf]
        %v6620 = vpack.c.bf16 %v6580, %v6578
        %v6621 = vpack.c.bf16 %v6581, %v6579
        %v6622 = vpack.c.bf16 %v6584, %v6582
        %v6623 = vpack.c.bf16 %v6585, %v6583
        %v6624 = vpack.c.bf16 %v6586, %v6586
        %v6625 = vpack.c.bf16 %v6587, %v6587
        %v6658 = vunpack.c.l.b16 %v6588
        %v6659 = vunpack.c.l.b16 %v6589
        %v6660 = vunpack.c.l.b16 %v6590
        %v6661 = vunpack.c.l.b16 %v6591
        %v6662 = vunpack.c.l.b16 %v6592
        %v6663 = vunpack.c.l.b16 %v6593
        %v6664 = vunpack.c.l.b16 %v6594
        %v6665 = vunpack.c.l.b16 %v6595
        %v6666 = vunpack.c.l.b16 %v6596
        %v6667 = vunpack.c.l.b16 %v6597
        %v6668 = vunpack.c.l.b16 %v6598
        %v6669 = vunpack.c.l.b16 %v6599
        %v6670 = vunpack.c.l.b16 %v6600
        %v6671 = vunpack.c.l.b16 %v6601
        %v6672 = vunpack.c.l.b16 %v6602
        %v6673 = vunpack.c.l.b16 %v6603
        %v6674 = vunpack.c.l.b16 %v6604
        %v6675 = vunpack.c.l.b16 %v6605
        %v6676 = vunpack.c.l.b16 %v6606
        %v6677 = vunpack.c.l.b16 %v6607
        %v6678 = vunpack.c.l.b16 %v6608
        %v6679 = vunpack.c.l.b16 %v6609
        %v6680 = vunpack.c.l.b16 %v6610
        %v6681 = vunpack.c.l.b16 %v6611
        %v6682 = vunpack.c.l.b16 %v6612
        %v6683 = vunpack.c.l.b16 %v6613
        %v6684 = vunpack.c.l.b16 %v6614
        %v6685 = vunpack.c.l.b16 %v6615
        %v6686 = vunpack.c.l.b16 %v6616
        %v6687 = vunpack.c.l.b16 %v6617
        %v6688 = vunpack.c.l.b16 %v6618
        %v6689 = vunpack.c.l.b16 %v6619
        %v6690 = vpack.c.b16 %v6659, %v6658
        %v6691 = vpack.c.b16 %v6661, %v6660
        %v6692 = vpack.c.b16 %v6663, %v6662
        %v6693 = vpack.c.b16 %v6665, %v6664
        %v6694 = vpack.c.b16 %v6667, %v6666
        %v6695 = vpack.c.b16 %v6669, %v6668
        %v6696 = vpack.c.b16 %v6671, %v6670
        %v6697 = vpack.c.b16 %v6673, %v6672
        %v6698 = vpack.c.b16 %v6675, %v6674
        %v6699 = vpack.c.b16 %v6677, %v6676
        %v6700 = vpack.c.b16 %v6679, %v6678
        %v6701 = vpack.c.b16 %v6681, %v6680
        %v6702 = vpack.c.b16 %v6683, %v6682
        %v6703 = vpack.c.b16 %v6685, %v6684
        %v6704 = vpack.c.b16 %v6687, %v6686
        %v6705 = vpack.c.b16 %v6689, %v6688
        %6722 = vmatprep.subr.bf16.mxu0 0
        %6723 = vmatpush1.bf16.msra.mxu0 %v6690
        %6724 = vmatprep.subr.bf16.mxu0 0
        %6725 = vmatpush1.bf16.msra.mxu0 %v6691
        %6726 = vmatprep.subr.bf16.mxu0 0
        %6727 = vmatpush1.bf16.msra.mxu0 %v6692
        %6728 = vmatprep.subr.bf16.mxu0 0
        %6729 = vmatpush1.bf16.msra.mxu0 %v6693
        %6730 = vmatprep.subr.bf16.mxu0 0
        %6731 = vmatpush1.bf16.msra.mxu0 %v6694
        %6732 = vmatprep.subr.bf16.mxu0 0
        %6733 = vmatpush1.bf16.msra.mxu0 %v6695
        %6734 = vmatprep.subr.bf16.mxu0 0
        %6735 = vmatpush1.bf16.msra.mxu0 %v6696
        %6736 = vmatprep.subr.bf16.mxu0 0
        %6737 = vmatpush1.bf16.msra.mxu0 %v6697
        %6738 = vmatprep.subr.bf16.mxu0 0
        %6739 = vmatpush1.bf16.msra.mxu0 %v6698
        %6740 = vmatprep.subr.bf16.mxu0 0
        %6741 = vmatpush1.bf16.msra.mxu0 %v6699
        %6742 = vmatprep.subr.bf16.mxu0 0
        %6743 = vmatpush1.bf16.msra.mxu0 %v6700
        %6744 = vmatprep.subr.bf16.mxu0 0
        %6745 = vmatpush1.bf16.msra.mxu0 %v6701
        %6746 = vmatprep.subr.bf16.mxu0 0
        %6747 = vmatpush1.bf16.msra.mxu0 %v6702
        %6748 = vmatprep.subr.bf16.mxu0 0
        %6749 = vmatpush1.bf16.msra.mxu0 %v6703
        %6750 = vmatprep.subr.bf16.mxu0 0
        %6751 = vmatpush1.bf16.msra.mxu0 %v6704
        %6752 = vmatprep.subr.bf16.mxu0 0
        %6753 = vmatpush1.bf16.msra.mxu0 %v6705
        %6754 = vmatprep.mubr.bf16.mxu0 %v6621
        %6755 = vmatmul.mubr.bf16.gmra.mrb[0].mxu0 %v6620
        %v6756 = vpop.f32.mrb[0].mxu0
        %v6757 = vadd.f32 0.0, %v6756
        %v6758 = vpop.f32.mrb[0].mxu0
        %v6759 = vpop.f32.mrb[0].mxu0
        %v6760 = vadd.f32 0.0, %v6759
        %v6761 = vpop.f32.mrb[0].mxu0
        %6762 = vmatprep.mubr.bf16.mxu0 %v6623
        %6763 = vmatmul.mubr.bf16.gmra.mrb[0].mxu0 %v6622
        %v6764 = vpop.f32.mrb[0].mxu0
        %v6765 = vadd.f32 0.0, %v6764
        %v6766 = vpop.f32.mrb[0].mxu0
        %v6767 = vpop.f32.mrb[0].mxu0
        %v6768 = vadd.f32 0.0, %v6767
        %v6769 = vpop.f32.mrb[0].mxu0
        %6770 = vmatprep.mubr.bf16.mxu0 %v6625
        %6771 = vmatmul.mubr.bf16.gmra.mrb[0].mxu0 %v6624
        %v6772 = vpop.f32.mrb[0].mxu0
        %v6773 = vadd.f32 0.0, %v6772
        %v6774 = vpop.f32.mrb[0].mxu0
        %v6775 = vpop.f32.mrb[0].mxu0
        %v6776 = vpop.f32.mrb[0].mxu0
        %6777 = vdwg.mxu0
        %v6778 = vadd.f32 %v6360, %v6757
        %v6779 = vadd.f32 %v6361, %v6760
        %v6780 = vadd.f32 %v6362, %v6765
        %v6781 = vadd.f32 %v6363, %v6768
        %v6782 = vadd.f32 %v6364, %v6773
        %v6783 = vld [vmem:[%s854] sm:$0x1]
        %v6785 = vlaneseq
        %v6786 = vshrl.u32 %v6785, 7
        %v6787 = vsub.s32 0, %v6786
        %v6788 = vrot.slane %v6783, %v6787
        %v6790 = vadd.f32 %v6778, %v6788
        %v6791 = vadd.f32 %v6779, %v6788
        %v6792 = vadd.f32 %v6780, %v6788
        %v6793 = vadd.f32 %v6781, %v6788
        %v6794 = vadd.f32 %v6782, %v6788
        %v6796 = vcombine.high %v6794, %v6794
        %6798 = vst.msk [vmem:[#allocation19] sm:$0xff] %vm981, %v6790
        %6799 = vst.msk [vmem:[#allocation19 + $0x8] sm:$0xff] %vm981, %v6791
        %6800 = vst.msk [vmem:[#allocation19 + $0x10] sm:$0xff] %vm981, %v6792
        %6801 = vst.msk [vmem:[#allocation19 + $0x18] sm:$0xff] %vm981, %v6793
        %vm6802 = vcmask 519168
        %6803 = vst.msk [vmem:[#allocation20] sm:$0xf] %vm6802, %v6794
        %6804 = vst.msk [vmem:[#allocation20 + $0x4] sm:$0xf] %vm6802, %v6796
        // Predicated region
        $region137: #{tpu_custom_call.1} parent=75 // pred_check
          %p6805 = pneg %p425
        $region138: #{tpu_custom_call.1} parent=75 // pred_check_branch
          %6807 = sbr.rel (%p6805) target = $region140
        $region139: #{tpu_custom_call.1} parent=75 // pred_region
          %s6808 = smul.u32 2, %s35
          %s6810 = ssub.s32 512, 512
          %6811 = vsyncadd [#allocation4], %s6810
          %s6812 = smul.addr %s6808, 2
          %s6813 = smul.addr %s6812, 128
          %s6814 = scalar_lea.hbm %s14, %s6813
          %s6815 = sshll.u32 [#allocation19], 4
          %s6816 = int_to_ptr.vmem [resolvable:$true] %s6815
          %6821 = dma.vmem_to_hbm [thread:$0]  %s6816, 512, %s6814, [#allocation4], 128, 128, 8
        $region140: #{tpu_custom_call.1} parent=75 // pred_fallthru
          _
        // Predicated region
        $region141: #{tpu_custom_call.1} parent=75 // pred_check
          %p6822 = pneg %p451
        $region142: #{tpu_custom_call.1} parent=75 // pred_check_branch
          %6824 = sbr.rel (%p6822) target = $region144
        $region143: #{tpu_custom_call.1} parent=75 // pred_region
          %s6825 = smul.u32 2, %s35
          %s6827 = ssub.s32 128, 128
          %6828 = vsyncadd [#allocation21], %s6827
          %s6829 = smul.addr %s6825, 64
          %s6830 = scalar_lea.hbm %s15, %s6829
          %s6831 = sshll.u32 [#allocation20], 4
          %s6832 = int_to_ptr.vmem [resolvable:$true] %s6831
          %6837 = dma.vmem_to_hbm [thread:$0]  %s6832, 128, %s6830, [#allocation21], 64, 64, 4
        $region144: #{tpu_custom_call.1} parent=75 // pred_fallthru
          _
        // Predicated region
        $region145: #{tpu_custom_call.1} parent=75 // pred_check
          %p6838 = pneg %p425
        $region146: #{tpu_custom_call.1} parent=75 // pred_check_branch
          %6840 = sbr.rel (%p6838) target = $region148
        $region147: #{tpu_custom_call.1} parent=75 // pred_region
          %6841 = dma.done [#allocation4], 512
        $region148: #{tpu_custom_call.1} parent=75 // pred_fallthru
          _
        // Predicated region
        $region149: #{tpu_custom_call.1} parent=75 // pred_check
          %p6842 = pneg %p451
        $region150: #{tpu_custom_call.1} parent=75 // pred_check_branch
          %6844 = sbr.rel (%p6842) target = $region152
        $region151: #{tpu_custom_call.1} parent=75 // pred_region
          %6845 = dma.done [#allocation21], 128
        $region152: #{tpu_custom_call.1} parent=75 // pred_fallthru
          _
      $region76: #{tpu_custom_call.1} parent=5 // pred_fallthru
        _
      %p6846 = scmp.le.s32.totalorder 2, %s26
      // Predicated region
      $region153: #{tpu_custom_call.1} parent=5 // pred_check
        %p6847 = pneg %p6846
      $region154: #{tpu_custom_call.1} parent=5 // pred_check_branch
        %6849 = sbr.rel (%p6847) target = $region156
      $region155: #{tpu_custom_call.1} parent=5 // pred_region
        %s6850 = ssub.s32 %s26, 2
      $region156: #{tpu_custom_call.1} parent=5 // pred_fallthru
        _
    $region6: #{tpu_custom_call.1} parent=1 // loop_footer
      %s30 = sadd.s32 1, %s26
    $region7: #{tpu_custom_call.1} parent=1 // loop_footer_branch
      %25 = sbr.rel target = $region3
    $region8: #{tpu_custom_call.1} parent=1 // loop_exit
      _
    %6851 = vsyncpa [#allocation3], 1
    %s6852 = scalar_lea.sflag [#allocation3], 1
    %6853 = vsyncpa %s6852, 1
    %6854 = vsyncpa [#allocation6], 1
    %6855 = vsyncpa [#allocation4], 1
    %s6856 = scalar_lea.sflag [#allocation4], 1
    %6857 = vsyncpa %s6856, 1
    %6858 = vsyncpa [#allocation21], 1

</llo_original>
